<compile_context>
chip_gen: v6e
topology: v6e:2x2x1
jax: 0.10.0
libtpu: 0.0.40
codegen_flags: <defaults>
</compile_context>

<pallas_src>
import functools
import numpy as np
import jax
import jax.numpy as jnp
from jax.experimental import pallas as pl
from jax.experimental.pallas import tpu as pltpu

D_MODEL = 128
NUM_HEADS = 4
D_HEAD = D_MODEL // NUM_HEADS
FF_EXPANSION = 2        # feed_forward_expansion_factor
CONV_EXPANSION = 2      # conv_expansion_factor
CONV_KERNEL = 15        # conv_kernel_size
CNN_IN = 39
CNN_KERNEL = 3
NUM_CLASSES = 8
LN_EPS = 1e-5
BN_EPS = 1e-5
VMEM_LIMIT = 48 * 1024 * 1024   # < 64 MiB physical on v7x, > 32 MiB default scope


# --------------------------- small in-kernel helpers ---------------------------

def _ln(x, g, b):
    mu = jnp.mean(x, axis=-1, keepdims=True)
    var = jnp.mean(jnp.square(x - mu), axis=-1, keepdims=True)
    return (x - mu) * jax.lax.rsqrt(var + LN_EPS) * g + b


def _mm(x, w_ref, b_ref=None):
    """bf16 MXU matmul with f32 accumulation, optional fused bias."""
    y = jnp.dot(x.astype(jnp.bfloat16), w_ref[...],
                preferred_element_type=jnp.float32)
    if b_ref is not None:
        y = y + b_ref[...]
    return y


def _swish(x):
    return x * jax.nn.sigmoid(x)


def _shift_rows(v, off):
    """Zero-padded shift along the time (sublane) axis: out[t] = v[t + off]."""
    n = v.shape[0]
    if off == 0:
        return v
    if off >= n or -off >= n:
        return jnp.zeros_like(v)
    if off > 0:
        return jnp.concatenate(
            [v[off:], jnp.zeros((off,) + v.shape[1:], v.dtype)], axis=0)
    return jnp.concatenate(
        [jnp.zeros((-off,) + v.shape[1:], v.dtype), v[:off]], axis=0)


# ----------------------- fused CNN front-end (per batch) -----------------------

def _cnn_frontend_kernel(xe_ref, xo_ref, w_ref, b_ref, out_ref):
    # Conv1d(39->128, k=3, 'same') + folded BN + ReLU + MaxPool1d(2, 2), computed
    # directly in pooled (even/odd phase) coordinates so the un-pooled activation
    # never exists.  y[t] = sum_k x[t + k - 1] @ W_k.
    th = out_ref.shape[0]
    cin = xe_ref.shape[1]
    xe = xe_ref[...]                       # even frames x[2m], m = 0..th   (th+1 rows)
    xo = xo_ref[...]                       # odd frames  x[2m+1], m = 0..th-1

    def tap(v, k):
        return jnp.dot(v.astype(jnp.bfloat16), w_ref[k],
                       preferred_element_type=jnp.float32)

    xe_cur = xe[:th]                       # x[2m]
    xe_nxt = xe[1:th + 1]                  # x[2m+2]
    if th > 1:
        xo_prev = jnp.concatenate(
            [jnp.zeros((1, cin), xo.dtype), xo[:th - 1]], axis=0)   # x[2m-1]
    else:
        xo_prev = jnp.zeros_like(xo)

    bias = b_ref[...]                                        # folded conv-bias + BN
    y_even = tap(xo_prev, 0) + tap(xe_cur, 1) + tap(xo, 2) + bias
    y_odd = tap(xe_cur, 0) + tap(xo, 1) + tap(xe_nxt, 2) + bias
    y_even = jnp.maximum(y_even, 0.0)                        # ReLU
    y_odd = jnp.maximum(y_odd, 0.0)
    out_ref[...] = jnp.maximum(y_even, y_odd)                # MaxPool1d(2, 2)


def cnn_frontend(x, w, b):
    bsz, t, cin = x.shape
    th = t // 2                            # MaxPool1d(2,2) drops a trailing odd frame
    x_e = x[:, 0::2, :]
    if x_e.shape[1] == th:                 # even t: zero frame for the right conv halo
        x_e = jnp.concatenate([x_e, jnp.zeros((bsz, 1, cin), x.dtype)], axis=1)
    x_o = x[:, 1::2, :]                    # exactly th frames for both parities
    return pl.pallas_call(
        _cnn_frontend_kernel,
        grid=(bsz,),
        in_specs=[
            pl.BlockSpec((None, th + 1, cin), lambda bb: (bb, 0, 0)),
            pl.BlockSpec((None, th, cin), lambda bb: (bb, 0, 0)),
            pl.BlockSpec((CNN_KERNEL, cin, D_MODEL), lambda bb: (0, 0, 0)),
            pl.BlockSpec((1, D_MODEL), lambda bb: (0, 0)),
        ],
        out_specs=pl.BlockSpec((None, th, D_MODEL), lambda bb: (bb, 0, 0)),
        out_shape=jax.ShapeDtypeStruct((bsz, th, D_MODEL), jnp.float32),
        compiler_params=pltpu.CompilerParams(
            dimension_semantics=("parallel",)),
    )(x_e, x_o, w, b)


# ----------------------- fused Conformer block (per batch) -----------------------

def _conformer_block_kernel(
        x_ref, pos_ref, lng_ref, lnb_ref,
        ff1w1_ref, ff1b1_ref, ff1w2_ref, ff1b2_ref,
        wqkv_ref, bqkv_ref, wp_ref, uv_ref, wo_ref, bo_ref,
        pw1w_ref, pw1b_ref, dww_ref, bns_ref, bnsh_ref, pw2w_ref, pw2b_ref,
        ff2w1_ref, ff2b1_ref, ff2w2_ref, ff2b2_ref,
        xo_ref, mean_ref):
    t = x_ref.shape[0]
    d = x_ref.shape[1]
    x = x_ref[...]                                           # (T, D) f32 residual stream

    def ln(v, idx):
        return _ln(v, lng_ref[idx, :], lnb_ref[idx, :])

    # ---------------- feed-forward module #1 (half-step residual) ----------------
    h = ln(x, 0)
    h = _swish(_mm(h, ff1w1_ref, ff1b1_ref))
    h = _mm(h, ff1w2_ref, ff1b2_ref)
    x = x + 0.5 * h

    # -------------- multi-head self-attention with relative pos enc --------------
    h = ln(x, 1)
    qkv = _mm(h, wqkv_ref, bqkv_ref)                         # fused Q|K|V   (T, 3D)
    pe = _mm(pos_ref[...], wp_ref)                           # pos_proj (no bias) (T, D)

    row = jax.lax.broadcasted_iota(jnp.int32, (t, t), 0)
    col = jax.lax.broadcasted_iota(jnp.int32, (t, t), 1)
    # per-row right-roll amounts for the Transformer-XL relative-shift trick
    shift_amt = jnp.where(row == t - 1, 0, row + 1)
    nbits = (t - 1).bit_length()
    bit_masks = []
    for b in range(nbits):
        if (1 << b) >= t:
            break
        bit_masks.append(
            jnp.bitwise_and(jnp.right_shift(shift_amt, b), 1) == 1)

    inv_sqrt_d = 1.0 / float(np.sqrt(D_MODEL))
    dn = (((1,), (1,)), ((), ()))                            # contract last dims (A @ B^T)
    ctx_heads = []
    for hh in range(NUM_HEADS):                              # all heads in one body
        lo, hi = hh * D_HEAD, (hh + 1) * D_HEAD
        qh = qkv[:, lo:hi]
        kh = qkv[:, d + lo:d + hi]
        vh = qkv[:, 2 * d + lo:2 * d + hi]
        ph = pe[:, lo:hi]
        u = uv_ref[hh, :]                                    # (D_HEAD,)
        vb = uv_ref[NUM_HEADS + hh, :]

        cs = jax.lax.dot_general((qh + u).astype(jnp.bfloat16),
                                 kh.astype(jnp.bfloat16), dn,
                                 preferred_element_type=jnp.float32)
        ps = jax.lax.dot_general((qh + vb).astype(jnp.bfloat16),
                                 ph.astype(jnp.bfloat16), dn,
                                 preferred_element_type=jnp.float32)

        # relative shift, fully in-kernel:  A[i, j] = ps[i, (j - i - 1) mod T]
        # built from log2(T) uniform circular rolls selected per row (binary
        # decomposition of the per-row shift), then the torch reshape-trick
        # result is  where(j<=i, A, where(j==i+1, 0, A[i+1])).
        a = ps
        for b, mask in enumerate(bit_masks):
            amt = 1 << b
            rolled = jnp.concatenate([a[:, t - amt:], a[:, :t - amt]], axis=1)
            a = jnp.where(mask, rolled, a)
        a_up = jnp.concatenate([a[1:], a[:1]], axis=0)
        shifted = jnp.where(col <= row, a,
                            jnp.where(col == row + 1, 0.0, a_up))

        s = (cs + shifted) * inv_sqrt_d
        s = s - jnp.max(s, axis=-1, keepdims=True)           # stable softmax
        e = jnp.exp(s)
        attn = e * pl.reciprocal(jnp.sum(e, axis=-1, keepdims=True), approx=True)
        ctx_heads.append(jnp.dot(attn.astype(jnp.bfloat16),
                                 vh.astype(jnp.bfloat16),
                                 preferred_element_type=jnp.float32))
    ctx = jnp.concatenate(ctx_heads, axis=1)                 # (T, D)
    x = x + _mm(ctx, wo_ref, bo_ref)

    # ------------------------------ convolution module ------------------------------
    h = ln(x, 2)
    h = _mm(h, pw1w_ref, pw1b_ref)                           # pointwise conv (T, 2D)
    h = h[:, :d] * jax.nn.sigmoid(h[:, d:])                  # GLU
    half = (CONV_KERNEL - 1) // 2
    acc = jnp.zeros((t, d), jnp.float32)
    for k in range(CONV_KERNEL):                             # depthwise taps, halo in VMEM
        acc = acc + _shift_rows(h, k - half) * dww_ref[k, :]
    hc = acc * bns_ref[...] + bnsh_ref[...]                  # folded eval-mode BatchNorm
    hc = _swish(hc)
    x = x + _mm(hc, pw2w_ref, pw2b_ref)                      # pointwise conv (dropout = id)

    # ---------------- feed-forward module #2 (half-step residual) ----------------
    h = ln(x, 3)
    h = _swish(_mm(h, ff2w1_ref, ff2b1_ref))
    h = _mm(h, ff2w2_ref, ff2b2_ref)
    x = x + 0.5 * h

    # ------------------------ final LayerNorm + outputs ------------------------
    x = ln(x, 4)
    xo_ref[...] = x
    mean_ref[...] = jnp.mean(x, axis=0, keepdims=True)       # per-layer time-mean (1, D)


def conformer_block(x, pos_emb, p):
    bsz, t, d = x.shape

    def const(shape):
        nd = len(shape)
        return pl.BlockSpec(shape, lambda bb, _nd=nd: (0,) * _nd)

    in_specs = [
        pl.BlockSpec((None, t, d), lambda bb: (bb, 0, 0)),   # x
        const((t, d)),                                       # pos_emb
        const((5, d)), const((5, d)),                        # ln gamma / beta (packed)
        const((d, FF_EXPANSION * d)), const((1, FF_EXPANSION * d)),
        const((FF_EXPANSION * d, d)), const((1, d)),         # ff1
        const((d, 3 * d)), const((1, 3 * d)),                # fused wqkv / bqkv
        const((d, d)),                                       # wp
        const((2 * NUM_HEADS, D_HEAD)),                      # u|v biases
        const((d, d)), const((1, d)),                        # wo / bo
        const((d, CONV_EXPANSION * d)), const((1, CONV_EXPANSION * d)),
        const((CONV_KERNEL, d)),                             # depthwise taps
        const((1, d)), const((1, d)),                        # folded BN scale / shift
        const((d, d)), const((1, d)),                        # pw2
        const((d, FF_EXPANSION * d)), const((1, FF_EXPANSION * d)),
        const((FF_EXPANSION * d, d)), const((1, d)),         # ff2
    ]
    out_specs = (
        pl.BlockSpec((None, t, d), lambda bb: (bb, 0, 0)),
        pl.BlockSpec((None, 1, d), lambda bb: (bb, 0, 0)),
    )
    out_shape = (jax.ShapeDtypeStruct((bsz, t, d), jnp.float32),
                 jax.ShapeDtypeStruct((bsz, 1, d), jnp.float32))
    return pl.pallas_call(
        _conformer_block_kernel,
        grid=(bsz,),
        in_specs=in_specs,
        out_specs=out_specs,
        out_shape=out_shape,
        compiler_params=pltpu.CompilerParams(
            dimension_semantics=("parallel",),
            vmem_limit_bytes=VMEM_LIMIT),
    )(x, pos_emb, p["ln_g"], p["ln_b"],
      p["ff1_w1"], p["ff1_b1"], p["ff1_w2"], p["ff1_b2"],
      p["wqkv"], p["bqkv"], p["wp"], p["uv"], p["wo"], p["bo"],
      p["pw1_w"], p["pw1_b"], p["dw_w"], p["bn_scale"], p["bn_shift"],
      p["pw2_w"], p["pw2_b"],
      p["ff2_w1"], p["ff2_b1"], p["ff2_w2"], p["ff2_b2"])


# --------------------------------- classifier head ---------------------------------

def _head_kernel(means_ref, wl_ref, cw_ref, cb_ref, o_ref):
    # weighted layer combine over the (L, B, D) per-layer time-means + linear head
    pooled = jnp.sum(means_ref[...] * wl_ref[...], axis=0)   # (B, D)
    o_ref[...] = jnp.dot(pooled.astype(jnp.bfloat16), cw_ref[...],
                         preferred_element_type=jnp.float32) + cb_ref[...]


def head(means, weighted_layers, cls_w, cls_b):
    num_layers, bsz, _ = means.shape
    ncls = cls_w.shape[1]
    return pl.pallas_call(
        _head_kernel,
        out_shape=jax.ShapeDtypeStruct((bsz, ncls), jnp.float32),
    )(means, weighted_layers.reshape(num_layers, 1, 1), cls_w, cls_b.reshape(1, -1))


# ------------------------------------ JAX glue ------------------------------------

def sinusoidal_positional_encoding(length, d_model):
    position = np.arange(length, dtype=np.float32)[:, None]
    div_term = np.exp(np.arange(0, d_model, 2, dtype=np.float32)
                      * (-np.log(10000.0) / d_model))
    pe = np.zeros((length, d_model), dtype=np.float32)
    pe[:, 0::2] = np.sin(position * div_term)
    pe[:, 1::2] = np.cos(position * div_term)
    return jnp.asarray(pe)


def cnn_conformer_forward(params, inputs, lengths=None):
    """inputs: (B, 39, T) float32, matching the PyTorch NCW convention."""
    del lengths  # unused by the reference forward
    x = jnp.transpose(inputs, (0, 2, 1))                     # -> (B, T, 39) channels-last
    x = cnn_frontend(x, params["cnn_w"], params["cnn_b"])    # conv+BN+ReLU+pool, fused
    # SpatialDropout1D(0.2): identity in inference; already (B, T2, C) layout.
    t2 = x.shape[1]
    pos_emb = sinusoidal_positional_encoding(t2, D_MODEL)

    means = []
    for blk in params["blocks"]:
        x, m = conformer_block(x, pos_emb, blk)              # one fused kernel per block
        means.append(m[:, 0, :])                             # (B, D) per-layer time-mean
    stacked = jnp.stack(means, axis=0)                       # (L, B, D)  -- tiny

    return head(stacked, params["weighted_layers"], params["cls_w"], params["cls_b"])


# ------------------------- deterministic parameters -------------------------

def init_params(key, num_layers=8):
    counter = [0]

    def normal(shape, std=1.0):
        counter[0] += 1
        return std * jax.random.normal(jax.random.fold_in(key, counter[0]),
                                       shape, jnp.float32)

    def zeros(shape):
        return jnp.zeros(shape, jnp.float32)

    def ones(shape):
        return jnp.ones(shape, jnp.float32)

    # eval-mode BatchNorm with running stats (mean=0, var=1), gamma=1, beta=0
    bn_scale = float(1.0 / np.sqrt(1.0 + BN_EPS))

    params = {}
    # CNN Conv1d(39, 128, 3) (+ folded BatchNorm1d). torch weight layout (Cout, Cin, K)
    # is re-packed as per-tap matrices (K, Cin, Cout) for the fused front-end kernel.
    conv_w = normal((D_MODEL, CNN_IN, CNN_KERNEL), std=0.05)
    conv_b = normal((D_MODEL,), std=0.05)
    params["cnn_w"] = (jnp.transpose(conv_w, (2, 1, 0)) * bn_scale).astype(jnp.bfloat16)
    params["cnn_b"] = (conv_b * bn_scale).reshape(1, -1)

    blocks = []
    for _ in range(num_layers):
        p = {}
        # LayerNorm params packed as (5, D): [ff1, att, conv, ff2, final]
        p["ln_g"], p["ln_b"] = ones((5, D_MODEL)), zeros((5, D_MODEL))

        # nn.Linear submodules get N(0,1) weights / zero bias (CNN_Conformer.init_weights)
        p["ff1_w1"] = normal((D_MODEL, D_MODEL * FF_EXPANSION)).astype(jnp.bfloat16)
        p["ff1_b1"] = zeros((1, D_MODEL * FF_EXPANSION))
        p["ff1_w2"] = normal((D_MODEL * FF_EXPANSION, D_MODEL)).astype(jnp.bfloat16)
        p["ff1_b2"] = zeros((1, D_MODEL))

        wq = normal((D_MODEL, D_MODEL))
        wk = normal((D_MODEL, D_MODEL))
        wv = normal((D_MODEL, D_MODEL))
        p["wqkv"] = jnp.concatenate([wq, wk, wv], axis=1).astype(jnp.bfloat16)
        p["bqkv"] = zeros((1, 3 * D_MODEL))
        p["wp"] = normal((D_MODEL, D_MODEL)).astype(jnp.bfloat16)    # pos_proj (no bias)
        p["uv"] = normal((2 * NUM_HEADS, D_HEAD), std=0.1)           # rows 0..H-1: u, H..2H-1: v
        p["wo"] = normal((D_MODEL, D_MODEL)).astype(jnp.bfloat16)
        p["bo"] = zeros((1, D_MODEL))

        p["pw1_w"] = normal((D_MODEL, D_MODEL * CONV_EXPANSION), std=0.05).astype(jnp.bfloat16)
        p["pw1_b"] = normal((1, D_MODEL * CONV_EXPANSION), std=0.05)
        p["dw_w"] = normal((CONV_KERNEL, D_MODEL), std=0.05)          # depthwise (no bias)
        p["bn_scale"] = jnp.full((1, D_MODEL), bn_scale, jnp.float32)
        p["bn_shift"] = zeros((1, D_MODEL))
        p["pw2_w"] = normal((D_MODEL, D_MODEL), std=0.05).astype(jnp.bfloat16)
        p["pw2_b"] = normal((1, D_MODEL), std=0.05)

        p["ff2_w1"] = normal((D_MODEL, D_MODEL * FF_EXPANSION)).astype(jnp.bfloat16)
        p["ff2_b1"] = zeros((1, D_MODEL * FF_EXPANSION))
        p["ff2_w2"] = normal((D_MODEL * FF_EXPANSION, D_MODEL)).astype(jnp.bfloat16)
        p["ff2_b2"] = zeros((1, D_MODEL))
        blocks.append(p)
    params["blocks"] = blocks

    params["weighted_layers"] = normal((1, num_layers))      # torch.randn(1, num_layers)
    params["cls_w"] = normal((D_MODEL, NUM_CLASSES)).astype(jnp.bfloat16)
    params["cls_b"] = zeros((NUM_CLASSES,))
    return params


# --------------------------------- main ---------------------------------

if __name__ == "__main__":
    key = jax.random.PRNGKey(0)
    num_layers = 8                                 # module default
    params = init_params(jax.random.fold_in(key, 1), num_layers=num_layers)

    batch, time_steps = 2, 16                      # -> seq len 8 after the CNN maxpool
    inputs = jax.random.normal(jax.random.fold_in(key, 2),
                               (batch, CNN_IN, time_steps), jnp.float32)
    lengths = jnp.full((batch,), time_steps, jnp.int32)   # unused, kept for API parity

    fwd = jax.jit(cnn_conformer_forward)
    out = jax.block_until_ready(fwd(params, inputs, lengths))

    assert out.shape == (batch, NUM_CLASSES), out.shape
    assert bool(jnp.all(jnp.isfinite(out)))
    print("KERNEL_OK")
</pallas_src>

<mosaic_0001>
module attributes {stable_mosaic.version = 11 : i64} {
  func.func @_cnn_frontend_kernel(%arg0: i32, %arg1: memref<1x9x39xf32, #tpu.memory_space<vmem>>, %arg2: memref<1x8x39xf32, #tpu.memory_space<vmem>>, %arg3: memref<3x39x128xbf16, #tpu.memory_space<vmem>>, %arg4: memref<1x128xf32, #tpu.memory_space<vmem>>, %arg5: memref<1x8x128xf32, #tpu.memory_space<vmem>>) attributes {dimension_semantics = [#tpu.dimension_semantics<parallel>], iteration_bounds = array<i64: 2>, scalar_prefetch = 0 : i64, scratch_operands = 0 : i64, tpu.core_type = #tpu.core_type<tc>, window_params = [{transform_indices = @transform_0, window_bounds = array<i64: 1, 9, 39>}, {transform_indices = @transform_1, window_bounds = array<i64: 1, 8, 39>}, {pipeline_mode = #tpu.pipeline_mode<synchronous>, transform_indices = @transform_2, window_bounds = array<i64: 3, 39, 128>}, {pipeline_mode = #tpu.pipeline_mode<synchronous>, transform_indices = @transform_3, window_bounds = array<i64: 1, 128>}, {transform_indices = @transform_4, window_bounds = array<i64: 1, 8, 128>}]} {
    %c0 = arith.constant 0 : index
    %c0_0 = arith.constant 0 : index
    %c0_1 = arith.constant 0 : index
    %0 = vector.load %arg1[%c0, %c0_0, %c0_1] : memref<1x9x39xf32, #tpu.memory_space<vmem>>, vector<1x9x39xf32>
    %1 = vector.shape_cast %0 : vector<1x9x39xf32> to vector<9x39xf32>
    %c0_2 = arith.constant 0 : index
    %c0_3 = arith.constant 0 : index
    %c0_4 = arith.constant 0 : index
    %2 = vector.load %arg2[%c0_2, %c0_3, %c0_4] : memref<1x8x39xf32, #tpu.memory_space<vmem>>, vector<1x8x39xf32>
    %3 = vector.shape_cast %2 : vector<1x8x39xf32> to vector<8x39xf32>
    %4 = vector.extract_strided_slice %1 {offsets = [0, 0], sizes = [8, 39], strides = [1, 1]} : vector<9x39xf32> to vector<8x39xf32>
    %5 = vector.extract_strided_slice %1 {offsets = [1, 0], sizes = [8, 39], strides = [1, 1]} : vector<9x39xf32> to vector<8x39xf32>
    %cst = arith.constant 0.000000e+00 : f32
    %6 = vector.broadcast %cst : f32 to vector<1x39xf32>
    %7 = vector.extract_strided_slice %3 {offsets = [0, 0], sizes = [7, 39], strides = [1, 1]} : vector<8x39xf32> to vector<7x39xf32>
    %8 = tpu.concatenate %6, %7 in 0 : vector<1x39xf32>, vector<7x39xf32> -> vector<8x39xf32>
    %c0_5 = arith.constant 0 : index
    %c0_6 = arith.constant 0 : index
    %9 = vector.load %arg4[%c0_5, %c0_6] : memref<1x128xf32, #tpu.memory_space<vmem>>, vector<1x128xf32>
    %10 = arith.truncf %8 : vector<8x39xf32> to vector<8x39xbf16>
    %c0_7 = arith.constant 0 : index
    %c0_8 = arith.constant 0 : index
    %c0_9 = arith.constant 0 : index
    %11 = vector.load %arg3[%c0_7, %c0_8, %c0_9] : memref<3x39x128xbf16, #tpu.memory_space<vmem>>, vector<1x39x128xbf16>
    %12 = vector.shape_cast %11 : vector<1x39x128xbf16> to vector<39x128xbf16>
    %cst_10 = arith.constant dense<0.000000e+00> : vector<8x128xf32>
    %13 = tpu.matmul %10, %12, %cst_10 {dimension_numbers = #tpu.dot_dimension_numbers<[1], [0], [0], [1], [0, 0, 1, 1], [], []>} : vector<8x39xbf16>, vector<39x128xbf16>, vector<8x128xf32> -> vector<8x128xf32>
    %14 = arith.truncf %4 : vector<8x39xf32> to vector<8x39xbf16>
    %c1 = arith.constant 1 : index
    %c0_11 = arith.constant 0 : index
    %c0_12 = arith.constant 0 : index
    %15 = vector.load %arg3[%c1, %c0_11, %c0_12] : memref<3x39x128xbf16, #tpu.memory_space<vmem>>, vector<1x39x128xbf16>
    %16 = vector.shape_cast %15 : vector<1x39x128xbf16> to vector<39x128xbf16>
    %cst_13 = arith.constant dense<0.000000e+00> : vector<8x128xf32>
    %17 = tpu.matmul %14, %16, %cst_13 {dimension_numbers = #tpu.dot_dimension_numbers<[1], [0], [0], [1], [0, 0, 1, 1], [], []>} : vector<8x39xbf16>, vector<39x128xbf16>, vector<8x128xf32> -> vector<8x128xf32>
    %18 = arith.addf %13, %17 : vector<8x128xf32>
    %19 = arith.truncf %3 : vector<8x39xf32> to vector<8x39xbf16>
    %c2 = arith.constant 2 : index
    %c0_14 = arith.constant 0 : index
    %c0_15 = arith.constant 0 : index
    %20 = vector.load %arg3[%c2, %c0_14, %c0_15] : memref<3x39x128xbf16, #tpu.memory_space<vmem>>, vector<1x39x128xbf16>
    %21 = vector.shape_cast %20 : vector<1x39x128xbf16> to vector<39x128xbf16>
    %cst_16 = arith.constant dense<0.000000e+00> : vector<8x128xf32>
    %22 = tpu.matmul %19, %21, %cst_16 {dimension_numbers = #tpu.dot_dimension_numbers<[1], [0], [0], [1], [0, 0, 1, 1], [], []>} : vector<8x39xbf16>, vector<39x128xbf16>, vector<8x128xf32> -> vector<8x128xf32>
    %23 = arith.addf %18, %22 : vector<8x128xf32>
    %24 = vector.broadcast %9 : vector<1x128xf32> to vector<8x128xf32>
    %25 = arith.addf %23, %24 : vector<8x128xf32>
    %26 = arith.truncf %4 : vector<8x39xf32> to vector<8x39xbf16>
    %c0_17 = arith.constant 0 : index
    %c0_18 = arith.constant 0 : index
    %c0_19 = arith.constant 0 : index
    %27 = vector.load %arg3[%c0_17, %c0_18, %c0_19] : memref<3x39x128xbf16, #tpu.memory_space<vmem>>, vector<1x39x128xbf16>
    %28 = vector.shape_cast %27 : vector<1x39x128xbf16> to vector<39x128xbf16>
    %cst_20 = arith.constant dense<0.000000e+00> : vector<8x128xf32>
    %29 = tpu.matmul %26, %28, %cst_20 {dimension_numbers = #tpu.dot_dimension_numbers<[1], [0], [0], [1], [0, 0, 1, 1], [], []>} : vector<8x39xbf16>, vector<39x128xbf16>, vector<8x128xf32> -> vector<8x128xf32>
    %30 = arith.truncf %3 : vector<8x39xf32> to vector<8x39xbf16>
    %c1_21 = arith.constant 1 : index
    %c0_22 = arith.constant 0 : index
    %c0_23 = arith.constant 0 : index
    %31 = vector.load %arg3[%c1_21, %c0_22, %c0_23] : memref<3x39x128xbf16, #tpu.memory_space<vmem>>, vector<1x39x128xbf16>
    %32 = vector.shape_cast %31 : vector<1x39x128xbf16> to vector<39x128xbf16>
    %cst_24 = arith.constant dense<0.000000e+00> : vector<8x128xf32>
    %33 = tpu.matmul %30, %32, %cst_24 {dimension_numbers = #tpu.dot_dimension_numbers<[1], [0], [0], [1], [0, 0, 1, 1], [], []>} : vector<8x39xbf16>, vector<39x128xbf16>, vector<8x128xf32> -> vector<8x128xf32>
    %34 = arith.addf %29, %33 : vector<8x128xf32>
    %35 = arith.truncf %5 : vector<8x39xf32> to vector<8x39xbf16>
    %c2_25 = arith.constant 2 : index
    %c0_26 = arith.constant 0 : index
    %c0_27 = arith.constant 0 : index
    %36 = vector.load %arg3[%c2_25, %c0_26, %c0_27] : memref<3x39x128xbf16, #tpu.memory_space<vmem>>, vector<1x39x128xbf16>
    %37 = vector.shape_cast %36 : vector<1x39x128xbf16> to vector<39x128xbf16>
    %cst_28 = arith.constant dense<0.000000e+00> : vector<8x128xf32>
    %38 = tpu.matmul %35, %37, %cst_28 {dimension_numbers = #tpu.dot_dimension_numbers<[1], [0], [0], [1], [0, 0, 1, 1], [], []>} : vector<8x39xbf16>, vector<39x128xbf16>, vector<8x128xf32> -> vector<8x128xf32>
    %39 = arith.addf %34, %38 : vector<8x128xf32>
    %40 = vector.broadcast %9 : vector<1x128xf32> to vector<8x128xf32>
    %41 = arith.addf %39, %40 : vector<8x128xf32>
    %cst_29 = arith.constant 0.000000e+00 : f32
    %42 = vector.broadcast %cst_29 : f32 to vector<8x128xf32>
    %43 = arith.maximumf %25, %42 : vector<8x128xf32>
    %cst_30 = arith.constant 0.000000e+00 : f32
    %44 = vector.broadcast %cst_30 : f32 to vector<8x128xf32>
    %45 = arith.maximumf %41, %44 : vector<8x128xf32>
    %46 = arith.maximumf %43, %45 : vector<8x128xf32>
    %c0_31 = arith.constant 0 : index
    %c0_32 = arith.constant 0 : index
    %c0_33 = arith.constant 0 : index
    %47 = vector.load %arg5[%c0_31, %c0_32, %c0_33] : memref<1x8x128xf32, #tpu.memory_space<vmem>>, vector<1x8x128xf32>
    %48 = vector.shape_cast %47 : vector<1x8x128xf32> to vector<8x128xf32>
    %49 = vector.shape_cast %46 : vector<8x128xf32> to vector<1x8x128xf32>
    tpu.vector_store %arg5[%c0_31, %c0_32, %c0_33], %49 {strides = array<i32>} : memref<1x8x128xf32, #tpu.memory_space<vmem>>, vector<1x8x128xf32>,
    return
  }
  func.func @transform_0(%arg0: i32) -> (i32, i32, i32) {
    %c0_i32 = arith.constant 0 : i32
    %c0_i32_0 = arith.constant 0 : i32
    %c0_i32_1 = arith.constant 0 : i32
    return %arg0, %c0_i32, %c0_i32_0 : i32, i32, i32
  }
  func.func @transform_1(%arg0: i32) -> (i32, i32, i32) {
    %c0_i32 = arith.constant 0 : i32
    %c0_i32_0 = arith.constant 0 : i32
    %c0_i32_1 = arith.constant 0 : i32
    return %arg0, %c0_i32, %c0_i32_0 : i32, i32, i32
  }
  func.func @transform_2(%arg0: i32) -> (i32, i32, i32) {
    %c0_i32 = arith.constant 0 : i32
    %c0_i32_0 = arith.constant 0 : i32
    %c0_i32_1 = arith.constant 0 : i32
    %c0_i32_2 = arith.constant 0 : i32
    return %c0_i32, %c0_i32_0, %c0_i32_1 : i32, i32, i32
  }
  func.func @transform_3(%arg0: i32) -> (i32, i32) {
    %c0_i32 = arith.constant 0 : i32
    %c0_i32_0 = arith.constant 0 : i32
    %c0_i32_1 = arith.constant 0 : i32
    return %c0_i32, %c0_i32_0 : i32, i32
  }
  func.func @transform_4(%arg0: i32) -> (i32, i32, i32) {
    %c0_i32 = arith.constant 0 : i32
    %c0_i32_0 = arith.constant 0 : i32
    %c0_i32_1 = arith.constant 0 : i32
    return %arg0, %c0_i32, %c0_i32_0 : i32, i32, i32
  }
}

module attributes {stable_mosaic.version = 11 : i64} {
  func.func @_conformer_block_kernel(%arg0: i32, %arg1: memref<1x8x128xf32, #tpu.memory_space<vmem>>, %arg2: memref<8x128xf32, #tpu.memory_space<vmem>>, %arg3: memref<5x128xf32, #tpu.memory_space<vmem>>, %arg4: memref<5x128xf32, #tpu.memory_space<vmem>>, %arg5: memref<128x256xbf16, #tpu.memory_space<vmem>>, %arg6: memref<1x256xf32, #tpu.memory_space<vmem>>, %arg7: memref<256x128xbf16, #tpu.memory_space<vmem>>, %arg8: memref<1x128xf32, #tpu.memory_space<vmem>>, %arg9: memref<128x384xbf16, #tpu.memory_space<vmem>>, %arg10: memref<1x384xf32, #tpu.memory_space<vmem>>, %arg11: memref<128x128xbf16, #tpu.memory_space<vmem>>, %arg12: memref<8x32xf32, #tpu.memory_space<vmem>>, %arg13: memref<128x128xbf16, #tpu.memory_space<vmem>>, %arg14: memref<1x128xf32, #tpu.memory_space<vmem>>, %arg15: memref<128x256xbf16, #tpu.memory_space<vmem>>, %arg16: memref<1x256xf32, #tpu.memory_space<vmem>>, %arg17: memref<15x128xf32, #tpu.memory_space<vmem>>, %arg18: memref<1x128xf32, #tpu.memory_space<vmem>>, %arg19: memref<1x128xf32, #tpu.memory_space<vmem>>, %arg20: memref<128x128xbf16, #tpu.memory_space<vmem>>, %arg21: memref<1x128xf32, #tpu.memory_space<vmem>>, %arg22: memref<128x256xbf16, #tpu.memory_space<vmem>>, %arg23: memref<1x256xf32, #tpu.memory_space<vmem>>, %arg24: memref<256x128xbf16, #tpu.memory_space<vmem>>, %arg25: memref<1x128xf32, #tpu.memory_space<vmem>>, %arg26: memref<1x8x128xf32, #tpu.memory_space<vmem>>, %arg27: memref<1x1x128xf32, #tpu.memory_space<vmem>>) attributes {dimension_semantics = [#tpu.dimension_semantics<parallel>], iteration_bounds = array<i64: 2>, scalar_prefetch = 0 : i64, scratch_operands = 0 : i64, tpu.core_type = #tpu.core_type<tc>, window_params = [{transform_indices = @transform_0, window_bounds = array<i64: 1, 8, 128>}, {pipeline_mode = #tpu.pipeline_mode<synchronous>, transform_indices = @transform_1, window_bounds = array<i64: 8, 128>}, {pipeline_mode = #tpu.pipeline_mode<synchronous>, transform_indices = @transform_2, window_bounds = array<i64: 5, 128>}, {pipeline_mode = #tpu.pipeline_mode<synchronous>, transform_indices = @transform_3, window_bounds = array<i64: 5, 128>}, {pipeline_mode = #tpu.pipeline_mode<synchronous>, transform_indices = @transform_4, window_bounds = array<i64: 128, 256>}, {pipeline_mode = #tpu.pipeline_mode<synchronous>, transform_indices = @transform_5, window_bounds = array<i64: 1, 256>}, {pipeline_mode = #tpu.pipeline_mode<synchronous>, transform_indices = @transform_6, window_bounds = array<i64: 256, 128>}, {pipeline_mode = #tpu.pipeline_mode<synchronous>, transform_indices = @transform_7, window_bounds = array<i64: 1, 128>}, {pipeline_mode = #tpu.pipeline_mode<synchronous>, transform_indices = @transform_8, window_bounds = array<i64: 128, 384>}, {pipeline_mode = #tpu.pipeline_mode<synchronous>, transform_indices = @transform_9, window_bounds = array<i64: 1, 384>}, {pipeline_mode = #tpu.pipeline_mode<synchronous>, transform_indices = @transform_10, window_bounds = array<i64: 128, 128>}, {pipeline_mode = #tpu.pipeline_mode<synchronous>, transform_indices = @transform_11, window_bounds = array<i64: 8, 32>}, {pipeline_mode = #tpu.pipeline_mode<synchronous>, transform_indices = @transform_12, window_bounds = array<i64: 128, 128>}, {pipeline_mode = #tpu.pipeline_mode<synchronous>, transform_indices = @transform_13, window_bounds = array<i64: 1, 128>}, {pipeline_mode = #tpu.pipeline_mode<synchronous>, transform_indices = @transform_14, window_bounds = array<i64: 128, 256>}, {pipeline_mode = #tpu.pipeline_mode<synchronous>, transform_indices = @transform_15, window_bounds = array<i64: 1, 256>}, {pipeline_mode = #tpu.pipeline_mode<synchronous>, transform_indices = @transform_16, window_bounds = array<i64: 15, 128>}, {pipeline_mode = #tpu.pipeline_mode<synchronous>, transform_indices = @transform_17, window_bounds = array<i64: 1, 128>}, {pipeline_mode = #tpu.pipeline_mode<synchronous>, transform_indices = @transform_18, window_bounds = array<i64: 1, 128>}, {pipeline_mode = #tpu.pipeline_mode<synchronous>, transform_indices = @transform_19, window_bounds = array<i64: 128, 128>}, {pipeline_mode = #tpu.pipeline_mode<synchronous>, transform_indices = @transform_20, window_bounds = array<i64: 1, 128>}, {pipeline_mode = #tpu.pipeline_mode<synchronous>, transform_indices = @transform_21, window_bounds = array<i64: 128, 256>}, {pipeline_mode = #tpu.pipeline_mode<synchronous>, transform_indices = @transform_22, window_bounds = array<i64: 1, 256>}, {pipeline_mode = #tpu.pipeline_mode<synchronous>, transform_indices = @transform_23, window_bounds = array<i64: 256, 128>}, {pipeline_mode = #tpu.pipeline_mode<synchronous>, transform_indices = @transform_24, window_bounds = array<i64: 1, 128>}, {transform_indices = @transform_25, window_bounds = array<i64: 1, 8, 128>}, {transform_indices = @transform_26, window_bounds = array<i64: 1, 1, 128>}]} {
    %c0 = arith.constant 0 : index
    %c0_0 = arith.constant 0 : index
    %c0_1 = arith.constant 0 : index
    %0 = vector.load %arg1[%c0, %c0_0, %c0_1] : memref<1x8x128xf32, #tpu.memory_space<vmem>>, vector<1x8x128xf32>
    %1 = vector.shape_cast %0 : vector<1x8x128xf32> to vector<8x128xf32>
    %c0_2 = arith.constant 0 : index
    %c0_3 = arith.constant 0 : index
    %2 = vector.load %arg3[%c0_2, %c0_3] : memref<5x128xf32, #tpu.memory_space<vmem>>, vector<1x128xf32>
    %3 = vector.shape_cast %2 : vector<1x128xf32> to vector<128xf32>
    %c0_4 = arith.constant 0 : index
    %c0_5 = arith.constant 0 : index
    %4 = vector.load %arg4[%c0_4, %c0_5] : memref<5x128xf32, #tpu.memory_space<vmem>>, vector<1x128xf32>
    %5 = vector.shape_cast %4 : vector<1x128xf32> to vector<128xf32>
    %cst = arith.constant dense<0.000000e+00> : vector<8xf32>
    %6 = vector.multi_reduction <add>, %1, %cst [1] : vector<8x128xf32> to vector<8xf32>
    %7 = vector.shape_cast %6 : vector<8xf32> to vector<8x1xf32>
    %cst_6 = arith.constant 1.280000e+02 : f32
    %8 = vector.broadcast %cst_6 : f32 to vector<8x1xf32>
    %9 = arith.divf %7, %8 : vector<8x1xf32>
    %10 = vector.broadcast %9 : vector<8x1xf32> to vector<8x128xf32>
    %11 = arith.subf %1, %10 : vector<8x128xf32>
    %12 = arith.mulf %11, %11 : vector<8x128xf32>
    %cst_7 = arith.constant dense<0.000000e+00> : vector<8xf32>
    %13 = vector.multi_reduction <add>, %12, %cst_7 [1] : vector<8x128xf32> to vector<8xf32>
    %14 = vector.shape_cast %13 : vector<8xf32> to vector<8x1xf32>
    %cst_8 = arith.constant 1.280000e+02 : f32
    %15 = vector.broadcast %cst_8 : f32 to vector<8x1xf32>
    %16 = arith.divf %14, %15 : vector<8x1xf32>
    %17 = vector.broadcast %9 : vector<8x1xf32> to vector<8x128xf32>
    %18 = arith.subf %1, %17 : vector<8x128xf32>
    %cst_9 = arith.constant 9.99999974E-6 : f32
    %19 = vector.broadcast %cst_9 : f32 to vector<8x1xf32>
    %20 = arith.addf %16, %19 : vector<8x1xf32>
    %21 = math.rsqrt %20 : vector<8x1xf32>
    %22 = vector.broadcast %21 : vector<8x1xf32> to vector<8x128xf32>
    %23 = arith.mulf %18, %22 : vector<8x128xf32>
    %24 = vector.shape_cast %3 : vector<128xf32> to vector<1x128xf32>
    %25 = vector.broadcast %24 : vector<1x128xf32> to vector<8x128xf32>
    %26 = arith.mulf %23, %25 : vector<8x128xf32>
    %27 = vector.shape_cast %5 : vector<128xf32> to vector<1x128xf32>
    %28 = vector.broadcast %27 : vector<1x128xf32> to vector<8x128xf32>
    %29 = arith.addf %26, %28 : vector<8x128xf32>
    %30 = arith.truncf %29 : vector<8x128xf32> to vector<8x128xbf16>
    %c0_10 = arith.constant 0 : index
    %c0_11 = arith.constant 0 : index
    %31 = vector.load %arg5[%c0_10, %c0_11] : memref<128x256xbf16, #tpu.memory_space<vmem>>, vector<128x256xbf16>
    %cst_12 = arith.constant dense<0.000000e+00> : vector<8x256xf32>
    %32 = tpu.matmul %30, %31, %cst_12 {dimension_numbers = #tpu.dot_dimension_numbers<[1], [0], [0], [1], [0, 0, 1, 1], [], []>} : vector<8x128xbf16>, vector<128x256xbf16>, vector<8x256xf32> -> vector<8x256xf32>
    %c0_13 = arith.constant 0 : index
    %c0_14 = arith.constant 0 : index
    %33 = vector.load %arg6[%c0_13, %c0_14] : memref<1x256xf32, #tpu.memory_space<vmem>>, vector<1x256xf32>
    %34 = vector.broadcast %33 : vector<1x256xf32> to vector<8x256xf32>
    %35 = arith.addf %32, %34 : vector<8x256xf32>
    %36 = arith.negf %35 : vector<8x256xf32>
    %37 = math.exp %36 : vector<8x256xf32>
    %cst_15 = arith.constant 1.000000e+00 : f32
    %38 = vector.broadcast %cst_15 : f32 to vector<8x256xf32>
    %39 = arith.addf %38, %37 : vector<8x256xf32>
    %40 = arith.divf %38, %39 : vector<8x256xf32>
    %41 = arith.mulf %35, %40 : vector<8x256xf32>
    %42 = arith.truncf %41 : vector<8x256xf32> to vector<8x256xbf16>
    %c0_16 = arith.constant 0 : index
    %c0_17 = arith.constant 0 : index
    %43 = vector.load %arg7[%c0_16, %c0_17] : memref<256x128xbf16, #tpu.memory_space<vmem>>, vector<256x128xbf16>
    %cst_18 = arith.constant dense<0.000000e+00> : vector<8x128xf32>
    %44 = tpu.matmul %42, %43, %cst_18 {dimension_numbers = #tpu.dot_dimension_numbers<[1], [0], [0], [1], [0, 0, 1, 1], [], []>} : vector<8x256xbf16>, vector<256x128xbf16>, vector<8x128xf32> -> vector<8x128xf32>
    %c0_19 = arith.constant 0 : index
    %c0_20 = arith.constant 0 : index
    %45 = vector.load %arg8[%c0_19, %c0_20] : memref<1x128xf32, #tpu.memory_space<vmem>>, vector<1x128xf32>
    %46 = vector.broadcast %45 : vector<1x128xf32> to vector<8x128xf32>
    %47 = arith.addf %44, %46 : vector<8x128xf32>
    %cst_21 = arith.constant 5.000000e-01 : f32
    %48 = vector.broadcast %cst_21 : f32 to vector<8x128xf32>
    %49 = arith.mulf %48, %47 : vector<8x128xf32>
    %50 = arith.addf %1, %49 : vector<8x128xf32>
    %c1 = arith.constant 1 : index
    %c0_22 = arith.constant 0 : index
    %51 = vector.load %arg3[%c1, %c0_22] : memref<5x128xf32, #tpu.memory_space<vmem>>, vector<1x128xf32>
    %52 = vector.shape_cast %51 : vector<1x128xf32> to vector<128xf32>
    %c1_23 = arith.constant 1 : index
    %c0_24 = arith.constant 0 : index
    %53 = vector.load %arg4[%c1_23, %c0_24] : memref<5x128xf32, #tpu.memory_space<vmem>>, vector<1x128xf32>
    %54 = vector.shape_cast %53 : vector<1x128xf32> to vector<128xf32>
    %cst_25 = arith.constant dense<0.000000e+00> : vector<8xf32>
    %55 = vector.multi_reduction <add>, %50, %cst_25 [1] : vector<8x128xf32> to vector<8xf32>
    %56 = vector.shape_cast %55 : vector<8xf32> to vector<8x1xf32>
    %cst_26 = arith.constant 1.280000e+02 : f32
    %57 = vector.broadcast %cst_26 : f32 to vector<8x1xf32>
    %58 = arith.divf %56, %57 : vector<8x1xf32>
    %59 = vector.broadcast %58 : vector<8x1xf32> to vector<8x128xf32>
    %60 = arith.subf %50, %59 : vector<8x128xf32>
    %61 = arith.mulf %60, %60 : vector<8x128xf32>
    %cst_27 = arith.constant dense<0.000000e+00> : vector<8xf32>
    %62 = vector.multi_reduction <add>, %61, %cst_27 [1] : vector<8x128xf32> to vector<8xf32>
    %63 = vector.shape_cast %62 : vector<8xf32> to vector<8x1xf32>
    %cst_28 = arith.constant 1.280000e+02 : f32
    %64 = vector.broadcast %cst_28 : f32 to vector<8x1xf32>
    %65 = arith.divf %63, %64 : vector<8x1xf32>
    %66 = vector.broadcast %58 : vector<8x1xf32> to vector<8x128xf32>
    %67 = arith.subf %50, %66 : vector<8x128xf32>
    %cst_29 = arith.constant 9.99999974E-6 : f32
    %68 = vector.broadcast %cst_29 : f32 to vector<8x1xf32>
    %69 = arith.addf %65, %68 : vector<8x1xf32>
    %70 = math.rsqrt %69 : vector<8x1xf32>
    %71 = vector.broadcast %70 : vector<8x1xf32> to vector<8x128xf32>
    %72 = arith.mulf %67, %71 : vector<8x128xf32>
    %73 = vector.shape_cast %52 : vector<128xf32> to vector<1x128xf32>
    %74 = vector.broadcast %73 : vector<1x128xf32> to vector<8x128xf32>
    %75 = arith.mulf %72, %74 : vector<8x128xf32>
    %76 = vector.shape_cast %54 : vector<128xf32> to vector<1x128xf32>
    %77 = vector.broadcast %76 : vector<1x128xf32> to vector<8x128xf32>
    %78 = arith.addf %75, %77 : vector<8x128xf32>
    %79 = arith.truncf %78 : vector<8x128xf32> to vector<8x128xbf16>
    %c0_30 = arith.constant 0 : index
    %c0_31 = arith.constant 0 : index
    %80 = vector.load %arg9[%c0_30, %c0_31] : memref<128x384xbf16, #tpu.memory_space<vmem>>, vector<128x384xbf16>
    %cst_32 = arith.constant dense<0.000000e+00> : vector<8x384xf32>
    %81 = tpu.matmul %79, %80, %cst_32 {dimension_numbers = #tpu.dot_dimension_numbers<[1], [0], [0], [1], [0, 0, 1, 1], [], []>} : vector<8x128xbf16>, vector<128x384xbf16>, vector<8x384xf32> -> vector<8x384xf32>
    %c0_33 = arith.constant 0 : index
    %c0_34 = arith.constant 0 : index
    %82 = vector.load %arg10[%c0_33, %c0_34] : memref<1x384xf32, #tpu.memory_space<vmem>>, vector<1x384xf32>
    %83 = vector.broadcast %82 : vector<1x384xf32> to vector<8x384xf32>
    %84 = arith.addf %81, %83 : vector<8x384xf32>
    %c0_35 = arith.constant 0 : index
    %c0_36 = arith.constant 0 : index
    %85 = vector.load %arg2[%c0_35, %c0_36] : memref<8x128xf32, #tpu.memory_space<vmem>>, vector<8x128xf32>
    %86 = arith.truncf %85 : vector<8x128xf32> to vector<8x128xbf16>
    %c0_37 = arith.constant 0 : index
    %c0_38 = arith.constant 0 : index
    %87 = vector.load %arg11[%c0_37, %c0_38] : memref<128x128xbf16, #tpu.memory_space<vmem>>, vector<128x128xbf16>
    %cst_39 = arith.constant dense<0.000000e+00> : vector<8x128xf32>
    %88 = tpu.matmul %86, %87, %cst_39 {dimension_numbers = #tpu.dot_dimension_numbers<[1], [0], [0], [1], [0, 0, 1, 1], [], []>} : vector<8x128xbf16>, vector<128x128xbf16>, vector<8x128xf32> -> vector<8x128xf32>
    %89 = tpu.iota {dimensions = array<i32: 0>} : vector<8x8xi32>
    %90 = tpu.iota {dimensions = array<i32: 1>} : vector<8x8xi32>
    %c7_i32 = arith.constant 7 : i32
    %91 = vector.broadcast %c7_i32 : i32 to vector<8x8xi32>
    %92 = arith.cmpi eq, %89, %91 : vector<8x8xi32>
    %c1_i32 = arith.constant 1 : i32
    %93 = vector.broadcast %c1_i32 : i32 to vector<8x8xi32>
    %94 = arith.addi %89, %93 : vector<8x8xi32>
    %c0_i32 = arith.constant 0 : i32
    %95 = vector.broadcast %c0_i32 : i32 to vector<8x8xi32>
    %96 = arith.select %92, %95, %94 : vector<8x8xi1>, vector<8x8xi32>
    %c0_i32_40 = arith.constant 0 : i32
    %97 = vector.broadcast %c0_i32_40 : i32 to vector<8x8xi32>
    %98 = arith.shrsi %96, %97 : vector<8x8xi32>
    %c1_i32_41 = arith.constant 1 : i32
    %99 = vector.broadcast %c1_i32_41 : i32 to vector<8x8xi32>
    %100 = arith.andi %98, %99 : vector<8x8xi32>
    %c1_i32_42 = arith.constant 1 : i32
    %101 = vector.broadcast %c1_i32_42 : i32 to vector<8x8xi32>
    %102 = arith.cmpi eq, %100, %101 : vector<8x8xi32>
    %c1_i32_43 = arith.constant 1 : i32
    %103 = vector.broadcast %c1_i32_43 : i32 to vector<8x8xi32>
    %104 = arith.shrsi %96, %103 : vector<8x8xi32>
    %c1_i32_44 = arith.constant 1 : i32
    %105 = vector.broadcast %c1_i32_44 : i32 to vector<8x8xi32>
    %106 = arith.andi %104, %105 : vector<8x8xi32>
    %c1_i32_45 = arith.constant 1 : i32
    %107 = vector.broadcast %c1_i32_45 : i32 to vector<8x8xi32>
    %108 = arith.cmpi eq, %106, %107 : vector<8x8xi32>
    %c2_i32 = arith.constant 2 : i32
    %109 = vector.broadcast %c2_i32 : i32 to vector<8x8xi32>
    %110 = arith.shrsi %96, %109 : vector<8x8xi32>
    %c1_i32_46 = arith.constant 1 : i32
    %111 = vector.broadcast %c1_i32_46 : i32 to vector<8x8xi32>
    %112 = arith.andi %110, %111 : vector<8x8xi32>
    %c1_i32_47 = arith.constant 1 : i32
    %113 = vector.broadcast %c1_i32_47 : i32 to vector<8x8xi32>
    %114 = arith.cmpi eq, %112, %113 : vector<8x8xi32>
    %115 = vector.extract_strided_slice %84 {offsets = [0, 0], sizes = [8, 32], strides = [1, 1]} : vector<8x384xf32> to vector<8x32xf32>
    %116 = vector.extract_strided_slice %84 {offsets = [0, 128], sizes = [8, 32], strides = [1, 1]} : vector<8x384xf32> to vector<8x32xf32>
    %117 = vector.extract_strided_slice %84 {offsets = [0, 256], sizes = [8, 32], strides = [1, 1]} : vector<8x384xf32> to vector<8x32xf32>
    %118 = vector.extract_strided_slice %88 {offsets = [0, 0], sizes = [8, 32], strides = [1, 1]} : vector<8x128xf32> to vector<8x32xf32>
    %c0_48 = arith.constant 0 : index
    %c0_49 = arith.constant 0 : index
    %119 = vector.load %arg12[%c0_48, %c0_49] : memref<8x32xf32, #tpu.memory_space<vmem>>, vector<1x32xf32>
    %120 = vector.shape_cast %119 : vector<1x32xf32> to vector<32xf32>
    %c4 = arith.constant 4 : index
    %c0_50 = arith.constant 0 : index
    %121 = vector.load %arg12[%c4, %c0_50] : memref<8x32xf32, #tpu.memory_space<vmem>>, vector<1x32xf32>
    %122 = vector.shape_cast %121 : vector<1x32xf32> to vector<32xf32>
    %123 = vector.shape_cast %120 : vector<32xf32> to vector<1x32xf32>
    %124 = vector.broadcast %123 : vector<1x32xf32> to vector<8x32xf32>
    %125 = arith.addf %115, %124 : vector<8x32xf32>
    %126 = arith.truncf %125 : vector<8x32xf32> to vector<8x32xbf16>
    %127 = arith.truncf %116 : vector<8x32xf32> to vector<8x32xbf16>
    %cst_51 = arith.constant dense<0.000000e+00> : vector<8x8xf32>
    %128 = tpu.matmul %126, %127, %cst_51 {dimension_numbers = #tpu.dot_dimension_numbers<[1], [1], [0], [0], [0, 0, 1, 0], [], []>} : vector<8x32xbf16>, vector<8x32xbf16>, vector<8x8xf32> -> vector<8x8xf32>
    %129 = vector.shape_cast %122 : vector<32xf32> to vector<1x32xf32>
    %130 = vector.broadcast %129 : vector<1x32xf32> to vector<8x32xf32>
    %131 = arith.addf %115, %130 : vector<8x32xf32>
    %132 = arith.truncf %131 : vector<8x32xf32> to vector<8x32xbf16>
    %133 = arith.truncf %118 : vector<8x32xf32> to vector<8x32xbf16>
    %cst_52 = arith.constant dense<0.000000e+00> : vector<8x8xf32>
    %134 = tpu.matmul %132, %133, %cst_52 {dimension_numbers = #tpu.dot_dimension_numbers<[1], [1], [0], [0], [0, 0, 1, 0], [], []>} : vector<8x32xbf16>, vector<8x32xbf16>, vector<8x8xf32> -> vector<8x8xf32>
    %135 = vector.extract_strided_slice %134 {offsets = [0, 7], sizes = [8, 1], strides = [1, 1]} : vector<8x8xf32> to vector<8x1xf32>
    %136 = vector.extract_strided_slice %134 {offsets = [0, 0], sizes = [8, 7], strides = [1, 1]} : vector<8x8xf32> to vector<8x7xf32>
    %137 = tpu.concatenate %135, %136 in 1 : vector<8x1xf32>, vector<8x7xf32> -> vector<8x8xf32>
    %138 = arith.select %102, %137, %134 : vector<8x8xi1>, vector<8x8xf32>
    %139 = vector.extract_strided_slice %138 {offsets = [0, 6], sizes = [8, 2], strides = [1, 1]} : vector<8x8xf32> to vector<8x2xf32>
    %140 = vector.extract_strided_slice %138 {offsets = [0, 0], sizes = [8, 6], strides = [1, 1]} : vector<8x8xf32> to vector<8x6xf32>
    %141 = tpu.concatenate %139, %140 in 1 : vector<8x2xf32>, vector<8x6xf32> -> vector<8x8xf32>
    %142 = arith.select %108, %141, %138 : vector<8x8xi1>, vector<8x8xf32>
    %143 = vector.extract_strided_slice %142 {offsets = [0, 4], sizes = [8, 4], strides = [1, 1]} : vector<8x8xf32> to vector<8x4xf32>
    %144 = vector.extract_strided_slice %142 {offsets = [0, 0], sizes = [8, 4], strides = [1, 1]} : vector<8x8xf32> to vector<8x4xf32>
    %145 = tpu.concatenate %143, %144 in 1 : vector<8x4xf32>, vector<8x4xf32> -> vector<8x8xf32>
    %146 = arith.select %114, %145, %142 : vector<8x8xi1>, vector<8x8xf32>
    %147 = vector.extract_strided_slice %146 {offsets = [1, 0], sizes = [7, 8], strides = [1, 1]} : vector<8x8xf32> to vector<7x8xf32>
    %148 = vector.extract_strided_slice %146 {offsets = [0, 0], sizes = [1, 8], strides = [1, 1]} : vector<8x8xf32> to vector<1x8xf32>
    %149 = tpu.concatenate %147, %148 in 0 : vector<7x8xf32>, vector<1x8xf32> -> vector<8x8xf32>
    %150 = arith.cmpi sle, %90, %89 : vector<8x8xi32>
    %c1_i32_53 = arith.constant 1 : i32
    %151 = vector.broadcast %c1_i32_53 : i32 to vector<8x8xi32>
    %152 = arith.addi %89, %151 : vector<8x8xi32>
    %153 = arith.cmpi eq, %90, %152 : vector<8x8xi32>
    %cst_54 = arith.constant 0.000000e+00 : f32
    %154 = vector.broadcast %cst_54 : f32 to vector<8x8xf32>
    %155 = arith.select %153, %154, %149 : vector<8x8xi1>, vector<8x8xf32>
    %156 = arith.select %150, %146, %155 : vector<8x8xi1>, vector<8x8xf32>
    %157 = arith.addf %128, %156 : vector<8x8xf32>
    %cst_55 = arith.constant 0.0883883461 : f32
    %158 = vector.broadcast %cst_55 : f32 to vector<8x8xf32>
    %159 = arith.mulf %157, %158 : vector<8x8xf32>
    %cst_56 = arith.constant dense<0xFF800000> : vector<8xf32>
    %160 = vector.multi_reduction <maximumf>, %159, %cst_56 [1] : vector<8x8xf32> to vector<8xf32>
    %161 = vector.shape_cast %160 : vector<8xf32> to vector<8x1xf32>
    %162 = vector.broadcast %161 : vector<8x1xf32> to vector<8x8xf32>
    %163 = arith.subf %159, %162 : vector<8x8xf32>
    %164 = math.exp %163 : vector<8x8xf32>
    %cst_57 = arith.constant dense<0.000000e+00> : vector<8xf32>
    %165 = vector.multi_reduction <add>, %164, %cst_57 [1] : vector<8x8xf32> to vector<8xf32>
    %166 = vector.shape_cast %165 : vector<8xf32> to vector<8x1xf32>
    %167 = tpu.reciprocal %166 {approx = true} : vector<8x1xf32> -> vector<8x1xf32>
    %168 = vector.broadcast %167 : vector<8x1xf32> to vector<8x8xf32>
    %169 = arith.mulf %164, %168 : vector<8x8xf32>
    %170 = arith.truncf %169 : vector<8x8xf32> to vector<8x8xbf16>
    %171 = arith.truncf %117 : vector<8x32xf32> to vector<8x32xbf16>
    %cst_58 = arith.constant dense<0.000000e+00> : vector<8x32xf32>
    %172 = tpu.matmul %170, %171, %cst_58 {dimension_numbers = #tpu.dot_dimension_numbers<[1], [0], [0], [1], [0, 0, 1, 1], [], []>} : vector<8x8xbf16>, vector<8x32xbf16>, vector<8x32xf32> -> vector<8x32xf32>
    %173 = vector.extract_strided_slice %84 {offsets = [0, 32], sizes = [8, 32], strides = [1, 1]} : vector<8x384xf32> to vector<8x32xf32>
    %174 = vector.extract_strided_slice %84 {offsets = [0, 160], sizes = [8, 32], strides = [1, 1]} : vector<8x384xf32> to vector<8x32xf32>
    %175 = vector.extract_strided_slice %84 {offsets = [0, 288], sizes = [8, 32], strides = [1, 1]} : vector<8x384xf32> to vector<8x32xf32>
    %176 = vector.extract_strided_slice %88 {offsets = [0, 32], sizes = [8, 32], strides = [1, 1]} : vector<8x128xf32> to vector<8x32xf32>
    %c1_59 = arith.constant 1 : index
    %c0_60 = arith.constant 0 : index
    %177 = vector.load %arg12[%c1_59, %c0_60] : memref<8x32xf32, #tpu.memory_space<vmem>>, vector<1x32xf32>
    %178 = vector.shape_cast %177 : vector<1x32xf32> to vector<32xf32>
    %c5 = arith.constant 5 : index
    %c0_61 = arith.constant 0 : index
    %179 = vector.load %arg12[%c5, %c0_61] : memref<8x32xf32, #tpu.memory_space<vmem>>, vector<1x32xf32>
    %180 = vector.shape_cast %179 : vector<1x32xf32> to vector<32xf32>
    %181 = vector.shape_cast %178 : vector<32xf32> to vector<1x32xf32>
    %182 = vector.broadcast %181 : vector<1x32xf32> to vector<8x32xf32>
    %183 = arith.addf %173, %182 : vector<8x32xf32>
    %184 = arith.truncf %183 : vector<8x32xf32> to vector<8x32xbf16>
    %185 = arith.truncf %174 : vector<8x32xf32> to vector<8x32xbf16>
    %cst_62 = arith.constant dense<0.000000e+00> : vector<8x8xf32>
    %186 = tpu.matmul %184, %185, %cst_62 {dimension_numbers = #tpu.dot_dimension_numbers<[1], [1], [0], [0], [0, 0, 1, 0], [], []>} : vector<8x32xbf16>, vector<8x32xbf16>, vector<8x8xf32> -> vector<8x8xf32>
    %187 = vector.shape_cast %180 : vector<32xf32> to vector<1x32xf32>
    %188 = vector.broadcast %187 : vector<1x32xf32> to vector<8x32xf32>
    %189 = arith.addf %173, %188 : vector<8x32xf32>
    %190 = arith.truncf %189 : vector<8x32xf32> to vector<8x32xbf16>
    %191 = arith.truncf %176 : vector<8x32xf32> to vector<8x32xbf16>
    %cst_63 = arith.constant dense<0.000000e+00> : vector<8x8xf32>
    %192 = tpu.matmul %190, %191, %cst_63 {dimension_numbers = #tpu.dot_dimension_numbers<[1], [1], [0], [0], [0, 0, 1, 0], [], []>} : vector<8x32xbf16>, vector<8x32xbf16>, vector<8x8xf32> -> vector<8x8xf32>
    %193 = vector.extract_strided_slice %192 {offsets = [0, 7], sizes = [8, 1], strides = [1, 1]} : vector<8x8xf32> to vector<8x1xf32>
    %194 = vector.extract_strided_slice %192 {offsets = [0, 0], sizes = [8, 7], strides = [1, 1]} : vector<8x8xf32> to vector<8x7xf32>
    %195 = tpu.concatenate %193, %194 in 1 : vector<8x1xf32>, vector<8x7xf32> -> vector<8x8xf32>
    %196 = arith.select %102, %195, %192 : vector<8x8xi1>, vector<8x8xf32>
    %197 = vector.extract_strided_slice %196 {offsets = [0, 6], sizes = [8, 2], strides = [1, 1]} : vector<8x8xf32> to vector<8x2xf32>
    %198 = vector.extract_strided_slice %196 {offsets = [0, 0], sizes = [8, 6], strides = [1, 1]} : vector<8x8xf32> to vector<8x6xf32>
    %199 = tpu.concatenate %197, %198 in 1 : vector<8x2xf32>, vector<8x6xf32> -> vector<8x8xf32>
    %200 = arith.select %108, %199, %196 : vector<8x8xi1>, vector<8x8xf32>
    %201 = vector.extract_strided_slice %200 {offsets = [0, 4], sizes = [8, 4], strides = [1, 1]} : vector<8x8xf32> to vector<8x4xf32>
    %202 = vector.extract_strided_slice %200 {offsets = [0, 0], sizes = [8, 4], strides = [1, 1]} : vector<8x8xf32> to vector<8x4xf32>
    %203 = tpu.concatenate %201, %202 in 1 : vector<8x4xf32>, vector<8x4xf32> -> vector<8x8xf32>
    %204 = arith.select %114, %203, %200 : vector<8x8xi1>, vector<8x8xf32>
    %205 = vector.extract_strided_slice %204 {offsets = [1, 0], sizes = [7, 8], strides = [1, 1]} : vector<8x8xf32> to vector<7x8xf32>
    %206 = vector.extract_strided_slice %204 {offsets = [0, 0], sizes = [1, 8], strides = [1, 1]} : vector<8x8xf32> to vector<1x8xf32>
    %207 = tpu.concatenate %205, %206 in 0 : vector<7x8xf32>, vector<1x8xf32> -> vector<8x8xf32>
    %208 = arith.cmpi sle, %90, %89 : vector<8x8xi32>
    %c1_i32_64 = arith.constant 1 : i32
    %209 = vector.broadcast %c1_i32_64 : i32 to vector<8x8xi32>
    %210 = arith.addi %89, %209 : vector<8x8xi32>
    %211 = arith.cmpi eq, %90, %210 : vector<8x8xi32>
    %cst_65 = arith.constant 0.000000e+00 : f32
    %212 = vector.broadcast %cst_65 : f32 to vector<8x8xf32>
    %213 = arith.select %211, %212, %207 : vector<8x8xi1>, vector<8x8xf32>
    %214 = arith.select %208, %204, %213 : vector<8x8xi1>, vector<8x8xf32>
    %215 = arith.addf %186, %214 : vector<8x8xf32>
    %cst_66 = arith.constant 0.0883883461 : f32
    %216 = vector.broadcast %cst_66 : f32 to vector<8x8xf32>
    %217 = arith.mulf %215, %216 : vector<8x8xf32>
    %cst_67 = arith.constant dense<0xFF800000> : vector<8xf32>
    %218 = vector.multi_reduction <maximumf>, %217, %cst_67 [1] : vector<8x8xf32> to vector<8xf32>
    %219 = vector.shape_cast %218 : vector<8xf32> to vector<8x1xf32>
    %220 = vector.broadcast %219 : vector<8x1xf32> to vector<8x8xf32>
    %221 = arith.subf %217, %220 : vector<8x8xf32>
    %222 = math.exp %221 : vector<8x8xf32>
    %cst_68 = arith.constant dense<0.000000e+00> : vector<8xf32>
    %223 = vector.multi_reduction <add>, %222, %cst_68 [1] : vector<8x8xf32> to vector<8xf32>
    %224 = vector.shape_cast %223 : vector<8xf32> to vector<8x1xf32>
    %225 = tpu.reciprocal %224 {approx = true} : vector<8x1xf32> -> vector<8x1xf32>
    %226 = vector.broadcast %225 : vector<8x1xf32> to vector<8x8xf32>
    %227 = arith.mulf %222, %226 : vector<8x8xf32>
    %228 = arith.truncf %227 : vector<8x8xf32> to vector<8x8xbf16>
    %229 = arith.truncf %175 : vector<8x32xf32> to vector<8x32xbf16>
    %cst_69 = arith.constant dense<0.000000e+00> : vector<8x32xf32>
    %230 = tpu.matmul %228, %229, %cst_69 {dimension_numbers = #tpu.dot_dimension_numbers<[1], [0], [0], [1], [0, 0, 1, 1], [], []>} : vector<8x8xbf16>, vector<8x32xbf16>, vector<8x32xf32> -> vector<8x32xf32>
    %231 = vector.extract_strided_slice %84 {offsets = [0, 64], sizes = [8, 32], strides = [1, 1]} : vector<8x384xf32> to vector<8x32xf32>
    %232 = vector.extract_strided_slice %84 {offsets = [0, 192], sizes = [8, 32], strides = [1, 1]} : vector<8x384xf32> to vector<8x32xf32>
    %233 = vector.extract_strided_slice %84 {offsets = [0, 320], sizes = [8, 32], strides = [1, 1]} : vector<8x384xf32> to vector<8x32xf32>
    %234 = vector.extract_strided_slice %88 {offsets = [0, 64], sizes = [8, 32], strides = [1, 1]} : vector<8x128xf32> to vector<8x32xf32>
    %c2 = arith.constant 2 : index
    %c0_70 = arith.constant 0 : index
    %235 = vector.load %arg12[%c2, %c0_70] : memref<8x32xf32, #tpu.memory_space<vmem>>, vector<1x32xf32>
    %236 = vector.shape_cast %235 : vector<1x32xf32> to vector<32xf32>
    %c6 = arith.constant 6 : index
    %c0_71 = arith.constant 0 : index
    %237 = vector.load %arg12[%c6, %c0_71] : memref<8x32xf32, #tpu.memory_space<vmem>>, vector<1x32xf32>
    %238 = vector.shape_cast %237 : vector<1x32xf32> to vector<32xf32>
    %239 = vector.shape_cast %236 : vector<32xf32> to vector<1x32xf32>
    %240 = vector.broadcast %239 : vector<1x32xf32> to vector<8x32xf32>
    %241 = arith.addf %231, %240 : vector<8x32xf32>
    %242 = arith.truncf %241 : vector<8x32xf32> to vector<8x32xbf16>
    %243 = arith.truncf %232 : vector<8x32xf32> to vector<8x32xbf16>
    %cst_72 = arith.constant dense<0.000000e+00> : vector<8x8xf32>
    %244 = tpu.matmul %242, %243, %cst_72 {dimension_numbers = #tpu.dot_dimension_numbers<[1], [1], [0], [0], [0, 0, 1, 0], [], []>} : vector<8x32xbf16>, vector<8x32xbf16>, vector<8x8xf32> -> vector<8x8xf32>
    %245 = vector.shape_cast %238 : vector<32xf32> to vector<1x32xf32>
    %246 = vector.broadcast %245 : vector<1x32xf32> to vector<8x32xf32>
    %247 = arith.addf %231, %246 : vector<8x32xf32>
    %248 = arith.truncf %247 : vector<8x32xf32> to vector<8x32xbf16>
    %249 = arith.truncf %234 : vector<8x32xf32> to vector<8x32xbf16>
    %cst_73 = arith.constant dense<0.000000e+00> : vector<8x8xf32>
    %250 = tpu.matmul %248, %249, %cst_73 {dimension_numbers = #tpu.dot_dimension_numbers<[1], [1], [0], [0], [0, 0, 1, 0], [], []>} : vector<8x32xbf16>, vector<8x32xbf16>, vector<8x8xf32> -> vector<8x8xf32>
    %251 = vector.extract_strided_slice %250 {offsets = [0, 7], sizes = [8, 1], strides = [1, 1]} : vector<8x8xf32> to vector<8x1xf32>
    %252 = vector.extract_strided_slice %250 {offsets = [0, 0], sizes = [8, 7], strides = [1, 1]} : vector<8x8xf32> to vector<8x7xf32>
    %253 = tpu.concatenate %251, %252 in 1 : vector<8x1xf32>, vector<8x7xf32> -> vector<8x8xf32>
    %254 = arith.select %102, %253, %250 : vector<8x8xi1>, vector<8x8xf32>
    %255 = vector.extract_strided_slice %254 {offsets = [0, 6], sizes = [8, 2], strides = [1, 1]} : vector<8x8xf32> to vector<8x2xf32>
    %256 = vector.extract_strided_slice %254 {offsets = [0, 0], sizes = [8, 6], strides = [1, 1]} : vector<8x8xf32> to vector<8x6xf32>
    %257 = tpu.concatenate %255, %256 in 1 : vector<8x2xf32>, vector<8x6xf32> -> vector<8x8xf32>
    %258 = arith.select %108, %257, %254 : vector<8x8xi1>, vector<8x8xf32>
    %259 = vector.extract_strided_slice %258 {offsets = [0, 4], sizes = [8, 4], strides = [1, 1]} : vector<8x8xf32> to vector<8x4xf32>
    %260 = vector.extract_strided_slice %258 {offsets = [0, 0], sizes = [8, 4], strides = [1, 1]} : vector<8x8xf32> to vector<8x4xf32>
    %261 = tpu.concatenate %259, %260 in 1 : vector<8x4xf32>, vector<8x4xf32> -> vector<8x8xf32>
    %262 = arith.select %114, %261, %258 : vector<8x8xi1>, vector<8x8xf32>
    %263 = vector.extract_strided_slice %262 {offsets = [1, 0], sizes = [7, 8], strides = [1, 1]} : vector<8x8xf32> to vector<7x8xf32>
    %264 = vector.extract_strided_slice %262 {offsets = [0, 0], sizes = [1, 8], strides = [1, 1]} : vector<8x8xf32> to vector<1x8xf32>
    %265 = tpu.concatenate %263, %264 in 0 : vector<7x8xf32>, vector<1x8xf32> -> vector<8x8xf32>
    %266 = arith.cmpi sle, %90, %89 : vector<8x8xi32>
    %c1_i32_74 = arith.constant 1 : i32
    %267 = vector.broadcast %c1_i32_74 : i32 to vector<8x8xi32>
    %268 = arith.addi %89, %267 : vector<8x8xi32>
    %269 = arith.cmpi eq, %90, %268 : vector<8x8xi32>
    %cst_75 = arith.constant 0.000000e+00 : f32
    %270 = vector.broadcast %cst_75 : f32 to vector<8x8xf32>
    %271 = arith.select %269, %270, %265 : vector<8x8xi1>, vector<8x8xf32>
    %272 = arith.select %266, %262, %271 : vector<8x8xi1>, vector<8x8xf32>
    %273 = arith.addf %244, %272 : vector<8x8xf32>
    %cst_76 = arith.constant 0.0883883461 : f32
    %274 = vector.broadcast %cst_76 : f32 to vector<8x8xf32>
    %275 = arith.mulf %273, %274 : vector<8x8xf32>
    %cst_77 = arith.constant dense<0xFF800000> : vector<8xf32>
    %276 = vector.multi_reduction <maximumf>, %275, %cst_77 [1] : vector<8x8xf32> to vector<8xf32>
    %277 = vector.shape_cast %276 : vector<8xf32> to vector<8x1xf32>
    %278 = vector.broadcast %277 : vector<8x1xf32> to vector<8x8xf32>
    %279 = arith.subf %275, %278 : vector<8x8xf32>
    %280 = math.exp %279 : vector<8x8xf32>
    %cst_78 = arith.constant dense<0.000000e+00> : vector<8xf32>
    %281 = vector.multi_reduction <add>, %280, %cst_78 [1] : vector<8x8xf32> to vector<8xf32>
    %282 = vector.shape_cast %281 : vector<8xf32> to vector<8x1xf32>
    %283 = tpu.reciprocal %282 {approx = true} : vector<8x1xf32> -> vector<8x1xf32>
    %284 = vector.broadcast %283 : vector<8x1xf32> to vector<8x8xf32>
    %285 = arith.mulf %280, %284 : vector<8x8xf32>
    %286 = arith.truncf %285 : vector<8x8xf32> to vector<8x8xbf16>
    %287 = arith.truncf %233 : vector<8x32xf32> to vector<8x32xbf16>
    %cst_79 = arith.constant dense<0.000000e+00> : vector<8x32xf32>
    %288 = tpu.matmul %286, %287, %cst_79 {dimension_numbers = #tpu.dot_dimension_numbers<[1], [0], [0], [1], [0, 0, 1, 1], [], []>} : vector<8x8xbf16>, vector<8x32xbf16>, vector<8x32xf32> -> vector<8x32xf32>
    %289 = vector.extract_strided_slice %84 {offsets = [0, 96], sizes = [8, 32], strides = [1, 1]} : vector<8x384xf32> to vector<8x32xf32>
    %290 = vector.extract_strided_slice %84 {offsets = [0, 224], sizes = [8, 32], strides = [1, 1]} : vector<8x384xf32> to vector<8x32xf32>
    %291 = vector.extract_strided_slice %84 {offsets = [0, 352], sizes = [8, 32], strides = [1, 1]} : vector<8x384xf32> to vector<8x32xf32>
    %292 = vector.extract_strided_slice %88 {offsets = [0, 96], sizes = [8, 32], strides = [1, 1]} : vector<8x128xf32> to vector<8x32xf32>
    %c3 = arith.constant 3 : index
    %c0_80 = arith.constant 0 : index
    %293 = vector.load %arg12[%c3, %c0_80] : memref<8x32xf32, #tpu.memory_space<vmem>>, vector<1x32xf32>
    %294 = vector.shape_cast %293 : vector<1x32xf32> to vector<32xf32>
    %c7 = arith.constant 7 : index
    %c0_81 = arith.constant 0 : index
    %295 = vector.load %arg12[%c7, %c0_81] : memref<8x32xf32, #tpu.memory_space<vmem>>, vector<1x32xf32>
    %296 = vector.shape_cast %295 : vector<1x32xf32> to vector<32xf32>
    %297 = vector.shape_cast %294 : vector<32xf32> to vector<1x32xf32>
    %298 = vector.broadcast %297 : vector<1x32xf32> to vector<8x32xf32>
    %299 = arith.addf %289, %298 : vector<8x32xf32>
    %300 = arith.truncf %299 : vector<8x32xf32> to vector<8x32xbf16>
    %301 = arith.truncf %290 : vector<8x32xf32> to vector<8x32xbf16>
    %cst_82 = arith.constant dense<0.000000e+00> : vector<8x8xf32>
    %302 = tpu.matmul %300, %301, %cst_82 {dimension_numbers = #tpu.dot_dimension_numbers<[1], [1], [0], [0], [0, 0, 1, 0], [], []>} : vector<8x32xbf16>, vector<8x32xbf16>, vector<8x8xf32> -> vector<8x8xf32>
    %303 = vector.shape_cast %296 : vector<32xf32> to vector<1x32xf32>
    %304 = vector.broadcast %303 : vector<1x32xf32> to vector<8x32xf32>
    %305 = arith.addf %289, %304 : vector<8x32xf32>
    %306 = arith.truncf %305 : vector<8x32xf32> to vector<8x32xbf16>
    %307 = arith.truncf %292 : vector<8x32xf32> to vector<8x32xbf16>
    %cst_83 = arith.constant dense<0.000000e+00> : vector<8x8xf32>
    %308 = tpu.matmul %306, %307, %cst_83 {dimension_numbers = #tpu.dot_dimension_numbers<[1], [1], [0], [0], [0, 0, 1, 0], [], []>} : vector<8x32xbf16>, vector<8x32xbf16>, vector<8x8xf32> -> vector<8x8xf32>
    %309 = vector.extract_strided_slice %308 {offsets = [0, 7], sizes = [8, 1], strides = [1, 1]} : vector<8x8xf32> to vector<8x1xf32>
    %310 = vector.extract_strided_slice %308 {offsets = [0, 0], sizes = [8, 7], strides = [1, 1]} : vector<8x8xf32> to vector<8x7xf32>
    %311 = tpu.concatenate %309, %310 in 1 : vector<8x1xf32>, vector<8x7xf32> -> vector<8x8xf32>
    %312 = arith.select %102, %311, %308 : vector<8x8xi1>, vector<8x8xf32>
    %313 = vector.extract_strided_slice %312 {offsets = [0, 6], sizes = [8, 2], strides = [1, 1]} : vector<8x8xf32> to vector<8x2xf32>
    %314 = vector.extract_strided_slice %312 {offsets = [0, 0], sizes = [8, 6], strides = [1, 1]} : vector<8x8xf32> to vector<8x6xf32>
    %315 = tpu.concatenate %313, %314 in 1 : vector<8x2xf32>, vector<8x6xf32> -> vector<8x8xf32>
    %316 = arith.select %108, %315, %312 : vector<8x8xi1>, vector<8x8xf32>
    %317 = vector.extract_strided_slice %316 {offsets = [0, 4], sizes = [8, 4], strides = [1, 1]} : vector<8x8xf32> to vector<8x4xf32>
    %318 = vector.extract_strided_slice %316 {offsets = [0, 0], sizes = [8, 4], strides = [1, 1]} : vector<8x8xf32> to vector<8x4xf32>
    %319 = tpu.concatenate %317, %318 in 1 : vector<8x4xf32>, vector<8x4xf32> -> vector<8x8xf32>
    %320 = arith.select %114, %319, %316 : vector<8x8xi1>, vector<8x8xf32>
    %321 = vector.extract_strided_slice %320 {offsets = [1, 0], sizes = [7, 8], strides = [1, 1]} : vector<8x8xf32> to vector<7x8xf32>
    %322 = vector.extract_strided_slice %320 {offsets = [0, 0], sizes = [1, 8], strides = [1, 1]} : vector<8x8xf32> to vector<1x8xf32>
    %323 = tpu.concatenate %321, %322 in 0 : vector<7x8xf32>, vector<1x8xf32> -> vector<8x8xf32>
    %324 = arith.cmpi sle, %90, %89 : vector<8x8xi32>
    %c1_i32_84 = arith.constant 1 : i32
    %325 = vector.broadcast %c1_i32_84 : i32 to vector<8x8xi32>
    %326 = arith.addi %89, %325 : vector<8x8xi32>
    %327 = arith.cmpi eq, %90, %326 : vector<8x8xi32>
    %cst_85 = arith.constant 0.000000e+00 : f32
    %328 = vector.broadcast %cst_85 : f32 to vector<8x8xf32>
    %329 = arith.select %327, %328, %323 : vector<8x8xi1>, vector<8x8xf32>
    %330 = arith.select %324, %320, %329 : vector<8x8xi1>, vector<8x8xf32>
    %331 = arith.addf %302, %330 : vector<8x8xf32>
    %cst_86 = arith.constant 0.0883883461 : f32
    %332 = vector.broadcast %cst_86 : f32 to vector<8x8xf32>
    %333 = arith.mulf %331, %332 : vector<8x8xf32>
    %cst_87 = arith.constant dense<0xFF800000> : vector<8xf32>
    %334 = vector.multi_reduction <maximumf>, %333, %cst_87 [1] : vector<8x8xf32> to vector<8xf32>
    %335 = vector.shape_cast %334 : vector<8xf32> to vector<8x1xf32>
    %336 = vector.broadcast %335 : vector<8x1xf32> to vector<8x8xf32>
    %337 = arith.subf %333, %336 : vector<8x8xf32>
    %338 = math.exp %337 : vector<8x8xf32>
    %cst_88 = arith.constant dense<0.000000e+00> : vector<8xf32>
    %339 = vector.multi_reduction <add>, %338, %cst_88 [1] : vector<8x8xf32> to vector<8xf32>
    %340 = vector.shape_cast %339 : vector<8xf32> to vector<8x1xf32>
    %341 = tpu.reciprocal %340 {approx = true} : vector<8x1xf32> -> vector<8x1xf32>
    %342 = vector.broadcast %341 : vector<8x1xf32> to vector<8x8xf32>
    %343 = arith.mulf %338, %342 : vector<8x8xf32>
    %344 = arith.truncf %343 : vector<8x8xf32> to vector<8x8xbf16>
    %345 = arith.truncf %291 : vector<8x32xf32> to vector<8x32xbf16>
    %cst_89 = arith.constant dense<0.000000e+00> : vector<8x32xf32>
    %346 = tpu.matmul %344, %345, %cst_89 {dimension_numbers = #tpu.dot_dimension_numbers<[1], [0], [0], [1], [0, 0, 1, 1], [], []>} : vector<8x8xbf16>, vector<8x32xbf16>, vector<8x32xf32> -> vector<8x32xf32>
    %347 = tpu.concatenate %172, %230, %288, %346 in 1 : vector<8x32xf32>, vector<8x32xf32>, vector<8x32xf32>, vector<8x32xf32> -> vector<8x128xf32>
    %348 = arith.truncf %347 : vector<8x128xf32> to vector<8x128xbf16>
    %c0_90 = arith.constant 0 : index
    %c0_91 = arith.constant 0 : index
    %349 = vector.load %arg13[%c0_90, %c0_91] : memref<128x128xbf16, #tpu.memory_space<vmem>>, vector<128x128xbf16>
    %cst_92 = arith.constant dense<0.000000e+00> : vector<8x128xf32>
    %350 = tpu.matmul %348, %349, %cst_92 {dimension_numbers = #tpu.dot_dimension_numbers<[1], [0], [0], [1], [0, 0, 1, 1], [], []>} : vector<8x128xbf16>, vector<128x128xbf16>, vector<8x128xf32> -> vector<8x128xf32>
    %c0_93 = arith.constant 0 : index
    %c0_94 = arith.constant 0 : index
    %351 = vector.load %arg14[%c0_93, %c0_94] : memref<1x128xf32, #tpu.memory_space<vmem>>, vector<1x128xf32>
    %352 = vector.broadcast %351 : vector<1x128xf32> to vector<8x128xf32>
    %353 = arith.addf %350, %352 : vector<8x128xf32>
    %354 = arith.addf %50, %353 : vector<8x128xf32>
    %c2_95 = arith.constant 2 : index
    %c0_96 = arith.constant 0 : index
    %355 = vector.load %arg3[%c2_95, %c0_96] : memref<5x128xf32, #tpu.memory_space<vmem>>, vector<1x128xf32>
    %356 = vector.shape_cast %355 : vector<1x128xf32> to vector<128xf32>
    %c2_97 = arith.constant 2 : index
    %c0_98 = arith.constant 0 : index
    %357 = vector.load %arg4[%c2_97, %c0_98] : memref<5x128xf32, #tpu.memory_space<vmem>>, vector<1x128xf32>
    %358 = vector.shape_cast %357 : vector<1x128xf32> to vector<128xf32>
    %cst_99 = arith.constant dense<0.000000e+00> : vector<8xf32>
    %359 = vector.multi_reduction <add>, %354, %cst_99 [1] : vector<8x128xf32> to vector<8xf32>
    %360 = vector.shape_cast %359 : vector<8xf32> to vector<8x1xf32>
    %cst_100 = arith.constant 1.280000e+02 : f32
    %361 = vector.broadcast %cst_100 : f32 to vector<8x1xf32>
    %362 = arith.divf %360, %361 : vector<8x1xf32>
    %363 = vector.broadcast %362 : vector<8x1xf32> to vector<8x128xf32>
    %364 = arith.subf %354, %363 : vector<8x128xf32>
    %365 = arith.mulf %364, %364 : vector<8x128xf32>
    %cst_101 = arith.constant dense<0.000000e+00> : vector<8xf32>
    %366 = vector.multi_reduction <add>, %365, %cst_101 [1] : vector<8x128xf32> to vector<8xf32>
    %367 = vector.shape_cast %366 : vector<8xf32> to vector<8x1xf32>
    %cst_102 = arith.constant 1.280000e+02 : f32
    %368 = vector.broadcast %cst_102 : f32 to vector<8x1xf32>
    %369 = arith.divf %367, %368 : vector<8x1xf32>
    %370 = vector.broadcast %362 : vector<8x1xf32> to vector<8x128xf32>
    %371 = arith.subf %354, %370 : vector<8x128xf32>
    %cst_103 = arith.constant 9.99999974E-6 : f32
    %372 = vector.broadcast %cst_103 : f32 to vector<8x1xf32>
    %373 = arith.addf %369, %372 : vector<8x1xf32>
    %374 = math.rsqrt %373 : vector<8x1xf32>
    %375 = vector.broadcast %374 : vector<8x1xf32> to vector<8x128xf32>
    %376 = arith.mulf %371, %375 : vector<8x128xf32>
    %377 = vector.shape_cast %356 : vector<128xf32> to vector<1x128xf32>
    %378 = vector.broadcast %377 : vector<1x128xf32> to vector<8x128xf32>
    %379 = arith.mulf %376, %378 : vector<8x128xf32>
    %380 = vector.shape_cast %358 : vector<128xf32> to vector<1x128xf32>
    %381 = vector.broadcast %380 : vector<1x128xf32> to vector<8x128xf32>
    %382 = arith.addf %379, %381 : vector<8x128xf32>
    %383 = arith.truncf %382 : vector<8x128xf32> to vector<8x128xbf16>
    %c0_104 = arith.constant 0 : index
    %c0_105 = arith.constant 0 : index
    %384 = vector.load %arg15[%c0_104, %c0_105] : memref<128x256xbf16, #tpu.memory_space<vmem>>, vector<128x256xbf16>
    %cst_106 = arith.constant dense<0.000000e+00> : vector<8x256xf32>
    %385 = tpu.matmul %383, %384, %cst_106 {dimension_numbers = #tpu.dot_dimension_numbers<[1], [0], [0], [1], [0, 0, 1, 1], [], []>} : vector<8x128xbf16>, vector<128x256xbf16>, vector<8x256xf32> -> vector<8x256xf32>
    %c0_107 = arith.constant 0 : index
    %c0_108 = arith.constant 0 : index
    %386 = vector.load %arg16[%c0_107, %c0_108] : memref<1x256xf32, #tpu.memory_space<vmem>>, vector<1x256xf32>
    %387 = vector.broadcast %386 : vector<1x256xf32> to vector<8x256xf32>
    %388 = arith.addf %385, %387 : vector<8x256xf32>
    %389 = vector.extract_strided_slice %388 {offsets = [0, 0], sizes = [8, 128], strides = [1, 1]} : vector<8x256xf32> to vector<8x128xf32>
    %390 = vector.extract_strided_slice %388 {offsets = [0, 128], sizes = [8, 128], strides = [1, 1]} : vector<8x256xf32> to vector<8x128xf32>
    %391 = arith.negf %390 : vector<8x128xf32>
    %392 = math.exp %391 : vector<8x128xf32>
    %cst_109 = arith.constant 1.000000e+00 : f32
    %393 = vector.broadcast %cst_109 : f32 to vector<8x128xf32>
    %394 = arith.addf %393, %392 : vector<8x128xf32>
    %395 = arith.divf %393, %394 : vector<8x128xf32>
    %396 = arith.mulf %389, %395 : vector<8x128xf32>
    %cst_110 = arith.constant 0.000000e+00 : f32
    %397 = vector.broadcast %cst_110 : f32 to vector<8x128xf32>
    %cst_111 = arith.constant 0.000000e+00 : f32
    %398 = vector.broadcast %cst_111 : f32 to vector<7x128xf32>
    %399 = vector.extract_strided_slice %396 {offsets = [0, 0], sizes = [1, 128], strides = [1, 1]} : vector<8x128xf32> to vector<1x128xf32>
    %400 = tpu.concatenate %398, %399 in 0 : vector<7x128xf32>, vector<1x128xf32> -> vector<8x128xf32>
    %c0_112 = arith.constant 0 : index
    %c0_113 = arith.constant 0 : index
    %401 = vector.load %arg17[%c0_112, %c0_113] : memref<15x128xf32, #tpu.memory_space<vmem>>, vector<1x128xf32>
    %402 = vector.shape_cast %401 : vector<1x128xf32> to vector<128xf32>
    %403 = vector.shape_cast %402 : vector<128xf32> to vector<1x128xf32>
    %404 = vector.broadcast %403 : vector<1x128xf32> to vector<8x128xf32>
    %405 = arith.mulf %400, %404 : vector<8x128xf32>
    %406 = arith.addf %397, %405 : vector<8x128xf32>
    %cst_114 = arith.constant 0.000000e+00 : f32
    %407 = vector.broadcast %cst_114 : f32 to vector<6x128xf32>
    %408 = vector.extract_strided_slice %396 {offsets = [0, 0], sizes = [2, 128], strides = [1, 1]} : vector<8x128xf32> to vector<2x128xf32>
    %409 = tpu.concatenate %407, %408 in 0 : vector<6x128xf32>, vector<2x128xf32> -> vector<8x128xf32>
    %c1_115 = arith.constant 1 : index
    %c0_116 = arith.constant 0 : index
    %410 = vector.load %arg17[%c1_115, %c0_116] : memref<15x128xf32, #tpu.memory_space<vmem>>, vector<1x128xf32>
    %411 = vector.shape_cast %410 : vector<1x128xf32> to vector<128xf32>
    %412 = vector.shape_cast %411 : vector<128xf32> to vector<1x128xf32>
    %413 = vector.broadcast %412 : vector<1x128xf32> to vector<8x128xf32>
    %414 = arith.mulf %409, %413 : vector<8x128xf32>
    %415 = arith.addf %406, %414 : vector<8x128xf32>
    %cst_117 = arith.constant 0.000000e+00 : f32
    %416 = vector.broadcast %cst_117 : f32 to vector<5x128xf32>
    %417 = vector.extract_strided_slice %396 {offsets = [0, 0], sizes = [3, 128], strides = [1, 1]} : vector<8x128xf32> to vector<3x128xf32>
    %418 = tpu.concatenate %416, %417 in 0 : vector<5x128xf32>, vector<3x128xf32> -> vector<8x128xf32>
    %c2_118 = arith.constant 2 : index
    %c0_119 = arith.constant 0 : index
    %419 = vector.load %arg17[%c2_118, %c0_119] : memref<15x128xf32, #tpu.memory_space<vmem>>, vector<1x128xf32>
    %420 = vector.shape_cast %419 : vector<1x128xf32> to vector<128xf32>
    %421 = vector.shape_cast %420 : vector<128xf32> to vector<1x128xf32>
    %422 = vector.broadcast %421 : vector<1x128xf32> to vector<8x128xf32>
    %423 = arith.mulf %418, %422 : vector<8x128xf32>
    %424 = arith.addf %415, %423 : vector<8x128xf32>
    %cst_120 = arith.constant 0.000000e+00 : f32
    %425 = vector.broadcast %cst_120 : f32 to vector<4x128xf32>
    %426 = vector.extract_strided_slice %396 {offsets = [0, 0], sizes = [4, 128], strides = [1, 1]} : vector<8x128xf32> to vector<4x128xf32>
    %427 = tpu.concatenate %425, %426 in 0 : vector<4x128xf32>, vector<4x128xf32> -> vector<8x128xf32>
    %c3_121 = arith.constant 3 : index
    %c0_122 = arith.constant 0 : index
    %428 = vector.load %arg17[%c3_121, %c0_122] : memref<15x128xf32, #tpu.memory_space<vmem>>, vector<1x128xf32>
    %429 = vector.shape_cast %428 : vector<1x128xf32> to vector<128xf32>
    %430 = vector.shape_cast %429 : vector<128xf32> to vector<1x128xf32>
    %431 = vector.broadcast %430 : vector<1x128xf32> to vector<8x128xf32>
    %432 = arith.mulf %427, %431 : vector<8x128xf32>
    %433 = arith.addf %424, %432 : vector<8x128xf32>
    %cst_123 = arith.constant 0.000000e+00 : f32
    %434 = vector.broadcast %cst_123 : f32 to vector<3x128xf32>
    %435 = vector.extract_strided_slice %396 {offsets = [0, 0], sizes = [5, 128], strides = [1, 1]} : vector<8x128xf32> to vector<5x128xf32>
    %436 = tpu.concatenate %434, %435 in 0 : vector<3x128xf32>, vector<5x128xf32> -> vector<8x128xf32>
    %c4_124 = arith.constant 4 : index
    %c0_125 = arith.constant 0 : index
    %437 = vector.load %arg17[%c4_124, %c0_125] : memref<15x128xf32, #tpu.memory_space<vmem>>, vector<1x128xf32>
    %438 = vector.shape_cast %437 : vector<1x128xf32> to vector<128xf32>
    %439 = vector.shape_cast %438 : vector<128xf32> to vector<1x128xf32>
    %440 = vector.broadcast %439 : vector<1x128xf32> to vector<8x128xf32>
    %441 = arith.mulf %436, %440 : vector<8x128xf32>
    %442 = arith.addf %433, %441 : vector<8x128xf32>
    %cst_126 = arith.constant 0.000000e+00 : f32
    %443 = vector.broadcast %cst_126 : f32 to vector<2x128xf32>
    %444 = vector.extract_strided_slice %396 {offsets = [0, 0], sizes = [6, 128], strides = [1, 1]} : vector<8x128xf32> to vector<6x128xf32>
    %445 = tpu.concatenate %443, %444 in 0 : vector<2x128xf32>, vector<6x128xf32> -> vector<8x128xf32>
    %c5_127 = arith.constant 5 : index
    %c0_128 = arith.constant 0 : index
    %446 = vector.load %arg17[%c5_127, %c0_128] : memref<15x128xf32, #tpu.memory_space<vmem>>, vector<1x128xf32>
    %447 = vector.shape_cast %446 : vector<1x128xf32> to vector<128xf32>
    %448 = vector.shape_cast %447 : vector<128xf32> to vector<1x128xf32>
    %449 = vector.broadcast %448 : vector<1x128xf32> to vector<8x128xf32>
    %450 = arith.mulf %445, %449 : vector<8x128xf32>
    %451 = arith.addf %442, %450 : vector<8x128xf32>
    %cst_129 = arith.constant 0.000000e+00 : f32
    %452 = vector.broadcast %cst_129 : f32 to vector<1x128xf32>
    %453 = vector.extract_strided_slice %396 {offsets = [0, 0], sizes = [7, 128], strides = [1, 1]} : vector<8x128xf32> to vector<7x128xf32>
    %454 = tpu.concatenate %452, %453 in 0 : vector<1x128xf32>, vector<7x128xf32> -> vector<8x128xf32>
    %c6_130 = arith.constant 6 : index
    %c0_131 = arith.constant 0 : index
    %455 = vector.load %arg17[%c6_130, %c0_131] : memref<15x128xf32, #tpu.memory_space<vmem>>, vector<1x128xf32>
    %456 = vector.shape_cast %455 : vector<1x128xf32> to vector<128xf32>
    %457 = vector.shape_cast %456 : vector<128xf32> to vector<1x128xf32>
    %458 = vector.broadcast %457 : vector<1x128xf32> to vector<8x128xf32>
    %459 = arith.mulf %454, %458 : vector<8x128xf32>
    %460 = arith.addf %451, %459 : vector<8x128xf32>
    %c7_132 = arith.constant 7 : index
    %c0_133 = arith.constant 0 : index
    %461 = vector.load %arg17[%c7_132, %c0_133] : memref<15x128xf32, #tpu.memory_space<vmem>>, vector<1x128xf32>
    %462 = vector.shape_cast %461 : vector<1x128xf32> to vector<128xf32>
    %463 = vector.shape_cast %462 : vector<128xf32> to vector<1x128xf32>
    %464 = vector.broadcast %463 : vector<1x128xf32> to vector<8x128xf32>
    %465 = arith.mulf %396, %464 : vector<8x128xf32>
    %466 = arith.addf %460, %465 : vector<8x128xf32>
    %467 = vector.extract_strided_slice %396 {offsets = [1, 0], sizes = [7, 128], strides = [1, 1]} : vector<8x128xf32> to vector<7x128xf32>
    %cst_134 = arith.constant 0.000000e+00 : f32
    %468 = vector.broadcast %cst_134 : f32 to vector<1x128xf32>
    %469 = tpu.concatenate %467, %468 in 0 : vector<7x128xf32>, vector<1x128xf32> -> vector<8x128xf32>
    %c8 = arith.constant 8 : index
    %c0_135 = arith.constant 0 : index
    %470 = vector.load %arg17[%c8, %c0_135] : memref<15x128xf32, #tpu.memory_space<vmem>>, vector<1x128xf32>
    %471 = vector.shape_cast %470 : vector<1x128xf32> to vector<128xf32>
    %472 = vector.shape_cast %471 : vector<128xf32> to vector<1x128xf32>
    %473 = vector.broadcast %472 : vector<1x128xf32> to vector<8x128xf32>
    %474 = arith.mulf %469, %473 : vector<8x128xf32>
    %475 = arith.addf %466, %474 : vector<8x128xf32>
    %476 = vector.extract_strided_slice %396 {offsets = [2, 0], sizes = [6, 128], strides = [1, 1]} : vector<8x128xf32> to vector<6x128xf32>
    %cst_136 = arith.constant 0.000000e+00 : f32
    %477 = vector.broadcast %cst_136 : f32 to vector<2x128xf32>
    %478 = tpu.concatenate %476, %477 in 0 : vector<6x128xf32>, vector<2x128xf32> -> vector<8x128xf32>
    %c9 = arith.constant 9 : index
    %c0_137 = arith.constant 0 : index
    %479 = vector.load %arg17[%c9, %c0_137] : memref<15x128xf32, #tpu.memory_space<vmem>>, vector<1x128xf32>
    %480 = vector.shape_cast %479 : vector<1x128xf32> to vector<128xf32>
    %481 = vector.shape_cast %480 : vector<128xf32> to vector<1x128xf32>
    %482 = vector.broadcast %481 : vector<1x128xf32> to vector<8x128xf32>
    %483 = arith.mulf %478, %482 : vector<8x128xf32>
    %484 = arith.addf %475, %483 : vector<8x128xf32>
    %485 = vector.extract_strided_slice %396 {offsets = [3, 0], sizes = [5, 128], strides = [1, 1]} : vector<8x128xf32> to vector<5x128xf32>
    %cst_138 = arith.constant 0.000000e+00 : f32
    %486 = vector.broadcast %cst_138 : f32 to vector<3x128xf32>
    %487 = tpu.concatenate %485, %486 in 0 : vector<5x128xf32>, vector<3x128xf32> -> vector<8x128xf32>
    %c10 = arith.constant 10 : index
    %c0_139 = arith.constant 0 : index
    %488 = vector.load %arg17[%c10, %c0_139] : memref<15x128xf32, #tpu.memory_space<vmem>>, vector<1x128xf32>
    %489 = vector.shape_cast %488 : vector<1x128xf32> to vector<128xf32>
    %490 = vector.shape_cast %489 : vector<128xf32> to vector<1x128xf32>
    %491 = vector.broadcast %490 : vector<1x128xf32> to vector<8x128xf32>
    %492 = arith.mulf %487, %491 : vector<8x128xf32>
    %493 = arith.addf %484, %492 : vector<8x128xf32>
    %494 = vector.extract_strided_slice %396 {offsets = [4, 0], sizes = [4, 128], strides = [1, 1]} : vector<8x128xf32> to vector<4x128xf32>
    %cst_140 = arith.constant 0.000000e+00 : f32
    %495 = vector.broadcast %cst_140 : f32 to vector<4x128xf32>
    %496 = tpu.concatenate %494, %495 in 0 : vector<4x128xf32>, vector<4x128xf32> -> vector<8x128xf32>
    %c11 = arith.constant 11 : index
    %c0_141 = arith.constant 0 : index
    %497 = vector.load %arg17[%c11, %c0_141] : memref<15x128xf32, #tpu.memory_space<vmem>>, vector<1x128xf32>
    %498 = vector.shape_cast %497 : vector<1x128xf32> to vector<128xf32>
    %499 = vector.shape_cast %498 : vector<128xf32> to vector<1x128xf32>
    %500 = vector.broadcast %499 : vector<1x128xf32> to vector<8x128xf32>
    %501 = arith.mulf %496, %500 : vector<8x128xf32>
    %502 = arith.addf %493, %501 : vector<8x128xf32>
    %503 = vector.extract_strided_slice %396 {offsets = [5, 0], sizes = [3, 128], strides = [1, 1]} : vector<8x128xf32> to vector<3x128xf32>
    %cst_142 = arith.constant 0.000000e+00 : f32
    %504 = vector.broadcast %cst_142 : f32 to vector<5x128xf32>
    %505 = tpu.concatenate %503, %504 in 0 : vector<3x128xf32>, vector<5x128xf32> -> vector<8x128xf32>
    %c12 = arith.constant 12 : index
    %c0_143 = arith.constant 0 : index
    %506 = vector.load %arg17[%c12, %c0_143] : memref<15x128xf32, #tpu.memory_space<vmem>>, vector<1x128xf32>
    %507 = vector.shape_cast %506 : vector<1x128xf32> to vector<128xf32>
    %508 = vector.shape_cast %507 : vector<128xf32> to vector<1x128xf32>
    %509 = vector.broadcast %508 : vector<1x128xf32> to vector<8x128xf32>
    %510 = arith.mulf %505, %509 : vector<8x128xf32>
    %511 = arith.addf %502, %510 : vector<8x128xf32>
    %512 = vector.extract_strided_slice %396 {offsets = [6, 0], sizes = [2, 128], strides = [1, 1]} : vector<8x128xf32> to vector<2x128xf32>
    %cst_144 = arith.constant 0.000000e+00 : f32
    %513 = vector.broadcast %cst_144 : f32 to vector<6x128xf32>
    %514 = tpu.concatenate %512, %513 in 0 : vector<2x128xf32>, vector<6x128xf32> -> vector<8x128xf32>
    %c13 = arith.constant 13 : index
    %c0_145 = arith.constant 0 : index
    %515 = vector.load %arg17[%c13, %c0_145] : memref<15x128xf32, #tpu.memory_space<vmem>>, vector<1x128xf32>
    %516 = vector.shape_cast %515 : vector<1x128xf32> to vector<128xf32>
    %517 = vector.shape_cast %516 : vector<128xf32> to vector<1x128xf32>
    %518 = vector.broadcast %517 : vector<1x128xf32> to vector<8x128xf32>
    %519 = arith.mulf %514, %518 : vector<8x128xf32>
    %520 = arith.addf %511, %519 : vector<8x128xf32>
    %521 = vector.extract_strided_slice %396 {offsets = [7, 0], sizes = [1, 128], strides = [1, 1]} : vector<8x128xf32> to vector<1x128xf32>
    %cst_146 = arith.constant 0.000000e+00 : f32
    %522 = vector.broadcast %cst_146 : f32 to vector<7x128xf32>
    %523 = tpu.concatenate %521, %522 in 0 : vector<1x128xf32>, vector<7x128xf32> -> vector<8x128xf32>
    %c14 = arith.constant 14 : index
    %c0_147 = arith.constant 0 : index
    %524 = vector.load %arg17[%c14, %c0_147] : memref<15x128xf32, #tpu.memory_space<vmem>>, vector<1x128xf32>
    %525 = vector.shape_cast %524 : vector<1x128xf32> to vector<128xf32>
    %526 = vector.shape_cast %525 : vector<128xf32> to vector<1x128xf32>
    %527 = vector.broadcast %526 : vector<1x128xf32> to vector<8x128xf32>
    %528 = arith.mulf %523, %527 : vector<8x128xf32>
    %529 = arith.addf %520, %528 : vector<8x128xf32>
    %c0_148 = arith.constant 0 : index
    %c0_149 = arith.constant 0 : index
    %530 = vector.load %arg18[%c0_148, %c0_149] : memref<1x128xf32, #tpu.memory_space<vmem>>, vector<1x128xf32>
    %531 = vector.broadcast %530 : vector<1x128xf32> to vector<8x128xf32>
    %532 = arith.mulf %529, %531 : vector<8x128xf32>
    %c0_150 = arith.constant 0 : index
    %c0_151 = arith.constant 0 : index
    %533 = vector.load %arg19[%c0_150, %c0_151] : memref<1x128xf32, #tpu.memory_space<vmem>>, vector<1x128xf32>
    %534 = vector.broadcast %533 : vector<1x128xf32> to vector<8x128xf32>
    %535 = arith.addf %532, %534 : vector<8x128xf32>
    %536 = arith.negf %535 : vector<8x128xf32>
    %537 = math.exp %536 : vector<8x128xf32>
    %cst_152 = arith.constant 1.000000e+00 : f32
    %538 = vector.broadcast %cst_152 : f32 to vector<8x128xf32>
    %539 = arith.addf %538, %537 : vector<8x128xf32>
    %540 = arith.divf %538, %539 : vector<8x128xf32>
    %541 = arith.mulf %535, %540 : vector<8x128xf32>
    %542 = arith.truncf %541 : vector<8x128xf32> to vector<8x128xbf16>
    %c0_153 = arith.constant 0 : index
    %c0_154 = arith.constant 0 : index
    %543 = vector.load %arg20[%c0_153, %c0_154] : memref<128x128xbf16, #tpu.memory_space<vmem>>, vector<128x128xbf16>
    %cst_155 = arith.constant dense<0.000000e+00> : vector<8x128xf32>
    %544 = tpu.matmul %542, %543, %cst_155 {dimension_numbers = #tpu.dot_dimension_numbers<[1], [0], [0], [1], [0, 0, 1, 1], [], []>} : vector<8x128xbf16>, vector<128x128xbf16>, vector<8x128xf32> -> vector<8x128xf32>
    %c0_156 = arith.constant 0 : index
    %c0_157 = arith.constant 0 : index
    %545 = vector.load %arg21[%c0_156, %c0_157] : memref<1x128xf32, #tpu.memory_space<vmem>>, vector<1x128xf32>
    %546 = vector.broadcast %545 : vector<1x128xf32> to vector<8x128xf32>
    %547 = arith.addf %544, %546 : vector<8x128xf32>
    %548 = arith.addf %354, %547 : vector<8x128xf32>
    %c3_158 = arith.constant 3 : index
    %c0_159 = arith.constant 0 : index
    %549 = vector.load %arg3[%c3_158, %c0_159] : memref<5x128xf32, #tpu.memory_space<vmem>>, vector<1x128xf32>
    %550 = vector.shape_cast %549 : vector<1x128xf32> to vector<128xf32>
    %c3_160 = arith.constant 3 : index
    %c0_161 = arith.constant 0 : index
    %551 = vector.load %arg4[%c3_160, %c0_161] : memref<5x128xf32, #tpu.memory_space<vmem>>, vector<1x128xf32>
    %552 = vector.shape_cast %551 : vector<1x128xf32> to vector<128xf32>
    %cst_162 = arith.constant dense<0.000000e+00> : vector<8xf32>
    %553 = vector.multi_reduction <add>, %548, %cst_162 [1] : vector<8x128xf32> to vector<8xf32>
    %554 = vector.shape_cast %553 : vector<8xf32> to vector<8x1xf32>
    %cst_163 = arith.constant 1.280000e+02 : f32
    %555 = vector.broadcast %cst_163 : f32 to vector<8x1xf32>
    %556 = arith.divf %554, %555 : vector<8x1xf32>
    %557 = vector.broadcast %556 : vector<8x1xf32> to vector<8x128xf32>
    %558 = arith.subf %548, %557 : vector<8x128xf32>
    %559 = arith.mulf %558, %558 : vector<8x128xf32>
    %cst_164 = arith.constant dense<0.000000e+00> : vector<8xf32>
    %560 = vector.multi_reduction <add>, %559, %cst_164 [1] : vector<8x128xf32> to vector<8xf32>
    %561 = vector.shape_cast %560 : vector<8xf32> to vector<8x1xf32>
    %cst_165 = arith.constant 1.280000e+02 : f32
    %562 = vector.broadcast %cst_165 : f32 to vector<8x1xf32>
    %563 = arith.divf %561, %562 : vector<8x1xf32>
    %564 = vector.broadcast %556 : vector<8x1xf32> to vector<8x128xf32>
    %565 = arith.subf %548, %564 : vector<8x128xf32>
    %cst_166 = arith.constant 9.99999974E-6 : f32
    %566 = vector.broadcast %cst_166 : f32 to vector<8x1xf32>
    %567 = arith.addf %563, %566 : vector<8x1xf32>
    %568 = math.rsqrt %567 : vector<8x1xf32>
    %569 = vector.broadcast %568 : vector<8x1xf32> to vector<8x128xf32>
    %570 = arith.mulf %565, %569 : vector<8x128xf32>
    %571 = vector.shape_cast %550 : vector<128xf32> to vector<1x128xf32>
    %572 = vector.broadcast %571 : vector<1x128xf32> to vector<8x128xf32>
    %573 = arith.mulf %570, %572 : vector<8x128xf32>
    %574 = vector.shape_cast %552 : vector<128xf32> to vector<1x128xf32>
    %575 = vector.broadcast %574 : vector<1x128xf32> to vector<8x128xf32>
    %576 = arith.addf %573, %575 : vector<8x128xf32>
    %577 = arith.truncf %576 : vector<8x128xf32> to vector<8x128xbf16>
    %c0_167 = arith.constant 0 : index
    %c0_168 = arith.constant 0 : index
    %578 = vector.load %arg22[%c0_167, %c0_168] : memref<128x256xbf16, #tpu.memory_space<vmem>>, vector<128x256xbf16>
    %cst_169 = arith.constant dense<0.000000e+00> : vector<8x256xf32>
    %579 = tpu.matmul %577, %578, %cst_169 {dimension_numbers = #tpu.dot_dimension_numbers<[1], [0], [0], [1], [0, 0, 1, 1], [], []>} : vector<8x128xbf16>, vector<128x256xbf16>, vector<8x256xf32> -> vector<8x256xf32>
    %c0_170 = arith.constant 0 : index
    %c0_171 = arith.constant 0 : index
    %580 = vector.load %arg23[%c0_170, %c0_171] : memref<1x256xf32, #tpu.memory_space<vmem>>, vector<1x256xf32>
    %581 = vector.broadcast %580 : vector<1x256xf32> to vector<8x256xf32>
    %582 = arith.addf %579, %581 : vector<8x256xf32>
    %583 = arith.negf %582 : vector<8x256xf32>
    %584 = math.exp %583 : vector<8x256xf32>
    %cst_172 = arith.constant 1.000000e+00 : f32
    %585 = vector.broadcast %cst_172 : f32 to vector<8x256xf32>
    %586 = arith.addf %585, %584 : vector<8x256xf32>
    %587 = arith.divf %585, %586 : vector<8x256xf32>
    %588 = arith.mulf %582, %587 : vector<8x256xf32>
    %589 = arith.truncf %588 : vector<8x256xf32> to vector<8x256xbf16>
    %c0_173 = arith.constant 0 : index
    %c0_174 = arith.constant 0 : index
    %590 = vector.load %arg24[%c0_173, %c0_174] : memref<256x128xbf16, #tpu.memory_space<vmem>>, vector<256x128xbf16>
    %cst_175 = arith.constant dense<0.000000e+00> : vector<8x128xf32>
    %591 = tpu.matmul %589, %590, %cst_175 {dimension_numbers = #tpu.dot_dimension_numbers<[1], [0], [0], [1], [0, 0, 1, 1], [], []>} : vector<8x256xbf16>, vector<256x128xbf16>, vector<8x128xf32> -> vector<8x128xf32>
    %c0_176 = arith.constant 0 : index
    %c0_177 = arith.constant 0 : index
    %592 = vector.load %arg25[%c0_176, %c0_177] : memref<1x128xf32, #tpu.memory_space<vmem>>, vector<1x128xf32>
    %593 = vector.broadcast %592 : vector<1x128xf32> to vector<8x128xf32>
    %594 = arith.addf %591, %593 : vector<8x128xf32>
    %cst_178 = arith.constant 5.000000e-01 : f32
    %595 = vector.broadcast %cst_178 : f32 to vector<8x128xf32>
    %596 = arith.mulf %595, %594 : vector<8x128xf32>
    %597 = arith.addf %548, %596 : vector<8x128xf32>
    %c4_179 = arith.constant 4 : index
    %c0_180 = arith.constant 0 : index
    %598 = vector.load %arg3[%c4_179, %c0_180] : memref<5x128xf32, #tpu.memory_space<vmem>>, vector<1x128xf32>
    %599 = vector.shape_cast %598 : vector<1x128xf32> to vector<128xf32>
    %c4_181 = arith.constant 4 : index
    %c0_182 = arith.constant 0 : index
    %600 = vector.load %arg4[%c4_181, %c0_182] : memref<5x128xf32, #tpu.memory_space<vmem>>, vector<1x128xf32>
    %601 = vector.shape_cast %600 : vector<1x128xf32> to vector<128xf32>
    %cst_183 = arith.constant dense<0.000000e+00> : vector<8xf32>
    %602 = vector.multi_reduction <add>, %597, %cst_183 [1] : vector<8x128xf32> to vector<8xf32>
    %603 = vector.shape_cast %602 : vector<8xf32> to vector<8x1xf32>
    %cst_184 = arith.constant 1.280000e+02 : f32
    %604 = vector.broadcast %cst_184 : f32 to vector<8x1xf32>
    %605 = arith.divf %603, %604 : vector<8x1xf32>
    %606 = vector.broadcast %605 : vector<8x1xf32> to vector<8x128xf32>
    %607 = arith.subf %597, %606 : vector<8x128xf32>
    %608 = arith.mulf %607, %607 : vector<8x128xf32>
    %cst_185 = arith.constant dense<0.000000e+00> : vector<8xf32>
    %609 = vector.multi_reduction <add>, %608, %cst_185 [1] : vector<8x128xf32> to vector<8xf32>
    %610 = vector.shape_cast %609 : vector<8xf32> to vector<8x1xf32>
    %cst_186 = arith.constant 1.280000e+02 : f32
    %611 = vector.broadcast %cst_186 : f32 to vector<8x1xf32>
    %612 = arith.divf %610, %611 : vector<8x1xf32>
    %613 = vector.broadcast %605 : vector<8x1xf32> to vector<8x128xf32>
    %614 = arith.subf %597, %613 : vector<8x128xf32>
    %cst_187 = arith.constant 9.99999974E-6 : f32
    %615 = vector.broadcast %cst_187 : f32 to vector<8x1xf32>
    %616 = arith.addf %612, %615 : vector<8x1xf32>
    %617 = math.rsqrt %616 : vector<8x1xf32>
    %618 = vector.broadcast %617 : vector<8x1xf32> to vector<8x128xf32>
    %619 = arith.mulf %614, %618 : vector<8x128xf32>
    %620 = vector.shape_cast %599 : vector<128xf32> to vector<1x128xf32>
    %621 = vector.broadcast %620 : vector<1x128xf32> to vector<8x128xf32>
    %622 = arith.mulf %619, %621 : vector<8x128xf32>
    %623 = vector.shape_cast %601 : vector<128xf32> to vector<1x128xf32>
    %624 = vector.broadcast %623 : vector<1x128xf32> to vector<8x128xf32>
    %625 = arith.addf %622, %624 : vector<8x128xf32>
    %c0_188 = arith.constant 0 : index
    %c0_189 = arith.constant 0 : index
    %c0_190 = arith.constant 0 : index
    %626 = vector.load %arg26[%c0_188, %c0_189, %c0_190] : memref<1x8x128xf32, #tpu.memory_space<vmem>>, vector<1x8x128xf32>
    %627 = vector.shape_cast %626 : vector<1x8x128xf32> to vector<8x128xf32>
    %628 = vector.shape_cast %625 : vector<8x128xf32> to vector<1x8x128xf32>
    tpu.vector_store %arg26[%c0_188, %c0_189, %c0_190], %628 {strides = array<i32>} : memref<1x8x128xf32, #tpu.memory_space<vmem>>, vector<1x8x128xf32>,
    %cst_191 = arith.constant dense<0.000000e+00> : vector<128xf32>
    %629 = vector.multi_reduction <add>, %625, %cst_191 [0] : vector<8x128xf32> to vector<128xf32>
    %630 = vector.shape_cast %629 : vector<128xf32> to vector<1x128xf32>
    %cst_192 = arith.constant 8.000000e+00 : f32
    %631 = vector.broadcast %cst_192 : f32 to vector<1x128xf32>
    %632 = arith.divf %630, %631 : vector<1x128xf32>
    %c0_193 = arith.constant 0 : index
    %c0_194 = arith.constant 0 : index
    %c0_195 = arith.constant 0 : index
    %633 = vector.load %arg27[%c0_193, %c0_194, %c0_195] : memref<1x1x128xf32, #tpu.memory_space<vmem>>, vector<1x1x128xf32>
    %634 = vector.shape_cast %633 : vector<1x1x128xf32> to vector<1x128xf32>
    %635 = vector.shape_cast %632 : vector<1x128xf32> to vector<1x1x128xf32>
    tpu.vector_store %arg27[%c0_193, %c0_194, %c0_195], %635 {strides = array<i32>} : memref<1x1x128xf32, #tpu.memory_space<vmem>>, vector<1x1x128xf32>,
    return
  }
  func.func @transform_0(%arg0: i32) -> (i32, i32, i32) {
    %c0_i32 = arith.constant 0 : i32
    %c0_i32_0 = arith.constant 0 : i32
    %c0_i32_1 = arith.constant 0 : i32
    return %arg0, %c0_i32, %c0_i32_0 : i32, i32, i32
  }
  func.func @transform_1(%arg0: i32) -> (i32, i32) {
    %c0_i32 = arith.constant 0 : i32
    %c0_i32_0 = arith.constant 0 : i32
    %c0_i32_1 = arith.constant 0 : i32
    return %c0_i32, %c0_i32_0 : i32, i32
  }
  func.func @transform_2(%arg0: i32) -> (i32, i32) {
    %c0_i32 = arith.constant 0 : i32
    %c0_i32_0 = arith.constant 0 : i32
    %c0_i32_1 = arith.constant 0 : i32
    return %c0_i32, %c0_i32_0 : i32, i32
  }
  func.func @transform_3(%arg0: i32) -> (i32, i32) {
    %c0_i32 = arith.constant 0 : i32
    %c0_i32_0 = arith.constant 0 : i32
    %c0_i32_1 = arith.constant 0 : i32
    return %c0_i32, %c0_i32_0 : i32, i32
  }
  func.func @transform_4(%arg0: i32) -> (i32, i32) {
    %c0_i32 = arith.constant 0 : i32
    %c0_i32_0 = arith.constant 0 : i32
    %c0_i32_1 = arith.constant 0 : i32
    return %c0_i32, %c0_i32_0 : i32, i32
  }
  func.func @transform_5(%arg0: i32) -> (i32, i32) {
    %c0_i32 = arith.constant 0 : i32
    %c0_i32_0 = arith.constant 0 : i32
    %c0_i32_1 = arith.constant 0 : i32
    return %c0_i32, %c0_i32_0 : i32, i32
  }
  func.func @transform_6(%arg0: i32) -> (i32, i32) {
    %c0_i32 = arith.constant 0 : i32
    %c0_i32_0 = arith.constant 0 : i32
    %c0_i32_1 = arith.constant 0 : i32
    return %c0_i32, %c0_i32_0 : i32, i32
  }
  func.func @transform_7(%arg0: i32) -> (i32, i32) {
    %c0_i32 = arith.constant 0 : i32
    %c0_i32_0 = arith.constant 0 : i32
    %c0_i32_1 = arith.constant 0 : i32
    return %c0_i32, %c0_i32_0 : i32, i32
  }
  func.func @transform_8(%arg0: i32) -> (i32, i32) {
    %c0_i32 = arith.constant 0 : i32
    %c0_i32_0 = arith.constant 0 : i32
    %c0_i32_1 = arith.constant 0 : i32
    return %c0_i32, %c0_i32_0 : i32, i32
  }
  func.func @transform_9(%arg0: i32) -> (i32, i32) {
    %c0_i32 = arith.constant 0 : i32
    %c0_i32_0 = arith.constant 0 : i32
    %c0_i32_1 = arith.constant 0 : i32
    return %c0_i32, %c0_i32_0 : i32, i32
  }
  func.func @transform_10(%arg0: i32) -> (i32, i32) {
    %c0_i32 = arith.constant 0 : i32
    %c0_i32_0 = arith.constant 0 : i32
    %c0_i32_1 = arith.constant 0 : i32
    return %c0_i32, %c0_i32_0 : i32, i32
  }
  func.func @transform_11(%arg0: i32) -> (i32, i32) {
    %c0_i32 = arith.constant 0 : i32
    %c0_i32_0 = arith.constant 0 : i32
    %c0_i32_1 = arith.constant 0 : i32
    return %c0_i32, %c0_i32_0 : i32, i32
  }
  func.func @transform_12(%arg0: i32) -> (i32, i32) {
    %c0_i32 = arith.constant 0 : i32
    %c0_i32_0 = arith.constant 0 : i32
    %c0_i32_1 = arith.constant 0 : i32
    return %c0_i32, %c0_i32_0 : i32, i32
  }
  func.func @transform_13(%arg0: i32) -> (i32, i32) {
    %c0_i32 = arith.constant 0 : i32
    %c0_i32_0 = arith.constant 0 : i32
    %c0_i32_1 = arith.constant 0 : i32
    return %c0_i32, %c0_i32_0 : i32, i32
  }
  func.func @transform_14(%arg0: i32) -> (i32, i32) {
    %c0_i32 = arith.constant 0 : i32
    %c0_i32_0 = arith.constant 0 : i32
    %c0_i32_1 = arith.constant 0 : i32
    return %c0_i32, %c0_i32_0 : i32, i32
  }
  func.func @transform_15(%arg0: i32) -> (i32, i32) {
    %c0_i32 = arith.constant 0 : i32
    %c0_i32_0 = arith.constant 0 : i32
    %c0_i32_1 = arith.constant 0 : i32
    return %c0_i32, %c0_i32_0 : i32, i32
  }
  func.func @transform_16(%arg0: i32) -> (i32, i32) {
    %c0_i32 = arith.constant 0 : i32
    %c0_i32_0 = arith.constant 0 : i32
    %c0_i32_1 = arith.constant 0 : i32
    return %c0_i32, %c0_i32_0 : i32, i32
  }
  func.func @transform_17(%arg0: i32) -> (i32, i32) {
    %c0_i32 = arith.constant 0 : i32
    %c0_i32_0 = arith.constant 0 : i32
    %c0_i32_1 = arith.constant 0 : i32
    return %c0_i32, %c0_i32_0 : i32, i32
  }
  func.func @transform_18(%arg0: i32) -> (i32, i32) {
    %c0_i32 = arith.constant 0 : i32
    %c0_i32_0 = arith.constant 0 : i32
    %c0_i32_1 = arith.constant 0 : i32
    return %c0_i32, %c0_i32_0 : i32, i32
  }
  func.func @transform_19(%arg0: i32) -> (i32, i32) {
    %c0_i32 = arith.constant 0 : i32
    %c0_i32_0 = arith.constant 0 : i32
    %c0_i32_1 = arith.constant 0 : i32
    return %c0_i32, %c0_i32_0 : i32, i32
  }
  func.func @transform_20(%arg0: i32) -> (i32, i32) {
    %c0_i32 = arith.constant 0 : i32
    %c0_i32_0 = arith.constant 0 : i32
    %c0_i32_1 = arith.constant 0 : i32
    return %c0_i32, %c0_i32_0 : i32, i32
  }
  func.func @transform_21(%arg0: i32) -> (i32, i32) {
    %c0_i32 = arith.constant 0 : i32
    %c0_i32_0 = arith.constant 0 : i32
    %c0_i32_1 = arith.constant 0 : i32
    return %c0_i32, %c0_i32_0 : i32, i32
  }
  func.func @transform_22(%arg0: i32) -> (i32, i32) {
    %c0_i32 = arith.constant 0 : i32
    %c0_i32_0 = arith.constant 0 : i32
    %c0_i32_1 = arith.constant 0 : i32
    return %c0_i32, %c0_i32_0 : i32, i32
  }
  func.func @transform_23(%arg0: i32) -> (i32, i32) {
    %c0_i32 = arith.constant 0 : i32
    %c0_i32_0 = arith.constant 0 : i32
    %c0_i32_1 = arith.constant 0 : i32
    return %c0_i32, %c0_i32_0 : i32, i32
  }
  func.func @transform_24(%arg0: i32) -> (i32, i32) {
    %c0_i32 = arith.constant 0 : i32
    %c0_i32_0 = arith.constant 0 : i32
    %c0_i32_1 = arith.constant 0 : i32
    return %c0_i32, %c0_i32_0 : i32, i32
  }
  func.func @transform_25(%arg0: i32) -> (i32, i32, i32) {
    %c0_i32 = arith.constant 0 : i32
    %c0_i32_0 = arith.constant 0 : i32
    %c0_i32_1 = arith.constant 0 : i32
    return %arg0, %c0_i32, %c0_i32_0 : i32, i32, i32
  }
  func.func @transform_26(%arg0: i32) -> (i32, i32, i32) {
    %c0_i32 = arith.constant 0 : i32
    %c0_i32_0 = arith.constant 0 : i32
    %c0_i32_1 = arith.constant 0 : i32
    return %arg0, %c0_i32, %c0_i32_0 : i32, i32, i32
  }
}

module attributes {stable_mosaic.version = 11 : i64} {
  func.func @_conformer_block_kernel(%arg0: i32, %arg1: memref<1x8x128xf32, #tpu.memory_space<vmem>>, %arg2: memref<8x128xf32, #tpu.memory_space<vmem>>, %arg3: memref<5x128xf32, #tpu.memory_space<vmem>>, %arg4: memref<5x128xf32, #tpu.memory_space<vmem>>, %arg5: memref<128x256xbf16, #tpu.memory_space<vmem>>, %arg6: memref<1x256xf32, #tpu.memory_space<vmem>>, %arg7: memref<256x128xbf16, #tpu.memory_space<vmem>>, %arg8: memref<1x128xf32, #tpu.memory_space<vmem>>, %arg9: memref<128x384xbf16, #tpu.memory_space<vmem>>, %arg10: memref<1x384xf32, #tpu.memory_space<vmem>>, %arg11: memref<128x128xbf16, #tpu.memory_space<vmem>>, %arg12: memref<8x32xf32, #tpu.memory_space<vmem>>, %arg13: memref<128x128xbf16, #tpu.memory_space<vmem>>, %arg14: memref<1x128xf32, #tpu.memory_space<vmem>>, %arg15: memref<128x256xbf16, #tpu.memory_space<vmem>>, %arg16: memref<1x256xf32, #tpu.memory_space<vmem>>, %arg17: memref<15x128xf32, #tpu.memory_space<vmem>>, %arg18: memref<1x128xf32, #tpu.memory_space<vmem>>, %arg19: memref<1x128xf32, #tpu.memory_space<vmem>>, %arg20: memref<128x128xbf16, #tpu.memory_space<vmem>>, %arg21: memref<1x128xf32, #tpu.memory_space<vmem>>, %arg22: memref<128x256xbf16, #tpu.memory_space<vmem>>, %arg23: memref<1x256xf32, #tpu.memory_space<vmem>>, %arg24: memref<256x128xbf16, #tpu.memory_space<vmem>>, %arg25: memref<1x128xf32, #tpu.memory_space<vmem>>, %arg26: memref<1x8x128xf32, #tpu.memory_space<vmem>>, %arg27: memref<1x1x128xf32, #tpu.memory_space<vmem>>) attributes {dimension_semantics = [#tpu.dimension_semantics<parallel>], iteration_bounds = array<i64: 2>, scalar_prefetch = 0 : i64, scratch_operands = 0 : i64, tpu.core_type = #tpu.core_type<tc>, window_params = [{transform_indices = @transform_0, window_bounds = array<i64: 1, 8, 128>}, {pipeline_mode = #tpu.pipeline_mode<synchronous>, transform_indices = @transform_1, window_bounds = array<i64: 8, 128>}, {pipeline_mode = #tpu.pipeline_mode<synchronous>, transform_indices = @transform_2, window_bounds = array<i64: 5, 128>}, {pipeline_mode = #tpu.pipeline_mode<synchronous>, transform_indices = @transform_3, window_bounds = array<i64: 5, 128>}, {pipeline_mode = #tpu.pipeline_mode<synchronous>, transform_indices = @transform_4, window_bounds = array<i64: 128, 256>}, {pipeline_mode = #tpu.pipeline_mode<synchronous>, transform_indices = @transform_5, window_bounds = array<i64: 1, 256>}, {pipeline_mode = #tpu.pipeline_mode<synchronous>, transform_indices = @transform_6, window_bounds = array<i64: 256, 128>}, {pipeline_mode = #tpu.pipeline_mode<synchronous>, transform_indices = @transform_7, window_bounds = array<i64: 1, 128>}, {pipeline_mode = #tpu.pipeline_mode<synchronous>, transform_indices = @transform_8, window_bounds = array<i64: 128, 384>}, {pipeline_mode = #tpu.pipeline_mode<synchronous>, transform_indices = @transform_9, window_bounds = array<i64: 1, 384>}, {pipeline_mode = #tpu.pipeline_mode<synchronous>, transform_indices = @transform_10, window_bounds = array<i64: 128, 128>}, {pipeline_mode = #tpu.pipeline_mode<synchronous>, transform_indices = @transform_11, window_bounds = array<i64: 8, 32>}, {pipeline_mode = #tpu.pipeline_mode<synchronous>, transform_indices = @transform_12, window_bounds = array<i64: 128, 128>}, {pipeline_mode = #tpu.pipeline_mode<synchronous>, transform_indices = @transform_13, window_bounds = array<i64: 1, 128>}, {pipeline_mode = #tpu.pipeline_mode<synchronous>, transform_indices = @transform_14, window_bounds = array<i64: 128, 256>}, {pipeline_mode = #tpu.pipeline_mode<synchronous>, transform_indices = @transform_15, window_bounds = array<i64: 1, 256>}, {pipeline_mode = #tpu.pipeline_mode<synchronous>, transform_indices = @transform_16, window_bounds = array<i64: 15, 128>}, {pipeline_mode = #tpu.pipeline_mode<synchronous>, transform_indices = @transform_17, window_bounds = array<i64: 1, 128>}, {pipeline_mode = #tpu.pipeline_mode<synchronous>, transform_indices = @transform_18, window_bounds = array<i64: 1, 128>}, {pipeline_mode = #tpu.pipeline_mode<synchronous>, transform_indices = @transform_19, window_bounds = array<i64: 128, 128>}, {pipeline_mode = #tpu.pipeline_mode<synchronous>, transform_indices = @transform_20, window_bounds = array<i64: 1, 128>}, {pipeline_mode = #tpu.pipeline_mode<synchronous>, transform_indices = @transform_21, window_bounds = array<i64: 128, 256>}, {pipeline_mode = #tpu.pipeline_mode<synchronous>, transform_indices = @transform_22, window_bounds = array<i64: 1, 256>}, {pipeline_mode = #tpu.pipeline_mode<synchronous>, transform_indices = @transform_23, window_bounds = array<i64: 256, 128>}, {pipeline_mode = #tpu.pipeline_mode<synchronous>, transform_indices = @transform_24, window_bounds = array<i64: 1, 128>}, {transform_indices = @transform_25, window_bounds = array<i64: 1, 8, 128>}, {transform_indices = @transform_26, window_bounds = array<i64: 1, 1, 128>}]} {
    %c0 = arith.constant 0 : index
    %c0_0 = arith.constant 0 : index
    %c0_1 = arith.constant 0 : index
    %0 = vector.load %arg1[%c0, %c0_0, %c0_1] : memref<1x8x128xf32, #tpu.memory_space<vmem>>, vector<1x8x128xf32>
    %1 = vector.shape_cast %0 : vector<1x8x128xf32> to vector<8x128xf32>
    %c0_2 = arith.constant 0 : index
    %c0_3 = arith.constant 0 : index
    %2 = vector.load %arg3[%c0_2, %c0_3] : memref<5x128xf32, #tpu.memory_space<vmem>>, vector<1x128xf32>
    %3 = vector.shape_cast %2 : vector<1x128xf32> to vector<128xf32>
    %c0_4 = arith.constant 0 : index
    %c0_5 = arith.constant 0 : index
    %4 = vector.load %arg4[%c0_4, %c0_5] : memref<5x128xf32, #tpu.memory_space<vmem>>, vector<1x128xf32>
    %5 = vector.shape_cast %4 : vector<1x128xf32> to vector<128xf32>
    %cst = arith.constant dense<0.000000e+00> : vector<8xf32>
    %6 = vector.multi_reduction <add>, %1, %cst [1] : vector<8x128xf32> to vector<8xf32>
    %7 = vector.shape_cast %6 : vector<8xf32> to vector<8x1xf32>
    %cst_6 = arith.constant 1.280000e+02 : f32
    %8 = vector.broadcast %cst_6 : f32 to vector<8x1xf32>
    %9 = arith.divf %7, %8 : vector<8x1xf32>
    %10 = vector.broadcast %9 : vector<8x1xf32> to vector<8x128xf32>
    %11 = arith.subf %1, %10 : vector<8x128xf32>
    %12 = arith.mulf %11, %11 : vector<8x128xf32>
    %cst_7 = arith.constant dense<0.000000e+00> : vector<8xf32>
    %13 = vector.multi_reduction <add>, %12, %cst_7 [1] : vector<8x128xf32> to vector<8xf32>
    %14 = vector.shape_cast %13 : vector<8xf32> to vector<8x1xf32>
    %cst_8 = arith.constant 1.280000e+02 : f32
    %15 = vector.broadcast %cst_8 : f32 to vector<8x1xf32>
    %16 = arith.divf %14, %15 : vector<8x1xf32>
    %17 = vector.broadcast %9 : vector<8x1xf32> to vector<8x128xf32>
    %18 = arith.subf %1, %17 : vector<8x128xf32>
    %cst_9 = arith.constant 9.99999974E-6 : f32
    %19 = vector.broadcast %cst_9 : f32 to vector<8x1xf32>
    %20 = arith.addf %16, %19 : vector<8x1xf32>
    %21 = math.rsqrt %20 : vector<8x1xf32>
    %22 = vector.broadcast %21 : vector<8x1xf32> to vector<8x128xf32>
    %23 = arith.mulf %18, %22 : vector<8x128xf32>
    %24 = vector.shape_cast %3 : vector<128xf32> to vector<1x128xf32>
    %25 = vector.broadcast %24 : vector<1x128xf32> to vector<8x128xf32>
    %26 = arith.mulf %23, %25 : vector<8x128xf32>
    %27 = vector.shape_cast %5 : vector<128xf32> to vector<1x128xf32>
    %28 = vector.broadcast %27 : vector<1x128xf32> to vector<8x128xf32>
    %29 = arith.addf %26, %28 : vector<8x128xf32>
    %30 = arith.truncf %29 : vector<8x128xf32> to vector<8x128xbf16>
    %c0_10 = arith.constant 0 : index
    %c0_11 = arith.constant 0 : index
    %31 = vector.load %arg5[%c0_10, %c0_11] : memref<128x256xbf16, #tpu.memory_space<vmem>>, vector<128x256xbf16>
    %cst_12 = arith.constant dense<0.000000e+00> : vector<8x256xf32>
    %32 = tpu.matmul %30, %31, %cst_12 {dimension_numbers = #tpu.dot_dimension_numbers<[1], [0], [0], [1], [0, 0, 1, 1], [], []>} : vector<8x128xbf16>, vector<128x256xbf16>, vector<8x256xf32> -> vector<8x256xf32>
    %c0_13 = arith.constant 0 : index
    %c0_14 = arith.constant 0 : index
    %33 = vector.load %arg6[%c0_13, %c0_14] : memref<1x256xf32, #tpu.memory_space<vmem>>, vector<1x256xf32>
    %34 = vector.broadcast %33 : vector<1x256xf32> to vector<8x256xf32>
    %35 = arith.addf %32, %34 : vector<8x256xf32>
    %36 = arith.negf %35 : vector<8x256xf32>
    %37 = math.exp %36 : vector<8x256xf32>
    %cst_15 = arith.constant 1.000000e+00 : f32
    %38 = vector.broadcast %cst_15 : f32 to vector<8x256xf32>
    %39 = arith.addf %38, %37 : vector<8x256xf32>
    %40 = arith.divf %38, %39 : vector<8x256xf32>
    %41 = arith.mulf %35, %40 : vector<8x256xf32>
    %42 = arith.truncf %41 : vector<8x256xf32> to vector<8x256xbf16>
    %c0_16 = arith.constant 0 : index
    %c0_17 = arith.constant 0 : index
    %43 = vector.load %arg7[%c0_16, %c0_17] : memref<256x128xbf16, #tpu.memory_space<vmem>>, vector<256x128xbf16>
    %cst_18 = arith.constant dense<0.000000e+00> : vector<8x128xf32>
    %44 = tpu.matmul %42, %43, %cst_18 {dimension_numbers = #tpu.dot_dimension_numbers<[1], [0], [0], [1], [0, 0, 1, 1], [], []>} : vector<8x256xbf16>, vector<256x128xbf16>, vector<8x128xf32> -> vector<8x128xf32>
    %c0_19 = arith.constant 0 : index
    %c0_20 = arith.constant 0 : index
    %45 = vector.load %arg8[%c0_19, %c0_20] : memref<1x128xf32, #tpu.memory_space<vmem>>, vector<1x128xf32>
    %46 = vector.broadcast %45 : vector<1x128xf32> to vector<8x128xf32>
    %47 = arith.addf %44, %46 : vector<8x128xf32>
    %cst_21 = arith.constant 5.000000e-01 : f32
    %48 = vector.broadcast %cst_21 : f32 to vector<8x128xf32>
    %49 = arith.mulf %48, %47 : vector<8x128xf32>
    %50 = arith.addf %1, %49 : vector<8x128xf32>
    %c1 = arith.constant 1 : index
    %c0_22 = arith.constant 0 : index
    %51 = vector.load %arg3[%c1, %c0_22] : memref<5x128xf32, #tpu.memory_space<vmem>>, vector<1x128xf32>
    %52 = vector.shape_cast %51 : vector<1x128xf32> to vector<128xf32>
    %c1_23 = arith.constant 1 : index
    %c0_24 = arith.constant 0 : index
    %53 = vector.load %arg4[%c1_23, %c0_24] : memref<5x128xf32, #tpu.memory_space<vmem>>, vector<1x128xf32>
    %54 = vector.shape_cast %53 : vector<1x128xf32> to vector<128xf32>
    %cst_25 = arith.constant dense<0.000000e+00> : vector<8xf32>
    %55 = vector.multi_reduction <add>, %50, %cst_25 [1] : vector<8x128xf32> to vector<8xf32>
    %56 = vector.shape_cast %55 : vector<8xf32> to vector<8x1xf32>
    %cst_26 = arith.constant 1.280000e+02 : f32
    %57 = vector.broadcast %cst_26 : f32 to vector<8x1xf32>
    %58 = arith.divf %56, %57 : vector<8x1xf32>
    %59 = vector.broadcast %58 : vector<8x1xf32> to vector<8x128xf32>
    %60 = arith.subf %50, %59 : vector<8x128xf32>
    %61 = arith.mulf %60, %60 : vector<8x128xf32>
    %cst_27 = arith.constant dense<0.000000e+00> : vector<8xf32>
    %62 = vector.multi_reduction <add>, %61, %cst_27 [1] : vector<8x128xf32> to vector<8xf32>
    %63 = vector.shape_cast %62 : vector<8xf32> to vector<8x1xf32>
    %cst_28 = arith.constant 1.280000e+02 : f32
    %64 = vector.broadcast %cst_28 : f32 to vector<8x1xf32>
    %65 = arith.divf %63, %64 : vector<8x1xf32>
    %66 = vector.broadcast %58 : vector<8x1xf32> to vector<8x128xf32>
    %67 = arith.subf %50, %66 : vector<8x128xf32>
    %cst_29 = arith.constant 9.99999974E-6 : f32
    %68 = vector.broadcast %cst_29 : f32 to vector<8x1xf32>
    %69 = arith.addf %65, %68 : vector<8x1xf32>
    %70 = math.rsqrt %69 : vector<8x1xf32>
    %71 = vector.broadcast %70 : vector<8x1xf32> to vector<8x128xf32>
    %72 = arith.mulf %67, %71 : vector<8x128xf32>
    %73 = vector.shape_cast %52 : vector<128xf32> to vector<1x128xf32>
    %74 = vector.broadcast %73 : vector<1x128xf32> to vector<8x128xf32>
    %75 = arith.mulf %72, %74 : vector<8x128xf32>
    %76 = vector.shape_cast %54 : vector<128xf32> to vector<1x128xf32>
    %77 = vector.broadcast %76 : vector<1x128xf32> to vector<8x128xf32>
    %78 = arith.addf %75, %77 : vector<8x128xf32>
    %79 = arith.truncf %78 : vector<8x128xf32> to vector<8x128xbf16>
    %c0_30 = arith.constant 0 : index
    %c0_31 = arith.constant 0 : index
    %80 = vector.load %arg9[%c0_30, %c0_31] : memref<128x384xbf16, #tpu.memory_space<vmem>>, vector<128x384xbf16>
    %cst_32 = arith.constant dense<0.000000e+00> : vector<8x384xf32>
    %81 = tpu.matmul %79, %80, %cst_32 {dimension_numbers = #tpu.dot_dimension_numbers<[1], [0], [0], [1], [0, 0, 1, 1], [], []>} : vector<8x128xbf16>, vector<128x384xbf16>, vector<8x384xf32> -> vector<8x384xf32>
    %c0_33 = arith.constant 0 : index
    %c0_34 = arith.constant 0 : index
    %82 = vector.load %arg10[%c0_33, %c0_34] : memref<1x384xf32, #tpu.memory_space<vmem>>, vector<1x384xf32>
    %83 = vector.broadcast %82 : vector<1x384xf32> to vector<8x384xf32>
    %84 = arith.addf %81, %83 : vector<8x384xf32>
    %c0_35 = arith.constant 0 : index
    %c0_36 = arith.constant 0 : index
    %85 = vector.load %arg2[%c0_35, %c0_36] : memref<8x128xf32, #tpu.memory_space<vmem>>, vector<8x128xf32>
    %86 = arith.truncf %85 : vector<8x128xf32> to vector<8x128xbf16>
    %c0_37 = arith.constant 0 : index
    %c0_38 = arith.constant 0 : index
    %87 = vector.load %arg11[%c0_37, %c0_38] : memref<128x128xbf16, #tpu.memory_space<vmem>>, vector<128x128xbf16>
    %cst_39 = arith.constant dense<0.000000e+00> : vector<8x128xf32>
    %88 = tpu.matmul %86, %87, %cst_39 {dimension_numbers = #tpu.dot_dimension_numbers<[1], [0], [0], [1], [0, 0, 1, 1], [], []>} : vector<8x128xbf16>, vector<128x128xbf16>, vector<8x128xf32> -> vector<8x128xf32>
    %89 = tpu.iota {dimensions = array<i32: 0>} : vector<8x8xi32>
    %90 = tpu.iota {dimensions = array<i32: 1>} : vector<8x8xi32>
    %c7_i32 = arith.constant 7 : i32
    %91 = vector.broadcast %c7_i32 : i32 to vector<8x8xi32>
    %92 = arith.cmpi eq, %89, %91 : vector<8x8xi32>
    %c1_i32 = arith.constant 1 : i32
    %93 = vector.broadcast %c1_i32 : i32 to vector<8x8xi32>
    %94 = arith.addi %89, %93 : vector<8x8xi32>
    %c0_i32 = arith.constant 0 : i32
    %95 = vector.broadcast %c0_i32 : i32 to vector<8x8xi32>
    %96 = arith.select %92, %95, %94 : vector<8x8xi1>, vector<8x8xi32>
    %c0_i32_40 = arith.constant 0 : i32
    %97 = vector.broadcast %c0_i32_40 : i32 to vector<8x8xi32>
    %98 = arith.shrsi %96, %97 : vector<8x8xi32>
    %c1_i32_41 = arith.constant 1 : i32
    %99 = vector.broadcast %c1_i32_41 : i32 to vector<8x8xi32>
    %100 = arith.andi %98, %99 : vector<8x8xi32>
    %c1_i32_42 = arith.constant 1 : i32
    %101 = vector.broadcast %c1_i32_42 : i32 to vector<8x8xi32>
    %102 = arith.cmpi eq, %100, %101 : vector<8x8xi32>
    %c1_i32_43 = arith.constant 1 : i32
    %103 = vector.broadcast %c1_i32_43 : i32 to vector<8x8xi32>
    %104 = arith.shrsi %96, %103 : vector<8x8xi32>
    %c1_i32_44 = arith.constant 1 : i32
    %105 = vector.broadcast %c1_i32_44 : i32 to vector<8x8xi32>
    %106 = arith.andi %104, %105 : vector<8x8xi32>
    %c1_i32_45 = arith.constant 1 : i32
    %107 = vector.broadcast %c1_i32_45 : i32 to vector<8x8xi32>
    %108 = arith.cmpi eq, %106, %107 : vector<8x8xi32>
    %c2_i32 = arith.constant 2 : i32
    %109 = vector.broadcast %c2_i32 : i32 to vector<8x8xi32>
    %110 = arith.shrsi %96, %109 : vector<8x8xi32>
    %c1_i32_46 = arith.constant 1 : i32
    %111 = vector.broadcast %c1_i32_46 : i32 to vector<8x8xi32>
    %112 = arith.andi %110, %111 : vector<8x8xi32>
    %c1_i32_47 = arith.constant 1 : i32
    %113 = vector.broadcast %c1_i32_47 : i32 to vector<8x8xi32>
    %114 = arith.cmpi eq, %112, %113 : vector<8x8xi32>
    %115 = vector.extract_strided_slice %84 {offsets = [0, 0], sizes = [8, 32], strides = [1, 1]} : vector<8x384xf32> to vector<8x32xf32>
    %116 = vector.extract_strided_slice %84 {offsets = [0, 128], sizes = [8, 32], strides = [1, 1]} : vector<8x384xf32> to vector<8x32xf32>
    %117 = vector.extract_strided_slice %84 {offsets = [0, 256], sizes = [8, 32], strides = [1, 1]} : vector<8x384xf32> to vector<8x32xf32>
    %118 = vector.extract_strided_slice %88 {offsets = [0, 0], sizes = [8, 32], strides = [1, 1]} : vector<8x128xf32> to vector<8x32xf32>
    %c0_48 = arith.constant 0 : index
    %c0_49 = arith.constant 0 : index
    %119 = vector.load %arg12[%c0_48, %c0_49] : memref<8x32xf32, #tpu.memory_space<vmem>>, vector<1x32xf32>
    %120 = vector.shape_cast %119 : vector<1x32xf32> to vector<32xf32>
    %c4 = arith.constant 4 : index
    %c0_50 = arith.constant 0 : index
    %121 = vector.load %arg12[%c4, %c0_50] : memref<8x32xf32, #tpu.memory_space<vmem>>, vector<1x32xf32>
    %122 = vector.shape_cast %121 : vector<1x32xf32> to vector<32xf32>
    %123 = vector.shape_cast %120 : vector<32xf32> to vector<1x32xf32>
    %124 = vector.broadcast %123 : vector<1x32xf32> to vector<8x32xf32>
    %125 = arith.addf %115, %124 : vector<8x32xf32>
    %126 = arith.truncf %125 : vector<8x32xf32> to vector<8x32xbf16>
    %127 = arith.truncf %116 : vector<8x32xf32> to vector<8x32xbf16>
    %cst_51 = arith.constant dense<0.000000e+00> : vector<8x8xf32>
    %128 = tpu.matmul %126, %127, %cst_51 {dimension_numbers = #tpu.dot_dimension_numbers<[1], [1], [0], [0], [0, 0, 1, 0], [], []>} : vector<8x32xbf16>, vector<8x32xbf16>, vector<8x8xf32> -> vector<8x8xf32>
    %129 = vector.shape_cast %122 : vector<32xf32> to vector<1x32xf32>
    %130 = vector.broadcast %129 : vector<1x32xf32> to vector<8x32xf32>
    %131 = arith.addf %115, %130 : vector<8x32xf32>
    %132 = arith.truncf %131 : vector<8x32xf32> to vector<8x32xbf16>
    %133 = arith.truncf %118 : vector<8x32xf32> to vector<8x32xbf16>
    %cst_52 = arith.constant dense<0.000000e+00> : vector<8x8xf32>
    %134 = tpu.matmul %132, %133, %cst_52 {dimension_numbers = #tpu.dot_dimension_numbers<[1], [1], [0], [0], [0, 0, 1, 0], [], []>} : vector<8x32xbf16>, vector<8x32xbf16>, vector<8x8xf32> -> vector<8x8xf32>
    %135 = vector.extract_strided_slice %134 {offsets = [0, 7], sizes = [8, 1], strides = [1, 1]} : vector<8x8xf32> to vector<8x1xf32>
    %136 = vector.extract_strided_slice %134 {offsets = [0, 0], sizes = [8, 7], strides = [1, 1]} : vector<8x8xf32> to vector<8x7xf32>
    %137 = tpu.concatenate %135, %136 in 1 : vector<8x1xf32>, vector<8x7xf32> -> vector<8x8xf32>
    %138 = arith.select %102, %137, %134 : vector<8x8xi1>, vector<8x8xf32>
    %139 = vector.extract_strided_slice %138 {offsets = [0, 6], sizes = [8, 2], strides = [1, 1]} : vector<8x8xf32> to vector<8x2xf32>
    %140 = vector.extract_strided_slice %138 {offsets = [0, 0], sizes = [8, 6], strides = [1, 1]} : vector<8x8xf32> to vector<8x6xf32>
    %141 = tpu.concatenate %139, %140 in 1 : vector<8x2xf32>, vector<8x6xf32> -> vector<8x8xf32>
    %142 = arith.select %108, %141, %138 : vector<8x8xi1>, vector<8x8xf32>
    %143 = vector.extract_strided_slice %142 {offsets = [0, 4], sizes = [8, 4], strides = [1, 1]} : vector<8x8xf32> to vector<8x4xf32>
    %144 = vector.extract_strided_slice %142 {offsets = [0, 0], sizes = [8, 4], strides = [1, 1]} : vector<8x8xf32> to vector<8x4xf32>
    %145 = tpu.concatenate %143, %144 in 1 : vector<8x4xf32>, vector<8x4xf32> -> vector<8x8xf32>
    %146 = arith.select %114, %145, %142 : vector<8x8xi1>, vector<8x8xf32>
    %147 = vector.extract_strided_slice %146 {offsets = [1, 0], sizes = [7, 8], strides = [1, 1]} : vector<8x8xf32> to vector<7x8xf32>
    %148 = vector.extract_strided_slice %146 {offsets = [0, 0], sizes = [1, 8], strides = [1, 1]} : vector<8x8xf32> to vector<1x8xf32>
    %149 = tpu.concatenate %147, %148 in 0 : vector<7x8xf32>, vector<1x8xf32> -> vector<8x8xf32>
    %150 = arith.cmpi sle, %90, %89 : vector<8x8xi32>
    %c1_i32_53 = arith.constant 1 : i32
    %151 = vector.broadcast %c1_i32_53 : i32 to vector<8x8xi32>
    %152 = arith.addi %89, %151 : vector<8x8xi32>
    %153 = arith.cmpi eq, %90, %152 : vector<8x8xi32>
    %cst_54 = arith.constant 0.000000e+00 : f32
    %154 = vector.broadcast %cst_54 : f32 to vector<8x8xf32>
    %155 = arith.select %153, %154, %149 : vector<8x8xi1>, vector<8x8xf32>
    %156 = arith.select %150, %146, %155 : vector<8x8xi1>, vector<8x8xf32>
    %157 = arith.addf %128, %156 : vector<8x8xf32>
    %cst_55 = arith.constant 0.0883883461 : f32
    %158 = vector.broadcast %cst_55 : f32 to vector<8x8xf32>
    %159 = arith.mulf %157, %158 : vector<8x8xf32>
    %cst_56 = arith.constant dense<0xFF800000> : vector<8xf32>
    %160 = vector.multi_reduction <maximumf>, %159, %cst_56 [1] : vector<8x8xf32> to vector<8xf32>
    %161 = vector.shape_cast %160 : vector<8xf32> to vector<8x1xf32>
    %162 = vector.broadcast %161 : vector<8x1xf32> to vector<8x8xf32>
    %163 = arith.subf %159, %162 : vector<8x8xf32>
    %164 = math.exp %163 : vector<8x8xf32>
    %cst_57 = arith.constant dense<0.000000e+00> : vector<8xf32>
    %165 = vector.multi_reduction <add>, %164, %cst_57 [1] : vector<8x8xf32> to vector<8xf32>
    %166 = vector.shape_cast %165 : vector<8xf32> to vector<8x1xf32>
    %167 = tpu.reciprocal %166 {approx = true} : vector<8x1xf32> -> vector<8x1xf32>
    %168 = vector.broadcast %167 : vector<8x1xf32> to vector<8x8xf32>
    %169 = arith.mulf %164, %168 : vector<8x8xf32>
    %170 = arith.truncf %169 : vector<8x8xf32> to vector<8x8xbf16>
    %171 = arith.truncf %117 : vector<8x32xf32> to vector<8x32xbf16>
    %cst_58 = arith.constant dense<0.000000e+00> : vector<8x32xf32>
    %172 = tpu.matmul %170, %171, %cst_58 {dimension_numbers = #tpu.dot_dimension_numbers<[1], [0], [0], [1], [0, 0, 1, 1], [], []>} : vector<8x8xbf16>, vector<8x32xbf16>, vector<8x32xf32> -> vector<8x32xf32>
    %173 = vector.extract_strided_slice %84 {offsets = [0, 32], sizes = [8, 32], strides = [1, 1]} : vector<8x384xf32> to vector<8x32xf32>
    %174 = vector.extract_strided_slice %84 {offsets = [0, 160], sizes = [8, 32], strides = [1, 1]} : vector<8x384xf32> to vector<8x32xf32>
    %175 = vector.extract_strided_slice %84 {offsets = [0, 288], sizes = [8, 32], strides = [1, 1]} : vector<8x384xf32> to vector<8x32xf32>
    %176 = vector.extract_strided_slice %88 {offsets = [0, 32], sizes = [8, 32], strides = [1, 1]} : vector<8x128xf32> to vector<8x32xf32>
    %c1_59 = arith.constant 1 : index
    %c0_60 = arith.constant 0 : index
    %177 = vector.load %arg12[%c1_59, %c0_60] : memref<8x32xf32, #tpu.memory_space<vmem>>, vector<1x32xf32>
    %178 = vector.shape_cast %177 : vector<1x32xf32> to vector<32xf32>
    %c5 = arith.constant 5 : index
    %c0_61 = arith.constant 0 : index
    %179 = vector.load %arg12[%c5, %c0_61] : memref<8x32xf32, #tpu.memory_space<vmem>>, vector<1x32xf32>
    %180 = vector.shape_cast %179 : vector<1x32xf32> to vector<32xf32>
    %181 = vector.shape_cast %178 : vector<32xf32> to vector<1x32xf32>
    %182 = vector.broadcast %181 : vector<1x32xf32> to vector<8x32xf32>
    %183 = arith.addf %173, %182 : vector<8x32xf32>
    %184 = arith.truncf %183 : vector<8x32xf32> to vector<8x32xbf16>
    %185 = arith.truncf %174 : vector<8x32xf32> to vector<8x32xbf16>
    %cst_62 = arith.constant dense<0.000000e+00> : vector<8x8xf32>
    %186 = tpu.matmul %184, %185, %cst_62 {dimension_numbers = #tpu.dot_dimension_numbers<[1], [1], [0], [0], [0, 0, 1, 0], [], []>} : vector<8x32xbf16>, vector<8x32xbf16>, vector<8x8xf32> -> vector<8x8xf32>
    %187 = vector.shape_cast %180 : vector<32xf32> to vector<1x32xf32>
    %188 = vector.broadcast %187 : vector<1x32xf32> to vector<8x32xf32>
    %189 = arith.addf %173, %188 : vector<8x32xf32>
    %190 = arith.truncf %189 : vector<8x32xf32> to vector<8x32xbf16>
    %191 = arith.truncf %176 : vector<8x32xf32> to vector<8x32xbf16>
    %cst_63 = arith.constant dense<0.000000e+00> : vector<8x8xf32>
    %192 = tpu.matmul %190, %191, %cst_63 {dimension_numbers = #tpu.dot_dimension_numbers<[1], [1], [0], [0], [0, 0, 1, 0], [], []>} : vector<8x32xbf16>, vector<8x32xbf16>, vector<8x8xf32> -> vector<8x8xf32>
    %193 = vector.extract_strided_slice %192 {offsets = [0, 7], sizes = [8, 1], strides = [1, 1]} : vector<8x8xf32> to vector<8x1xf32>
    %194 = vector.extract_strided_slice %192 {offsets = [0, 0], sizes = [8, 7], strides = [1, 1]} : vector<8x8xf32> to vector<8x7xf32>
    %195 = tpu.concatenate %193, %194 in 1 : vector<8x1xf32>, vector<8x7xf32> -> vector<8x8xf32>
    %196 = arith.select %102, %195, %192 : vector<8x8xi1>, vector<8x8xf32>
    %197 = vector.extract_strided_slice %196 {offsets = [0, 6], sizes = [8, 2], strides = [1, 1]} : vector<8x8xf32> to vector<8x2xf32>
    %198 = vector.extract_strided_slice %196 {offsets = [0, 0], sizes = [8, 6], strides = [1, 1]} : vector<8x8xf32> to vector<8x6xf32>
    %199 = tpu.concatenate %197, %198 in 1 : vector<8x2xf32>, vector<8x6xf32> -> vector<8x8xf32>
    %200 = arith.select %108, %199, %196 : vector<8x8xi1>, vector<8x8xf32>
    %201 = vector.extract_strided_slice %200 {offsets = [0, 4], sizes = [8, 4], strides = [1, 1]} : vector<8x8xf32> to vector<8x4xf32>
    %202 = vector.extract_strided_slice %200 {offsets = [0, 0], sizes = [8, 4], strides = [1, 1]} : vector<8x8xf32> to vector<8x4xf32>
    %203 = tpu.concatenate %201, %202 in 1 : vector<8x4xf32>, vector<8x4xf32> -> vector<8x8xf32>
    %204 = arith.select %114, %203, %200 : vector<8x8xi1>, vector<8x8xf32>
    %205 = vector.extract_strided_slice %204 {offsets = [1, 0], sizes = [7, 8], strides = [1, 1]} : vector<8x8xf32> to vector<7x8xf32>
    %206 = vector.extract_strided_slice %204 {offsets = [0, 0], sizes = [1, 8], strides = [1, 1]} : vector<8x8xf32> to vector<1x8xf32>
    %207 = tpu.concatenate %205, %206 in 0 : vector<7x8xf32>, vector<1x8xf32> -> vector<8x8xf32>
    %208 = arith.cmpi sle, %90, %89 : vector<8x8xi32>
    %c1_i32_64 = arith.constant 1 : i32
    %209 = vector.broadcast %c1_i32_64 : i32 to vector<8x8xi32>
    %210 = arith.addi %89, %209 : vector<8x8xi32>
    %211 = arith.cmpi eq, %90, %210 : vector<8x8xi32>
    %cst_65 = arith.constant 0.000000e+00 : f32
    %212 = vector.broadcast %cst_65 : f32 to vector<8x8xf32>
    %213 = arith.select %211, %212, %207 : vector<8x8xi1>, vector<8x8xf32>
    %214 = arith.select %208, %204, %213 : vector<8x8xi1>, vector<8x8xf32>
    %215 = arith.addf %186, %214 : vector<8x8xf32>
    %cst_66 = arith.constant 0.0883883461 : f32
    %216 = vector.broadcast %cst_66 : f32 to vector<8x8xf32>
    %217 = arith.mulf %215, %216 : vector<8x8xf32>
    %cst_67 = arith.constant dense<0xFF800000> : vector<8xf32>
    %218 = vector.multi_reduction <maximumf>, %217, %cst_67 [1] : vector<8x8xf32> to vector<8xf32>
    %219 = vector.shape_cast %218 : vector<8xf32> to vector<8x1xf32>
    %220 = vector.broadcast %219 : vector<8x1xf32> to vector<8x8xf32>
    %221 = arith.subf %217, %220 : vector<8x8xf32>
    %222 = math.exp %221 : vector<8x8xf32>
    %cst_68 = arith.constant dense<0.000000e+00> : vector<8xf32>
    %223 = vector.multi_reduction <add>, %222, %cst_68 [1] : vector<8x8xf32> to vector<8xf32>
    %224 = vector.shape_cast %223 : vector<8xf32> to vector<8x1xf32>
    %225 = tpu.reciprocal %224 {approx = true} : vector<8x1xf32> -> vector<8x1xf32>
    %226 = vector.broadcast %225 : vector<8x1xf32> to vector<8x8xf32>
    %227 = arith.mulf %222, %226 : vector<8x8xf32>
    %228 = arith.truncf %227 : vector<8x8xf32> to vector<8x8xbf16>
    %229 = arith.truncf %175 : vector<8x32xf32> to vector<8x32xbf16>
    %cst_69 = arith.constant dense<0.000000e+00> : vector<8x32xf32>
    %230 = tpu.matmul %228, %229, %cst_69 {dimension_numbers = #tpu.dot_dimension_numbers<[1], [0], [0], [1], [0, 0, 1, 1], [], []>} : vector<8x8xbf16>, vector<8x32xbf16>, vector<8x32xf32> -> vector<8x32xf32>
    %231 = vector.extract_strided_slice %84 {offsets = [0, 64], sizes = [8, 32], strides = [1, 1]} : vector<8x384xf32> to vector<8x32xf32>
    %232 = vector.extract_strided_slice %84 {offsets = [0, 192], sizes = [8, 32], strides = [1, 1]} : vector<8x384xf32> to vector<8x32xf32>
    %233 = vector.extract_strided_slice %84 {offsets = [0, 320], sizes = [8, 32], strides = [1, 1]} : vector<8x384xf32> to vector<8x32xf32>
    %234 = vector.extract_strided_slice %88 {offsets = [0, 64], sizes = [8, 32], strides = [1, 1]} : vector<8x128xf32> to vector<8x32xf32>
    %c2 = arith.constant 2 : index
    %c0_70 = arith.constant 0 : index
    %235 = vector.load %arg12[%c2, %c0_70] : memref<8x32xf32, #tpu.memory_space<vmem>>, vector<1x32xf32>
    %236 = vector.shape_cast %235 : vector<1x32xf32> to vector<32xf32>
    %c6 = arith.constant 6 : index
    %c0_71 = arith.constant 0 : index
    %237 = vector.load %arg12[%c6, %c0_71] : memref<8x32xf32, #tpu.memory_space<vmem>>, vector<1x32xf32>
    %238 = vector.shape_cast %237 : vector<1x32xf32> to vector<32xf32>
    %239 = vector.shape_cast %236 : vector<32xf32> to vector<1x32xf32>
    %240 = vector.broadcast %239 : vector<1x32xf32> to vector<8x32xf32>
    %241 = arith.addf %231, %240 : vector<8x32xf32>
    %242 = arith.truncf %241 : vector<8x32xf32> to vector<8x32xbf16>
    %243 = arith.truncf %232 : vector<8x32xf32> to vector<8x32xbf16>
    %cst_72 = arith.constant dense<0.000000e+00> : vector<8x8xf32>
    %244 = tpu.matmul %242, %243, %cst_72 {dimension_numbers = #tpu.dot_dimension_numbers<[1], [1], [0], [0], [0, 0, 1, 0], [], []>} : vector<8x32xbf16>, vector<8x32xbf16>, vector<8x8xf32> -> vector<8x8xf32>
    %245 = vector.shape_cast %238 : vector<32xf32> to vector<1x32xf32>
    %246 = vector.broadcast %245 : vector<1x32xf32> to vector<8x32xf32>
    %247 = arith.addf %231, %246 : vector<8x32xf32>
    %248 = arith.truncf %247 : vector<8x32xf32> to vector<8x32xbf16>
    %249 = arith.truncf %234 : vector<8x32xf32> to vector<8x32xbf16>
    %cst_73 = arith.constant dense<0.000000e+00> : vector<8x8xf32>
    %250 = tpu.matmul %248, %249, %cst_73 {dimension_numbers = #tpu.dot_dimension_numbers<[1], [1], [0], [0], [0, 0, 1, 0], [], []>} : vector<8x32xbf16>, vector<8x32xbf16>, vector<8x8xf32> -> vector<8x8xf32>
    %251 = vector.extract_strided_slice %250 {offsets = [0, 7], sizes = [8, 1], strides = [1, 1]} : vector<8x8xf32> to vector<8x1xf32>
    %252 = vector.extract_strided_slice %250 {offsets = [0, 0], sizes = [8, 7], strides = [1, 1]} : vector<8x8xf32> to vector<8x7xf32>
    %253 = tpu.concatenate %251, %252 in 1 : vector<8x1xf32>, vector<8x7xf32> -> vector<8x8xf32>
    %254 = arith.select %102, %253, %250 : vector<8x8xi1>, vector<8x8xf32>
    %255 = vector.extract_strided_slice %254 {offsets = [0, 6], sizes = [8, 2], strides = [1, 1]} : vector<8x8xf32> to vector<8x2xf32>
    %256 = vector.extract_strided_slice %254 {offsets = [0, 0], sizes = [8, 6], strides = [1, 1]} : vector<8x8xf32> to vector<8x6xf32>
    %257 = tpu.concatenate %255, %256 in 1 : vector<8x2xf32>, vector<8x6xf32> -> vector<8x8xf32>
    %258 = arith.select %108, %257, %254 : vector<8x8xi1>, vector<8x8xf32>
    %259 = vector.extract_strided_slice %258 {offsets = [0, 4], sizes = [8, 4], strides = [1, 1]} : vector<8x8xf32> to vector<8x4xf32>
    %260 = vector.extract_strided_slice %258 {offsets = [0, 0], sizes = [8, 4], strides = [1, 1]} : vector<8x8xf32> to vector<8x4xf32>
    %261 = tpu.concatenate %259, %260 in 1 : vector<8x4xf32>, vector<8x4xf32> -> vector<8x8xf32>
    %262 = arith.select %114, %261, %258 : vector<8x8xi1>, vector<8x8xf32>
    %263 = vector.extract_strided_slice %262 {offsets = [1, 0], sizes = [7, 8], strides = [1, 1]} : vector<8x8xf32> to vector<7x8xf32>
    %264 = vector.extract_strided_slice %262 {offsets = [0, 0], sizes = [1, 8], strides = [1, 1]} : vector<8x8xf32> to vector<1x8xf32>
    %265 = tpu.concatenate %263, %264 in 0 : vector<7x8xf32>, vector<1x8xf32> -> vector<8x8xf32>
    %266 = arith.cmpi sle, %90, %89 : vector<8x8xi32>
    %c1_i32_74 = arith.constant 1 : i32
    %267 = vector.broadcast %c1_i32_74 : i32 to vector<8x8xi32>
    %268 = arith.addi %89, %267 : vector<8x8xi32>
    %269 = arith.cmpi eq, %90, %268 : vector<8x8xi32>
    %cst_75 = arith.constant 0.000000e+00 : f32
    %270 = vector.broadcast %cst_75 : f32 to vector<8x8xf32>
    %271 = arith.select %269, %270, %265 : vector<8x8xi1>, vector<8x8xf32>
    %272 = arith.select %266, %262, %271 : vector<8x8xi1>, vector<8x8xf32>
    %273 = arith.addf %244, %272 : vector<8x8xf32>
    %cst_76 = arith.constant 0.0883883461 : f32
    %274 = vector.broadcast %cst_76 : f32 to vector<8x8xf32>
    %275 = arith.mulf %273, %274 : vector<8x8xf32>
    %cst_77 = arith.constant dense<0xFF800000> : vector<8xf32>
    %276 = vector.multi_reduction <maximumf>, %275, %cst_77 [1] : vector<8x8xf32> to vector<8xf32>
    %277 = vector.shape_cast %276 : vector<8xf32> to vector<8x1xf32>
    %278 = vector.broadcast %277 : vector<8x1xf32> to vector<8x8xf32>
    %279 = arith.subf %275, %278 : vector<8x8xf32>
    %280 = math.exp %279 : vector<8x8xf32>
    %cst_78 = arith.constant dense<0.000000e+00> : vector<8xf32>
    %281 = vector.multi_reduction <add>, %280, %cst_78 [1] : vector<8x8xf32> to vector<8xf32>
    %282 = vector.shape_cast %281 : vector<8xf32> to vector<8x1xf32>
    %283 = tpu.reciprocal %282 {approx = true} : vector<8x1xf32> -> vector<8x1xf32>
    %284 = vector.broadcast %283 : vector<8x1xf32> to vector<8x8xf32>
    %285 = arith.mulf %280, %284 : vector<8x8xf32>
    %286 = arith.truncf %285 : vector<8x8xf32> to vector<8x8xbf16>
    %287 = arith.truncf %233 : vector<8x32xf32> to vector<8x32xbf16>
    %cst_79 = arith.constant dense<0.000000e+00> : vector<8x32xf32>
    %288 = tpu.matmul %286, %287, %cst_79 {dimension_numbers = #tpu.dot_dimension_numbers<[1], [0], [0], [1], [0, 0, 1, 1], [], []>} : vector<8x8xbf16>, vector<8x32xbf16>, vector<8x32xf32> -> vector<8x32xf32>
    %289 = vector.extract_strided_slice %84 {offsets = [0, 96], sizes = [8, 32], strides = [1, 1]} : vector<8x384xf32> to vector<8x32xf32>
    %290 = vector.extract_strided_slice %84 {offsets = [0, 224], sizes = [8, 32], strides = [1, 1]} : vector<8x384xf32> to vector<8x32xf32>
    %291 = vector.extract_strided_slice %84 {offsets = [0, 352], sizes = [8, 32], strides = [1, 1]} : vector<8x384xf32> to vector<8x32xf32>
    %292 = vector.extract_strided_slice %88 {offsets = [0, 96], sizes = [8, 32], strides = [1, 1]} : vector<8x128xf32> to vector<8x32xf32>
    %c3 = arith.constant 3 : index
    %c0_80 = arith.constant 0 : index
    %293 = vector.load %arg12[%c3, %c0_80] : memref<8x32xf32, #tpu.memory_space<vmem>>, vector<1x32xf32>
    %294 = vector.shape_cast %293 : vector<1x32xf32> to vector<32xf32>
    %c7 = arith.constant 7 : index
    %c0_81 = arith.constant 0 : index
    %295 = vector.load %arg12[%c7, %c0_81] : memref<8x32xf32, #tpu.memory_space<vmem>>, vector<1x32xf32>
    %296 = vector.shape_cast %295 : vector<1x32xf32> to vector<32xf32>
    %297 = vector.shape_cast %294 : vector<32xf32> to vector<1x32xf32>
    %298 = vector.broadcast %297 : vector<1x32xf32> to vector<8x32xf32>
    %299 = arith.addf %289, %298 : vector<8x32xf32>
    %300 = arith.truncf %299 : vector<8x32xf32> to vector<8x32xbf16>
    %301 = arith.truncf %290 : vector<8x32xf32> to vector<8x32xbf16>
    %cst_82 = arith.constant dense<0.000000e+00> : vector<8x8xf32>
    %302 = tpu.matmul %300, %301, %cst_82 {dimension_numbers = #tpu.dot_dimension_numbers<[1], [1], [0], [0], [0, 0, 1, 0], [], []>} : vector<8x32xbf16>, vector<8x32xbf16>, vector<8x8xf32> -> vector<8x8xf32>
    %303 = vector.shape_cast %296 : vector<32xf32> to vector<1x32xf32>
    %304 = vector.broadcast %303 : vector<1x32xf32> to vector<8x32xf32>
    %305 = arith.addf %289, %304 : vector<8x32xf32>
    %306 = arith.truncf %305 : vector<8x32xf32> to vector<8x32xbf16>
    %307 = arith.truncf %292 : vector<8x32xf32> to vector<8x32xbf16>
    %cst_83 = arith.constant dense<0.000000e+00> : vector<8x8xf32>
    %308 = tpu.matmul %306, %307, %cst_83 {dimension_numbers = #tpu.dot_dimension_numbers<[1], [1], [0], [0], [0, 0, 1, 0], [], []>} : vector<8x32xbf16>, vector<8x32xbf16>, vector<8x8xf32> -> vector<8x8xf32>
    %309 = vector.extract_strided_slice %308 {offsets = [0, 7], sizes = [8, 1], strides = [1, 1]} : vector<8x8xf32> to vector<8x1xf32>
    %310 = vector.extract_strided_slice %308 {offsets = [0, 0], sizes = [8, 7], strides = [1, 1]} : vector<8x8xf32> to vector<8x7xf32>
    %311 = tpu.concatenate %309, %310 in 1 : vector<8x1xf32>, vector<8x7xf32> -> vector<8x8xf32>
    %312 = arith.select %102, %311, %308 : vector<8x8xi1>, vector<8x8xf32>
    %313 = vector.extract_strided_slice %312 {offsets = [0, 6], sizes = [8, 2], strides = [1, 1]} : vector<8x8xf32> to vector<8x2xf32>
    %314 = vector.extract_strided_slice %312 {offsets = [0, 0], sizes = [8, 6], strides = [1, 1]} : vector<8x8xf32> to vector<8x6xf32>
    %315 = tpu.concatenate %313, %314 in 1 : vector<8x2xf32>, vector<8x6xf32> -> vector<8x8xf32>
    %316 = arith.select %108, %315, %312 : vector<8x8xi1>, vector<8x8xf32>
    %317 = vector.extract_strided_slice %316 {offsets = [0, 4], sizes = [8, 4], strides = [1, 1]} : vector<8x8xf32> to vector<8x4xf32>
    %318 = vector.extract_strided_slice %316 {offsets = [0, 0], sizes = [8, 4], strides = [1, 1]} : vector<8x8xf32> to vector<8x4xf32>
    %319 = tpu.concatenate %317, %318 in 1 : vector<8x4xf32>, vector<8x4xf32> -> vector<8x8xf32>
    %320 = arith.select %114, %319, %316 : vector<8x8xi1>, vector<8x8xf32>
    %321 = vector.extract_strided_slice %320 {offsets = [1, 0], sizes = [7, 8], strides = [1, 1]} : vector<8x8xf32> to vector<7x8xf32>
    %322 = vector.extract_strided_slice %320 {offsets = [0, 0], sizes = [1, 8], strides = [1, 1]} : vector<8x8xf32> to vector<1x8xf32>
    %323 = tpu.concatenate %321, %322 in 0 : vector<7x8xf32>, vector<1x8xf32> -> vector<8x8xf32>
    %324 = arith.cmpi sle, %90, %89 : vector<8x8xi32>
    %c1_i32_84 = arith.constant 1 : i32
    %325 = vector.broadcast %c1_i32_84 : i32 to vector<8x8xi32>
    %326 = arith.addi %89, %325 : vector<8x8xi32>
    %327 = arith.cmpi eq, %90, %326 : vector<8x8xi32>
    %cst_85 = arith.constant 0.000000e+00 : f32
    %328 = vector.broadcast %cst_85 : f32 to vector<8x8xf32>
    %329 = arith.select %327, %328, %323 : vector<8x8xi1>, vector<8x8xf32>
    %330 = arith.select %324, %320, %329 : vector<8x8xi1>, vector<8x8xf32>
    %331 = arith.addf %302, %330 : vector<8x8xf32>
    %cst_86 = arith.constant 0.0883883461 : f32
    %332 = vector.broadcast %cst_86 : f32 to vector<8x8xf32>
    %333 = arith.mulf %331, %332 : vector<8x8xf32>
    %cst_87 = arith.constant dense<0xFF800000> : vector<8xf32>
    %334 = vector.multi_reduction <maximumf>, %333, %cst_87 [1] : vector<8x8xf32> to vector<8xf32>
    %335 = vector.shape_cast %334 : vector<8xf32> to vector<8x1xf32>
    %336 = vector.broadcast %335 : vector<8x1xf32> to vector<8x8xf32>
    %337 = arith.subf %333, %336 : vector<8x8xf32>
    %338 = math.exp %337 : vector<8x8xf32>
    %cst_88 = arith.constant dense<0.000000e+00> : vector<8xf32>
    %339 = vector.multi_reduction <add>, %338, %cst_88 [1] : vector<8x8xf32> to vector<8xf32>
    %340 = vector.shape_cast %339 : vector<8xf32> to vector<8x1xf32>
    %341 = tpu.reciprocal %340 {approx = true} : vector<8x1xf32> -> vector<8x1xf32>
    %342 = vector.broadcast %341 : vector<8x1xf32> to vector<8x8xf32>
    %343 = arith.mulf %338, %342 : vector<8x8xf32>
    %344 = arith.truncf %343 : vector<8x8xf32> to vector<8x8xbf16>
    %345 = arith.truncf %291 : vector<8x32xf32> to vector<8x32xbf16>
    %cst_89 = arith.constant dense<0.000000e+00> : vector<8x32xf32>
    %346 = tpu.matmul %344, %345, %cst_89 {dimension_numbers = #tpu.dot_dimension_numbers<[1], [0], [0], [1], [0, 0, 1, 1], [], []>} : vector<8x8xbf16>, vector<8x32xbf16>, vector<8x32xf32> -> vector<8x32xf32>
    %347 = tpu.concatenate %172, %230, %288, %346 in 1 : vector<8x32xf32>, vector<8x32xf32>, vector<8x32xf32>, vector<8x32xf32> -> vector<8x128xf32>
    %348 = arith.truncf %347 : vector<8x128xf32> to vector<8x128xbf16>
    %c0_90 = arith.constant 0 : index
    %c0_91 = arith.constant 0 : index
    %349 = vector.load %arg13[%c0_90, %c0_91] : memref<128x128xbf16, #tpu.memory_space<vmem>>, vector<128x128xbf16>
    %cst_92 = arith.constant dense<0.000000e+00> : vector<8x128xf32>
    %350 = tpu.matmul %348, %349, %cst_92 {dimension_numbers = #tpu.dot_dimension_numbers<[1], [0], [0], [1], [0, 0, 1, 1], [], []>} : vector<8x128xbf16>, vector<128x128xbf16>, vector<8x128xf32> -> vector<8x128xf32>
    %c0_93 = arith.constant 0 : index
    %c0_94 = arith.constant 0 : index
    %351 = vector.load %arg14[%c0_93, %c0_94] : memref<1x128xf32, #tpu.memory_space<vmem>>, vector<1x128xf32>
    %352 = vector.broadcast %351 : vector<1x128xf32> to vector<8x128xf32>
    %353 = arith.addf %350, %352 : vector<8x128xf32>
    %354 = arith.addf %50, %353 : vector<8x128xf32>
    %c2_95 = arith.constant 2 : index
    %c0_96 = arith.constant 0 : index
    %355 = vector.load %arg3[%c2_95, %c0_96] : memref<5x128xf32, #tpu.memory_space<vmem>>, vector<1x128xf32>
    %356 = vector.shape_cast %355 : vector<1x128xf32> to vector<128xf32>
    %c2_97 = arith.constant 2 : index
    %c0_98 = arith.constant 0 : index
    %357 = vector.load %arg4[%c2_97, %c0_98] : memref<5x128xf32, #tpu.memory_space<vmem>>, vector<1x128xf32>
    %358 = vector.shape_cast %357 : vector<1x128xf32> to vector<128xf32>
    %cst_99 = arith.constant dense<0.000000e+00> : vector<8xf32>
    %359 = vector.multi_reduction <add>, %354, %cst_99 [1] : vector<8x128xf32> to vector<8xf32>
    %360 = vector.shape_cast %359 : vector<8xf32> to vector<8x1xf32>
    %cst_100 = arith.constant 1.280000e+02 : f32
    %361 = vector.broadcast %cst_100 : f32 to vector<8x1xf32>
    %362 = arith.divf %360, %361 : vector<8x1xf32>
    %363 = vector.broadcast %362 : vector<8x1xf32> to vector<8x128xf32>
    %364 = arith.subf %354, %363 : vector<8x128xf32>
    %365 = arith.mulf %364, %364 : vector<8x128xf32>
    %cst_101 = arith.constant dense<0.000000e+00> : vector<8xf32>
    %366 = vector.multi_reduction <add>, %365, %cst_101 [1] : vector<8x128xf32> to vector<8xf32>
    %367 = vector.shape_cast %366 : vector<8xf32> to vector<8x1xf32>
    %cst_102 = arith.constant 1.280000e+02 : f32
    %368 = vector.broadcast %cst_102 : f32 to vector<8x1xf32>
    %369 = arith.divf %367, %368 : vector<8x1xf32>
    %370 = vector.broadcast %362 : vector<8x1xf32> to vector<8x128xf32>
    %371 = arith.subf %354, %370 : vector<8x128xf32>
    %cst_103 = arith.constant 9.99999974E-6 : f32
    %372 = vector.broadcast %cst_103 : f32 to vector<8x1xf32>
    %373 = arith.addf %369, %372 : vector<8x1xf32>
    %374 = math.rsqrt %373 : vector<8x1xf32>
    %375 = vector.broadcast %374 : vector<8x1xf32> to vector<8x128xf32>
    %376 = arith.mulf %371, %375 : vector<8x128xf32>
    %377 = vector.shape_cast %356 : vector<128xf32> to vector<1x128xf32>
    %378 = vector.broadcast %377 : vector<1x128xf32> to vector<8x128xf32>
    %379 = arith.mulf %376, %378 : vector<8x128xf32>
    %380 = vector.shape_cast %358 : vector<128xf32> to vector<1x128xf32>
    %381 = vector.broadcast %380 : vector<1x128xf32> to vector<8x128xf32>
    %382 = arith.addf %379, %381 : vector<8x128xf32>
    %383 = arith.truncf %382 : vector<8x128xf32> to vector<8x128xbf16>
    %c0_104 = arith.constant 0 : index
    %c0_105 = arith.constant 0 : index
    %384 = vector.load %arg15[%c0_104, %c0_105] : memref<128x256xbf16, #tpu.memory_space<vmem>>, vector<128x256xbf16>
    %cst_106 = arith.constant dense<0.000000e+00> : vector<8x256xf32>
    %385 = tpu.matmul %383, %384, %cst_106 {dimension_numbers = #tpu.dot_dimension_numbers<[1], [0], [0], [1], [0, 0, 1, 1], [], []>} : vector<8x128xbf16>, vector<128x256xbf16>, vector<8x256xf32> -> vector<8x256xf32>
    %c0_107 = arith.constant 0 : index
    %c0_108 = arith.constant 0 : index
    %386 = vector.load %arg16[%c0_107, %c0_108] : memref<1x256xf32, #tpu.memory_space<vmem>>, vector<1x256xf32>
    %387 = vector.broadcast %386 : vector<1x256xf32> to vector<8x256xf32>
    %388 = arith.addf %385, %387 : vector<8x256xf32>
    %389 = vector.extract_strided_slice %388 {offsets = [0, 0], sizes = [8, 128], strides = [1, 1]} : vector<8x256xf32> to vector<8x128xf32>
    %390 = vector.extract_strided_slice %388 {offsets = [0, 128], sizes = [8, 128], strides = [1, 1]} : vector<8x256xf32> to vector<8x128xf32>
    %391 = arith.negf %390 : vector<8x128xf32>
    %392 = math.exp %391 : vector<8x128xf32>
    %cst_109 = arith.constant 1.000000e+00 : f32
    %393 = vector.broadcast %cst_109 : f32 to vector<8x128xf32>
    %394 = arith.addf %393, %392 : vector<8x128xf32>
    %395 = arith.divf %393, %394 : vector<8x128xf32>
    %396 = arith.mulf %389, %395 : vector<8x128xf32>
    %cst_110 = arith.constant 0.000000e+00 : f32
    %397 = vector.broadcast %cst_110 : f32 to vector<8x128xf32>
    %cst_111 = arith.constant 0.000000e+00 : f32
    %398 = vector.broadcast %cst_111 : f32 to vector<7x128xf32>
    %399 = vector.extract_strided_slice %396 {offsets = [0, 0], sizes = [1, 128], strides = [1, 1]} : vector<8x128xf32> to vector<1x128xf32>
    %400 = tpu.concatenate %398, %399 in 0 : vector<7x128xf32>, vector<1x128xf32> -> vector<8x128xf32>
    %c0_112 = arith.constant 0 : index
    %c0_113 = arith.constant 0 : index
    %401 = vector.load %arg17[%c0_112, %c0_113] : memref<15x128xf32, #tpu.memory_space<vmem>>, vector<1x128xf32>
    %402 = vector.shape_cast %401 : vector<1x128xf32> to vector<128xf32>
    %403 = vector.shape_cast %402 : vector<128xf32> to vector<1x128xf32>
    %404 = vector.broadcast %403 : vector<1x128xf32> to vector<8x128xf32>
    %405 = arith.mulf %400, %404 : vector<8x128xf32>
    %406 = arith.addf %397, %405 : vector<8x128xf32>
    %cst_114 = arith.constant 0.000000e+00 : f32
    %407 = vector.broadcast %cst_114 : f32 to vector<6x128xf32>
    %408 = vector.extract_strided_slice %396 {offsets = [0, 0], sizes = [2, 128], strides = [1, 1]} : vector<8x128xf32> to vector<2x128xf32>
    %409 = tpu.concatenate %407, %408 in 0 : vector<6x128xf32>, vector<2x128xf32> -> vector<8x128xf32>
    %c1_115 = arith.constant 1 : index
    %c0_116 = arith.constant 0 : index
    %410 = vector.load %arg17[%c1_115, %c0_116] : memref<15x128xf32, #tpu.memory_space<vmem>>, vector<1x128xf32>
    %411 = vector.shape_cast %410 : vector<1x128xf32> to vector<128xf32>
    %412 = vector.shape_cast %411 : vector<128xf32> to vector<1x128xf32>
    %413 = vector.broadcast %412 : vector<1x128xf32> to vector<8x128xf32>
    %414 = arith.mulf %409, %413 : vector<8x128xf32>
    %415 = arith.addf %406, %414 : vector<8x128xf32>
    %cst_117 = arith.constant 0.000000e+00 : f32
    %416 = vector.broadcast %cst_117 : f32 to vector<5x128xf32>
    %417 = vector.extract_strided_slice %396 {offsets = [0, 0], sizes = [3, 128], strides = [1, 1]} : vector<8x128xf32> to vector<3x128xf32>
    %418 = tpu.concatenate %416, %417 in 0 : vector<5x128xf32>, vector<3x128xf32> -> vector<8x128xf32>
    %c2_118 = arith.constant 2 : index
    %c0_119 = arith.constant 0 : index
    %419 = vector.load %arg17[%c2_118, %c0_119] : memref<15x128xf32, #tpu.memory_space<vmem>>, vector<1x128xf32>
    %420 = vector.shape_cast %419 : vector<1x128xf32> to vector<128xf32>
    %421 = vector.shape_cast %420 : vector<128xf32> to vector<1x128xf32>
    %422 = vector.broadcast %421 : vector<1x128xf32> to vector<8x128xf32>
    %423 = arith.mulf %418, %422 : vector<8x128xf32>
    %424 = arith.addf %415, %423 : vector<8x128xf32>
    %cst_120 = arith.constant 0.000000e+00 : f32
    %425 = vector.broadcast %cst_120 : f32 to vector<4x128xf32>
    %426 = vector.extract_strided_slice %396 {offsets = [0, 0], sizes = [4, 128], strides = [1, 1]} : vector<8x128xf32> to vector<4x128xf32>
    %427 = tpu.concatenate %425, %426 in 0 : vector<4x128xf32>, vector<4x128xf32> -> vector<8x128xf32>
    %c3_121 = arith.constant 3 : index
    %c0_122 = arith.constant 0 : index
    %428 = vector.load %arg17[%c3_121, %c0_122] : memref<15x128xf32, #tpu.memory_space<vmem>>, vector<1x128xf32>
    %429 = vector.shape_cast %428 : vector<1x128xf32> to vector<128xf32>
    %430 = vector.shape_cast %429 : vector<128xf32> to vector<1x128xf32>
    %431 = vector.broadcast %430 : vector<1x128xf32> to vector<8x128xf32>
    %432 = arith.mulf %427, %431 : vector<8x128xf32>
    %433 = arith.addf %424, %432 : vector<8x128xf32>
    %cst_123 = arith.constant 0.000000e+00 : f32
    %434 = vector.broadcast %cst_123 : f32 to vector<3x128xf32>
    %435 = vector.extract_strided_slice %396 {offsets = [0, 0], sizes = [5, 128], strides = [1, 1]} : vector<8x128xf32> to vector<5x128xf32>
    %436 = tpu.concatenate %434, %435 in 0 : vector<3x128xf32>, vector<5x128xf32> -> vector<8x128xf32>
    %c4_124 = arith.constant 4 : index
    %c0_125 = arith.constant 0 : index
    %437 = vector.load %arg17[%c4_124, %c0_125] : memref<15x128xf32, #tpu.memory_space<vmem>>, vector<1x128xf32>
    %438 = vector.shape_cast %437 : vector<1x128xf32> to vector<128xf32>
    %439 = vector.shape_cast %438 : vector<128xf32> to vector<1x128xf32>
    %440 = vector.broadcast %439 : vector<1x128xf32> to vector<8x128xf32>
    %441 = arith.mulf %436, %440 : vector<8x128xf32>
    %442 = arith.addf %433, %441 : vector<8x128xf32>
    %cst_126 = arith.constant 0.000000e+00 : f32
    %443 = vector.broadcast %cst_126 : f32 to vector<2x128xf32>
    %444 = vector.extract_strided_slice %396 {offsets = [0, 0], sizes = [6, 128], strides = [1, 1]} : vector<8x128xf32> to vector<6x128xf32>
    %445 = tpu.concatenate %443, %444 in 0 : vector<2x128xf32>, vector<6x128xf32> -> vector<8x128xf32>
    %c5_127 = arith.constant 5 : index
    %c0_128 = arith.constant 0 : index
    %446 = vector.load %arg17[%c5_127, %c0_128] : memref<15x128xf32, #tpu.memory_space<vmem>>, vector<1x128xf32>
    %447 = vector.shape_cast %446 : vector<1x128xf32> to vector<128xf32>
    %448 = vector.shape_cast %447 : vector<128xf32> to vector<1x128xf32>
    %449 = vector.broadcast %448 : vector<1x128xf32> to vector<8x128xf32>
    %450 = arith.mulf %445, %449 : vector<8x128xf32>
    %451 = arith.addf %442, %450 : vector<8x128xf32>
    %cst_129 = arith.constant 0.000000e+00 : f32
    %452 = vector.broadcast %cst_129 : f32 to vector<1x128xf32>
    %453 = vector.extract_strided_slice %396 {offsets = [0, 0], sizes = [7, 128], strides = [1, 1]} : vector<8x128xf32> to vector<7x128xf32>
    %454 = tpu.concatenate %452, %453 in 0 : vector<1x128xf32>, vector<7x128xf32> -> vector<8x128xf32>
    %c6_130 = arith.constant 6 : index
    %c0_131 = arith.constant 0 : index
    %455 = vector.load %arg17[%c6_130, %c0_131] : memref<15x128xf32, #tpu.memory_space<vmem>>, vector<1x128xf32>
    %456 = vector.shape_cast %455 : vector<1x128xf32> to vector<128xf32>
    %457 = vector.shape_cast %456 : vector<128xf32> to vector<1x128xf32>
    %458 = vector.broadcast %457 : vector<1x128xf32> to vector<8x128xf32>
    %459 = arith.mulf %454, %458 : vector<8x128xf32>
    %460 = arith.addf %451, %459 : vector<8x128xf32>
    %c7_132 = arith.constant 7 : index
    %c0_133 = arith.constant 0 : index
    %461 = vector.load %arg17[%c7_132, %c0_133] : memref<15x128xf32, #tpu.memory_space<vmem>>, vector<1x128xf32>
    %462 = vector.shape_cast %461 : vector<1x128xf32> to vector<128xf32>
    %463 = vector.shape_cast %462 : vector<128xf32> to vector<1x128xf32>
    %464 = vector.broadcast %463 : vector<1x128xf32> to vector<8x128xf32>
    %465 = arith.mulf %396, %464 : vector<8x128xf32>
    %466 = arith.addf %460, %465 : vector<8x128xf32>
    %467 = vector.extract_strided_slice %396 {offsets = [1, 0], sizes = [7, 128], strides = [1, 1]} : vector<8x128xf32> to vector<7x128xf32>
    %cst_134 = arith.constant 0.000000e+00 : f32
    %468 = vector.broadcast %cst_134 : f32 to vector<1x128xf32>
    %469 = tpu.concatenate %467, %468 in 0 : vector<7x128xf32>, vector<1x128xf32> -> vector<8x128xf32>
    %c8 = arith.constant 8 : index
    %c0_135 = arith.constant 0 : index
    %470 = vector.load %arg17[%c8, %c0_135] : memref<15x128xf32, #tpu.memory_space<vmem>>, vector<1x128xf32>
    %471 = vector.shape_cast %470 : vector<1x128xf32> to vector<128xf32>
    %472 = vector.shape_cast %471 : vector<128xf32> to vector<1x128xf32>
    %473 = vector.broadcast %472 : vector<1x128xf32> to vector<8x128xf32>
    %474 = arith.mulf %469, %473 : vector<8x128xf32>
    %475 = arith.addf %466, %474 : vector<8x128xf32>
    %476 = vector.extract_strided_slice %396 {offsets = [2, 0], sizes = [6, 128], strides = [1, 1]} : vector<8x128xf32> to vector<6x128xf32>
    %cst_136 = arith.constant 0.000000e+00 : f32
    %477 = vector.broadcast %cst_136 : f32 to vector<2x128xf32>
    %478 = tpu.concatenate %476, %477 in 0 : vector<6x128xf32>, vector<2x128xf32> -> vector<8x128xf32>
    %c9 = arith.constant 9 : index
    %c0_137 = arith.constant 0 : index
    %479 = vector.load %arg17[%c9, %c0_137] : memref<15x128xf32, #tpu.memory_space<vmem>>, vector<1x128xf32>
    %480 = vector.shape_cast %479 : vector<1x128xf32> to vector<128xf32>
    %481 = vector.shape_cast %480 : vector<128xf32> to vector<1x128xf32>
    %482 = vector.broadcast %481 : vector<1x128xf32> to vector<8x128xf32>
    %483 = arith.mulf %478, %482 : vector<8x128xf32>
    %484 = arith.addf %475, %483 : vector<8x128xf32>
    %485 = vector.extract_strided_slice %396 {offsets = [3, 0], sizes = [5, 128], strides = [1, 1]} : vector<8x128xf32> to vector<5x128xf32>
    %cst_138 = arith.constant 0.000000e+00 : f32
    %486 = vector.broadcast %cst_138 : f32 to vector<3x128xf32>
    %487 = tpu.concatenate %485, %486 in 0 : vector<5x128xf32>, vector<3x128xf32> -> vector<8x128xf32>
    %c10 = arith.constant 10 : index
    %c0_139 = arith.constant 0 : index
    %488 = vector.load %arg17[%c10, %c0_139] : memref<15x128xf32, #tpu.memory_space<vmem>>, vector<1x128xf32>
    %489 = vector.shape_cast %488 : vector<1x128xf32> to vector<128xf32>
    %490 = vector.shape_cast %489 : vector<128xf32> to vector<1x128xf32>
    %491 = vector.broadcast %490 : vector<1x128xf32> to vector<8x128xf32>
    %492 = arith.mulf %487, %491 : vector<8x128xf32>
    %493 = arith.addf %484, %492 : vector<8x128xf32>
    %494 = vector.extract_strided_slice %396 {offsets = [4, 0], sizes = [4, 128], strides = [1, 1]} : vector<8x128xf32> to vector<4x128xf32>
    %cst_140 = arith.constant 0.000000e+00 : f32
    %495 = vector.broadcast %cst_140 : f32 to vector<4x128xf32>
    %496 = tpu.concatenate %494, %495 in 0 : vector<4x128xf32>, vector<4x128xf32> -> vector<8x128xf32>
    %c11 = arith.constant 11 : index
    %c0_141 = arith.constant 0 : index
    %497 = vector.load %arg17[%c11, %c0_141] : memref<15x128xf32, #tpu.memory_space<vmem>>, vector<1x128xf32>
    %498 = vector.shape_cast %497 : vector<1x128xf32> to vector<128xf32>
    %499 = vector.shape_cast %498 : vector<128xf32> to vector<1x128xf32>
    %500 = vector.broadcast %499 : vector<1x128xf32> to vector<8x128xf32>
    %501 = arith.mulf %496, %500 : vector<8x128xf32>
    %502 = arith.addf %493, %501 : vector<8x128xf32>
    %503 = vector.extract_strided_slice %396 {offsets = [5, 0], sizes = [3, 128], strides = [1, 1]} : vector<8x128xf32> to vector<3x128xf32>
    %cst_142 = arith.constant 0.000000e+00 : f32
    %504 = vector.broadcast %cst_142 : f32 to vector<5x128xf32>
    %505 = tpu.concatenate %503, %504 in 0 : vector<3x128xf32>, vector<5x128xf32> -> vector<8x128xf32>
    %c12 = arith.constant 12 : index
    %c0_143 = arith.constant 0 : index
    %506 = vector.load %arg17[%c12, %c0_143] : memref<15x128xf32, #tpu.memory_space<vmem>>, vector<1x128xf32>
    %507 = vector.shape_cast %506 : vector<1x128xf32> to vector<128xf32>
    %508 = vector.shape_cast %507 : vector<128xf32> to vector<1x128xf32>
    %509 = vector.broadcast %508 : vector<1x128xf32> to vector<8x128xf32>
    %510 = arith.mulf %505, %509 : vector<8x128xf32>
    %511 = arith.addf %502, %510 : vector<8x128xf32>
    %512 = vector.extract_strided_slice %396 {offsets = [6, 0], sizes = [2, 128], strides = [1, 1]} : vector<8x128xf32> to vector<2x128xf32>
    %cst_144 = arith.constant 0.000000e+00 : f32
    %513 = vector.broadcast %cst_144 : f32 to vector<6x128xf32>
    %514 = tpu.concatenate %512, %513 in 0 : vector<2x128xf32>, vector<6x128xf32> -> vector<8x128xf32>
    %c13 = arith.constant 13 : index
    %c0_145 = arith.constant 0 : index
    %515 = vector.load %arg17[%c13, %c0_145] : memref<15x128xf32, #tpu.memory_space<vmem>>, vector<1x128xf32>
    %516 = vector.shape_cast %515 : vector<1x128xf32> to vector<128xf32>
    %517 = vector.shape_cast %516 : vector<128xf32> to vector<1x128xf32>
    %518 = vector.broadcast %517 : vector<1x128xf32> to vector<8x128xf32>
    %519 = arith.mulf %514, %518 : vector<8x128xf32>
    %520 = arith.addf %511, %519 : vector<8x128xf32>
    %521 = vector.extract_strided_slice %396 {offsets = [7, 0], sizes = [1, 128], strides = [1, 1]} : vector<8x128xf32> to vector<1x128xf32>
    %cst_146 = arith.constant 0.000000e+00 : f32
    %522 = vector.broadcast %cst_146 : f32 to vector<7x128xf32>
    %523 = tpu.concatenate %521, %522 in 0 : vector<1x128xf32>, vector<7x128xf32> -> vector<8x128xf32>
    %c14 = arith.constant 14 : index
    %c0_147 = arith.constant 0 : index
    %524 = vector.load %arg17[%c14, %c0_147] : memref<15x128xf32, #tpu.memory_space<vmem>>, vector<1x128xf32>
    %525 = vector.shape_cast %524 : vector<1x128xf32> to vector<128xf32>
    %526 = vector.shape_cast %525 : vector<128xf32> to vector<1x128xf32>
    %527 = vector.broadcast %526 : vector<1x128xf32> to vector<8x128xf32>
    %528 = arith.mulf %523, %527 : vector<8x128xf32>
    %529 = arith.addf %520, %528 : vector<8x128xf32>
    %c0_148 = arith.constant 0 : index
    %c0_149 = arith.constant 0 : index
    %530 = vector.load %arg18[%c0_148, %c0_149] : memref<1x128xf32, #tpu.memory_space<vmem>>, vector<1x128xf32>
    %531 = vector.broadcast %530 : vector<1x128xf32> to vector<8x128xf32>
    %532 = arith.mulf %529, %531 : vector<8x128xf32>
    %c0_150 = arith.constant 0 : index
    %c0_151 = arith.constant 0 : index
    %533 = vector.load %arg19[%c0_150, %c0_151] : memref<1x128xf32, #tpu.memory_space<vmem>>, vector<1x128xf32>
    %534 = vector.broadcast %533 : vector<1x128xf32> to vector<8x128xf32>
    %535 = arith.addf %532, %534 : vector<8x128xf32>
    %536 = arith.negf %535 : vector<8x128xf32>
    %537 = math.exp %536 : vector<8x128xf32>
    %cst_152 = arith.constant 1.000000e+00 : f32
    %538 = vector.broadcast %cst_152 : f32 to vector<8x128xf32>
    %539 = arith.addf %538, %537 : vector<8x128xf32>
    %540 = arith.divf %538, %539 : vector<8x128xf32>
    %541 = arith.mulf %535, %540 : vector<8x128xf32>
    %542 = arith.truncf %541 : vector<8x128xf32> to vector<8x128xbf16>
    %c0_153 = arith.constant 0 : index
    %c0_154 = arith.constant 0 : index
    %543 = vector.load %arg20[%c0_153, %c0_154] : memref<128x128xbf16, #tpu.memory_space<vmem>>, vector<128x128xbf16>
    %cst_155 = arith.constant dense<0.000000e+00> : vector<8x128xf32>
    %544 = tpu.matmul %542, %543, %cst_155 {dimension_numbers = #tpu.dot_dimension_numbers<[1], [0], [0], [1], [0, 0, 1, 1], [], []>} : vector<8x128xbf16>, vector<128x128xbf16>, vector<8x128xf32> -> vector<8x128xf32>
    %c0_156 = arith.constant 0 : index
    %c0_157 = arith.constant 0 : index
    %545 = vector.load %arg21[%c0_156, %c0_157] : memref<1x128xf32, #tpu.memory_space<vmem>>, vector<1x128xf32>
    %546 = vector.broadcast %545 : vector<1x128xf32> to vector<8x128xf32>
    %547 = arith.addf %544, %546 : vector<8x128xf32>
    %548 = arith.addf %354, %547 : vector<8x128xf32>
    %c3_158 = arith.constant 3 : index
    %c0_159 = arith.constant 0 : index
    %549 = vector.load %arg3[%c3_158, %c0_159] : memref<5x128xf32, #tpu.memory_space<vmem>>, vector<1x128xf32>
    %550 = vector.shape_cast %549 : vector<1x128xf32> to vector<128xf32>
    %c3_160 = arith.constant 3 : index
    %c0_161 = arith.constant 0 : index
    %551 = vector.load %arg4[%c3_160, %c0_161] : memref<5x128xf32, #tpu.memory_space<vmem>>, vector<1x128xf32>
    %552 = vector.shape_cast %551 : vector<1x128xf32> to vector<128xf32>
    %cst_162 = arith.constant dense<0.000000e+00> : vector<8xf32>
    %553 = vector.multi_reduction <add>, %548, %cst_162 [1] : vector<8x128xf32> to vector<8xf32>
    %554 = vector.shape_cast %553 : vector<8xf32> to vector<8x1xf32>
    %cst_163 = arith.constant 1.280000e+02 : f32
    %555 = vector.broadcast %cst_163 : f32 to vector<8x1xf32>
    %556 = arith.divf %554, %555 : vector<8x1xf32>
    %557 = vector.broadcast %556 : vector<8x1xf32> to vector<8x128xf32>
    %558 = arith.subf %548, %557 : vector<8x128xf32>
    %559 = arith.mulf %558, %558 : vector<8x128xf32>
    %cst_164 = arith.constant dense<0.000000e+00> : vector<8xf32>
    %560 = vector.multi_reduction <add>, %559, %cst_164 [1] : vector<8x128xf32> to vector<8xf32>
    %561 = vector.shape_cast %560 : vector<8xf32> to vector<8x1xf32>
    %cst_165 = arith.constant 1.280000e+02 : f32
    %562 = vector.broadcast %cst_165 : f32 to vector<8x1xf32>
    %563 = arith.divf %561, %562 : vector<8x1xf32>
    %564 = vector.broadcast %556 : vector<8x1xf32> to vector<8x128xf32>
    %565 = arith.subf %548, %564 : vector<8x128xf32>
    %cst_166 = arith.constant 9.99999974E-6 : f32
    %566 = vector.broadcast %cst_166 : f32 to vector<8x1xf32>
    %567 = arith.addf %563, %566 : vector<8x1xf32>
    %568 = math.rsqrt %567 : vector<8x1xf32>
    %569 = vector.broadcast %568 : vector<8x1xf32> to vector<8x128xf32>
    %570 = arith.mulf %565, %569 : vector<8x128xf32>
    %571 = vector.shape_cast %550 : vector<128xf32> to vector<1x128xf32>
    %572 = vector.broadcast %571 : vector<1x128xf32> to vector<8x128xf32>
    %573 = arith.mulf %570, %572 : vector<8x128xf32>
    %574 = vector.shape_cast %552 : vector<128xf32> to vector<1x128xf32>
    %575 = vector.broadcast %574 : vector<1x128xf32> to vector<8x128xf32>
    %576 = arith.addf %573, %575 : vector<8x128xf32>
    %577 = arith.truncf %576 : vector<8x128xf32> to vector<8x128xbf16>
    %c0_167 = arith.constant 0 : index
    %c0_168 = arith.constant 0 : index
    %578 = vector.load %arg22[%c0_167, %c0_168] : memref<128x256xbf16, #tpu.memory_space<vmem>>, vector<128x256xbf16>
    %cst_169 = arith.constant dense<0.000000e+00> : vector<8x256xf32>
    %579 = tpu.matmul %577, %578, %cst_169 {dimension_numbers = #tpu.dot_dimension_numbers<[1], [0], [0], [1], [0, 0, 1, 1], [], []>} : vector<8x128xbf16>, vector<128x256xbf16>, vector<8x256xf32> -> vector<8x256xf32>
    %c0_170 = arith.constant 0 : index
    %c0_171 = arith.constant 0 : index
    %580 = vector.load %arg23[%c0_170, %c0_171] : memref<1x256xf32, #tpu.memory_space<vmem>>, vector<1x256xf32>
    %581 = vector.broadcast %580 : vector<1x256xf32> to vector<8x256xf32>
    %582 = arith.addf %579, %581 : vector<8x256xf32>
    %583 = arith.negf %582 : vector<8x256xf32>
    %584 = math.exp %583 : vector<8x256xf32>
    %cst_172 = arith.constant 1.000000e+00 : f32
    %585 = vector.broadcast %cst_172 : f32 to vector<8x256xf32>
    %586 = arith.addf %585, %584 : vector<8x256xf32>
    %587 = arith.divf %585, %586 : vector<8x256xf32>
    %588 = arith.mulf %582, %587 : vector<8x256xf32>
    %589 = arith.truncf %588 : vector<8x256xf32> to vector<8x256xbf16>
    %c0_173 = arith.constant 0 : index
    %c0_174 = arith.constant 0 : index
    %590 = vector.load %arg24[%c0_173, %c0_174] : memref<256x128xbf16, #tpu.memory_space<vmem>>, vector<256x128xbf16>
    %cst_175 = arith.constant dense<0.000000e+00> : vector<8x128xf32>
    %591 = tpu.matmul %589, %590, %cst_175 {dimension_numbers = #tpu.dot_dimension_numbers<[1], [0], [0], [1], [0, 0, 1, 1], [], []>} : vector<8x256xbf16>, vector<256x128xbf16>, vector<8x128xf32> -> vector<8x128xf32>
    %c0_176 = arith.constant 0 : index
    %c0_177 = arith.constant 0 : index
    %592 = vector.load %arg25[%c0_176, %c0_177] : memref<1x128xf32, #tpu.memory_space<vmem>>, vector<1x128xf32>
    %593 = vector.broadcast %592 : vector<1x128xf32> to vector<8x128xf32>
    %594 = arith.addf %591, %593 : vector<8x128xf32>
    %cst_178 = arith.constant 5.000000e-01 : f32
    %595 = vector.broadcast %cst_178 : f32 to vector<8x128xf32>
    %596 = arith.mulf %595, %594 : vector<8x128xf32>
    %597 = arith.addf %548, %596 : vector<8x128xf32>
    %c4_179 = arith.constant 4 : index
    %c0_180 = arith.constant 0 : index
    %598 = vector.load %arg3[%c4_179, %c0_180] : memref<5x128xf32, #tpu.memory_space<vmem>>, vector<1x128xf32>
    %599 = vector.shape_cast %598 : vector<1x128xf32> to vector<128xf32>
    %c4_181 = arith.constant 4 : index
    %c0_182 = arith.constant 0 : index
    %600 = vector.load %arg4[%c4_181, %c0_182] : memref<5x128xf32, #tpu.memory_space<vmem>>, vector<1x128xf32>
    %601 = vector.shape_cast %600 : vector<1x128xf32> to vector<128xf32>
    %cst_183 = arith.constant dense<0.000000e+00> : vector<8xf32>
    %602 = vector.multi_reduction <add>, %597, %cst_183 [1] : vector<8x128xf32> to vector<8xf32>
    %603 = vector.shape_cast %602 : vector<8xf32> to vector<8x1xf32>
    %cst_184 = arith.constant 1.280000e+02 : f32
    %604 = vector.broadcast %cst_184 : f32 to vector<8x1xf32>
    %605 = arith.divf %603, %604 : vector<8x1xf32>
    %606 = vector.broadcast %605 : vector<8x1xf32> to vector<8x128xf32>
    %607 = arith.subf %597, %606 : vector<8x128xf32>
    %608 = arith.mulf %607, %607 : vector<8x128xf32>
    %cst_185 = arith.constant dense<0.000000e+00> : vector<8xf32>
    %609 = vector.multi_reduction <add>, %608, %cst_185 [1] : vector<8x128xf32> to vector<8xf32>
    %610 = vector.shape_cast %609 : vector<8xf32> to vector<8x1xf32>
    %cst_186 = arith.constant 1.280000e+02 : f32
    %611 = vector.broadcast %cst_186 : f32 to vector<8x1xf32>
    %612 = arith.divf %610, %611 : vector<8x1xf32>
    %613 = vector.broadcast %605 : vector<8x1xf32> to vector<8x128xf32>
    %614 = arith.subf %597, %613 : vector<8x128xf32>
    %cst_187 = arith.constant 9.99999974E-6 : f32
    %615 = vector.broadcast %cst_187 : f32 to vector<8x1xf32>
    %616 = arith.addf %612, %615 : vector<8x1xf32>
    %617 = math.rsqrt %616 : vector<8x1xf32>
    %618 = vector.broadcast %617 : vector<8x1xf32> to vector<8x128xf32>
    %619 = arith.mulf %614, %618 : vector<8x128xf32>
    %620 = vector.shape_cast %599 : vector<128xf32> to vector<1x128xf32>
    %621 = vector.broadcast %620 : vector<1x128xf32> to vector<8x128xf32>
    %622 = arith.mulf %619, %621 : vector<8x128xf32>
    %623 = vector.shape_cast %601 : vector<128xf32> to vector<1x128xf32>
    %624 = vector.broadcast %623 : vector<1x128xf32> to vector<8x128xf32>
    %625 = arith.addf %622, %624 : vector<8x128xf32>
    %c0_188 = arith.constant 0 : index
    %c0_189 = arith.constant 0 : index
    %c0_190 = arith.constant 0 : index
    %626 = vector.load %arg26[%c0_188, %c0_189, %c0_190] : memref<1x8x128xf32, #tpu.memory_space<vmem>>, vector<1x8x128xf32>
    %627 = vector.shape_cast %626 : vector<1x8x128xf32> to vector<8x128xf32>
    %628 = vector.shape_cast %625 : vector<8x128xf32> to vector<1x8x128xf32>
    tpu.vector_store %arg26[%c0_188, %c0_189, %c0_190], %628 {strides = array<i32>} : memref<1x8x128xf32, #tpu.memory_space<vmem>>, vector<1x8x128xf32>,
    %cst_191 = arith.constant dense<0.000000e+00> : vector<128xf32>
    %629 = vector.multi_reduction <add>, %625, %cst_191 [0] : vector<8x128xf32> to vector<128xf32>
    %630 = vector.shape_cast %629 : vector<128xf32> to vector<1x128xf32>
    %cst_192 = arith.constant 8.000000e+00 : f32
    %631 = vector.broadcast %cst_192 : f32 to vector<1x128xf32>
    %632 = arith.divf %630, %631 : vector<1x128xf32>
    %c0_193 = arith.constant 0 : index
    %c0_194 = arith.constant 0 : index
    %c0_195 = arith.constant 0 : index
    %633 = vector.load %arg27[%c0_193, %c0_194, %c0_195] : memref<1x1x128xf32, #tpu.memory_space<vmem>>, vector<1x1x128xf32>
    %634 = vector.shape_cast %633 : vector<1x1x128xf32> to vector<1x128xf32>
    %635 = vector.shape_cast %632 : vector<1x128xf32> to vector<1x1x128xf32>
    tpu.vector_store %arg27[%c0_193, %c0_194, %c0_195], %635 {strides = array<i32>} : memref<1x1x128xf32, #tpu.memory_space<vmem>>, vector<1x1x128xf32>,
    return
  }
  func.func @transform_0(%arg0: i32) -> (i32, i32, i32) {
    %c0_i32 = arith.constant 0 : i32
    %c0_i32_0 = arith.constant 0 : i32
    %c0_i32_1 = arith.constant 0 : i32
    return %arg0, %c0_i32, %c0_i32_0 : i32, i32, i32
  }
  func.func @transform_1(%arg0: i32) -> (i32, i32) {
    %c0_i32 = arith.constant 0 : i32
    %c0_i32_0 = arith.constant 0 : i32
    %c0_i32_1 = arith.constant 0 : i32
    return %c0_i32, %c0_i32_0 : i32, i32
  }
  func.func @transform_2(%arg0: i32) -> (i32, i32) {
    %c0_i32 = arith.constant 0 : i32
    %c0_i32_0 = arith.constant 0 : i32
    %c0_i32_1 = arith.constant 0 : i32
    return %c0_i32, %c0_i32_0 : i32, i32
  }
  func.func @transform_3(%arg0: i32) -> (i32, i32) {
    %c0_i32 = arith.constant 0 : i32
    %c0_i32_0 = arith.constant 0 : i32
    %c0_i32_1 = arith.constant 0 : i32
    return %c0_i32, %c0_i32_0 : i32, i32
  }
  func.func @transform_4(%arg0: i32) -> (i32, i32) {
    %c0_i32 = arith.constant 0 : i32
    %c0_i32_0 = arith.constant 0 : i32
    %c0_i32_1 = arith.constant 0 : i32
    return %c0_i32, %c0_i32_0 : i32, i32
  }
  func.func @transform_5(%arg0: i32) -> (i32, i32) {
    %c0_i32 = arith.constant 0 : i32
    %c0_i32_0 = arith.constant 0 : i32
    %c0_i32_1 = arith.constant 0 : i32
    return %c0_i32, %c0_i32_0 : i32, i32
  }
  func.func @transform_6(%arg0: i32) -> (i32, i32) {
    %c0_i32 = arith.constant 0 : i32
    %c0_i32_0 = arith.constant 0 : i32
    %c0_i32_1 = arith.constant 0 : i32
    return %c0_i32, %c0_i32_0 : i32, i32
  }
  func.func @transform_7(%arg0: i32) -> (i32, i32) {
    %c0_i32 = arith.constant 0 : i32
    %c0_i32_0 = arith.constant 0 : i32
    %c0_i32_1 = arith.constant 0 : i32
    return %c0_i32, %c0_i32_0 : i32, i32
  }
  func.func @transform_8(%arg0: i32) -> (i32, i32) {
    %c0_i32 = arith.constant 0 : i32
    %c0_i32_0 = arith.constant 0 : i32
    %c0_i32_1 = arith.constant 0 : i32
    return %c0_i32, %c0_i32_0 : i32, i32
  }
  func.func @transform_9(%arg0: i32) -> (i32, i32) {
    %c0_i32 = arith.constant 0 : i32
    %c0_i32_0 = arith.constant 0 : i32
    %c0_i32_1 = arith.constant 0 : i32
    return %c0_i32, %c0_i32_0 : i32, i32
  }
  func.func @transform_10(%arg0: i32) -> (i32, i32) {
    %c0_i32 = arith.constant 0 : i32
    %c0_i32_0 = arith.constant 0 : i32
    %c0_i32_1 = arith.constant 0 : i32
    return %c0_i32, %c0_i32_0 : i32, i32
  }
  func.func @transform_11(%arg0: i32) -> (i32, i32) {
    %c0_i32 = arith.constant 0 : i32
    %c0_i32_0 = arith.constant 0 : i32
    %c0_i32_1 = arith.constant 0 : i32
    return %c0_i32, %c0_i32_0 : i32, i32
  }
  func.func @transform_12(%arg0: i32) -> (i32, i32) {
    %c0_i32 = arith.constant 0 : i32
    %c0_i32_0 = arith.constant 0 : i32
    %c0_i32_1 = arith.constant 0 : i32
    return %c0_i32, %c0_i32_0 : i32, i32
  }
  func.func @transform_13(%arg0: i32) -> (i32, i32) {
    %c0_i32 = arith.constant 0 : i32
    %c0_i32_0 = arith.constant 0 : i32
    %c0_i32_1 = arith.constant 0 : i32
    return %c0_i32, %c0_i32_0 : i32, i32
  }
  func.func @transform_14(%arg0: i32) -> (i32, i32) {
    %c0_i32 = arith.constant 0 : i32
    %c0_i32_0 = arith.constant 0 : i32
    %c0_i32_1 = arith.constant 0 : i32
    return %c0_i32, %c0_i32_0 : i32, i32
  }
  func.func @transform_15(%arg0: i32) -> (i32, i32) {
    %c0_i32 = arith.constant 0 : i32
    %c0_i32_0 = arith.constant 0 : i32
    %c0_i32_1 = arith.constant 0 : i32
    return %c0_i32, %c0_i32_0 : i32, i32
  }
  func.func @transform_16(%arg0: i32) -> (i32, i32) {
    %c0_i32 = arith.constant 0 : i32
    %c0_i32_0 = arith.constant 0 : i32
    %c0_i32_1 = arith.constant 0 : i32
    return %c0_i32, %c0_i32_0 : i32, i32
  }
  func.func @transform_17(%arg0: i32) -> (i32, i32) {
    %c0_i32 = arith.constant 0 : i32
    %c0_i32_0 = arith.constant 0 : i32
    %c0_i32_1 = arith.constant 0 : i32
    return %c0_i32, %c0_i32_0 : i32, i32
  }
  func.func @transform_18(%arg0: i32) -> (i32, i32) {
    %c0_i32 = arith.constant 0 : i32
    %c0_i32_0 = arith.constant 0 : i32
    %c0_i32_1 = arith.constant 0 : i32
    return %c0_i32, %c0_i32_0 : i32, i32
  }
  func.func @transform_19(%arg0: i32) -> (i32, i32) {
    %c0_i32 = arith.constant 0 : i32
    %c0_i32_0 = arith.constant 0 : i32
    %c0_i32_1 = arith.constant 0 : i32
    return %c0_i32, %c0_i32_0 : i32, i32
  }
  func.func @transform_20(%arg0: i32) -> (i32, i32) {
    %c0_i32 = arith.constant 0 : i32
    %c0_i32_0 = arith.constant 0 : i32
    %c0_i32_1 = arith.constant 0 : i32
    return %c0_i32, %c0_i32_0 : i32, i32
  }
  func.func @transform_21(%arg0: i32) -> (i32, i32) {
    %c0_i32 = arith.constant 0 : i32
    %c0_i32_0 = arith.constant 0 : i32
    %c0_i32_1 = arith.constant 0 : i32
    return %c0_i32, %c0_i32_0 : i32, i32
  }
  func.func @transform_22(%arg0: i32) -> (i32, i32) {
    %c0_i32 = arith.constant 0 : i32
    %c0_i32_0 = arith.constant 0 : i32
    %c0_i32_1 = arith.constant 0 : i32
    return %c0_i32, %c0_i32_0 : i32, i32
  }
  func.func @transform_23(%arg0: i32) -> (i32, i32) {
    %c0_i32 = arith.constant 0 : i32
    %c0_i32_0 = arith.constant 0 : i32
    %c0_i32_1 = arith.constant 0 : i32
    return %c0_i32, %c0_i32_0 : i32, i32
  }
  func.func @transform_24(%arg0: i32) -> (i32, i32) {
    %c0_i32 = arith.constant 0 : i32
    %c0_i32_0 = arith.constant 0 : i32
    %c0_i32_1 = arith.constant 0 : i32
    return %c0_i32, %c0_i32_0 : i32, i32
  }
  func.func @transform_25(%arg0: i32) -> (i32, i32, i32) {
    %c0_i32 = arith.constant 0 : i32
    %c0_i32_0 = arith.constant 0 : i32
    %c0_i32_1 = arith.constant 0 : i32
    return %arg0, %c0_i32, %c0_i32_0 : i32, i32, i32
  }
  func.func @transform_26(%arg0: i32) -> (i32, i32, i32) {
    %c0_i32 = arith.constant 0 : i32
    %c0_i32_0 = arith.constant 0 : i32
    %c0_i32_1 = arith.constant 0 : i32
    return %arg0, %c0_i32, %c0_i32_0 : i32, i32, i32
  }
}

module attributes {stable_mosaic.version = 11 : i64} {
  func.func @_head_kernel(%arg0: memref<8x2x128xf32, #tpu.memory_space<vmem>>, %arg1: memref<8x1x1xf32, #tpu.memory_space<vmem>>, %arg2: memref<128x8xbf16, #tpu.memory_space<vmem>>, %arg3: memref<1x8xf32, #tpu.memory_space<vmem>>, %arg4: memref<2x8xf32, #tpu.memory_space<vmem>>) attributes {dimension_semantics = [], scalar_prefetch = 0 : i64, scratch_operands = 0 : i64, tpu.core_type = #tpu.core_type<tc>} {
    %c0 = arith.constant 0 : index
    %c0_0 = arith.constant 0 : index
    %c0_1 = arith.constant 0 : index
    %0 = vector.load %arg0[%c0, %c0_0, %c0_1] : memref<8x2x128xf32, #tpu.memory_space<vmem>>, vector<8x2x128xf32>
    %c0_2 = arith.constant 0 : index
    %c0_3 = arith.constant 0 : index
    %c0_4 = arith.constant 0 : index
    %1 = vector.load %arg1[%c0_2, %c0_3, %c0_4] : memref<8x1x1xf32, #tpu.memory_space<vmem>>, vector<8x1x1xf32>
    %2 = vector.broadcast %1 : vector<8x1x1xf32> to vector<8x2x128xf32>
    %3 = arith.mulf %0, %2 : vector<8x2x128xf32>
    %cst = arith.constant dense<0.000000e+00> : vector<2x128xf32>
    %4 = vector.multi_reduction <add>, %3, %cst [0] : vector<8x2x128xf32> to vector<2x128xf32>
    %5 = arith.truncf %4 : vector<2x128xf32> to vector<2x128xbf16>
    %c0_5 = arith.constant 0 : index
    %c0_6 = arith.constant 0 : index
    %6 = vector.load %arg2[%c0_5, %c0_6] : memref<128x8xbf16, #tpu.memory_space<vmem>>, vector<128x8xbf16>
    %cst_7 = arith.constant dense<0.000000e+00> : vector<2x8xf32>
    %7 = tpu.matmul %5, %6, %cst_7 {dimension_numbers = #tpu.dot_dimension_numbers<[1], [0], [0], [1], [0, 0, 1, 1], [], []>} : vector<2x128xbf16>, vector<128x8xbf16>, vector<2x8xf32> -> vector<2x8xf32>
    %c0_8 = arith.constant 0 : index
    %c0_9 = arith.constant 0 : index
    %8 = vector.load %arg3[%c0_8, %c0_9] : memref<1x8xf32, #tpu.memory_space<vmem>>, vector<1x8xf32>
    %9 = vector.broadcast %8 : vector<1x8xf32> to vector<2x8xf32>
    %10 = arith.addf %7, %9 : vector<2x8xf32>
    %c0_10 = arith.constant 0 : index
    %c0_11 = arith.constant 0 : index
    %11 = vector.load %arg4[%c0_10, %c0_11] : memref<2x8xf32, #tpu.memory_space<vmem>>, vector<2x8xf32>
    tpu.vector_store %arg4[%c0_10, %c0_11], %10 {strides = array<i32>} : memref<2x8xf32, #tpu.memory_space<vmem>>, vector<2x8xf32>,
    return
  }
}

</mosaic_0001>

<llo_original>
// kernel: cnn_conformer_forward.10
$region0: #{cnn_conformer_forward.10}
  #allocation0 [shape = 'u32[]', space=smem, size = 0x4, offset = 0x4, fixed_abs, tag = 'smem constant byte address 0x4 - core index']
  #allocation1 [shape = 'u32[144,128]{1,0:T(1,128)}', space=vmem, size = 0x12000, scoped, tag = 'internal scratch']
  %s0 = inlined_call_operand.vmem [shape: f32[2,9,39], index: 0, kind: input, shape index: {}]
  %s1 = inlined_call_operand.vmem [shape: f32[2,8,39], index: 1, kind: input, shape index: {}]
  %s2 = inlined_call_operand.vmem [shape: bf16[3,39,128], index: 2, kind: input, shape index: {}]
  %s3 = inlined_call_operand.vmem [shape: f32[1,128], index: 3, kind: input, shape index: {}]
  %s4 = inlined_call_operand.vmem [shape: f32[2,8,128], index: 4, kind: output, shape index: {}]
  %s5 = sld [smem:[#allocation0]]
  $region49: #{cnn_conformer_forward.10} parent=0
    _
  %s7 = ssub.s32 1, %s5
  %s8 = scalar_select 0, %s7, %s5
  loop: start=0, step=1, limit=4
  $region2: #{cnn_conformer_forward.10} parent=0 // loop_pre_header
    _
  $region3: #{cnn_conformer_forward.10} parent=0 // loop_header
    %s10 = sphi 0, %s14
    %p11 = scmp.ge.s32.totalorder %s10, 4
    %s20 = sphi 0, %s22
    %s23 = sphi 0, %s20
    %s24 = sphi 0, %s23
    %s40 = sphi 0, %s24
    %s46 = sphi 0, %s48
    %s49 = sphi 0, %s46
    %s50 = sphi 0, %s49
    %s66 = sphi 0, %s50
    %s70 = sphi 0, %s70
    %s72 = sphi 0, %s70
    %s73 = sphi 0, %s72
    %s87 = sphi 0, %s73
    %s91 = sphi 0, %s91
    %s93 = sphi 0, %s91
    %s94 = sphi 0, %s93
    %s108 = sphi 0, %s94
    %s114 = sphi 0, %s116
    %s117 = sphi 0, %s114
    %s118 = sphi 0, %s117
    %s134 = sphi 0, %s118
  $region4: #{cnn_conformer_forward.10} parent=0 // loop_header_branch
    %13 = sbr.rel (%p11) target = $region8
  $region5: #{cnn_conformer_forward.10} parent=0 // loop_body
    %s15 = ssub.s32 %s10, 1
    %s16 = ssub.s32 %s10, 2
    %s17 = sadd.s32 %s10, 1
    %s18 = ssub.s32 %s10, %s17
    %p19 = scmp.eq.s32.totalorder %s18, 0
    %s21 = sadd.s32 %s20, 1
    %s22 = scalar_select %p19, %s20, %s21
    %p25 = pneg %p19
    %p26 = scmp.eq.s32.totalorder %s10, 1
    %p27 = por %p25, %p26
    %p28 = scmp.ne.s32.totalorder %s20, %s23
    %p29 = scmp.eq.s32.totalorder %s10, 0
    %p30 = por %p28, %p29
    %p31 = scmp.ne.s32.totalorder %s20, %s23
    %p32 = scmp.eq.s32.totalorder %s15, 1
    %p33 = por %p31, %p32
    %p34 = scmp.ne.s32.totalorder %s23, %s24
    %p35 = scmp.eq.s32.totalorder %s15, 0
    %p36 = por %p34, %p35
    %p37 = scmp.ne.s32.totalorder %s23, %s24
    %p38 = scmp.eq.s32.totalorder %s16, 1
    %p39 = por %p37, %p38
    %p41 = scmp.ne.s32.totalorder %s24, %s40
    %p42 = scmp.eq.s32.totalorder %s16, 0
    %p43 = por %p41, %p42
    %s44 = ssub.s32 %s10, %s17
    %p45 = scmp.eq.s32.totalorder %s44, 0
    %s47 = sadd.s32 %s46, 1
    %s48 = scalar_select %p45, %s46, %s47
    %p51 = pneg %p45
    %p52 = scmp.eq.s32.totalorder %s10, 1
    %p53 = por %p51, %p52
    %p54 = scmp.ne.s32.totalorder %s46, %s49
    %p55 = scmp.eq.s32.totalorder %s10, 0
    %p56 = por %p54, %p55
    %p57 = scmp.ne.s32.totalorder %s46, %s49
    %p58 = scmp.eq.s32.totalorder %s15, 1
    %p59 = por %p57, %p58
    %p60 = scmp.ne.s32.totalorder %s49, %s50
    %p61 = scmp.eq.s32.totalorder %s15, 0
    %p62 = por %p60, %p61
    %p63 = scmp.ne.s32.totalorder %s49, %s50
    %p64 = scmp.eq.s32.totalorder %s16, 1
    %p65 = por %p63, %p64
    %p67 = scmp.ne.s32.totalorder %s50, %s66
    %p68 = scmp.eq.s32.totalorder %s16, 0
    %p69 = por %p67, %p68
    %s71 = sadd.s32 %s70, 1
    %p74 = scmp.eq.s32.totalorder %s10, 1
    %p75 = scmp.ne.s32.totalorder %s70, %s72
    %p76 = scmp.eq.s32.totalorder %s10, 0
    %p77 = por %p75, %p76
    %p78 = scmp.ne.s32.totalorder %s70, %s72
    %p79 = scmp.eq.s32.totalorder %s15, 1
    %p80 = por %p78, %p79
    %p81 = scmp.ne.s32.totalorder %s72, %s73
    %p82 = scmp.eq.s32.totalorder %s15, 0
    %p83 = por %p81, %p82
    %p84 = scmp.ne.s32.totalorder %s72, %s73
    %p85 = scmp.eq.s32.totalorder %s16, 1
    %p86 = por %p84, %p85
    %p88 = scmp.ne.s32.totalorder %s73, %s87
    %p89 = scmp.eq.s32.totalorder %s16, 0
    %p90 = por %p88, %p89
    %s92 = sadd.s32 %s91, 1
    %p95 = scmp.eq.s32.totalorder %s10, 1
    %p96 = scmp.ne.s32.totalorder %s91, %s93
    %p97 = scmp.eq.s32.totalorder %s10, 0
    %p98 = por %p96, %p97
    %p99 = scmp.ne.s32.totalorder %s91, %s93
    %p100 = scmp.eq.s32.totalorder %s15, 1
    %p101 = por %p99, %p100
    %p102 = scmp.ne.s32.totalorder %s93, %s94
    %p103 = scmp.eq.s32.totalorder %s15, 0
    %p104 = por %p102, %p103
    %p105 = scmp.ne.s32.totalorder %s93, %s94
    %p106 = scmp.eq.s32.totalorder %s16, 1
    %p107 = por %p105, %p106
    %p109 = scmp.ne.s32.totalorder %s94, %s108
    %p110 = scmp.eq.s32.totalorder %s16, 0
    %p111 = por %p109, %p110
    %s112 = ssub.s32 %s10, %s17
    %p113 = scmp.eq.s32.totalorder %s112, 0
    %s115 = sadd.s32 %s114, 1
    %s116 = scalar_select %p113, %s114, %s115
    %p119 = pneg %p113
    %p120 = scmp.eq.s32.totalorder %s10, 1
    %p121 = por %p119, %p120
    %p122 = scmp.ne.s32.totalorder %s114, %s117
    %p123 = scmp.eq.s32.totalorder %s10, 0
    %p124 = por %p122, %p123
    %p125 = scmp.ne.s32.totalorder %s114, %s117
    %p126 = scmp.eq.s32.totalorder %s15, 1
    %p127 = por %p125, %p126
    %p128 = scmp.ne.s32.totalorder %s117, %s118
    %p129 = scmp.eq.s32.totalorder %s15, 0
    %p130 = por %p128, %p129
    %p131 = scmp.ne.s32.totalorder %s117, %s118
    %p132 = scmp.eq.s32.totalorder %s16, 1
    %p133 = por %p131, %p132
    %p135 = scmp.ne.s32.totalorder %s118, %s134
    %p136 = scmp.eq.s32.totalorder %s16, 0
    %p137 = por %p135, %p136
    %p138 = scmp.le.s32.totalorder 1, %s10
    %p139 = scmp.lt.s32.totalorder %s10, 3
    %p140 = pnand %p138, %p139
    %p141 = pneg %p140
    // Predicated region
    $region9: #{cnn_conformer_forward.10} parent=5 // pred_check
      _
    $region10: #{cnn_conformer_forward.10} parent=5 // pred_check_branch
      %143 = sbr.rel (%p140) target = $region12
    $region11: #{cnn_conformer_forward.10} parent=5 // pred_region
      %s144 = ssub.s32 %s10, 1
      // Predicated region
      $region13: #{cnn_conformer_forward.10} parent=11 // pred_check
        %p145 = pneg %p83
      $region14: #{cnn_conformer_forward.10} parent=11 // pred_check_branch
        %147 = sbr.rel (%p145) target = $region16
      $region15: #{cnn_conformer_forward.10} parent=11 // pred_region
        _
      $region16: #{cnn_conformer_forward.10} parent=11 // pred_fallthru
        _
      // Predicated region
      $region17: #{cnn_conformer_forward.10} parent=11 // pred_check
        %p148 = pneg %p104
      $region18: #{cnn_conformer_forward.10} parent=11 // pred_check_branch
        %150 = sbr.rel (%p148) target = $region20
      $region19: #{cnn_conformer_forward.10} parent=11 // pred_region
        _
      $region20: #{cnn_conformer_forward.10} parent=11 // pred_fallthru
        _
    $region12: #{cnn_conformer_forward.10} parent=5 // pred_fallthru
      _
    %p151 = scmp.lt.s32.totalorder %s10, 2
    // Predicated region
    $region21: #{cnn_conformer_forward.10} parent=5 // pred_check
      %p152 = pneg %p151
    $region22: #{cnn_conformer_forward.10} parent=5 // pred_check_branch
      %154 = sbr.rel (%p152) target = $region24
    $region23: #{cnn_conformer_forward.10} parent=5 // pred_region
      // Predicated region
      $region25: #{cnn_conformer_forward.10} parent=23 // pred_check
        %p155 = pneg %p30
      $region26: #{cnn_conformer_forward.10} parent=23 // pred_check_branch
        %157 = sbr.rel (%p155) target = $region28
      $region27: #{cnn_conformer_forward.10} parent=23 // pred_region
        %p158 = scmp.lt.s32.totalorder %s10, 1
        %s159 = scalar_select %p158, %s10, 1
        %s160 = smul.addr %s159, 2
        %s161 = smul.addr %s160, 8
        %s162 = scalar_lea.vmem %s0, %s161
      $region28: #{cnn_conformer_forward.10} parent=23 // pred_fallthru
        _
      // Predicated region
      $region29: #{cnn_conformer_forward.10} parent=23 // pred_check
        %p163 = pneg %p56
      $region30: #{cnn_conformer_forward.10} parent=23 // pred_check_branch
        %165 = sbr.rel (%p163) target = $region32
      $region31: #{cnn_conformer_forward.10} parent=23 // pred_region
        %p166 = scmp.lt.s32.totalorder %s10, 1
        %s167 = scalar_select %p166, %s10, 1
        %s168 = smul.addr %s167, 8
        %s169 = scalar_lea.vmem %s1, %s168
      $region32: #{cnn_conformer_forward.10} parent=23 // pred_fallthru
        _
    $region24: #{cnn_conformer_forward.10} parent=5 // pred_fallthru
      _
    %p170 = scmp.le.s32.totalorder 1, %s10
    %p171 = scmp.lt.s32.totalorder %s10, 3
    %p172 = pnand %p170, %p171
    %p173 = pneg %p172
    // Predicated region
    $region33: #{cnn_conformer_forward.10} parent=5 // pred_check
      _
    $region34: #{cnn_conformer_forward.10} parent=5 // pred_check_branch
      %175 = sbr.rel (%p172) target = $region36
    $region35: #{cnn_conformer_forward.10} parent=5 // pred_region
      %s176 = ssub.s32 %s10, 1
      %p177 = scmp.lt.s32.totalorder %s15, 1
      %s178 = scalar_select %p177, %s15, 1
      %s179 = smul.addr %s178, 2
      %s180 = smul.addr %s179, 8
      %s181 = scalar_lea.vmem %s0, %s180
      %p182 = pneg %p36
      %p183 = pneg %p33
      %p184 = scmp.lt.s32.totalorder %s15, 1
      %s185 = scalar_select %p184, %s15, 1
      %s186 = smul.addr %s185, 8
      %s187 = scalar_lea.vmem %s1, %s186
      %p188 = pneg %p62
      %p189 = pneg %p59
      %p190 = pneg %p83
      %p191 = pneg %p80
      %p192 = pneg %p104
      %p193 = pneg %p101
      %p194 = pneg %p130
      %p195 = pneg %p127
      %p196 = scmp.lt.s32.totalorder %s15, 1
      %s197 = scalar_select %p196, %s15, 1
      %s198 = smul.addr %s197, 8
      %s199 = scalar_lea.vmem %s4, %s198
      %p200 = scmp.lt.s32.totalorder %s15, 1
      %s201 = scalar_select %p200, %s15, 1
      %s202 = smul.addr %s201, 2
      %s203 = smul.addr %s202, 8
      %s204 = scalar_lea.vmem %s0, %s203
      %p205 = scmp.lt.s32.totalorder %s15, 1
      %s206 = scalar_select %p205, %s15, 1
      %s207 = smul.addr %s206, 8
      %s208 = scalar_lea.vmem %s1, %s207
      %p209 = scmp.lt.s32.totalorder %s15, 1
      %s210 = scalar_select %p209, %s15, 1
      %s211 = smul.addr %s210, 8
      %s212 = scalar_lea.vmem %s4, %s211
      %v214 = vld [vmem:[%s204] sm:$0xff]
      %v215 = vld [vmem:[%s204 + $0x8] sm:$0x1]
      %v216 = vld [vmem:[%s208] sm:$0xff]
      %v218 = vrot.slane %v216, 7
      %vm220 = vcmask 1040384
      %v221 = vsel %vm220, 0.0, %v218
      %v222 = vld [vmem:[%s3] sm:$0x1]
      %v223 = vpack.c.bf16 %v221, %v221
      %v224 = vld [vmem:[%s2] sm:$0xf]
      %v225 = vld [vmem:[%s2 + $0x4] sm:$0xf]
      %v226 = vld [vmem:[%s2 + $0x8] sm:$0xf]
      %v227 = vld [vmem:[%s2 + $0xc] sm:$0xf]
      %v228 = vld [vmem:[%s2 + $0x10] sm:$0xf]
      %v229 = vpack.c.bf16 %v214, %v214
      %s230 = scalar_lea.vmem %s2, 20
      %v231 = vld [vmem:[%s230] sm:$0xf]
      %v232 = vld [vmem:[%s230 + $0x4] sm:$0xf]
      %v233 = vld [vmem:[%s230 + $0x8] sm:$0xf]
      %v234 = vld [vmem:[%s230 + $0xc] sm:$0xf]
      %v235 = vld [vmem:[%s230 + $0x10] sm:$0xf]
      %v241 = vunpack.c.l.b16 %v231
      %v242 = vunpack.c.l.b16 %v232
      %v243 = vunpack.c.l.b16 %v233
      %v244 = vunpack.c.l.b16 %v234
      %v245 = vunpack.c.l.b16 %v235
      %v246 = vpack.c.b16 %v242, %v241
      %v247 = vpack.c.b16 %v244, %v243
      %v248 = vpack.c.b16 %v245, %v245
      %vm251 = vcmask 318464
      %v253 = vsel %vm251, %v229, 0
      %vm255 = vcmask 1042432
      %vm256 = vcmask 1043456
      %v257 = vsel %vm255, 4294967295, 65535
      %v258 = vsel %vm256, %v257, 0
      %v260 = vand.u32 %v248, %v258
      %262 = vmatprep.subr.bf16.mxu0 0
      %263 = vmatpush1.bf16.msra.mxu0 0
      %264 = vmatprep.subr.bf16.mxu0 0
      %265 = vmatpush1.bf16.msra.mxu0 0
      %266 = vmatprep.subr.bf16.mxu0 0
      %267 = vmatpush1.bf16.msra.mxu0 0
      %268 = vmatprep.subr.bf16.mxu0 0
      %269 = vmatpush1.bf16.msra.mxu0 0
      %270 = vmatprep.subr.bf16.mxu0 0
      %271 = vmatpush1.bf16.msra.mxu0 0
      %272 = vmatprep.subr.bf16.mxu0 0
      %273 = vmatpush1.bf16.msra.mxu0 %v260
      %274 = vmatprep.subr.bf16.mxu0 0
      %275 = vmatpush1.bf16.msra.mxu0 %v247
      %276 = vmatprep.subr.bf16.mxu0 0
      %277 = vmatpush1.bf16.msra.mxu0 %v246
      %278 = vmatprep.subr.bf16.mxu0 0
      %279 = vmatpush2.bf16.msra.mxu0 0
      %280 = vmatprep.subr.bf16.mxu0 0
      %281 = vmatpush2.bf16.msra.mxu0 0
      %282 = vmatprep.subr.bf16.mxu0 0
      %283 = vmatpush2.bf16.msra.mxu0 0
      %284 = vmatprep.subr.bf16.mxu0 0
      %285 = vmatpush2.bf16.msra.mxu0 0
      %286 = vmatprep.subr.bf16.mxu0 0
      %287 = vmatpush2.bf16.msra.mxu0 0
      %288 = vmatprep.subr.bf16.mxu0 0
      %289 = vmatpush2.bf16.msra.mxu0 0
      %290 = vmatprep.subr.bf16.mxu0 0
      %291 = vmatpush2.bf16.msra.mxu0 0
      %292 = vmatprep.subr.bf16.mxu0 0
      %293 = vmatpush2.bf16.msra.mxu0 0
      %294 = vmatprep.mubr.bf16.mxu0 0
      %295 = vmatmul.mubr.bf16.gmra.mxu0 %v253
      %v296 = vpop.f32.mrf.mxu0
      %v297 = vadd.f32 0.0, %v296
      %v298 = vpop.f32.mrf.mxu0
      %v299 = vpop.f32.mrf.mxu0
      %v300 = vpop.f32.mrf.mxu0
      %301 = vdwg.mxu0
      %v307 = vunpack.c.l.b16 %v224
      %v308 = vunpack.c.l.b16 %v225
      %v309 = vunpack.c.l.b16 %v226
      %v310 = vunpack.c.l.b16 %v227
      %v311 = vunpack.c.l.b16 %v228
      %v312 = vpack.c.b16 %v308, %v307
      %v313 = vpack.c.b16 %v310, %v309
      %v314 = vpack.c.b16 %v311, %v311
      %v318 = vsel %vm251, %v223, 0
      %v321 = vand.u32 %v314, %v258
      %323 = vmatprep.subr.bf16.mxu0 0
      %324 = vmatpush1.bf16.msra.mxu0 0
      %325 = vmatprep.subr.bf16.mxu0 0
      %326 = vmatpush1.bf16.msra.mxu0 0
      %327 = vmatprep.subr.bf16.mxu0 0
      %328 = vmatpush1.bf16.msra.mxu0 0
      %329 = vmatprep.subr.bf16.mxu0 0
      %330 = vmatpush1.bf16.msra.mxu0 0
      %331 = vmatprep.subr.bf16.mxu0 0
      %332 = vmatpush1.bf16.msra.mxu0 0
      %333 = vmatprep.subr.bf16.mxu0 0
      %334 = vmatpush1.bf16.msra.mxu0 %v321
      %335 = vmatprep.subr.bf16.mxu0 0
      %336 = vmatpush1.bf16.msra.mxu0 %v313
      %337 = vmatprep.subr.bf16.mxu0 0
      %338 = vmatpush1.bf16.msra.mxu0 %v312
      %339 = vmatprep.subr.bf16.mxu0 0
      %340 = vmatpush2.bf16.msra.mxu0 0
      %341 = vmatprep.subr.bf16.mxu0 0
      %342 = vmatpush2.bf16.msra.mxu0 0
      %343 = vmatprep.subr.bf16.mxu0 0
      %344 = vmatpush2.bf16.msra.mxu0 0
      %345 = vmatprep.subr.bf16.mxu0 0
      %346 = vmatpush2.bf16.msra.mxu0 0
      %347 = vmatprep.subr.bf16.mxu0 0
      %348 = vmatpush2.bf16.msra.mxu0 0
      %349 = vmatprep.subr.bf16.mxu0 0
      %350 = vmatpush2.bf16.msra.mxu0 0
      %351 = vmatprep.subr.bf16.mxu0 0
      %352 = vmatpush2.bf16.msra.mxu0 0
      %353 = vmatprep.subr.bf16.mxu0 0
      %354 = vmatpush2.bf16.msra.mxu0 0
      %355 = vmatprep.mubr.bf16.mxu0 0
      %356 = vmatmul.mubr.bf16.gmra.mxu0 %v318
      %v357 = vpop.f32.mrf.mxu0
      %v358 = vadd.f32 %v297, %v357
      %v359 = vpop.f32.mrf.mxu0
      %v360 = vpop.f32.mrf.mxu0
      %v361 = vpop.f32.mrf.mxu0
      %362 = vdwg.mxu0
      %v363 = vpack.c.bf16 %v216, %v216
      %s364 = scalar_lea.vmem %s2, 40
      %v365 = vld [vmem:[%s364] sm:$0xf]
      %v366 = vld [vmem:[%s364 + $0x4] sm:$0xf]
      %v367 = vld [vmem:[%s364 + $0x8] sm:$0xf]
      %v368 = vld [vmem:[%s364 + $0xc] sm:$0xf]
      %v369 = vld [vmem:[%s364 + $0x10] sm:$0xf]
      %v375 = vunpack.c.l.b16 %v365
      %v376 = vunpack.c.l.b16 %v366
      %v377 = vunpack.c.l.b16 %v367
      %v378 = vunpack.c.l.b16 %v368
      %v379 = vunpack.c.l.b16 %v369
      %v380 = vpack.c.b16 %v376, %v375
      %v381 = vpack.c.b16 %v378, %v377
      %v382 = vpack.c.b16 %v379, %v379
      %v386 = vsel %vm251, %v363, 0
      %v389 = vand.u32 %v382, %v258
      %391 = vmatprep.subr.bf16.mxu0 0
      %392 = vmatpush1.bf16.msra.mxu0 0
      %393 = vmatprep.subr.bf16.mxu0 0
      %394 = vmatpush1.bf16.msra.mxu0 0
      %395 = vmatprep.subr.bf16.mxu0 0
      %396 = vmatpush1.bf16.msra.mxu0 0
      %397 = vmatprep.subr.bf16.mxu0 0
      %398 = vmatpush1.bf16.msra.mxu0 0
      %399 = vmatprep.subr.bf16.mxu0 0
      %400 = vmatpush1.bf16.msra.mxu0 0
      %401 = vmatprep.subr.bf16.mxu0 0
      %402 = vmatpush1.bf16.msra.mxu0 %v389
      %403 = vmatprep.subr.bf16.mxu0 0
      %404 = vmatpush1.bf16.msra.mxu0 %v381
      %405 = vmatprep.subr.bf16.mxu0 0
      %406 = vmatpush1.bf16.msra.mxu0 %v380
      %407 = vmatprep.subr.bf16.mxu0 0
      %408 = vmatpush2.bf16.msra.mxu0 0
      %409 = vmatprep.subr.bf16.mxu0 0
      %410 = vmatpush2.bf16.msra.mxu0 0
      %411 = vmatprep.subr.bf16.mxu0 0
      %412 = vmatpush2.bf16.msra.mxu0 0
      %413 = vmatprep.subr.bf16.mxu0 0
      %414 = vmatpush2.bf16.msra.mxu0 0
      %415 = vmatprep.subr.bf16.mxu0 0
      %416 = vmatpush2.bf16.msra.mxu0 0
      %417 = vmatprep.subr.bf16.mxu0 0
      %418 = vmatpush2.bf16.msra.mxu0 0
      %419 = vmatprep.subr.bf16.mxu0 0
      %420 = vmatpush2.bf16.msra.mxu0 0
      %421 = vmatprep.subr.bf16.mxu0 0
      %422 = vmatpush2.bf16.msra.mxu0 0
      %423 = vmatprep.mubr.bf16.mxu0 0
      %424 = vmatmul.mubr.bf16.gmra.mxu0 %v386
      %v425 = vpop.f32.mrf.mxu0
      %v426 = vadd.f32 0.0, %v425
      %v427 = vpop.f32.mrf.mxu0
      %v428 = vpop.f32.mrf.mxu0
      %v429 = vpop.f32.mrf.mxu0
      %430 = vdwg.mxu0
      %v431 = vadd.f32 %v358, %v426
      %v433 = vlaneseq
      %v434 = vshrl.u32 %v433, 7
      %v435 = vsub.s32 0, %v434
      %v436 = vrot.slane %v222, %v435
      %v438 = vadd.f32 %v431, %v436
      %439 = vmatprep.subr.bf16.mxu0 0
      %440 = vmatpush1.bf16.msra.mxu0 0
      %441 = vmatprep.subr.bf16.mxu0 0
      %442 = vmatpush1.bf16.msra.mxu0 0
      %443 = vmatprep.subr.bf16.mxu0 0
      %444 = vmatpush1.bf16.msra.mxu0 0
      %445 = vmatprep.subr.bf16.mxu0 0
      %446 = vmatpush1.bf16.msra.mxu0 0
      %447 = vmatprep.subr.bf16.mxu0 0
      %448 = vmatpush1.bf16.msra.mxu0 0
      %449 = vmatprep.subr.bf16.mxu0 0
      %450 = vmatpush1.bf16.msra.mxu0 %v260
      %451 = vmatprep.subr.bf16.mxu0 0
      %452 = vmatpush1.bf16.msra.mxu0 %v247
      %453 = vmatprep.subr.bf16.mxu0 0
      %454 = vmatpush1.bf16.msra.mxu0 %v246
      %455 = vmatprep.subr.bf16.mxu0 0
      %456 = vmatpush2.bf16.msra.mxu0 0
      %457 = vmatprep.subr.bf16.mxu0 0
      %458 = vmatpush2.bf16.msra.mxu0 0
      %459 = vmatprep.subr.bf16.mxu0 0
      %460 = vmatpush2.bf16.msra.mxu0 0
      %461 = vmatprep.subr.bf16.mxu0 0
      %462 = vmatpush2.bf16.msra.mxu0 0
      %463 = vmatprep.subr.bf16.mxu0 0
      %464 = vmatpush2.bf16.msra.mxu0 0
      %465 = vmatprep.subr.bf16.mxu0 0
      %466 = vmatpush2.bf16.msra.mxu0 0
      %467 = vmatprep.subr.bf16.mxu0 0
      %468 = vmatpush2.bf16.msra.mxu0 0
      %469 = vmatprep.subr.bf16.mxu0 0
      %470 = vmatpush2.bf16.msra.mxu0 0
      %471 = vmatprep.mubr.bf16.mxu0 0
      %472 = vmatmul.mubr.bf16.gmra.mxu0 %v386
      %v473 = vpop.f32.mrf.mxu0
      %v474 = vadd.f32 0.0, %v473
      %v475 = vpop.f32.mrf.mxu0
      %v476 = vpop.f32.mrf.mxu0
      %v477 = vpop.f32.mrf.mxu0
      %478 = vdwg.mxu0
      %479 = vmatprep.subr.bf16.mxu0 0
      %480 = vmatpush1.bf16.msra.mxu0 0
      %481 = vmatprep.subr.bf16.mxu0 0
      %482 = vmatpush1.bf16.msra.mxu0 0
      %483 = vmatprep.subr.bf16.mxu0 0
      %484 = vmatpush1.bf16.msra.mxu0 0
      %485 = vmatprep.subr.bf16.mxu0 0
      %486 = vmatpush1.bf16.msra.mxu0 0
      %487 = vmatprep.subr.bf16.mxu0 0
      %488 = vmatpush1.bf16.msra.mxu0 0
      %489 = vmatprep.subr.bf16.mxu0 0
      %490 = vmatpush1.bf16.msra.mxu0 %v321
      %491 = vmatprep.subr.bf16.mxu0 0
      %492 = vmatpush1.bf16.msra.mxu0 %v313
      %493 = vmatprep.subr.bf16.mxu0 0
      %494 = vmatpush1.bf16.msra.mxu0 %v312
      %495 = vmatprep.subr.bf16.mxu0 0
      %496 = vmatpush2.bf16.msra.mxu0 0
      %497 = vmatprep.subr.bf16.mxu0 0
      %498 = vmatpush2.bf16.msra.mxu0 0
      %499 = vmatprep.subr.bf16.mxu0 0
      %500 = vmatpush2.bf16.msra.mxu0 0
      %501 = vmatprep.subr.bf16.mxu0 0
      %502 = vmatpush2.bf16.msra.mxu0 0
      %503 = vmatprep.subr.bf16.mxu0 0
      %504 = vmatpush2.bf16.msra.mxu0 0
      %505 = vmatprep.subr.bf16.mxu0 0
      %506 = vmatpush2.bf16.msra.mxu0 0
      %507 = vmatprep.subr.bf16.mxu0 0
      %508 = vmatpush2.bf16.msra.mxu0 0
      %509 = vmatprep.subr.bf16.mxu0 0
      %510 = vmatpush2.bf16.msra.mxu0 0
      %511 = vmatprep.mubr.bf16.mxu0 0
      %512 = vmatmul.mubr.bf16.gmra.mxu0 %v253
      %v513 = vpop.f32.mrf.mxu0
      %v514 = vadd.f32 %v474, %v513
      %v515 = vpop.f32.mrf.mxu0
      %v516 = vpop.f32.mrf.mxu0
      %v517 = vpop.f32.mrf.mxu0
      %518 = vdwg.mxu0
      %v519 = vpack.c.bf16 %v215, %v214
      %v521 = vshrl.u32 %v519, 16
      %v523 = vshll.u32 %v519, 16
      %v525 = vrot.slane %v523, 1
      %v526 = vor.u32 %v521, %v525
      %v528 = vsel %vm251, %v526, 0
      %530 = vmatprep.subr.bf16.mxu0 0
      %531 = vmatpush1.bf16.msra.mxu0 0
      %532 = vmatprep.subr.bf16.mxu0 0
      %533 = vmatpush1.bf16.msra.mxu0 0
      %534 = vmatprep.subr.bf16.mxu0 0
      %535 = vmatpush1.bf16.msra.mxu0 0
      %536 = vmatprep.subr.bf16.mxu0 0
      %537 = vmatpush1.bf16.msra.mxu0 0
      %538 = vmatprep.subr.bf16.mxu0 0
      %539 = vmatpush1.bf16.msra.mxu0 0
      %540 = vmatprep.subr.bf16.mxu0 0
      %541 = vmatpush1.bf16.msra.mxu0 %v389
      %542 = vmatprep.subr.bf16.mxu0 0
      %543 = vmatpush1.bf16.msra.mxu0 %v381
      %544 = vmatprep.subr.bf16.mxu0 0
      %545 = vmatpush1.bf16.msra.mxu0 %v380
      %546 = vmatprep.subr.bf16.mxu0 0
      %547 = vmatpush2.bf16.msra.mxu0 0
      %548 = vmatprep.subr.bf16.mxu0 0
      %549 = vmatpush2.bf16.msra.mxu0 0
      %550 = vmatprep.subr.bf16.mxu0 0
      %551 = vmatpush2.bf16.msra.mxu0 0
      %552 = vmatprep.subr.bf16.mxu0 0
      %553 = vmatpush2.bf16.msra.mxu0 0
      %554 = vmatprep.subr.bf16.mxu0 0
      %555 = vmatpush2.bf16.msra.mxu0 0
      %556 = vmatprep.subr.bf16.mxu0 0
      %557 = vmatpush2.bf16.msra.mxu0 0
      %558 = vmatprep.subr.bf16.mxu0 0
      %559 = vmatpush2.bf16.msra.mxu0 0
      %560 = vmatprep.subr.bf16.mxu0 0
      %561 = vmatpush2.bf16.msra.mxu0 0
      %562 = vmatprep.mubr.bf16.mxu0 0
      %563 = vmatmul.mubr.bf16.gmra.mxu0 %v528
      %v564 = vpop.f32.mrf.mxu0
      %v565 = vadd.f32 0.0, %v564
      %v566 = vpop.f32.mrf.mxu0
      %v567 = vpop.f32.mrf.mxu0
      %v568 = vpop.f32.mrf.mxu0
      %569 = vdwg.mxu0
      %v570 = vadd.f32 %v514, %v565
      %v571 = vadd.f32 %v570, %v436
      %v572 = vmax.f32 %v438, 0.0
      %v573 = vmax.f32 %v571, 0.0
      %v574 = vmax.f32 %v572, %v573
      %575 = vst [vmem:[%s212] sm:$0xff] %v574
      %p576 = scmp.lt.s32.totalorder %s15, 1
      %s577 = scalar_select %p576, %s15, 1
      %s578 = smul.addr %s577, 8
      %s579 = scalar_lea.vmem %s4, %s578
      // Predicated region
      $region37: #{cnn_conformer_forward.10} parent=35 // pred_check
        %p580 = pneg %p127
      $region38: #{cnn_conformer_forward.10} parent=35 // pred_check_branch
        %582 = sbr.rel (%p580) target = $region40
      $region39: #{cnn_conformer_forward.10} parent=35 // pred_region
        _
      $region40: #{cnn_conformer_forward.10} parent=35 // pred_fallthru
        _
    $region36: #{cnn_conformer_forward.10} parent=5 // pred_fallthru
      _
    %p583 = scmp.le.s32.totalorder 2, %s10
    // Predicated region
    $region41: #{cnn_conformer_forward.10} parent=5 // pred_check
      %p584 = pneg %p583
    $region42: #{cnn_conformer_forward.10} parent=5 // pred_check_branch
      %586 = sbr.rel (%p584) target = $region44
    $region43: #{cnn_conformer_forward.10} parent=5 // pred_region
      %s587 = ssub.s32 %s10, 2
      // Predicated region
      $region45: #{cnn_conformer_forward.10} parent=43 // pred_check
        %p588 = pneg %p133
      $region46: #{cnn_conformer_forward.10} parent=43 // pred_check_branch
        %590 = sbr.rel (%p588) target = $region48
      $region47: #{cnn_conformer_forward.10} parent=43 // pred_region
        %p591 = scmp.lt.s32.totalorder %s16, 1
        %s592 = scalar_select %p591, %s16, 1
        %s593 = smul.addr %s592, 8
        %s594 = scalar_lea.vmem %s4, %s593
      $region48: #{cnn_conformer_forward.10} parent=43 // pred_fallthru
        _
    $region44: #{cnn_conformer_forward.10} parent=5 // pred_fallthru
      _
  $region6: #{cnn_conformer_forward.10} parent=0 // loop_footer
    %s14 = sadd.s32 1, %s10
  $region7: #{cnn_conformer_forward.10} parent=0 // loop_footer_branch
    %9 = sbr.rel target = $region3
  $region8: #{cnn_conformer_forward.10} parent=0 // loop_exit
    _

// kernel: cnn_conformer_forward.19
$region0: #{cnn_conformer_forward.19}
  #allocation0 [shape = 'u32[]', space=smem, size = 0x4, offset = 0x4, fixed_abs, tag = 'smem constant byte address 0x4 - core index']
  #allocation1 [shape = 'u32[144,128]{1,0:T(1,128)}', space=vmem, size = 0x12000, scoped, tag = 'internal scratch']
  %s0 = inlined_call_operand.vmem [shape: f32[8,2,128], index: 0, kind: input, shape index: {}]
  %s1 = inlined_call_operand.vmem [shape: f32[8,1,1], index: 1, kind: input, shape index: {}]
  %s2 = inlined_call_operand.vmem [shape: bf16[128,8], index: 2, kind: input, shape index: {}]
  %s3 = inlined_call_operand.vmem [shape: f32[1,8], index: 3, kind: input, shape index: {}]
  %s4 = inlined_call_operand.hbm [shape: f32[2,8], index: 4, kind: output, shape index: {}]
  %s5 = sld [smem:[#allocation0]]
  $region26: #{cnn_conformer_forward.19} parent=0
    _
  %s7 = ssub.s32 1, %s5
  %s8 = scalar_select 0, %s7, %s5
  $region1: #{cnn_conformer_forward.19} parent=0
    #allocation2 [shape = 'u8[1024]{0}', space=vmem, size = 0x400, scoped, tag = 'output window, operand 0, single buffered']
    #allocation3 [shape = 's32[1]{0}', space=sflag, size = 0x4, scoped, tag = 'scoped memory for cnn_conformer_forward.19']
    %9 = vsyncpa [#allocation3], 0
    // Predicated region
    $region2: #{cnn_conformer_forward.19} parent=1 // pred_check
      _
    $region3: #{cnn_conformer_forward.19} parent=1 // pred_check_branch
      %11 = sbr.rel (0) target = $region5
    $region4: #{cnn_conformer_forward.19} parent=1 // pred_region
      _
    $region5: #{cnn_conformer_forward.19} parent=1 // pred_fallthru
      _
    // Predicated region
    $region6: #{cnn_conformer_forward.19} parent=1 // pred_check
      _
    $region7: #{cnn_conformer_forward.19} parent=1 // pred_check_branch
      %13 = sbr.rel (0) target = $region9
    $region8: #{cnn_conformer_forward.19} parent=1 // pred_region
      _
    $region9: #{cnn_conformer_forward.19} parent=1 // pred_fallthru
      _
    // Predicated region
    $region10: #{cnn_conformer_forward.19} parent=1 // pred_check
      _
    $region11: #{cnn_conformer_forward.19} parent=1 // pred_check_branch
      %15 = sbr.rel (0) target = $region13
    $region12: #{cnn_conformer_forward.19} parent=1 // pred_region
      _
    $region13: #{cnn_conformer_forward.19} parent=1 // pred_fallthru
      _
    // Predicated region
    $region14: #{cnn_conformer_forward.19} parent=1 // pred_check
      _
    $region15: #{cnn_conformer_forward.19} parent=1 // pred_check_branch
      %17 = sbr.rel (0) target = $region17
    $region16: #{cnn_conformer_forward.19} parent=1 // pred_region
      _
    $region17: #{cnn_conformer_forward.19} parent=1 // pred_fallthru
      _
    %v19 = vld [vmem:[%s0] sm:$0x3]
    %v20 = vld [vmem:[%s0 + $0x2] sm:$0x3]
    %v21 = vld [vmem:[%s0 + $0x4] sm:$0x3]
    %v22 = vld [vmem:[%s0 + $0x6] sm:$0x3]
    %v23 = vld [vmem:[%s0 + $0x8] sm:$0x3]
    %v24 = vld [vmem:[%s0 + $0xa] sm:$0x3]
    %v25 = vld [vmem:[%s0 + $0xc] sm:$0x3]
    %v26 = vld [vmem:[%s0 + $0xe] sm:$0x3]
    %v27 = vld [vmem:[%s1] sm:$0x1]
    %v28 = vld [vmem:[%s1 + $0x1] sm:$0x1]
    %v29 = vld [vmem:[%s1 + $0x2] sm:$0x1]
    %v30 = vld [vmem:[%s1 + $0x3] sm:$0x1]
    %v31 = vld [vmem:[%s1 + $0x4] sm:$0x1]
    %v32 = vld [vmem:[%s1 + $0x5] sm:$0x1]
    %v33 = vld [vmem:[%s1 + $0x6] sm:$0x1]
    %v34 = vld [vmem:[%s1 + $0x7] sm:$0x1]
    %v43 = vlaneseq
    %v44 = vshrl.u32 %v43, 7
    %v45 = vsub.s32 0, %v44
    %v46 = vrot.slane %v27, %v45
    %v47 = vlaneseq
    %v48 = vshrl.u32 %v47, 7
    %v49 = vsub.s32 0, %v48
    %v50 = vrot.slane %v28, %v49
    %v51 = vlaneseq
    %v52 = vshrl.u32 %v51, 7
    %v53 = vsub.s32 0, %v52
    %v54 = vrot.slane %v29, %v53
    %v55 = vlaneseq
    %v56 = vshrl.u32 %v55, 7
    %v57 = vsub.s32 0, %v56
    %v58 = vrot.slane %v30, %v57
    %v59 = vlaneseq
    %v60 = vshrl.u32 %v59, 7
    %v61 = vsub.s32 0, %v60
    %v62 = vrot.slane %v31, %v61
    %v63 = vlaneseq
    %v64 = vshrl.u32 %v63, 7
    %v65 = vsub.s32 0, %v64
    %v66 = vrot.slane %v32, %v65
    %v67 = vlaneseq
    %v68 = vshrl.u32 %v67, 7
    %v69 = vsub.s32 0, %v68
    %v70 = vrot.slane %v33, %v69
    %v71 = vlaneseq
    %v72 = vshrl.u32 %v71, 7
    %v73 = vsub.s32 0, %v72
    %v74 = vrot.slane %v34, %v73
    %75 = vset.pattern.permute.xlu0 0
    %76 = vperm.xlu0 %75, %v46
    %v77 = vpop.permute.xlu0 %76
    %79 = vset.pattern.permute.xlu0 0
    %80 = vperm.xlu0 %79, %v50
    %v81 = vpop.permute.xlu0 %80
    %83 = vset.pattern.permute.xlu0 0
    %84 = vperm.xlu0 %83, %v54
    %v85 = vpop.permute.xlu0 %84
    %87 = vset.pattern.permute.xlu0 0
    %88 = vperm.xlu0 %87, %v58
    %v89 = vpop.permute.xlu0 %88
    %91 = vset.pattern.permute.xlu0 0
    %92 = vperm.xlu0 %91, %v62
    %v93 = vpop.permute.xlu0 %92
    %95 = vset.pattern.permute.xlu0 0
    %96 = vperm.xlu0 %95, %v66
    %v97 = vpop.permute.xlu0 %96
    %99 = vset.pattern.permute.xlu0 0
    %100 = vperm.xlu0 %99, %v70
    %v101 = vpop.permute.xlu0 %100
    %103 = vset.pattern.permute.xlu0 0
    %104 = vperm.xlu0 %103, %v74
    %v105 = vpop.permute.xlu0 %104
    %v107 = vmul.f32 %v19, %v77
    %v108 = vmul.f32 %v20, %v81
    %v109 = vmul.f32 %v21, %v85
    %v110 = vmul.f32 %v22, %v89
    %v111 = vmul.f32 %v23, %v93
    %v112 = vmul.f32 %v24, %v97
    %v113 = vmul.f32 %v25, %v101
    %v114 = vmul.f32 %v26, %v105
    %vm115 = vcmask 1041408
    %v116 = vsel %vm115, %v107, 0.0
    %v117 = vsel %vm115, %v108, 0.0
    %v118 = vadd.f32 %v116, %v117
    %v119 = vsel %vm115, %v109, 0.0
    %v120 = vadd.f32 %v118, %v119
    %v121 = vsel %vm115, %v110, 0.0
    %v122 = vadd.f32 %v120, %v121
    %v123 = vsel %vm115, %v111, 0.0
    %v124 = vadd.f32 %v122, %v123
    %v125 = vsel %vm115, %v112, 0.0
    %v126 = vadd.f32 %v124, %v125
    %v127 = vsel %vm115, %v113, 0.0
    %v128 = vadd.f32 %v126, %v127
    %v129 = vsel %vm115, %v114, 0.0
    %v130 = vadd.f32 %v128, %v129
    %v131 = vpack.c.bf16 %v130, %v130
    %v132 = vld [vmem:[%s2] sm:$0xf]
    %v133 = vld [vmem:[%s2 + $0x4] sm:$0xf]
    %v134 = vld [vmem:[%s2 + $0x8] sm:$0xf]
    %v135 = vld [vmem:[%s2 + $0xc] sm:$0xf]
    %v136 = vld [vmem:[%s2 + $0x10] sm:$0xf]
    %v137 = vld [vmem:[%s2 + $0x14] sm:$0xf]
    %v138 = vld [vmem:[%s2 + $0x18] sm:$0xf]
    %v139 = vld [vmem:[%s2 + $0x1c] sm:$0xf]
    %v140 = vld [vmem:[%s2 + $0x20] sm:$0xf]
    %v141 = vld [vmem:[%s2 + $0x24] sm:$0xf]
    %v142 = vld [vmem:[%s2 + $0x28] sm:$0xf]
    %v143 = vld [vmem:[%s2 + $0x2c] sm:$0xf]
    %v144 = vld [vmem:[%s2 + $0x30] sm:$0xf]
    %v145 = vld [vmem:[%s2 + $0x34] sm:$0xf]
    %v146 = vld [vmem:[%s2 + $0x38] sm:$0xf]
    %v147 = vld [vmem:[%s2 + $0x3c] sm:$0xf]
    %v148 = vld [vmem:[%s3] sm:$0x1]
    %v150 = vlaneseq
    %v151 = vshrl.u32 %v150, 7
    %v152 = vsub.s32 0, %v151
    %v153 = vrot.slane %v148, %v152
    %v171 = vunpack.c.l.b16 %v132
    %v172 = vunpack.c.l.b16 %v133
    %v173 = vunpack.c.l.b16 %v134
    %v174 = vunpack.c.l.b16 %v135
    %v175 = vunpack.c.l.b16 %v136
    %v176 = vunpack.c.l.b16 %v137
    %v177 = vunpack.c.l.b16 %v138
    %v178 = vunpack.c.l.b16 %v139
    %v179 = vunpack.c.l.b16 %v140
    %v180 = vunpack.c.l.b16 %v141
    %v181 = vunpack.c.l.b16 %v142
    %v182 = vunpack.c.l.b16 %v143
    %v183 = vunpack.c.l.b16 %v144
    %v184 = vunpack.c.l.b16 %v145
    %v185 = vunpack.c.l.b16 %v146
    %v186 = vunpack.c.l.b16 %v147
    %v187 = vpack.c.b16 %v172, %v171
    %v188 = vpack.c.b16 %v174, %v173
    %v189 = vpack.c.b16 %v176, %v175
    %v190 = vpack.c.b16 %v178, %v177
    %v191 = vpack.c.b16 %v180, %v179
    %v192 = vpack.c.b16 %v182, %v181
    %v193 = vpack.c.b16 %v184, %v183
    %v194 = vpack.c.b16 %v186, %v185
    %203 = vmatprep.subr.bf16.mxu0 0
    %204 = vmatpush1.bf16.msra.mxu0 %v194
    %205 = vmatprep.subr.bf16.mxu0 0
    %206 = vmatpush1.bf16.msra.mxu0 %v193
    %207 = vmatprep.subr.bf16.mxu0 0
    %208 = vmatpush1.bf16.msra.mxu0 %v192
    %209 = vmatprep.subr.bf16.mxu0 0
    %210 = vmatpush1.bf16.msra.mxu0 %v191
    %211 = vmatprep.subr.bf16.mxu0 0
    %212 = vmatpush1.bf16.msra.mxu0 %v190
    %213 = vmatprep.subr.bf16.mxu0 0
    %214 = vmatpush1.bf16.msra.mxu0 %v189
    %215 = vmatprep.subr.bf16.mxu0 0
    %216 = vmatpush1.bf16.msra.mxu0 %v188
    %217 = vmatprep.subr.bf16.mxu0 0
    %218 = vmatpush1.bf16.msra.mxu0 %v187
    %219 = vmatprep.subr.bf16.mxu0 0
    %220 = vmatpush2.bf16.msra.mxu0 0
    %221 = vmatprep.subr.bf16.mxu0 0
    %222 = vmatpush2.bf16.msra.mxu0 0
    %223 = vmatprep.subr.bf16.mxu0 0
    %224 = vmatpush2.bf16.msra.mxu0 0
    %225 = vmatprep.subr.bf16.mxu0 0
    %226 = vmatpush2.bf16.msra.mxu0 0
    %227 = vmatprep.subr.bf16.mxu0 0
    %228 = vmatpush2.bf16.msra.mxu0 0
    %229 = vmatprep.subr.bf16.mxu0 0
    %230 = vmatpush2.bf16.msra.mxu0 0
    %231 = vmatprep.subr.bf16.mxu0 0
    %232 = vmatpush2.bf16.msra.mxu0 0
    %233 = vmatprep.subr.bf16.mxu0 0
    %234 = vmatpush2.bf16.msra.mxu0 0
    %235 = vmatprep.mubr.bf16.mxu0 0
    %236 = vmatmul.mubr.bf16.gmra.mxu0 %v131
    %v237 = vpop.f32.mrf.mxu0
    %v238 = vadd.f32 %v153, %v237
    %v239 = vpop.f32.mrf.mxu0
    %v240 = vpop.f32.mrf.mxu0
    %v241 = vpop.f32.mrf.mxu0
    %242 = vdwg.mxu0
    %vm243 = vcmask 58368
    %244 = vst.msk [vmem:[#allocation2] sm:$0x3] %vm243, %v238
    // Predicated region
    $region18: #{cnn_conformer_forward.19} parent=1 // pred_check
      _
    $region19: #{cnn_conformer_forward.19} parent=1 // pred_check_branch
      %246 = sbr.rel (0) target = $region21
    $region20: #{cnn_conformer_forward.19} parent=1 // pred_region
      %s248 = ssub.s32 32, 32
      %249 = vsyncadd [#allocation3], %s248
      %s251 = sshll.u32 [#allocation2], 4
      %s252 = int_to_ptr.vmem [resolvable:$true] %s251
      %254 = dma.vmem_to_hbm [thread:$0]  %s252, 32, %s4, [#allocation3]
    $region21: #{cnn_conformer_forward.19} parent=1 // pred_fallthru
      _
    // Predicated region
    $region22: #{cnn_conformer_forward.19} parent=1 // pred_check
      _
    $region23: #{cnn_conformer_forward.19} parent=1 // pred_check_branch
      %256 = sbr.rel (0) target = $region25
    $region24: #{cnn_conformer_forward.19} parent=1 // pred_region
      %257 = dma.done [#allocation3], 32
    $region25: #{cnn_conformer_forward.19} parent=1 // pred_fallthru
      _
    %258 = vsyncpa [#allocation3], 1

// kernel: cnn_conformer_forward.11
$region0: #{cnn_conformer_forward.11}
  #allocation0 [shape = 'u32[]', space=smem, size = 0x4, offset = 0x4, fixed_abs, tag = 'smem constant byte address 0x4 - core index']
  #allocation1 [shape = 'u32[144,128]{1,0:T(1,128)}', space=vmem, size = 0x12000, scoped, tag = 'internal scratch']
  %s0 = inlined_call_operand.vmem [shape: f32[2,8,128], index: 0, kind: input, shape index: {}]
  %s1 = inlined_call_operand.vmem [shape: f32[8,128], index: 1, kind: input, shape index: {}]
  %s2 = inlined_call_operand.vmem [shape: f32[5,128], index: 2, kind: input, shape index: {}]
  %s3 = inlined_call_operand.vmem [shape: f32[5,128], index: 3, kind: input, shape index: {}]
  %s4 = inlined_call_operand.vmem [shape: bf16[128,256], index: 4, kind: input, shape index: {}]
  %s5 = inlined_call_operand.vmem [shape: f32[1,256], index: 5, kind: input, shape index: {}]
  %s6 = inlined_call_operand.vmem [shape: bf16[256,128], index: 6, kind: input, shape index: {}]
  %s7 = inlined_call_operand.vmem [shape: f32[1,128], index: 7, kind: input, shape index: {}]
  %s8 = inlined_call_operand.vmem [shape: bf16[128,384], index: 8, kind: input, shape index: {}]
  %s9 = inlined_call_operand.vmem [shape: f32[1,384], index: 9, kind: input, shape index: {}]
  %s10 = inlined_call_operand.vmem [shape: bf16[128,128], index: 10, kind: input, shape index: {}]
  %s11 = inlined_call_operand.vmem [shape: f32[8,32], index: 11, kind: input, shape index: {}]
  %s12 = inlined_call_operand.vmem [shape: bf16[128,128], index: 12, kind: input, shape index: {}]
  %s13 = inlined_call_operand.vmem [shape: f32[1,128], index: 13, kind: input, shape index: {}]
  %s14 = inlined_call_operand.vmem [shape: bf16[128,256], index: 14, kind: input, shape index: {}]
  %s15 = inlined_call_operand.vmem [shape: f32[1,256], index: 15, kind: input, shape index: {}]
  %s16 = inlined_call_operand.vmem [shape: f32[15,128], index: 16, kind: input, shape index: {}]
  %s17 = inlined_call_operand.vmem [shape: f32[1,128], index: 17, kind: input, shape index: {}]
  %s18 = inlined_call_operand.vmem [shape: f32[1,128], index: 18, kind: input, shape index: {}]
  %s19 = inlined_call_operand.vmem [shape: bf16[128,128], index: 19, kind: input, shape index: {}]
  %s20 = inlined_call_operand.vmem [shape: f32[1,128], index: 20, kind: input, shape index: {}]
  %s21 = inlined_call_operand.vmem [shape: bf16[128,256], index: 21, kind: input, shape index: {}]
  %s22 = inlined_call_operand.vmem [shape: f32[1,256], index: 22, kind: input, shape index: {}]
  %s23 = inlined_call_operand.vmem [shape: bf16[256,128], index: 23, kind: input, shape index: {}]
  %s24 = inlined_call_operand.vmem [shape: f32[1,128], index: 24, kind: input, shape index: {}]
  %s25 = inlined_call_operand.vmem [shape: f32[2,8,128], index: 25, kind: output, shape index: {0}]
  %s26 = inlined_call_operand.vmem [shape: f32[2,1,128], index: 26, kind: output, shape index: {1}]
  %27 = xla_tuple %s25, %s26
  %s28 = sld [smem:[#allocation0]]
  $region141: #{cnn_conformer_forward.11} parent=0
    _
  %s30 = ssub.s32 1, %s28
  %s31 = scalar_select 0, %s30, %s28
  loop: start=0, step=1, limit=4
  $region2: #{cnn_conformer_forward.11} parent=0 // loop_pre_header
    _
  $region3: #{cnn_conformer_forward.11} parent=0 // loop_header
    %s33 = sphi 0, %s37
    %p34 = scmp.ge.s32.totalorder %s33, 4
    %s43 = sphi 0, %s45
    %s46 = sphi 0, %s43
    %s47 = sphi 0, %s46
    %s63 = sphi 0, %s47
    %s67 = sphi 0, %s67
    %s69 = sphi 0, %s67
    %s70 = sphi 0, %s69
    %s84 = sphi 0, %s70
    %s88 = sphi 0, %s88
    %s90 = sphi 0, %s88
    %s91 = sphi 0, %s90
    %s105 = sphi 0, %s91
    %s109 = sphi 0, %s109
    %s111 = sphi 0, %s109
    %s112 = sphi 0, %s111
    %s126 = sphi 0, %s112
    %s130 = sphi 0, %s130
    %s132 = sphi 0, %s130
    %s133 = sphi 0, %s132
    %s147 = sphi 0, %s133
    %s151 = sphi 0, %s151
    %s153 = sphi 0, %s151
    %s154 = sphi 0, %s153
    %s168 = sphi 0, %s154
    %s172 = sphi 0, %s172
    %s174 = sphi 0, %s172
    %s175 = sphi 0, %s174
    %s189 = sphi 0, %s175
    %s193 = sphi 0, %s193
    %s195 = sphi 0, %s193
    %s196 = sphi 0, %s195
    %s210 = sphi 0, %s196
    %s214 = sphi 0, %s214
    %s216 = sphi 0, %s214
    %s217 = sphi 0, %s216
    %s231 = sphi 0, %s217
    %s235 = sphi 0, %s235
    %s237 = sphi 0, %s235
    %s238 = sphi 0, %s237
    %s252 = sphi 0, %s238
    %s256 = sphi 0, %s256
    %s258 = sphi 0, %s256
    %s259 = sphi 0, %s258
    %s273 = sphi 0, %s259
    %s277 = sphi 0, %s277
    %s279 = sphi 0, %s277
    %s280 = sphi 0, %s279
    %s294 = sphi 0, %s280
    %s298 = sphi 0, %s298
    %s300 = sphi 0, %s298
    %s301 = sphi 0, %s300
    %s315 = sphi 0, %s301
    %s319 = sphi 0, %s319
    %s321 = sphi 0, %s319
    %s322 = sphi 0, %s321
    %s336 = sphi 0, %s322
    %s340 = sphi 0, %s340
    %s342 = sphi 0, %s340
    %s343 = sphi 0, %s342
    %s357 = sphi 0, %s343
    %s361 = sphi 0, %s361
    %s363 = sphi 0, %s361
    %s364 = sphi 0, %s363
    %s378 = sphi 0, %s364
    %s382 = sphi 0, %s382
    %s384 = sphi 0, %s382
    %s385 = sphi 0, %s384
    %s399 = sphi 0, %s385
    %s403 = sphi 0, %s403
    %s405 = sphi 0, %s403
    %s406 = sphi 0, %s405
    %s420 = sphi 0, %s406
    %s424 = sphi 0, %s424
    %s426 = sphi 0, %s424
    %s427 = sphi 0, %s426
    %s441 = sphi 0, %s427
    %s445 = sphi 0, %s445
    %s447 = sphi 0, %s445
    %s448 = sphi 0, %s447
    %s462 = sphi 0, %s448
    %s466 = sphi 0, %s466
    %s468 = sphi 0, %s466
    %s469 = sphi 0, %s468
    %s483 = sphi 0, %s469
    %s487 = sphi 0, %s487
    %s489 = sphi 0, %s487
    %s490 = sphi 0, %s489
    %s504 = sphi 0, %s490
    %s508 = sphi 0, %s508
    %s510 = sphi 0, %s508
    %s511 = sphi 0, %s510
    %s525 = sphi 0, %s511
    %s529 = sphi 0, %s529
    %s531 = sphi 0, %s529
    %s532 = sphi 0, %s531
    %s546 = sphi 0, %s532
    %s550 = sphi 0, %s550
    %s552 = sphi 0, %s550
    %s553 = sphi 0, %s552
    %s567 = sphi 0, %s553
    %s573 = sphi 0, %s575
    %s576 = sphi 0, %s573
    %s577 = sphi 0, %s576
    %s593 = sphi 0, %s577
    %s599 = sphi 0, %s601
    %s602 = sphi 0, %s599
    %s603 = sphi 0, %s602
    %s619 = sphi 0, %s603
  $region4: #{cnn_conformer_forward.11} parent=0 // loop_header_branch
    %36 = sbr.rel (%p34) target = $region8
  $region5: #{cnn_conformer_forward.11} parent=0 // loop_body
    %s38 = ssub.s32 %s33, 1
    %s39 = ssub.s32 %s33, 2
    %s40 = sadd.s32 %s33, 1
    %s41 = ssub.s32 %s33, %s40
    %p42 = scmp.eq.s32.totalorder %s41, 0
    %s44 = sadd.s32 %s43, 1
    %s45 = scalar_select %p42, %s43, %s44
    %p48 = pneg %p42
    %p49 = scmp.eq.s32.totalorder %s33, 1
    %p50 = por %p48, %p49
    %p51 = scmp.ne.s32.totalorder %s43, %s46
    %p52 = scmp.eq.s32.totalorder %s33, 0
    %p53 = por %p51, %p52
    %p54 = scmp.ne.s32.totalorder %s43, %s46
    %p55 = scmp.eq.s32.totalorder %s38, 1
    %p56 = por %p54, %p55
    %p57 = scmp.ne.s32.totalorder %s46, %s47
    %p58 = scmp.eq.s32.totalorder %s38, 0
    %p59 = por %p57, %p58
    %p60 = scmp.ne.s32.totalorder %s46, %s47
    %p61 = scmp.eq.s32.totalorder %s39, 1
    %p62 = por %p60, %p61
    %p64 = scmp.ne.s32.totalorder %s47, %s63
    %p65 = scmp.eq.s32.totalorder %s39, 0
    %p66 = por %p64, %p65
    %s68 = sadd.s32 %s67, 1
    %p71 = scmp.eq.s32.totalorder %s33, 1
    %p72 = scmp.ne.s32.totalorder %s67, %s69
    %p73 = scmp.eq.s32.totalorder %s33, 0
    %p74 = por %p72, %p73
    %p75 = scmp.ne.s32.totalorder %s67, %s69
    %p76 = scmp.eq.s32.totalorder %s38, 1
    %p77 = por %p75, %p76
    %p78 = scmp.ne.s32.totalorder %s69, %s70
    %p79 = scmp.eq.s32.totalorder %s38, 0
    %p80 = por %p78, %p79
    %p81 = scmp.ne.s32.totalorder %s69, %s70
    %p82 = scmp.eq.s32.totalorder %s39, 1
    %p83 = por %p81, %p82
    %p85 = scmp.ne.s32.totalorder %s70, %s84
    %p86 = scmp.eq.s32.totalorder %s39, 0
    %p87 = por %p85, %p86
    %s89 = sadd.s32 %s88, 1
    %p92 = scmp.eq.s32.totalorder %s33, 1
    %p93 = scmp.ne.s32.totalorder %s88, %s90
    %p94 = scmp.eq.s32.totalorder %s33, 0
    %p95 = por %p93, %p94
    %p96 = scmp.ne.s32.totalorder %s88, %s90
    %p97 = scmp.eq.s32.totalorder %s38, 1
    %p98 = por %p96, %p97
    %p99 = scmp.ne.s32.totalorder %s90, %s91
    %p100 = scmp.eq.s32.totalorder %s38, 0
    %p101 = por %p99, %p100
    %p102 = scmp.ne.s32.totalorder %s90, %s91
    %p103 = scmp.eq.s32.totalorder %s39, 1
    %p104 = por %p102, %p103
    %p106 = scmp.ne.s32.totalorder %s91, %s105
    %p107 = scmp.eq.s32.totalorder %s39, 0
    %p108 = por %p106, %p107
    %s110 = sadd.s32 %s109, 1
    %p113 = scmp.eq.s32.totalorder %s33, 1
    %p114 = scmp.ne.s32.totalorder %s109, %s111
    %p115 = scmp.eq.s32.totalorder %s33, 0
    %p116 = por %p114, %p115
    %p117 = scmp.ne.s32.totalorder %s109, %s111
    %p118 = scmp.eq.s32.totalorder %s38, 1
    %p119 = por %p117, %p118
    %p120 = scmp.ne.s32.totalorder %s111, %s112
    %p121 = scmp.eq.s32.totalorder %s38, 0
    %p122 = por %p120, %p121
    %p123 = scmp.ne.s32.totalorder %s111, %s112
    %p124 = scmp.eq.s32.totalorder %s39, 1
    %p125 = por %p123, %p124
    %p127 = scmp.ne.s32.totalorder %s112, %s126
    %p128 = scmp.eq.s32.totalorder %s39, 0
    %p129 = por %p127, %p128
    %s131 = sadd.s32 %s130, 1
    %p134 = scmp.eq.s32.totalorder %s33, 1
    %p135 = scmp.ne.s32.totalorder %s130, %s132
    %p136 = scmp.eq.s32.totalorder %s33, 0
    %p137 = por %p135, %p136
    %p138 = scmp.ne.s32.totalorder %s130, %s132
    %p139 = scmp.eq.s32.totalorder %s38, 1
    %p140 = por %p138, %p139
    %p141 = scmp.ne.s32.totalorder %s132, %s133
    %p142 = scmp.eq.s32.totalorder %s38, 0
    %p143 = por %p141, %p142
    %p144 = scmp.ne.s32.totalorder %s132, %s133
    %p145 = scmp.eq.s32.totalorder %s39, 1
    %p146 = por %p144, %p145
    %p148 = scmp.ne.s32.totalorder %s133, %s147
    %p149 = scmp.eq.s32.totalorder %s39, 0
    %p150 = por %p148, %p149
    %s152 = sadd.s32 %s151, 1
    %p155 = scmp.eq.s32.totalorder %s33, 1
    %p156 = scmp.ne.s32.totalorder %s151, %s153
    %p157 = scmp.eq.s32.totalorder %s33, 0
    %p158 = por %p156, %p157
    %p159 = scmp.ne.s32.totalorder %s151, %s153
    %p160 = scmp.eq.s32.totalorder %s38, 1
    %p161 = por %p159, %p160
    %p162 = scmp.ne.s32.totalorder %s153, %s154
    %p163 = scmp.eq.s32.totalorder %s38, 0
    %p164 = por %p162, %p163
    %p165 = scmp.ne.s32.totalorder %s153, %s154
    %p166 = scmp.eq.s32.totalorder %s39, 1
    %p167 = por %p165, %p166
    %p169 = scmp.ne.s32.totalorder %s154, %s168
    %p170 = scmp.eq.s32.totalorder %s39, 0
    %p171 = por %p169, %p170
    %s173 = sadd.s32 %s172, 1
    %p176 = scmp.eq.s32.totalorder %s33, 1
    %p177 = scmp.ne.s32.totalorder %s172, %s174
    %p178 = scmp.eq.s32.totalorder %s33, 0
    %p179 = por %p177, %p178
    %p180 = scmp.ne.s32.totalorder %s172, %s174
    %p181 = scmp.eq.s32.totalorder %s38, 1
    %p182 = por %p180, %p181
    %p183 = scmp.ne.s32.totalorder %s174, %s175
    %p184 = scmp.eq.s32.totalorder %s38, 0
    %p185 = por %p183, %p184
    %p186 = scmp.ne.s32.totalorder %s174, %s175
    %p187 = scmp.eq.s32.totalorder %s39, 1
    %p188 = por %p186, %p187
    %p190 = scmp.ne.s32.totalorder %s175, %s189
    %p191 = scmp.eq.s32.totalorder %s39, 0
    %p192 = por %p190, %p191
    %s194 = sadd.s32 %s193, 1
    %p197 = scmp.eq.s32.totalorder %s33, 1
    %p198 = scmp.ne.s32.totalorder %s193, %s195
    %p199 = scmp.eq.s32.totalorder %s33, 0
    %p200 = por %p198, %p199
    %p201 = scmp.ne.s32.totalorder %s193, %s195
    %p202 = scmp.eq.s32.totalorder %s38, 1
    %p203 = por %p201, %p202
    %p204 = scmp.ne.s32.totalorder %s195, %s196
    %p205 = scmp.eq.s32.totalorder %s38, 0
    %p206 = por %p204, %p205
    %p207 = scmp.ne.s32.totalorder %s195, %s196
    %p208 = scmp.eq.s32.totalorder %s39, 1
    %p209 = por %p207, %p208
    %p211 = scmp.ne.s32.totalorder %s196, %s210
    %p212 = scmp.eq.s32.totalorder %s39, 0
    %p213 = por %p211, %p212
    %s215 = sadd.s32 %s214, 1
    %p218 = scmp.eq.s32.totalorder %s33, 1
    %p219 = scmp.ne.s32.totalorder %s214, %s216
    %p220 = scmp.eq.s32.totalorder %s33, 0
    %p221 = por %p219, %p220
    %p222 = scmp.ne.s32.totalorder %s214, %s216
    %p223 = scmp.eq.s32.totalorder %s38, 1
    %p224 = por %p222, %p223
    %p225 = scmp.ne.s32.totalorder %s216, %s217
    %p226 = scmp.eq.s32.totalorder %s38, 0
    %p227 = por %p225, %p226
    %p228 = scmp.ne.s32.totalorder %s216, %s217
    %p229 = scmp.eq.s32.totalorder %s39, 1
    %p230 = por %p228, %p229
    %p232 = scmp.ne.s32.totalorder %s217, %s231
    %p233 = scmp.eq.s32.totalorder %s39, 0
    %p234 = por %p232, %p233
    %s236 = sadd.s32 %s235, 1
    %p239 = scmp.eq.s32.totalorder %s33, 1
    %p240 = scmp.ne.s32.totalorder %s235, %s237
    %p241 = scmp.eq.s32.totalorder %s33, 0
    %p242 = por %p240, %p241
    %p243 = scmp.ne.s32.totalorder %s235, %s237
    %p244 = scmp.eq.s32.totalorder %s38, 1
    %p245 = por %p243, %p244
    %p246 = scmp.ne.s32.totalorder %s237, %s238
    %p247 = scmp.eq.s32.totalorder %s38, 0
    %p248 = por %p246, %p247
    %p249 = scmp.ne.s32.totalorder %s237, %s238
    %p250 = scmp.eq.s32.totalorder %s39, 1
    %p251 = por %p249, %p250
    %p253 = scmp.ne.s32.totalorder %s238, %s252
    %p254 = scmp.eq.s32.totalorder %s39, 0
    %p255 = por %p253, %p254
    %s257 = sadd.s32 %s256, 1
    %p260 = scmp.eq.s32.totalorder %s33, 1
    %p261 = scmp.ne.s32.totalorder %s256, %s258
    %p262 = scmp.eq.s32.totalorder %s33, 0
    %p263 = por %p261, %p262
    %p264 = scmp.ne.s32.totalorder %s256, %s258
    %p265 = scmp.eq.s32.totalorder %s38, 1
    %p266 = por %p264, %p265
    %p267 = scmp.ne.s32.totalorder %s258, %s259
    %p268 = scmp.eq.s32.totalorder %s38, 0
    %p269 = por %p267, %p268
    %p270 = scmp.ne.s32.totalorder %s258, %s259
    %p271 = scmp.eq.s32.totalorder %s39, 1
    %p272 = por %p270, %p271
    %p274 = scmp.ne.s32.totalorder %s259, %s273
    %p275 = scmp.eq.s32.totalorder %s39, 0
    %p276 = por %p274, %p275
    %s278 = sadd.s32 %s277, 1
    %p281 = scmp.eq.s32.totalorder %s33, 1
    %p282 = scmp.ne.s32.totalorder %s277, %s279
    %p283 = scmp.eq.s32.totalorder %s33, 0
    %p284 = por %p282, %p283
    %p285 = scmp.ne.s32.totalorder %s277, %s279
    %p286 = scmp.eq.s32.totalorder %s38, 1
    %p287 = por %p285, %p286
    %p288 = scmp.ne.s32.totalorder %s279, %s280
    %p289 = scmp.eq.s32.totalorder %s38, 0
    %p290 = por %p288, %p289
    %p291 = scmp.ne.s32.totalorder %s279, %s280
    %p292 = scmp.eq.s32.totalorder %s39, 1
    %p293 = por %p291, %p292
    %p295 = scmp.ne.s32.totalorder %s280, %s294
    %p296 = scmp.eq.s32.totalorder %s39, 0
    %p297 = por %p295, %p296
    %s299 = sadd.s32 %s298, 1
    %p302 = scmp.eq.s32.totalorder %s33, 1
    %p303 = scmp.ne.s32.totalorder %s298, %s300
    %p304 = scmp.eq.s32.totalorder %s33, 0
    %p305 = por %p303, %p304
    %p306 = scmp.ne.s32.totalorder %s298, %s300
    %p307 = scmp.eq.s32.totalorder %s38, 1
    %p308 = por %p306, %p307
    %p309 = scmp.ne.s32.totalorder %s300, %s301
    %p310 = scmp.eq.s32.totalorder %s38, 0
    %p311 = por %p309, %p310
    %p312 = scmp.ne.s32.totalorder %s300, %s301
    %p313 = scmp.eq.s32.totalorder %s39, 1
    %p314 = por %p312, %p313
    %p316 = scmp.ne.s32.totalorder %s301, %s315
    %p317 = scmp.eq.s32.totalorder %s39, 0
    %p318 = por %p316, %p317
    %s320 = sadd.s32 %s319, 1
    %p323 = scmp.eq.s32.totalorder %s33, 1
    %p324 = scmp.ne.s32.totalorder %s319, %s321
    %p325 = scmp.eq.s32.totalorder %s33, 0
    %p326 = por %p324, %p325
    %p327 = scmp.ne.s32.totalorder %s319, %s321
    %p328 = scmp.eq.s32.totalorder %s38, 1
    %p329 = por %p327, %p328
    %p330 = scmp.ne.s32.totalorder %s321, %s322
    %p331 = scmp.eq.s32.totalorder %s38, 0
    %p332 = por %p330, %p331
    %p333 = scmp.ne.s32.totalorder %s321, %s322
    %p334 = scmp.eq.s32.totalorder %s39, 1
    %p335 = por %p333, %p334
    %p337 = scmp.ne.s32.totalorder %s322, %s336
    %p338 = scmp.eq.s32.totalorder %s39, 0
    %p339 = por %p337, %p338
    %s341 = sadd.s32 %s340, 1
    %p344 = scmp.eq.s32.totalorder %s33, 1
    %p345 = scmp.ne.s32.totalorder %s340, %s342
    %p346 = scmp.eq.s32.totalorder %s33, 0
    %p347 = por %p345, %p346
    %p348 = scmp.ne.s32.totalorder %s340, %s342
    %p349 = scmp.eq.s32.totalorder %s38, 1
    %p350 = por %p348, %p349
    %p351 = scmp.ne.s32.totalorder %s342, %s343
    %p352 = scmp.eq.s32.totalorder %s38, 0
    %p353 = por %p351, %p352
    %p354 = scmp.ne.s32.totalorder %s342, %s343
    %p355 = scmp.eq.s32.totalorder %s39, 1
    %p356 = por %p354, %p355
    %p358 = scmp.ne.s32.totalorder %s343, %s357
    %p359 = scmp.eq.s32.totalorder %s39, 0
    %p360 = por %p358, %p359
    %s362 = sadd.s32 %s361, 1
    %p365 = scmp.eq.s32.totalorder %s33, 1
    %p366 = scmp.ne.s32.totalorder %s361, %s363
    %p367 = scmp.eq.s32.totalorder %s33, 0
    %p368 = por %p366, %p367
    %p369 = scmp.ne.s32.totalorder %s361, %s363
    %p370 = scmp.eq.s32.totalorder %s38, 1
    %p371 = por %p369, %p370
    %p372 = scmp.ne.s32.totalorder %s363, %s364
    %p373 = scmp.eq.s32.totalorder %s38, 0
    %p374 = por %p372, %p373
    %p375 = scmp.ne.s32.totalorder %s363, %s364
    %p376 = scmp.eq.s32.totalorder %s39, 1
    %p377 = por %p375, %p376
    %p379 = scmp.ne.s32.totalorder %s364, %s378
    %p380 = scmp.eq.s32.totalorder %s39, 0
    %p381 = por %p379, %p380
    %s383 = sadd.s32 %s382, 1
    %p386 = scmp.eq.s32.totalorder %s33, 1
    %p387 = scmp.ne.s32.totalorder %s382, %s384
    %p388 = scmp.eq.s32.totalorder %s33, 0
    %p389 = por %p387, %p388
    %p390 = scmp.ne.s32.totalorder %s382, %s384
    %p391 = scmp.eq.s32.totalorder %s38, 1
    %p392 = por %p390, %p391
    %p393 = scmp.ne.s32.totalorder %s384, %s385
    %p394 = scmp.eq.s32.totalorder %s38, 0
    %p395 = por %p393, %p394
    %p396 = scmp.ne.s32.totalorder %s384, %s385
    %p397 = scmp.eq.s32.totalorder %s39, 1
    %p398 = por %p396, %p397
    %p400 = scmp.ne.s32.totalorder %s385, %s399
    %p401 = scmp.eq.s32.totalorder %s39, 0
    %p402 = por %p400, %p401
    %s404 = sadd.s32 %s403, 1
    %p407 = scmp.eq.s32.totalorder %s33, 1
    %p408 = scmp.ne.s32.totalorder %s403, %s405
    %p409 = scmp.eq.s32.totalorder %s33, 0
    %p410 = por %p408, %p409
    %p411 = scmp.ne.s32.totalorder %s403, %s405
    %p412 = scmp.eq.s32.totalorder %s38, 1
    %p413 = por %p411, %p412
    %p414 = scmp.ne.s32.totalorder %s405, %s406
    %p415 = scmp.eq.s32.totalorder %s38, 0
    %p416 = por %p414, %p415
    %p417 = scmp.ne.s32.totalorder %s405, %s406
    %p418 = scmp.eq.s32.totalorder %s39, 1
    %p419 = por %p417, %p418
    %p421 = scmp.ne.s32.totalorder %s406, %s420
    %p422 = scmp.eq.s32.totalorder %s39, 0
    %p423 = por %p421, %p422
    %s425 = sadd.s32 %s424, 1
    %p428 = scmp.eq.s32.totalorder %s33, 1
    %p429 = scmp.ne.s32.totalorder %s424, %s426
    %p430 = scmp.eq.s32.totalorder %s33, 0
    %p431 = por %p429, %p430
    %p432 = scmp.ne.s32.totalorder %s424, %s426
    %p433 = scmp.eq.s32.totalorder %s38, 1
    %p434 = por %p432, %p433
    %p435 = scmp.ne.s32.totalorder %s426, %s427
    %p436 = scmp.eq.s32.totalorder %s38, 0
    %p437 = por %p435, %p436
    %p438 = scmp.ne.s32.totalorder %s426, %s427
    %p439 = scmp.eq.s32.totalorder %s39, 1
    %p440 = por %p438, %p439
    %p442 = scmp.ne.s32.totalorder %s427, %s441
    %p443 = scmp.eq.s32.totalorder %s39, 0
    %p444 = por %p442, %p443
    %s446 = sadd.s32 %s445, 1
    %p449 = scmp.eq.s32.totalorder %s33, 1
    %p450 = scmp.ne.s32.totalorder %s445, %s447
    %p451 = scmp.eq.s32.totalorder %s33, 0
    %p452 = por %p450, %p451
    %p453 = scmp.ne.s32.totalorder %s445, %s447
    %p454 = scmp.eq.s32.totalorder %s38, 1
    %p455 = por %p453, %p454
    %p456 = scmp.ne.s32.totalorder %s447, %s448
    %p457 = scmp.eq.s32.totalorder %s38, 0
    %p458 = por %p456, %p457
    %p459 = scmp.ne.s32.totalorder %s447, %s448
    %p460 = scmp.eq.s32.totalorder %s39, 1
    %p461 = por %p459, %p460
    %p463 = scmp.ne.s32.totalorder %s448, %s462
    %p464 = scmp.eq.s32.totalorder %s39, 0
    %p465 = por %p463, %p464
    %s467 = sadd.s32 %s466, 1
    %p470 = scmp.eq.s32.totalorder %s33, 1
    %p471 = scmp.ne.s32.totalorder %s466, %s468
    %p472 = scmp.eq.s32.totalorder %s33, 0
    %p473 = por %p471, %p472
    %p474 = scmp.ne.s32.totalorder %s466, %s468
    %p475 = scmp.eq.s32.totalorder %s38, 1
    %p476 = por %p474, %p475
    %p477 = scmp.ne.s32.totalorder %s468, %s469
    %p478 = scmp.eq.s32.totalorder %s38, 0
    %p479 = por %p477, %p478
    %p480 = scmp.ne.s32.totalorder %s468, %s469
    %p481 = scmp.eq.s32.totalorder %s39, 1
    %p482 = por %p480, %p481
    %p484 = scmp.ne.s32.totalorder %s469, %s483
    %p485 = scmp.eq.s32.totalorder %s39, 0
    %p486 = por %p484, %p485
    %s488 = sadd.s32 %s487, 1
    %p491 = scmp.eq.s32.totalorder %s33, 1
    %p492 = scmp.ne.s32.totalorder %s487, %s489
    %p493 = scmp.eq.s32.totalorder %s33, 0
    %p494 = por %p492, %p493
    %p495 = scmp.ne.s32.totalorder %s487, %s489
    %p496 = scmp.eq.s32.totalorder %s38, 1
    %p497 = por %p495, %p496
    %p498 = scmp.ne.s32.totalorder %s489, %s490
    %p499 = scmp.eq.s32.totalorder %s38, 0
    %p500 = por %p498, %p499
    %p501 = scmp.ne.s32.totalorder %s489, %s490
    %p502 = scmp.eq.s32.totalorder %s39, 1
    %p503 = por %p501, %p502
    %p505 = scmp.ne.s32.totalorder %s490, %s504
    %p506 = scmp.eq.s32.totalorder %s39, 0
    %p507 = por %p505, %p506
    %s509 = sadd.s32 %s508, 1
    %p512 = scmp.eq.s32.totalorder %s33, 1
    %p513 = scmp.ne.s32.totalorder %s508, %s510
    %p514 = scmp.eq.s32.totalorder %s33, 0
    %p515 = por %p513, %p514
    %p516 = scmp.ne.s32.totalorder %s508, %s510
    %p517 = scmp.eq.s32.totalorder %s38, 1
    %p518 = por %p516, %p517
    %p519 = scmp.ne.s32.totalorder %s510, %s511
    %p520 = scmp.eq.s32.totalorder %s38, 0
    %p521 = por %p519, %p520
    %p522 = scmp.ne.s32.totalorder %s510, %s511
    %p523 = scmp.eq.s32.totalorder %s39, 1
    %p524 = por %p522, %p523
    %p526 = scmp.ne.s32.totalorder %s511, %s525
    %p527 = scmp.eq.s32.totalorder %s39, 0
    %p528 = por %p526, %p527
    %s530 = sadd.s32 %s529, 1
    %p533 = scmp.eq.s32.totalorder %s33, 1
    %p534 = scmp.ne.s32.totalorder %s529, %s531
    %p535 = scmp.eq.s32.totalorder %s33, 0
    %p536 = por %p534, %p535
    %p537 = scmp.ne.s32.totalorder %s529, %s531
    %p538 = scmp.eq.s32.totalorder %s38, 1
    %p539 = por %p537, %p538
    %p540 = scmp.ne.s32.totalorder %s531, %s532
    %p541 = scmp.eq.s32.totalorder %s38, 0
    %p542 = por %p540, %p541
    %p543 = scmp.ne.s32.totalorder %s531, %s532
    %p544 = scmp.eq.s32.totalorder %s39, 1
    %p545 = por %p543, %p544
    %p547 = scmp.ne.s32.totalorder %s532, %s546
    %p548 = scmp.eq.s32.totalorder %s39, 0
    %p549 = por %p547, %p548
    %s551 = sadd.s32 %s550, 1
    %p554 = scmp.eq.s32.totalorder %s33, 1
    %p555 = scmp.ne.s32.totalorder %s550, %s552
    %p556 = scmp.eq.s32.totalorder %s33, 0
    %p557 = por %p555, %p556
    %p558 = scmp.ne.s32.totalorder %s550, %s552
    %p559 = scmp.eq.s32.totalorder %s38, 1
    %p560 = por %p558, %p559
    %p561 = scmp.ne.s32.totalorder %s552, %s553
    %p562 = scmp.eq.s32.totalorder %s38, 0
    %p563 = por %p561, %p562
    %p564 = scmp.ne.s32.totalorder %s552, %s553
    %p565 = scmp.eq.s32.totalorder %s39, 1
    %p566 = por %p564, %p565
    %p568 = scmp.ne.s32.totalorder %s553, %s567
    %p569 = scmp.eq.s32.totalorder %s39, 0
    %p570 = por %p568, %p569
    %s571 = ssub.s32 %s33, %s40
    %p572 = scmp.eq.s32.totalorder %s571, 0
    %s574 = sadd.s32 %s573, 1
    %s575 = scalar_select %p572, %s573, %s574
    %p578 = pneg %p572
    %p579 = scmp.eq.s32.totalorder %s33, 1
    %p580 = por %p578, %p579
    %p581 = scmp.ne.s32.totalorder %s573, %s576
    %p582 = scmp.eq.s32.totalorder %s33, 0
    %p583 = por %p581, %p582
    %p584 = scmp.ne.s32.totalorder %s573, %s576
    %p585 = scmp.eq.s32.totalorder %s38, 1
    %p586 = por %p584, %p585
    %p587 = scmp.ne.s32.totalorder %s576, %s577
    %p588 = scmp.eq.s32.totalorder %s38, 0
    %p589 = por %p587, %p588
    %p590 = scmp.ne.s32.totalorder %s576, %s577
    %p591 = scmp.eq.s32.totalorder %s39, 1
    %p592 = por %p590, %p591
    %p594 = scmp.ne.s32.totalorder %s577, %s593
    %p595 = scmp.eq.s32.totalorder %s39, 0
    %p596 = por %p594, %p595
    %s597 = ssub.s32 %s33, %s40
    %p598 = scmp.eq.s32.totalorder %s597, 0
    %s600 = sadd.s32 %s599, 1
    %s601 = scalar_select %p598, %s599, %s600
    %p604 = pneg %p598
    %p605 = scmp.eq.s32.totalorder %s33, 1
    %p606 = por %p604, %p605
    %p607 = scmp.ne.s32.totalorder %s599, %s602
    %p608 = scmp.eq.s32.totalorder %s33, 0
    %p609 = por %p607, %p608
    %p610 = scmp.ne.s32.totalorder %s599, %s602
    %p611 = scmp.eq.s32.totalorder %s38, 1
    %p612 = por %p610, %p611
    %p613 = scmp.ne.s32.totalorder %s602, %s603
    %p614 = scmp.eq.s32.totalorder %s38, 0
    %p615 = por %p613, %p614
    %p616 = scmp.ne.s32.totalorder %s602, %s603
    %p617 = scmp.eq.s32.totalorder %s39, 1
    %p618 = por %p616, %p617
    %p620 = scmp.ne.s32.totalorder %s603, %s619
    %p621 = scmp.eq.s32.totalorder %s39, 0
    %p622 = por %p620, %p621
    %p623 = scmp.le.s32.totalorder 1, %s33
    %p624 = scmp.lt.s32.totalorder %s33, 3
    %p625 = pnand %p623, %p624
    %p626 = pneg %p625
    // Predicated region
    $region9: #{cnn_conformer_forward.11} parent=5 // pred_check
      _
    $region10: #{cnn_conformer_forward.11} parent=5 // pred_check_branch
      %628 = sbr.rel (%p625) target = $region12
    $region11: #{cnn_conformer_forward.11} parent=5 // pred_region
      %s629 = ssub.s32 %s33, 1
      // Predicated region
      $region13: #{cnn_conformer_forward.11} parent=11 // pred_check
        %p630 = pneg %p80
      $region14: #{cnn_conformer_forward.11} parent=11 // pred_check_branch
        %632 = sbr.rel (%p630) target = $region16
      $region15: #{cnn_conformer_forward.11} parent=11 // pred_region
        _
      $region16: #{cnn_conformer_forward.11} parent=11 // pred_fallthru
        _
      // Predicated region
      $region17: #{cnn_conformer_forward.11} parent=11 // pred_check
        %p633 = pneg %p101
      $region18: #{cnn_conformer_forward.11} parent=11 // pred_check_branch
        %635 = sbr.rel (%p633) target = $region20
      $region19: #{cnn_conformer_forward.11} parent=11 // pred_region
        _
      $region20: #{cnn_conformer_forward.11} parent=11 // pred_fallthru
        _
      // Predicated region
      $region21: #{cnn_conformer_forward.11} parent=11 // pred_check
        %p636 = pneg %p122
      $region22: #{cnn_conformer_forward.11} parent=11 // pred_check_branch
        %638 = sbr.rel (%p636) target = $region24
      $region23: #{cnn_conformer_forward.11} parent=11 // pred_region
        _
      $region24: #{cnn_conformer_forward.11} parent=11 // pred_fallthru
        _
      // Predicated region
      $region25: #{cnn_conformer_forward.11} parent=11 // pred_check
        %p639 = pneg %p143
      $region26: #{cnn_conformer_forward.11} parent=11 // pred_check_branch
        %641 = sbr.rel (%p639) target = $region28
      $region27: #{cnn_conformer_forward.11} parent=11 // pred_region
        _
      $region28: #{cnn_conformer_forward.11} parent=11 // pred_fallthru
        _
      // Predicated region
      $region29: #{cnn_conformer_forward.11} parent=11 // pred_check
        %p642 = pneg %p164
      $region30: #{cnn_conformer_forward.11} parent=11 // pred_check_branch
        %644 = sbr.rel (%p642) target = $region32
      $region31: #{cnn_conformer_forward.11} parent=11 // pred_region
        _
      $region32: #{cnn_conformer_forward.11} parent=11 // pred_fallthru
        _
      // Predicated region
      $region33: #{cnn_conformer_forward.11} parent=11 // pred_check
        %p645 = pneg %p185
      $region34: #{cnn_conformer_forward.11} parent=11 // pred_check_branch
        %647 = sbr.rel (%p645) target = $region36
      $region35: #{cnn_conformer_forward.11} parent=11 // pred_region
        _
      $region36: #{cnn_conformer_forward.11} parent=11 // pred_fallthru
        _
      // Predicated region
      $region37: #{cnn_conformer_forward.11} parent=11 // pred_check
        %p648 = pneg %p206
      $region38: #{cnn_conformer_forward.11} parent=11 // pred_check_branch
        %650 = sbr.rel (%p648) target = $region40
      $region39: #{cnn_conformer_forward.11} parent=11 // pred_region
        _
      $region40: #{cnn_conformer_forward.11} parent=11 // pred_fallthru
        _
      // Predicated region
      $region41: #{cnn_conformer_forward.11} parent=11 // pred_check
        %p651 = pneg %p227
      $region42: #{cnn_conformer_forward.11} parent=11 // pred_check_branch
        %653 = sbr.rel (%p651) target = $region44
      $region43: #{cnn_conformer_forward.11} parent=11 // pred_region
        _
      $region44: #{cnn_conformer_forward.11} parent=11 // pred_fallthru
        _
      // Predicated region
      $region45: #{cnn_conformer_forward.11} parent=11 // pred_check
        %p654 = pneg %p248
      $region46: #{cnn_conformer_forward.11} parent=11 // pred_check_branch
        %656 = sbr.rel (%p654) target = $region48
      $region47: #{cnn_conformer_forward.11} parent=11 // pred_region
        _
      $region48: #{cnn_conformer_forward.11} parent=11 // pred_fallthru
        _
      // Predicated region
      $region49: #{cnn_conformer_forward.11} parent=11 // pred_check
        %p657 = pneg %p269
      $region50: #{cnn_conformer_forward.11} parent=11 // pred_check_branch
        %659 = sbr.rel (%p657) target = $region52
      $region51: #{cnn_conformer_forward.11} parent=11 // pred_region
        _
      $region52: #{cnn_conformer_forward.11} parent=11 // pred_fallthru
        _
      // Predicated region
      $region53: #{cnn_conformer_forward.11} parent=11 // pred_check
        %p660 = pneg %p290
      $region54: #{cnn_conformer_forward.11} parent=11 // pred_check_branch
        %662 = sbr.rel (%p660) target = $region56
      $region55: #{cnn_conformer_forward.11} parent=11 // pred_region
        _
      $region56: #{cnn_conformer_forward.11} parent=11 // pred_fallthru
        _
      // Predicated region
      $region57: #{cnn_conformer_forward.11} parent=11 // pred_check
        %p663 = pneg %p311
      $region58: #{cnn_conformer_forward.11} parent=11 // pred_check_branch
        %665 = sbr.rel (%p663) target = $region60
      $region59: #{cnn_conformer_forward.11} parent=11 // pred_region
        _
      $region60: #{cnn_conformer_forward.11} parent=11 // pred_fallthru
        _
      // Predicated region
      $region61: #{cnn_conformer_forward.11} parent=11 // pred_check
        %p666 = pneg %p332
      $region62: #{cnn_conformer_forward.11} parent=11 // pred_check_branch
        %668 = sbr.rel (%p666) target = $region64
      $region63: #{cnn_conformer_forward.11} parent=11 // pred_region
        _
      $region64: #{cnn_conformer_forward.11} parent=11 // pred_fallthru
        _
      // Predicated region
      $region65: #{cnn_conformer_forward.11} parent=11 // pred_check
        %p669 = pneg %p353
      $region66: #{cnn_conformer_forward.11} parent=11 // pred_check_branch
        %671 = sbr.rel (%p669) target = $region68
      $region67: #{cnn_conformer_forward.11} parent=11 // pred_region
        _
      $region68: #{cnn_conformer_forward.11} parent=11 // pred_fallthru
        _
      // Predicated region
      $region69: #{cnn_conformer_forward.11} parent=11 // pred_check
        %p672 = pneg %p374
      $region70: #{cnn_conformer_forward.11} parent=11 // pred_check_branch
        %674 = sbr.rel (%p672) target = $region72
      $region71: #{cnn_conformer_forward.11} parent=11 // pred_region
        _
      $region72: #{cnn_conformer_forward.11} parent=11 // pred_fallthru
        _
      // Predicated region
      $region73: #{cnn_conformer_forward.11} parent=11 // pred_check
        %p675 = pneg %p395
      $region74: #{cnn_conformer_forward.11} parent=11 // pred_check_branch
        %677 = sbr.rel (%p675) target = $region76
      $region75: #{cnn_conformer_forward.11} parent=11 // pred_region
        _
      $region76: #{cnn_conformer_forward.11} parent=11 // pred_fallthru
        _
      // Predicated region
      $region77: #{cnn_conformer_forward.11} parent=11 // pred_check
        %p678 = pneg %p416
      $region78: #{cnn_conformer_forward.11} parent=11 // pred_check_branch
        %680 = sbr.rel (%p678) target = $region80
      $region79: #{cnn_conformer_forward.11} parent=11 // pred_region
        _
      $region80: #{cnn_conformer_forward.11} parent=11 // pred_fallthru
        _
      // Predicated region
      $region81: #{cnn_conformer_forward.11} parent=11 // pred_check
        %p681 = pneg %p437
      $region82: #{cnn_conformer_forward.11} parent=11 // pred_check_branch
        %683 = sbr.rel (%p681) target = $region84
      $region83: #{cnn_conformer_forward.11} parent=11 // pred_region
        _
      $region84: #{cnn_conformer_forward.11} parent=11 // pred_fallthru
        _
      // Predicated region
      $region85: #{cnn_conformer_forward.11} parent=11 // pred_check
        %p684 = pneg %p458
      $region86: #{cnn_conformer_forward.11} parent=11 // pred_check_branch
        %686 = sbr.rel (%p684) target = $region88
      $region87: #{cnn_conformer_forward.11} parent=11 // pred_region
        _
      $region88: #{cnn_conformer_forward.11} parent=11 // pred_fallthru
        _
      // Predicated region
      $region89: #{cnn_conformer_forward.11} parent=11 // pred_check
        %p687 = pneg %p479
      $region90: #{cnn_conformer_forward.11} parent=11 // pred_check_branch
        %689 = sbr.rel (%p687) target = $region92
      $region91: #{cnn_conformer_forward.11} parent=11 // pred_region
        _
      $region92: #{cnn_conformer_forward.11} parent=11 // pred_fallthru
        _
      // Predicated region
      $region93: #{cnn_conformer_forward.11} parent=11 // pred_check
        %p690 = pneg %p500
      $region94: #{cnn_conformer_forward.11} parent=11 // pred_check_branch
        %692 = sbr.rel (%p690) target = $region96
      $region95: #{cnn_conformer_forward.11} parent=11 // pred_region
        _
      $region96: #{cnn_conformer_forward.11} parent=11 // pred_fallthru
        _
      // Predicated region
      $region97: #{cnn_conformer_forward.11} parent=11 // pred_check
        %p693 = pneg %p521
      $region98: #{cnn_conformer_forward.11} parent=11 // pred_check_branch
        %695 = sbr.rel (%p693) target = $region100
      $region99: #{cnn_conformer_forward.11} parent=11 // pred_region
        _
      $region100: #{cnn_conformer_forward.11} parent=11 // pred_fallthru
        _
      // Predicated region
      $region101: #{cnn_conformer_forward.11} parent=11 // pred_check
        %p696 = pneg %p542
      $region102: #{cnn_conformer_forward.11} parent=11 // pred_check_branch
        %698 = sbr.rel (%p696) target = $region104
      $region103: #{cnn_conformer_forward.11} parent=11 // pred_region
        _
      $region104: #{cnn_conformer_forward.11} parent=11 // pred_fallthru
        _
      // Predicated region
      $region105: #{cnn_conformer_forward.11} parent=11 // pred_check
        %p699 = pneg %p563
      $region106: #{cnn_conformer_forward.11} parent=11 // pred_check_branch
        %701 = sbr.rel (%p699) target = $region108
      $region107: #{cnn_conformer_forward.11} parent=11 // pred_region
        _
      $region108: #{cnn_conformer_forward.11} parent=11 // pred_fallthru
        _
    $region12: #{cnn_conformer_forward.11} parent=5 // pred_fallthru
      _
    %p702 = scmp.lt.s32.totalorder %s33, 2
    // Predicated region
    $region109: #{cnn_conformer_forward.11} parent=5 // pred_check
      %p703 = pneg %p702
    $region110: #{cnn_conformer_forward.11} parent=5 // pred_check_branch
      %705 = sbr.rel (%p703) target = $region112
    $region111: #{cnn_conformer_forward.11} parent=5 // pred_region
      // Predicated region
      $region113: #{cnn_conformer_forward.11} parent=111 // pred_check
        %p706 = pneg %p53
      $region114: #{cnn_conformer_forward.11} parent=111 // pred_check_branch
        %708 = sbr.rel (%p706) target = $region116
      $region115: #{cnn_conformer_forward.11} parent=111 // pred_region
        %p709 = scmp.lt.s32.totalorder %s33, 1
        %s710 = scalar_select %p709, %s33, 1
        %s711 = smul.addr %s710, 8
        %s712 = scalar_lea.vmem %s0, %s711
      $region116: #{cnn_conformer_forward.11} parent=111 // pred_fallthru
        _
    $region112: #{cnn_conformer_forward.11} parent=5 // pred_fallthru
      _
    %p713 = scmp.le.s32.totalorder 1, %s33
    %p714 = scmp.lt.s32.totalorder %s33, 3
    %p715 = pnand %p713, %p714
    %p716 = pneg %p715
    // Predicated region
    $region117: #{cnn_conformer_forward.11} parent=5 // pred_check
      _
    $region118: #{cnn_conformer_forward.11} parent=5 // pred_check_branch
      %718 = sbr.rel (%p715) target = $region120
    $region119: #{cnn_conformer_forward.11} parent=5 // pred_region
      %s719 = ssub.s32 %s33, 1
      %p720 = scmp.lt.s32.totalorder %s38, 1
      %s721 = scalar_select %p720, %s38, 1
      %s722 = smul.addr %s721, 8
      %s723 = scalar_lea.vmem %s0, %s722
      %p724 = pneg %p59
      %p725 = pneg %p56
      %p726 = pneg %p80
      %p727 = pneg %p77
      %p728 = pneg %p101
      %p729 = pneg %p98
      %p730 = pneg %p122
      %p731 = pneg %p119
      %p732 = pneg %p143
      %p733 = pneg %p140
      %p734 = pneg %p164
      %p735 = pneg %p161
      %p736 = pneg %p185
      %p737 = pneg %p182
      %p738 = pneg %p206
      %p739 = pneg %p203
      %p740 = pneg %p227
      %p741 = pneg %p224
      %p742 = pneg %p248
      %p743 = pneg %p245
      %p744 = pneg %p269
      %p745 = pneg %p266
      %p746 = pneg %p290
      %p747 = pneg %p287
      %p748 = pneg %p311
      %p749 = pneg %p308
      %p750 = pneg %p332
      %p751 = pneg %p329
      %p752 = pneg %p353
      %p753 = pneg %p350
      %p754 = pneg %p374
      %p755 = pneg %p371
      %p756 = pneg %p395
      %p757 = pneg %p392
      %p758 = pneg %p416
      %p759 = pneg %p413
      %p760 = pneg %p437
      %p761 = pneg %p434
      %p762 = pneg %p458
      %p763 = pneg %p455
      %p764 = pneg %p479
      %p765 = pneg %p476
      %p766 = pneg %p500
      %p767 = pneg %p497
      %p768 = pneg %p521
      %p769 = pneg %p518
      %p770 = pneg %p542
      %p771 = pneg %p539
      %p772 = pneg %p563
      %p773 = pneg %p560
      %p774 = pneg %p589
      %p775 = pneg %p586
      %p776 = scmp.lt.s32.totalorder %s38, 1
      %s777 = scalar_select %p776, %s38, 1
      %s778 = smul.addr %s777, 8
      %s779 = scalar_lea.vmem %s25, %s778
      %p780 = pneg %p615
      %p781 = pneg %p612
      %p782 = scmp.lt.s32.totalorder %s38, 1
      %s783 = scalar_select %p782, %s38, 1
      %s784 = scalar_lea.vmem %s26, %s783
      %p785 = scmp.lt.s32.totalorder %s38, 1
      %s786 = scalar_select %p785, %s38, 1
      %s787 = smul.addr %s786, 8
      %s788 = scalar_lea.vmem %s0, %s787
      %p789 = scmp.lt.s32.totalorder %s38, 1
      %s790 = scalar_select %p789, %s38, 1
      %s791 = smul.addr %s790, 8
      %s792 = scalar_lea.vmem %s25, %s791
      %p793 = scmp.lt.s32.totalorder %s38, 1
      %s794 = scalar_select %p793, %s38, 1
      %s795 = scalar_lea.vmem %s26, %s794
      %v797 = vld [vmem:[%s788] sm:$0xff]
      %v798 = vld [vmem:[%s2] sm:$0x1]
      %v799 = vld [vmem:[%s3] sm:$0x1]
      %800 = vadd.xlane.f32.xlu0 %v797
      %v801 = vpop.xlane.xlu0 %800
      %v802 = vrcp.pop 128.0
      %v803 = vmul.f32 %v801, %v802
      %v804 = vsub.f32 %v797, %v803
      %v805 = vmul.f32 %v804, %v804
      %806 = vadd.xlane.f32.xlu0 %v805
      %v807 = vpop.xlane.xlu0 %806
      %v808 = vmul.f32 %v807, %v802
      %v809 = vadd.f32 %v808, 1e-05
      %v810 = vrsqrt.pop %v809
      %v811 = vmul.f32 %v804, %v810
      %v812 = vlaneseq
      %v813 = vshrl.u32 %v812, 7
      %v814 = vsub.s32 0, %v813
      %v815 = vrot.slane %v798, %v814
      %v816 = vmul.f32 %v811, %v815
      %v817 = vlaneseq
      %v818 = vshrl.u32 %v817, 7
      %v819 = vsub.s32 0, %v818
      %v820 = vrot.slane %v799, %v819
      %v821 = vadd.f32 %v816, %v820
      %v822 = vpack.c.bf16 %v821, %v821
      %v823 = vld [vmem:[%s4] sm:$0xff]
      %v824 = vld [vmem:[%s4 + $0x8] sm:$0xff]
      %v825 = vld [vmem:[%s4 + $0x10] sm:$0xff]
      %v826 = vld [vmem:[%s4 + $0x18] sm:$0xff]
      %v827 = vld [vmem:[%s4 + $0x20] sm:$0xff]
      %v828 = vld [vmem:[%s4 + $0x28] sm:$0xff]
      %v829 = vld [vmem:[%s4 + $0x30] sm:$0xff]
      %v830 = vld [vmem:[%s4 + $0x38] sm:$0xff]
      %v831 = vld [vmem:[%s4 + $0x40] sm:$0xff]
      %v832 = vld [vmem:[%s4 + $0x48] sm:$0xff]
      %v833 = vld [vmem:[%s4 + $0x50] sm:$0xff]
      %v834 = vld [vmem:[%s4 + $0x58] sm:$0xff]
      %v835 = vld [vmem:[%s4 + $0x60] sm:$0xff]
      %v836 = vld [vmem:[%s4 + $0x68] sm:$0xff]
      %v837 = vld [vmem:[%s4 + $0x70] sm:$0xff]
      %v838 = vld [vmem:[%s4 + $0x78] sm:$0xff]
      %v839 = vld [vmem:[%s5] sm:$0x3]
      %v841 = vlaneseq
      %v842 = vshrl.u32 %v841, 7
      %v843 = vsub.s32 0, %v842
      %v844 = vrot.slane %v839, %v843
      %v845 = vlaneseq
      %v846 = vshrl.u32 %v845, 7
      %v847 = vsub.s32 1, %v846
      %v848 = vrot.slane %v839, %v847
      %v867 = vunpack.c.l.b16 %v823
      %v868 = vunpack.c.h.b16 %v823
      %v869 = vunpack.c.l.b16 %v824
      %v870 = vunpack.c.h.b16 %v824
      %v871 = vunpack.c.l.b16 %v825
      %v872 = vunpack.c.h.b16 %v825
      %v873 = vunpack.c.l.b16 %v826
      %v874 = vunpack.c.h.b16 %v826
      %v875 = vunpack.c.l.b16 %v827
      %v876 = vunpack.c.h.b16 %v827
      %v877 = vunpack.c.l.b16 %v828
      %v878 = vunpack.c.h.b16 %v828
      %v879 = vunpack.c.l.b16 %v829
      %v880 = vunpack.c.h.b16 %v829
      %v881 = vunpack.c.l.b16 %v830
      %v882 = vunpack.c.h.b16 %v830
      %v883 = vunpack.c.l.b16 %v831
      %v884 = vunpack.c.h.b16 %v831
      %v885 = vunpack.c.l.b16 %v832
      %v886 = vunpack.c.h.b16 %v832
      %v887 = vunpack.c.l.b16 %v833
      %v888 = vunpack.c.h.b16 %v833
      %v889 = vunpack.c.l.b16 %v834
      %v890 = vunpack.c.h.b16 %v834
      %v891 = vunpack.c.l.b16 %v835
      %v892 = vunpack.c.h.b16 %v835
      %v893 = vunpack.c.l.b16 %v836
      %v894 = vunpack.c.h.b16 %v836
      %v895 = vunpack.c.l.b16 %v837
      %v896 = vunpack.c.h.b16 %v837
      %v897 = vunpack.c.l.b16 %v838
      %v898 = vunpack.c.h.b16 %v838
      %v899 = vpack.c.b16 %v869, %v867
      %v900 = vpack.c.b16 %v870, %v868
      %v901 = vpack.c.b16 %v873, %v871
      %v902 = vpack.c.b16 %v874, %v872
      %v903 = vpack.c.b16 %v877, %v875
      %v904 = vpack.c.b16 %v878, %v876
      %v905 = vpack.c.b16 %v881, %v879
      %v906 = vpack.c.b16 %v882, %v880
      %v907 = vpack.c.b16 %v885, %v883
      %v908 = vpack.c.b16 %v886, %v884
      %v909 = vpack.c.b16 %v889, %v887
      %v910 = vpack.c.b16 %v890, %v888
      %v911 = vpack.c.b16 %v893, %v891
      %v912 = vpack.c.b16 %v894, %v892
      %v913 = vpack.c.b16 %v897, %v895
      %v914 = vpack.c.b16 %v898, %v896
      %931 = vmatprep.subr.bf16.mxu0 %v914
      %932 = vmatpush1.bf16.msra.mxu0 %v913
      %933 = vmatprep.subr.bf16.mxu0 %v912
      %934 = vmatpush1.bf16.msra.mxu0 %v911
      %935 = vmatprep.subr.bf16.mxu0 %v910
      %936 = vmatpush1.bf16.msra.mxu0 %v909
      %937 = vmatprep.subr.bf16.mxu0 %v908
      %938 = vmatpush1.bf16.msra.mxu0 %v907
      %939 = vmatprep.subr.bf16.mxu0 %v906
      %940 = vmatpush1.bf16.msra.mxu0 %v905
      %941 = vmatprep.subr.bf16.mxu0 %v904
      %942 = vmatpush1.bf16.msra.mxu0 %v903
      %943 = vmatprep.subr.bf16.mxu0 %v902
      %944 = vmatpush1.bf16.msra.mxu0 %v901
      %945 = vmatprep.subr.bf16.mxu0 %v900
      %946 = vmatpush1.bf16.msra.mxu0 %v899
      %947 = vmatprep.subr.bf16.mxu0 0
      %948 = vmatpush2.bf16.msra.mxu0 0
      %949 = vmatprep.subr.bf16.mxu0 0
      %950 = vmatpush2.bf16.msra.mxu0 0
      %951 = vmatprep.subr.bf16.mxu0 0
      %952 = vmatpush2.bf16.msra.mxu0 0
      %953 = vmatprep.subr.bf16.mxu0 0
      %954 = vmatpush2.bf16.msra.mxu0 0
      %955 = vmatprep.subr.bf16.mxu0 0
      %956 = vmatpush2.bf16.msra.mxu0 0
      %957 = vmatprep.subr.bf16.mxu0 0
      %958 = vmatpush2.bf16.msra.mxu0 0
      %959 = vmatprep.subr.bf16.mxu0 0
      %960 = vmatpush2.bf16.msra.mxu0 0
      %961 = vmatprep.subr.bf16.mxu0 0
      %962 = vmatpush2.bf16.msra.mxu0 0
      %963 = vmatprep.mubr.bf16.mxu0 0
      %964 = vmatmul.mubr.bf16.gmra.mxu0 %v822
      %v965 = vpop.f32.mrf.mxu0
      %v966 = vadd.f32 %v844, %v965
      %v967 = vpop.f32.mrf.mxu0
      %v968 = vadd.f32 %v848, %v967
      %v969 = vpop.f32.mrf.mxu0
      %v970 = vpop.f32.mrf.mxu0
      %971 = vdwg.mxu0
      %v972 = vxor.u32 %v966, 2147483648
      %v973 = vxor.u32 %v968, 2147483648
      %v974 = vmul.f32 %v972, 1.442695
      %v975 = vpow.pop %v974
      %v976 = vmul.f32 %v973, 1.442695
      %v977 = vpow.pop %v976
      %v978 = vadd.f32 %v975, 1.0
      %v979 = vadd.f32 %v977, 1.0
      %v980 = vrcp.pop %v978
      %v981 = vmul.f32 1.0, %v980
      %v982 = vrcp.pop %v979
      %v983 = vmul.f32 1.0, %v982
      %v984 = vmul.f32 %v966, %v981
      %v985 = vmul.f32 %v968, %v983
      %v986 = vpack.c.bf16 %v984, %v984
      %v987 = vpack.c.bf16 %v985, %v985
      %v988 = vld [vmem:[%s6] sm:$0xf]
      %v989 = vld [vmem:[%s6 + $0x4] sm:$0xf]
      %v990 = vld [vmem:[%s6 + $0x8] sm:$0xf]
      %v991 = vld [vmem:[%s6 + $0xc] sm:$0xf]
      %v992 = vld [vmem:[%s6 + $0x10] sm:$0xf]
      %v993 = vld [vmem:[%s6 + $0x14] sm:$0xf]
      %v994 = vld [vmem:[%s6 + $0x18] sm:$0xf]
      %v995 = vld [vmem:[%s6 + $0x1c] sm:$0xf]
      %v996 = vld [vmem:[%s6 + $0x20] sm:$0xf]
      %v997 = vld [vmem:[%s6 + $0x24] sm:$0xf]
      %v998 = vld [vmem:[%s6 + $0x28] sm:$0xf]
      %v999 = vld [vmem:[%s6 + $0x2c] sm:$0xf]
      %v1000 = vld [vmem:[%s6 + $0x30] sm:$0xf]
      %v1001 = vld [vmem:[%s6 + $0x34] sm:$0xf]
      %v1002 = vld [vmem:[%s6 + $0x38] sm:$0xf]
      %v1003 = vld [vmem:[%s6 + $0x3c] sm:$0xf]
      %v1004 = vld [vmem:[%s6 + $0x40] sm:$0xf]
      %v1005 = vld [vmem:[%s6 + $0x44] sm:$0xf]
      %v1006 = vld [vmem:[%s6 + $0x48] sm:$0xf]
      %v1007 = vld [vmem:[%s6 + $0x4c] sm:$0xf]
      %v1008 = vld [vmem:[%s6 + $0x50] sm:$0xf]
      %v1009 = vld [vmem:[%s6 + $0x54] sm:$0xf]
      %v1010 = vld [vmem:[%s6 + $0x58] sm:$0xf]
      %v1011 = vld [vmem:[%s6 + $0x5c] sm:$0xf]
      %v1012 = vld [vmem:[%s6 + $0x60] sm:$0xf]
      %v1013 = vld [vmem:[%s6 + $0x64] sm:$0xf]
      %v1014 = vld [vmem:[%s6 + $0x68] sm:$0xf]
      %v1015 = vld [vmem:[%s6 + $0x6c] sm:$0xf]
      %v1016 = vld [vmem:[%s6 + $0x70] sm:$0xf]
      %v1017 = vld [vmem:[%s6 + $0x74] sm:$0xf]
      %v1018 = vld [vmem:[%s6 + $0x78] sm:$0xf]
      %v1019 = vld [vmem:[%s6 + $0x7c] sm:$0xf]
      %v1020 = vld [vmem:[%s7] sm:$0x1]
      %v1022 = vlaneseq
      %v1023 = vshrl.u32 %v1022, 7
      %v1024 = vsub.s32 0, %v1023
      %v1025 = vrot.slane %v1020, %v1024
      %v1059 = vunpack.c.l.b16 %v988
      %v1060 = vunpack.c.l.b16 %v989
      %v1061 = vunpack.c.l.b16 %v990
      %v1062 = vunpack.c.l.b16 %v991
      %v1063 = vunpack.c.l.b16 %v992
      %v1064 = vunpack.c.l.b16 %v993
      %v1065 = vunpack.c.l.b16 %v994
      %v1066 = vunpack.c.l.b16 %v995
      %v1067 = vunpack.c.l.b16 %v996
      %v1068 = vunpack.c.l.b16 %v997
      %v1069 = vunpack.c.l.b16 %v998
      %v1070 = vunpack.c.l.b16 %v999
      %v1071 = vunpack.c.l.b16 %v1000
      %v1072 = vunpack.c.l.b16 %v1001
      %v1073 = vunpack.c.l.b16 %v1002
      %v1074 = vunpack.c.l.b16 %v1003
      %v1075 = vunpack.c.l.b16 %v1004
      %v1076 = vunpack.c.l.b16 %v1005
      %v1077 = vunpack.c.l.b16 %v1006
      %v1078 = vunpack.c.l.b16 %v1007
      %v1079 = vunpack.c.l.b16 %v1008
      %v1080 = vunpack.c.l.b16 %v1009
      %v1081 = vunpack.c.l.b16 %v1010
      %v1082 = vunpack.c.l.b16 %v1011
      %v1083 = vunpack.c.l.b16 %v1012
      %v1084 = vunpack.c.l.b16 %v1013
      %v1085 = vunpack.c.l.b16 %v1014
      %v1086 = vunpack.c.l.b16 %v1015
      %v1087 = vunpack.c.l.b16 %v1016
      %v1088 = vunpack.c.l.b16 %v1017
      %v1089 = vunpack.c.l.b16 %v1018
      %v1090 = vunpack.c.l.b16 %v1019
      %v1091 = vpack.c.b16 %v1060, %v1059
      %v1092 = vpack.c.b16 %v1062, %v1061
      %v1093 = vpack.c.b16 %v1064, %v1063
      %v1094 = vpack.c.b16 %v1066, %v1065
      %v1095 = vpack.c.b16 %v1068, %v1067
      %v1096 = vpack.c.b16 %v1070, %v1069
      %v1097 = vpack.c.b16 %v1072, %v1071
      %v1098 = vpack.c.b16 %v1074, %v1073
      %v1099 = vpack.c.b16 %v1076, %v1075
      %v1100 = vpack.c.b16 %v1078, %v1077
      %v1101 = vpack.c.b16 %v1080, %v1079
      %v1102 = vpack.c.b16 %v1082, %v1081
      %v1103 = vpack.c.b16 %v1084, %v1083
      %v1104 = vpack.c.b16 %v1086, %v1085
      %v1105 = vpack.c.b16 %v1088, %v1087
      %v1106 = vpack.c.b16 %v1090, %v1089
      %1123 = vmatprep.subr.bf16.mxu0 0
      %1124 = vmatpush1.bf16.msra.mxu0 %v1098
      %1125 = vmatprep.subr.bf16.mxu0 0
      %1126 = vmatpush1.bf16.msra.mxu0 %v1097
      %1127 = vmatprep.subr.bf16.mxu0 0
      %1128 = vmatpush1.bf16.msra.mxu0 %v1096
      %1129 = vmatprep.subr.bf16.mxu0 0
      %1130 = vmatpush1.bf16.msra.mxu0 %v1095
      %1131 = vmatprep.subr.bf16.mxu0 0
      %1132 = vmatpush1.bf16.msra.mxu0 %v1094
      %1133 = vmatprep.subr.bf16.mxu0 0
      %1134 = vmatpush1.bf16.msra.mxu0 %v1093
      %1135 = vmatprep.subr.bf16.mxu0 0
      %1136 = vmatpush1.bf16.msra.mxu0 %v1092
      %1137 = vmatprep.subr.bf16.mxu0 0
      %1138 = vmatpush1.bf16.msra.mxu0 %v1091
      %1139 = vmatprep.subr.bf16.mxu0 0
      %1140 = vmatpush2.bf16.msra.mxu0 %v1106
      %1141 = vmatprep.subr.bf16.mxu0 0
      %1142 = vmatpush2.bf16.msra.mxu0 %v1105
      %1143 = vmatprep.subr.bf16.mxu0 0
      %1144 = vmatpush2.bf16.msra.mxu0 %v1104
      %1145 = vmatprep.subr.bf16.mxu0 0
      %1146 = vmatpush2.bf16.msra.mxu0 %v1103
      %1147 = vmatprep.subr.bf16.mxu0 0
      %1148 = vmatpush2.bf16.msra.mxu0 %v1102
      %1149 = vmatprep.subr.bf16.mxu0 0
      %1150 = vmatpush2.bf16.msra.mxu0 %v1101
      %1151 = vmatprep.subr.bf16.mxu0 0
      %1152 = vmatpush2.bf16.msra.mxu0 %v1100
      %1153 = vmatprep.subr.bf16.mxu0 0
      %1154 = vmatpush2.bf16.msra.mxu0 %v1099
      %1155 = vmatprep.mubr.bf16.mxu0 %v987
      %1156 = vmatmul.mubr.bf16.gmra.mxu0 %v986
      %v1157 = vpop.f32.mrf.mxu0
      %v1158 = vadd.f32 %v1025, %v1157
      %v1159 = vpop.f32.mrf.mxu0
      %v1160 = vpop.f32.mrf.mxu0
      %v1161 = vpop.f32.mrf.mxu0
      %1162 = vdwg.mxu0
      %v1163 = vmul.f32 %v1158, 0.5
      %v1164 = vadd.f32 %v797, %v1163
      %v1165 = vld [vmem:[%s2 + $0x1] sm:$0x1]
      %v1166 = vld [vmem:[%s3 + $0x1] sm:$0x1]
      %1167 = vadd.xlane.f32.xlu0 %v1164
      %v1168 = vpop.xlane.xlu0 %1167
      %v1169 = vmul.f32 %v1168, %v802
      %v1170 = vsub.f32 %v1164, %v1169
      %v1171 = vmul.f32 %v1170, %v1170
      %1172 = vadd.xlane.f32.xlu0 %v1171
      %v1173 = vpop.xlane.xlu0 %1172
      %v1174 = vmul.f32 %v1173, %v802
      %v1175 = vadd.f32 %v1174, 1e-05
      %v1176 = vrsqrt.pop %v1175
      %v1177 = vmul.f32 %v1170, %v1176
      %v1178 = vlaneseq
      %v1179 = vshrl.u32 %v1178, 7
      %v1180 = vsub.s32 0, %v1179
      %v1181 = vrot.slane %v1165, %v1180
      %v1182 = vmul.f32 %v1177, %v1181
      %v1183 = vlaneseq
      %v1184 = vshrl.u32 %v1183, 7
      %v1185 = vsub.s32 0, %v1184
      %v1186 = vrot.slane %v1166, %v1185
      %v1187 = vadd.f32 %v1182, %v1186
      %v1188 = vpack.c.bf16 %v1187, %v1187
      %v1189 = vld [vmem:[%s8] sm:$0xff]
      %v1190 = vld [vmem:[%s8 + $0x8] sm:$0xf]
      %v1191 = vld [vmem:[%s8 + $0xc] sm:$0xff]
      %v1192 = vld [vmem:[%s8 + $0x14] sm:$0xf]
      %v1193 = vld [vmem:[%s8 + $0x18] sm:$0xff]
      %v1194 = vld [vmem:[%s8 + $0x20] sm:$0xf]
      %v1195 = vld [vmem:[%s8 + $0x24] sm:$0xff]
      %v1196 = vld [vmem:[%s8 + $0x2c] sm:$0xf]
      %v1197 = vld [vmem:[%s8 + $0x30] sm:$0xff]
      %v1198 = vld [vmem:[%s8 + $0x38] sm:$0xf]
      %v1199 = vld [vmem:[%s8 + $0x3c] sm:$0xff]
      %v1200 = vld [vmem:[%s8 + $0x44] sm:$0xf]
      %v1201 = vld [vmem:[%s8 + $0x48] sm:$0xff]
      %v1202 = vld [vmem:[%s8 + $0x50] sm:$0xf]
      %v1203 = vld [vmem:[%s8 + $0x54] sm:$0xff]
      %v1204 = vld [vmem:[%s8 + $0x5c] sm:$0xf]
      %v1205 = vld [vmem:[%s8 + $0x60] sm:$0xff]
      %v1206 = vld [vmem:[%s8 + $0x68] sm:$0xf]
      %v1207 = vld [vmem:[%s8 + $0x6c] sm:$0xff]
      %v1208 = vld [vmem:[%s8 + $0x74] sm:$0xf]
      %v1209 = vld [vmem:[%s8 + $0x78] sm:$0xff]
      %v1210 = vld [vmem:[%s8 + $0x80] sm:$0xf]
      %v1211 = vld [vmem:[%s8 + $0x84] sm:$0xff]
      %v1212 = vld [vmem:[%s8 + $0x8c] sm:$0xf]
      %v1213 = vld [vmem:[%s8 + $0x90] sm:$0xff]
      %v1214 = vld [vmem:[%s8 + $0x98] sm:$0xf]
      %v1215 = vld [vmem:[%s8 + $0x9c] sm:$0xff]
      %v1216 = vld [vmem:[%s8 + $0xa4] sm:$0xf]
      %v1217 = vld [vmem:[%s8 + $0xa8] sm:$0xff]
      %v1218 = vld [vmem:[%s8 + $0xb0] sm:$0xf]
      %v1219 = vld [vmem:[%s8 + $0xb4] sm:$0xff]
      %v1220 = vld [vmem:[%s8 + $0xbc] sm:$0xf]
      %v1221 = vld [vmem:[%s9] sm:$0x7]
      %v1223 = vlaneseq
      %v1224 = vshrl.u32 %v1223, 7
      %v1225 = vsub.s32 0, %v1224
      %v1226 = vrot.slane %v1221, %v1225
      %v1227 = vlaneseq
      %v1228 = vshrl.u32 %v1227, 7
      %v1229 = vsub.s32 1, %v1228
      %v1230 = vrot.slane %v1221, %v1229
      %v1231 = vlaneseq
      %v1232 = vshrl.u32 %v1231, 7
      %v1233 = vsub.s32 2, %v1232
      %v1234 = vrot.slane %v1221, %v1233
      %v1270 = vunpack.c.l.b16 %v1189
      %v1271 = vunpack.c.h.b16 %v1189
      %v1272 = vunpack.c.l.b16 %v1190
      %v1273 = vunpack.c.l.b16 %v1191
      %v1274 = vunpack.c.h.b16 %v1191
      %v1275 = vunpack.c.l.b16 %v1192
      %v1276 = vunpack.c.l.b16 %v1193
      %v1277 = vunpack.c.h.b16 %v1193
      %v1278 = vunpack.c.l.b16 %v1194
      %v1279 = vunpack.c.l.b16 %v1195
      %v1280 = vunpack.c.h.b16 %v1195
      %v1281 = vunpack.c.l.b16 %v1196
      %v1282 = vunpack.c.l.b16 %v1197
      %v1283 = vunpack.c.h.b16 %v1197
      %v1284 = vunpack.c.l.b16 %v1198
      %v1285 = vunpack.c.l.b16 %v1199
      %v1286 = vunpack.c.h.b16 %v1199
      %v1287 = vunpack.c.l.b16 %v1200
      %v1288 = vunpack.c.l.b16 %v1201
      %v1289 = vunpack.c.h.b16 %v1201
      %v1290 = vunpack.c.l.b16 %v1202
      %v1291 = vunpack.c.l.b16 %v1203
      %v1292 = vunpack.c.h.b16 %v1203
      %v1293 = vunpack.c.l.b16 %v1204
      %v1294 = vunpack.c.l.b16 %v1205
      %v1295 = vunpack.c.h.b16 %v1205
      %v1296 = vunpack.c.l.b16 %v1206
      %v1297 = vunpack.c.l.b16 %v1207
      %v1298 = vunpack.c.h.b16 %v1207
      %v1299 = vunpack.c.l.b16 %v1208
      %v1300 = vunpack.c.l.b16 %v1209
      %v1301 = vunpack.c.h.b16 %v1209
      %v1302 = vunpack.c.l.b16 %v1210
      %v1303 = vunpack.c.l.b16 %v1211
      %v1304 = vunpack.c.h.b16 %v1211
      %v1305 = vunpack.c.l.b16 %v1212
      %v1306 = vunpack.c.l.b16 %v1213
      %v1307 = vunpack.c.h.b16 %v1213
      %v1308 = vunpack.c.l.b16 %v1214
      %v1309 = vunpack.c.l.b16 %v1215
      %v1310 = vunpack.c.h.b16 %v1215
      %v1311 = vunpack.c.l.b16 %v1216
      %v1312 = vunpack.c.l.b16 %v1217
      %v1313 = vunpack.c.h.b16 %v1217
      %v1314 = vunpack.c.l.b16 %v1218
      %v1315 = vunpack.c.l.b16 %v1219
      %v1316 = vunpack.c.h.b16 %v1219
      %v1317 = vunpack.c.l.b16 %v1220
      %v1318 = vpack.c.b16 %v1273, %v1270
      %v1319 = vpack.c.b16 %v1274, %v1271
      %v1320 = vpack.c.b16 %v1275, %v1272
      %v1321 = vpack.c.b16 %v1279, %v1276
      %v1322 = vpack.c.b16 %v1280, %v1277
      %v1323 = vpack.c.b16 %v1281, %v1278
      %v1324 = vpack.c.b16 %v1285, %v1282
      %v1325 = vpack.c.b16 %v1286, %v1283
      %v1326 = vpack.c.b16 %v1287, %v1284
      %v1327 = vpack.c.b16 %v1291, %v1288
      %v1328 = vpack.c.b16 %v1292, %v1289
      %v1329 = vpack.c.b16 %v1293, %v1290
      %v1330 = vpack.c.b16 %v1297, %v1294
      %v1331 = vpack.c.b16 %v1298, %v1295
      %v1332 = vpack.c.b16 %v1299, %v1296
      %v1333 = vpack.c.b16 %v1303, %v1300
      %v1334 = vpack.c.b16 %v1304, %v1301
      %v1335 = vpack.c.b16 %v1305, %v1302
      %v1336 = vpack.c.b16 %v1309, %v1306
      %v1337 = vpack.c.b16 %v1310, %v1307
      %v1338 = vpack.c.b16 %v1311, %v1308
      %v1339 = vpack.c.b16 %v1315, %v1312
      %v1340 = vpack.c.b16 %v1316, %v1313
      %v1341 = vpack.c.b16 %v1317, %v1314
      %1366 = vmatprep.subr.bf16.mxu0 %v1340
      %1367 = vmatpush1.bf16.msra.mxu0 %v1339
      %1368 = vmatprep.subr.bf16.mxu0 %v1337
      %1369 = vmatpush1.bf16.msra.mxu0 %v1336
      %1370 = vmatprep.subr.bf16.mxu0 %v1334
      %1371 = vmatpush1.bf16.msra.mxu0 %v1333
      %1372 = vmatprep.subr.bf16.mxu0 %v1331
      %1373 = vmatpush1.bf16.msra.mxu0 %v1330
      %1374 = vmatprep.subr.bf16.mxu0 %v1328
      %1375 = vmatpush1.bf16.msra.mxu0 %v1327
      %1376 = vmatprep.subr.bf16.mxu0 %v1325
      %1377 = vmatpush1.bf16.msra.mxu0 %v1324
      %1378 = vmatprep.subr.bf16.mxu0 %v1322
      %1379 = vmatpush1.bf16.msra.mxu0 %v1321
      %1380 = vmatprep.subr.bf16.mxu0 %v1319
      %1381 = vmatpush1.bf16.msra.mxu0 %v1318
      %1382 = vmatprep.subr.bf16.mxu0 0
      %1383 = vmatpush2.bf16.msra.mxu0 0
      %1384 = vmatprep.subr.bf16.mxu0 0
      %1385 = vmatpush2.bf16.msra.mxu0 0
      %1386 = vmatprep.subr.bf16.mxu0 0
      %1387 = vmatpush2.bf16.msra.mxu0 0
      %1388 = vmatprep.subr.bf16.mxu0 0
      %1389 = vmatpush2.bf16.msra.mxu0 0
      %1390 = vmatprep.subr.bf16.mxu0 0
      %1391 = vmatpush2.bf16.msra.mxu0 0
      %1392 = vmatprep.subr.bf16.mxu0 0
      %1393 = vmatpush2.bf16.msra.mxu0 0
      %1394 = vmatprep.subr.bf16.mxu0 0
      %1395 = vmatpush2.bf16.msra.mxu0 0
      %1396 = vmatprep.subr.bf16.mxu0 0
      %1397 = vmatpush2.bf16.msra.mxu0 0
      %1398 = vmatprep.mubr.bf16.mxu0 0
      %1399 = vmatmul.mubr.bf16.gmra.mxu0 %v1188
      %v1400 = vpop.f32.mrf.mxu0
      %v1401 = vadd.f32 %v1226, %v1400
      %v1402 = vpop.f32.mrf.mxu0
      %v1403 = vadd.f32 %v1230, %v1402
      %v1404 = vpop.f32.mrf.mxu0
      %v1405 = vpop.f32.mrf.mxu0
      %1406 = vdwg.mxu0
      %1407 = vmatprep.subr.bf16.mxu0 0
      %1408 = vmatpush1.bf16.msra.mxu0 %v1341
      %1409 = vmatprep.subr.bf16.mxu0 0
      %1410 = vmatpush1.bf16.msra.mxu0 %v1338
      %1411 = vmatprep.subr.bf16.mxu0 0
      %1412 = vmatpush1.bf16.msra.mxu0 %v1335
      %1413 = vmatprep.subr.bf16.mxu0 0
      %1414 = vmatpush1.bf16.msra.mxu0 %v1332
      %1415 = vmatprep.subr.bf16.mxu0 0
      %1416 = vmatpush1.bf16.msra.mxu0 %v1329
      %1417 = vmatprep.subr.bf16.mxu0 0
      %1418 = vmatpush1.bf16.msra.mxu0 %v1326
      %1419 = vmatprep.subr.bf16.mxu0 0
      %1420 = vmatpush1.bf16.msra.mxu0 %v1323
      %1421 = vmatprep.subr.bf16.mxu0 0
      %1422 = vmatpush1.bf16.msra.mxu0 %v1320
      %1423 = vmatprep.subr.bf16.mxu0 0
      %1424 = vmatpush2.bf16.msra.mxu0 0
      %1425 = vmatprep.subr.bf16.mxu0 0
      %1426 = vmatpush2.bf16.msra.mxu0 0
      %1427 = vmatprep.subr.bf16.mxu0 0
      %1428 = vmatpush2.bf16.msra.mxu0 0
      %1429 = vmatprep.subr.bf16.mxu0 0
      %1430 = vmatpush2.bf16.msra.mxu0 0
      %1431 = vmatprep.subr.bf16.mxu0 0
      %1432 = vmatpush2.bf16.msra.mxu0 0
      %1433 = vmatprep.subr.bf16.mxu0 0
      %1434 = vmatpush2.bf16.msra.mxu0 0
      %1435 = vmatprep.subr.bf16.mxu0 0
      %1436 = vmatpush2.bf16.msra.mxu0 0
      %1437 = vmatprep.subr.bf16.mxu0 0
      %1438 = vmatpush2.bf16.msra.mxu0 0
      %1439 = vmatprep.mubr.bf16.mxu0 0
      %1440 = vmatmul.mubr.bf16.gmra.mxu0 %v1188
      %v1441 = vpop.f32.mrf.mxu0
      %v1442 = vadd.f32 %v1234, %v1441
      %v1443 = vpop.f32.mrf.mxu0
      %v1444 = vpop.f32.mrf.mxu0
      %v1445 = vpop.f32.mrf.mxu0
      %1446 = vdwg.mxu0
      %v1447 = vld [vmem:[%s1] sm:$0xff]
      %v1448 = vpack.c.bf16 %v1447, %v1447
      %v1449 = vld [vmem:[%s10] sm:$0xf]
      %v1450 = vld [vmem:[%s10 + $0x4] sm:$0xf]
      %v1451 = vld [vmem:[%s10 + $0x8] sm:$0xf]
      %v1452 = vld [vmem:[%s10 + $0xc] sm:$0xf]
      %v1453 = vld [vmem:[%s10 + $0x10] sm:$0xf]
      %v1454 = vld [vmem:[%s10 + $0x14] sm:$0xf]
      %v1455 = vld [vmem:[%s10 + $0x18] sm:$0xf]
      %v1456 = vld [vmem:[%s10 + $0x1c] sm:$0xf]
      %v1457 = vld [vmem:[%s10 + $0x20] sm:$0xf]
      %v1458 = vld [vmem:[%s10 + $0x24] sm:$0xf]
      %v1459 = vld [vmem:[%s10 + $0x28] sm:$0xf]
      %v1460 = vld [vmem:[%s10 + $0x2c] sm:$0xf]
      %v1461 = vld [vmem:[%s10 + $0x30] sm:$0xf]
      %v1462 = vld [vmem:[%s10 + $0x34] sm:$0xf]
      %v1463 = vld [vmem:[%s10 + $0x38] sm:$0xf]
      %v1464 = vld [vmem:[%s10 + $0x3c] sm:$0xf]
      %v1481 = vunpack.c.l.b16 %v1449
      %v1482 = vunpack.c.l.b16 %v1450
      %v1483 = vunpack.c.l.b16 %v1451
      %v1484 = vunpack.c.l.b16 %v1452
      %v1485 = vunpack.c.l.b16 %v1453
      %v1486 = vunpack.c.l.b16 %v1454
      %v1487 = vunpack.c.l.b16 %v1455
      %v1488 = vunpack.c.l.b16 %v1456
      %v1489 = vunpack.c.l.b16 %v1457
      %v1490 = vunpack.c.l.b16 %v1458
      %v1491 = vunpack.c.l.b16 %v1459
      %v1492 = vunpack.c.l.b16 %v1460
      %v1493 = vunpack.c.l.b16 %v1461
      %v1494 = vunpack.c.l.b16 %v1462
      %v1495 = vunpack.c.l.b16 %v1463
      %v1496 = vunpack.c.l.b16 %v1464
      %v1497 = vpack.c.b16 %v1482, %v1481
      %v1498 = vpack.c.b16 %v1484, %v1483
      %v1499 = vpack.c.b16 %v1486, %v1485
      %v1500 = vpack.c.b16 %v1488, %v1487
      %v1501 = vpack.c.b16 %v1490, %v1489
      %v1502 = vpack.c.b16 %v1492, %v1491
      %v1503 = vpack.c.b16 %v1494, %v1493
      %v1504 = vpack.c.b16 %v1496, %v1495
      %1513 = vmatprep.subr.bf16.mxu0 0
      %1514 = vmatpush1.bf16.msra.mxu0 %v1504
      %1515 = vmatprep.subr.bf16.mxu0 0
      %1516 = vmatpush1.bf16.msra.mxu0 %v1503
      %1517 = vmatprep.subr.bf16.mxu0 0
      %1518 = vmatpush1.bf16.msra.mxu0 %v1502
      %1519 = vmatprep.subr.bf16.mxu0 0
      %1520 = vmatpush1.bf16.msra.mxu0 %v1501
      %1521 = vmatprep.subr.bf16.mxu0 0
      %1522 = vmatpush1.bf16.msra.mxu0 %v1500
      %1523 = vmatprep.subr.bf16.mxu0 0
      %1524 = vmatpush1.bf16.msra.mxu0 %v1499
      %1525 = vmatprep.subr.bf16.mxu0 0
      %1526 = vmatpush1.bf16.msra.mxu0 %v1498
      %1527 = vmatprep.subr.bf16.mxu0 0
      %1528 = vmatpush1.bf16.msra.mxu0 %v1497
      %1529 = vmatprep.subr.bf16.mxu0 0
      %1530 = vmatpush2.bf16.msra.mxu0 0
      %1531 = vmatprep.subr.bf16.mxu0 0
      %1532 = vmatpush2.bf16.msra.mxu0 0
      %1533 = vmatprep.subr.bf16.mxu0 0
      %1534 = vmatpush2.bf16.msra.mxu0 0
      %1535 = vmatprep.subr.bf16.mxu0 0
      %1536 = vmatpush2.bf16.msra.mxu0 0
      %1537 = vmatprep.subr.bf16.mxu0 0
      %1538 = vmatpush2.bf16.msra.mxu0 0
      %1539 = vmatprep.subr.bf16.mxu0 0
      %1540 = vmatpush2.bf16.msra.mxu0 0
      %1541 = vmatprep.subr.bf16.mxu0 0
      %1542 = vmatpush2.bf16.msra.mxu0 0
      %1543 = vmatprep.subr.bf16.mxu0 0
      %1544 = vmatpush2.bf16.msra.mxu0 0
      %1545 = vmatprep.mubr.bf16.mxu0 0
      %1546 = vmatmul.mubr.bf16.gmra.mxu0 %v1448
      %v1547 = vpop.f32.mrf.mxu0
      %v1548 = vadd.f32 0.0, %v1547
      %v1549 = vpop.f32.mrf.mxu0
      %v1550 = vpop.f32.mrf.mxu0
      %v1551 = vpop.f32.mrf.mxu0
      %1552 = vdwg.mxu0
      %v1553 = vlaneseq
      %v1554 = vshrl.u32 %v1553, 7
      %v1555 = vlaneseq
      %v1556 = vand.u32 %v1555, 127
      %vm1557 = vcmp.eq.s32.totalorder %v1554, 7
      %v1558 = vadd.s32 %v1554, 1
      %v1559 = vsel %vm1557, 0, %v1558
      %v1560 = vand.u32 %v1559, 1
      %vm1561 = vcmp.eq.s32.totalorder %v1560, 1
      %v1562 = vshra.s32 %v1559, 1
      %v1563 = vand.u32 %v1562, 1
      %vm1564 = vcmp.eq.s32.totalorder %v1563, 1
      %v1565 = vshra.s32 %v1559, 2
      %v1566 = vand.u32 %v1565, 1
      %vm1567 = vcmp.eq.s32.totalorder %v1566, 1
      %v1568 = vld [vmem:[%s11] sm:$0x1]
      %v1569 = vld [vmem:[%s11 + $0x4] sm:$0x1]
      %v1570 = vlaneseq
      %v1571 = vshrl.u32 %v1570, 7
      %v1572 = vsub.s32 0, %v1571
      %v1573 = vrot.slane %v1568, %v1572
      %v1574 = vadd.f32 %v1401, %v1573
      %v1575 = vpack.c.bf16 %v1574, %v1574
      %v1576 = vpack.c.bf16 %v1403, %v1403
      %v1577 = vlaneseq
      %v1578 = vshrl.u32 %v1577, 7
      %v1579 = vsub.s32 0, %v1578
      %v1580 = vrot.slane %v1569, %v1579
      %v1581 = vadd.f32 %v1401, %v1580
      %v1582 = vpack.c.bf16 %v1581, %v1581
      %v1583 = vpack.c.bf16 %v1548, %v1548
      %vm1584 = vcmask 261120
      %v1586 = vsel %vm1584, %v1582, 0
      %v1589 = vsel %vm1584, %v1583, 0
      %1591 = vmatprep.subr.bf16.mxu0 0
      %1592 = vmatpush1.bf16.xpose.msra.mxu0 0
      %1593 = vmatprep.subr.bf16.mxu0 0
      %1594 = vmatpush1.bf16.xpose.msra.mxu0 0
      %1595 = vmatprep.subr.bf16.mxu0 0
      %1596 = vmatpush1.bf16.xpose.msra.mxu0 0
      %1597 = vmatprep.subr.bf16.mxu0 0
      %1598 = vmatpush1.bf16.xpose.msra.mxu0 0
      %1599 = vmatprep.subr.bf16.mxu0 0
      %1600 = vmatpush1.bf16.xpose.msra.mxu0 0
      %1601 = vmatprep.subr.bf16.mxu0 0
      %1602 = vmatpush1.bf16.xpose.msra.mxu0 0
      %1603 = vmatprep.subr.bf16.mxu0 0
      %1604 = vmatpush1.bf16.xpose.msra.mxu0 0
      %1605 = vmatprep.subr.bf16.mxu0 0
      %1606 = vmatpush1.bf16.xpose.msra.mxu0 %v1589
      %1607 = vmatprep.subr.bf16.mxu0 0
      %1608 = vmatpush2.bf16.xpose.msra.mxu0 0
      %1609 = vmatprep.subr.bf16.mxu0 0
      %1610 = vmatpush2.bf16.xpose.msra.mxu0 0
      %1611 = vmatprep.subr.bf16.mxu0 0
      %1612 = vmatpush2.bf16.xpose.msra.mxu0 0
      %1613 = vmatprep.subr.bf16.mxu0 0
      %1614 = vmatpush2.bf16.xpose.msra.mxu0 0
      %1615 = vmatprep.subr.bf16.mxu0 0
      %1616 = vmatpush2.bf16.xpose.msra.mxu0 0
      %1617 = vmatprep.subr.bf16.mxu0 0
      %1618 = vmatpush2.bf16.xpose.msra.mxu0 0
      %1619 = vmatprep.subr.bf16.mxu0 0
      %1620 = vmatpush2.bf16.xpose.msra.mxu0 0
      %1621 = vmatprep.subr.bf16.mxu0 0
      %1622 = vmatpush2.bf16.xpose.msra.mxu0 0
      %1623 = vmatprep.mubr.bf16.mxu0 0
      %1624 = vmatmul.mubr.bf16.gmra.mxu0 %v1586
      %v1625 = vpop.f32.mrf.mxu0
      %v1626 = vadd.f32 0.0, %v1625
      %v1627 = vpop.f32.mrf.mxu0
      %v1628 = vpop.f32.mrf.mxu0
      %v1629 = vpop.f32.mrf.mxu0
      %1630 = vdwg.mxu0
      %1632 = vrot.lane.b32.xlu0 %v1626, 121
      %v1633 = vpop.permute.xlu0 %1632
      %1635 = vrot.lane.b32.xlu0 %v1626, 1
      %v1636 = vpop.permute.xlu0 %1635
      %vm1638 = vcmask 7168
      %v1639 = vsel %vm1638, %v1633, %v1636
      %v1640 = vsel %vm1561, %v1639, %v1626
      %1642 = vrot.lane.b32.xlu0 %v1640, 122
      %v1643 = vpop.permute.xlu0 %1642
      %1645 = vrot.lane.b32.xlu0 %v1640, 2
      %v1646 = vpop.permute.xlu0 %1645
      %vm1648 = vcmask 15360
      %v1649 = vsel %vm1648, %v1643, %v1646
      %v1650 = vsel %vm1564, %v1649, %v1640
      %1652 = vrot.lane.b32.xlu0 %v1650, 124
      %v1653 = vpop.permute.xlu0 %1652
      %1655 = vrot.lane.b32.xlu0 %v1650, 4
      %v1656 = vpop.permute.xlu0 %1655
      %vm1658 = vcmask 31744
      %v1659 = vsel %vm1658, %v1653, %v1656
      %v1660 = vsel %vm1567, %v1659, %v1650
      %v1662 = vrot.slane %v1660, 1
      %vm1664 = vcmask 1046528
      %v1665 = vsel %vm1664, %v1662, %v1662
      %vm1666 = vcmp.le.s32.totalorder %v1556, %v1554
      %vm1667 = vcmp.eq.s32.totalorder %v1556, %v1558
      %v1668 = vsel %vm1667, 0.0, %v1665
      %v1669 = vsel %vm1666, %v1660, %v1668
      %v1671 = vsel %vm1584, %v1575, 0
      %v1674 = vsel %vm1584, %v1576, 0
      %1676 = vmatprep.subr.bf16.mxu0 0
      %1677 = vmatpush1.bf16.xpose.msra.mxu0 0
      %1678 = vmatprep.subr.bf16.mxu0 0
      %1679 = vmatpush1.bf16.xpose.msra.mxu0 0
      %1680 = vmatprep.subr.bf16.mxu0 0
      %1681 = vmatpush1.bf16.xpose.msra.mxu0 0
      %1682 = vmatprep.subr.bf16.mxu0 0
      %1683 = vmatpush1.bf16.xpose.msra.mxu0 0
      %1684 = vmatprep.subr.bf16.mxu0 0
      %1685 = vmatpush1.bf16.xpose.msra.mxu0 0
      %1686 = vmatprep.subr.bf16.mxu0 0
      %1687 = vmatpush1.bf16.xpose.msra.mxu0 0
      %1688 = vmatprep.subr.bf16.mxu0 0
      %1689 = vmatpush1.bf16.xpose.msra.mxu0 0
      %1690 = vmatprep.subr.bf16.mxu0 0
      %1691 = vmatpush1.bf16.xpose.msra.mxu0 %v1674
      %1692 = vmatprep.subr.bf16.mxu0 0
      %1693 = vmatpush2.bf16.xpose.msra.mxu0 0
      %1694 = vmatprep.subr.bf16.mxu0 0
      %1695 = vmatpush2.bf16.xpose.msra.mxu0 0
      %1696 = vmatprep.subr.bf16.mxu0 0
      %1697 = vmatpush2.bf16.xpose.msra.mxu0 0
      %1698 = vmatprep.subr.bf16.mxu0 0
      %1699 = vmatpush2.bf16.xpose.msra.mxu0 0
      %1700 = vmatprep.subr.bf16.mxu0 0
      %1701 = vmatpush2.bf16.xpose.msra.mxu0 0
      %1702 = vmatprep.subr.bf16.mxu0 0
      %1703 = vmatpush2.bf16.xpose.msra.mxu0 0
      %1704 = vmatprep.subr.bf16.mxu0 0
      %1705 = vmatpush2.bf16.xpose.msra.mxu0 0
      %1706 = vmatprep.subr.bf16.mxu0 0
      %1707 = vmatpush2.bf16.xpose.msra.mxu0 0
      %1708 = vmatprep.mubr.bf16.mxu0 0
      %1709 = vmatmul.mubr.bf16.gmra.mxu0 %v1671
      %v1710 = vpop.f32.mrf.mxu0
      %v1711 = vadd.f32 %v1669, %v1710
      %v1712 = vpop.f32.mrf.mxu0
      %v1713 = vpop.f32.mrf.mxu0
      %v1714 = vpop.f32.mrf.mxu0
      %1715 = vdwg.mxu0
      %v1716 = vmul.f32 %v1711, 0.088388346
      %vm1717 = vcmask 64512
      %v1718 = vsel %vm1717, %v1716, -inf
      %1719 = vmax.xlane.f32.xlu0 %v1718
      %v1720 = vpop.xlane.xlu0 %1719
      %v1721 = vsub.f32 %v1716, %v1720
      %v1722 = vmul.f32 %v1721, 1.442695
      %v1723 = vpow.pop %v1722
      %v1724 = vsel %vm1717, %v1723, 0.0
      %1725 = vadd.xlane.f32.xlu0 %v1724
      %v1726 = vpop.xlane.xlu0 %1725
      %v1727 = vrcp.pop %v1726
      %v1728 = vmul.f32 %v1723, %v1727
      %v1729 = vpack.c.bf16 %v1728, %v1728
      %v1730 = vpack.c.bf16 %v1442, %v1442
      %v1732 = vsel %vm1717, %v1729, 0
      %vm1734 = vcmask 1043456
      %v1736 = vsel %vm1734, %v1730, 0
      %1738 = vmatprep.subr.bf16.mxu0 0
      %1739 = vmatpush1.bf16.msra.mxu0 0
      %1740 = vmatprep.subr.bf16.mxu0 0
      %1741 = vmatpush1.bf16.msra.mxu0 0
      %1742 = vmatprep.subr.bf16.mxu0 0
      %1743 = vmatpush1.bf16.msra.mxu0 0
      %1744 = vmatprep.subr.bf16.mxu0 0
      %1745 = vmatpush1.bf16.msra.mxu0 0
      %1746 = vmatprep.subr.bf16.mxu0 0
      %1747 = vmatpush1.bf16.msra.mxu0 0
      %1748 = vmatprep.subr.bf16.mxu0 0
      %1749 = vmatpush1.bf16.msra.mxu0 0
      %1750 = vmatprep.subr.bf16.mxu0 0
      %1751 = vmatpush1.bf16.msra.mxu0 0
      %1752 = vmatprep.subr.bf16.mxu0 0
      %1753 = vmatpush1.bf16.msra.mxu0 %v1736
      %1754 = vmatprep.subr.bf16.mxu0 0
      %1755 = vmatpush2.bf16.msra.mxu0 0
      %1756 = vmatprep.subr.bf16.mxu0 0
      %1757 = vmatpush2.bf16.msra.mxu0 0
      %1758 = vmatprep.subr.bf16.mxu0 0
      %1759 = vmatpush2.bf16.msra.mxu0 0
      %1760 = vmatprep.subr.bf16.mxu0 0
      %1761 = vmatpush2.bf16.msra.mxu0 0
      %1762 = vmatprep.subr.bf16.mxu0 0
      %1763 = vmatpush2.bf16.msra.mxu0 0
      %1764 = vmatprep.subr.bf16.mxu0 0
      %1765 = vmatpush2.bf16.msra.mxu0 0
      %1766 = vmatprep.subr.bf16.mxu0 0
      %1767 = vmatpush2.bf16.msra.mxu0 0
      %1768 = vmatprep.subr.bf16.mxu0 0
      %1769 = vmatpush2.bf16.msra.mxu0 0
      %1770 = vmatprep.mubr.bf16.mxu0 0
      %1771 = vmatmul.mubr.bf16.gmra.mxu0 %v1732
      %v1772 = vpop.f32.mrf.mxu0
      %v1773 = vadd.f32 0.0, %v1772
      %v1774 = vpop.f32.mrf.mxu0
      %v1775 = vpop.f32.mrf.mxu0
      %v1776 = vpop.f32.mrf.mxu0
      %1777 = vdwg.mxu0
      %v1778 = vld [vmem:[%s11 + $0x1] sm:$0x1]
      %v1779 = vld [vmem:[%s11 + $0x5] sm:$0x1]
      %v1780 = vlaneseq
      %v1781 = vshrl.u32 %v1780, 7
      %v1782 = vsub.s32 0, %v1781
      %v1783 = vrot.slane %v1778, %v1782
      %1785 = vrot.lane.b32.xlu0 %v1783, 32
      %v1786 = vpop.permute.xlu0 %1785
      %v1788 = vadd.f32 %v1401, %v1786
      %v1789 = vpack.c.bf16 %v1788, %v1788
      %v1790 = vlaneseq
      %v1791 = vshrl.u32 %v1790, 7
      %v1792 = vsub.s32 0, %v1791
      %v1793 = vrot.slane %v1779, %v1792
      %1795 = vrot.lane.b32.xlu0 %v1793, 32
      %v1796 = vpop.permute.xlu0 %1795
      %v1798 = vadd.f32 %v1401, %v1796
      %v1799 = vpack.c.bf16 %v1798, %v1798
      %1801 = vrot.lane.b32.xlu0 %v1799, 96
      %v1802 = vpop.permute.xlu0 %1801
      %1804 = vrot.lane.b32.xlu0 %v1583, 96
      %v1805 = vpop.permute.xlu0 %1804
      %v1807 = vsel %vm1584, %v1802, 0
      %v1810 = vsel %vm1584, %v1805, 0
      %1812 = vmatprep.subr.bf16.mxu0 0
      %1813 = vmatpush1.bf16.xpose.msra.mxu0 0
      %1814 = vmatprep.subr.bf16.mxu0 0
      %1815 = vmatpush1.bf16.xpose.msra.mxu0 0
      %1816 = vmatprep.subr.bf16.mxu0 0
      %1817 = vmatpush1.bf16.xpose.msra.mxu0 0
      %1818 = vmatprep.subr.bf16.mxu0 0
      %1819 = vmatpush1.bf16.xpose.msra.mxu0 0
      %1820 = vmatprep.subr.bf16.mxu0 0
      %1821 = vmatpush1.bf16.xpose.msra.mxu0 0
      %1822 = vmatprep.subr.bf16.mxu0 0
      %1823 = vmatpush1.bf16.xpose.msra.mxu0 0
      %1824 = vmatprep.subr.bf16.mxu0 0
      %1825 = vmatpush1.bf16.xpose.msra.mxu0 0
      %1826 = vmatprep.subr.bf16.mxu0 0
      %1827 = vmatpush1.bf16.xpose.msra.mxu0 %v1810
      %1828 = vmatprep.subr.bf16.mxu0 0
      %1829 = vmatpush2.bf16.xpose.msra.mxu0 0
      %1830 = vmatprep.subr.bf16.mxu0 0
      %1831 = vmatpush2.bf16.xpose.msra.mxu0 0
      %1832 = vmatprep.subr.bf16.mxu0 0
      %1833 = vmatpush2.bf16.xpose.msra.mxu0 0
      %1834 = vmatprep.subr.bf16.mxu0 0
      %1835 = vmatpush2.bf16.xpose.msra.mxu0 0
      %1836 = vmatprep.subr.bf16.mxu0 0
      %1837 = vmatpush2.bf16.xpose.msra.mxu0 0
      %1838 = vmatprep.subr.bf16.mxu0 0
      %1839 = vmatpush2.bf16.xpose.msra.mxu0 0
      %1840 = vmatprep.subr.bf16.mxu0 0
      %1841 = vmatpush2.bf16.xpose.msra.mxu0 0
      %1842 = vmatprep.subr.bf16.mxu0 0
      %1843 = vmatpush2.bf16.xpose.msra.mxu0 0
      %1844 = vmatprep.mubr.bf16.mxu0 0
      %1845 = vmatmul.mubr.bf16.gmra.mxu0 %v1807
      %v1846 = vpop.f32.mrf.mxu0
      %v1847 = vadd.f32 0.0, %v1846
      %v1848 = vpop.f32.mrf.mxu0
      %v1849 = vpop.f32.mrf.mxu0
      %v1850 = vpop.f32.mrf.mxu0
      %1851 = vdwg.mxu0
      %1853 = vrot.lane.b32.xlu0 %v1847, 121
      %v1854 = vpop.permute.xlu0 %1853
      %1856 = vrot.lane.b32.xlu0 %v1847, 1
      %v1857 = vpop.permute.xlu0 %1856
      %v1859 = vsel %vm1638, %v1854, %v1857
      %v1860 = vsel %vm1561, %v1859, %v1847
      %1862 = vrot.lane.b32.xlu0 %v1860, 122
      %v1863 = vpop.permute.xlu0 %1862
      %1865 = vrot.lane.b32.xlu0 %v1860, 2
      %v1866 = vpop.permute.xlu0 %1865
      %v1868 = vsel %vm1648, %v1863, %v1866
      %v1869 = vsel %vm1564, %v1868, %v1860
      %1871 = vrot.lane.b32.xlu0 %v1869, 124
      %v1872 = vpop.permute.xlu0 %1871
      %1874 = vrot.lane.b32.xlu0 %v1869, 4
      %v1875 = vpop.permute.xlu0 %1874
      %v1877 = vsel %vm1658, %v1872, %v1875
      %v1878 = vsel %vm1567, %v1877, %v1869
      %v1880 = vrot.slane %v1878, 1
      %v1882 = vsel %vm1664, %v1880, %v1880
      %v1883 = vsel %vm1667, 0.0, %v1882
      %v1884 = vsel %vm1666, %v1878, %v1883
      %1886 = vrot.lane.b32.xlu0 %v1789, 96
      %v1887 = vpop.permute.xlu0 %1886
      %1889 = vrot.lane.b32.xlu0 %v1576, 96
      %v1890 = vpop.permute.xlu0 %1889
      %v1892 = vsel %vm1584, %v1887, 0
      %v1895 = vsel %vm1584, %v1890, 0
      %1897 = vmatprep.subr.bf16.mxu0 0
      %1898 = vmatpush1.bf16.xpose.msra.mxu0 0
      %1899 = vmatprep.subr.bf16.mxu0 0
      %1900 = vmatpush1.bf16.xpose.msra.mxu0 0
      %1901 = vmatprep.subr.bf16.mxu0 0
      %1902 = vmatpush1.bf16.xpose.msra.mxu0 0
      %1903 = vmatprep.subr.bf16.mxu0 0
      %1904 = vmatpush1.bf16.xpose.msra.mxu0 0
      %1905 = vmatprep.subr.bf16.mxu0 0
      %1906 = vmatpush1.bf16.xpose.msra.mxu0 0
      %1907 = vmatprep.subr.bf16.mxu0 0
      %1908 = vmatpush1.bf16.xpose.msra.mxu0 0
      %1909 = vmatprep.subr.bf16.mxu0 0
      %1910 = vmatpush1.bf16.xpose.msra.mxu0 0
      %1911 = vmatprep.subr.bf16.mxu0 0
      %1912 = vmatpush1.bf16.xpose.msra.mxu0 %v1895
      %1913 = vmatprep.subr.bf16.mxu0 0
      %1914 = vmatpush2.bf16.xpose.msra.mxu0 0
      %1915 = vmatprep.subr.bf16.mxu0 0
      %1916 = vmatpush2.bf16.xpose.msra.mxu0 0
      %1917 = vmatprep.subr.bf16.mxu0 0
      %1918 = vmatpush2.bf16.xpose.msra.mxu0 0
      %1919 = vmatprep.subr.bf16.mxu0 0
      %1920 = vmatpush2.bf16.xpose.msra.mxu0 0
      %1921 = vmatprep.subr.bf16.mxu0 0
      %1922 = vmatpush2.bf16.xpose.msra.mxu0 0
      %1923 = vmatprep.subr.bf16.mxu0 0
      %1924 = vmatpush2.bf16.xpose.msra.mxu0 0
      %1925 = vmatprep.subr.bf16.mxu0 0
      %1926 = vmatpush2.bf16.xpose.msra.mxu0 0
      %1927 = vmatprep.subr.bf16.mxu0 0
      %1928 = vmatpush2.bf16.xpose.msra.mxu0 0
      %1929 = vmatprep.mubr.bf16.mxu0 0
      %1930 = vmatmul.mubr.bf16.gmra.mxu0 %v1892
      %v1931 = vpop.f32.mrf.mxu0
      %v1932 = vadd.f32 %v1884, %v1931
      %v1933 = vpop.f32.mrf.mxu0
      %v1934 = vpop.f32.mrf.mxu0
      %v1935 = vpop.f32.mrf.mxu0
      %1936 = vdwg.mxu0
      %v1937 = vmul.f32 %v1932, 0.088388346
      %v1938 = vsel %vm1717, %v1937, -inf
      %1939 = vmax.xlane.f32.xlu0 %v1938
      %v1940 = vpop.xlane.xlu0 %1939
      %v1941 = vsub.f32 %v1937, %v1940
      %v1942 = vmul.f32 %v1941, 1.442695
      %v1943 = vpow.pop %v1942
      %v1944 = vsel %vm1717, %v1943, 0.0
      %1945 = vadd.xlane.f32.xlu0 %v1944
      %v1946 = vpop.xlane.xlu0 %1945
      %v1947 = vrcp.pop %v1946
      %v1948 = vmul.f32 %v1943, %v1947
      %v1949 = vpack.c.bf16 %v1948, %v1948
      %1951 = vrot.lane.b32.xlu0 %v1730, 96
      %v1952 = vpop.permute.xlu0 %1951
      %v1954 = vsel %vm1717, %v1949, 0
      %v1957 = vsel %vm1734, %v1952, 0
      %1959 = vmatprep.subr.bf16.mxu0 0
      %1960 = vmatpush1.bf16.msra.mxu0 0
      %1961 = vmatprep.subr.bf16.mxu0 0
      %1962 = vmatpush1.bf16.msra.mxu0 0
      %1963 = vmatprep.subr.bf16.mxu0 0
      %1964 = vmatpush1.bf16.msra.mxu0 0
      %1965 = vmatprep.subr.bf16.mxu0 0
      %1966 = vmatpush1.bf16.msra.mxu0 0
      %1967 = vmatprep.subr.bf16.mxu0 0
      %1968 = vmatpush1.bf16.msra.mxu0 0
      %1969 = vmatprep.subr.bf16.mxu0 0
      %1970 = vmatpush1.bf16.msra.mxu0 0
      %1971 = vmatprep.subr.bf16.mxu0 0
      %1972 = vmatpush1.bf16.msra.mxu0 0
      %1973 = vmatprep.subr.bf16.mxu0 0
      %1974 = vmatpush1.bf16.msra.mxu0 %v1957
      %1975 = vmatprep.subr.bf16.mxu0 0
      %1976 = vmatpush2.bf16.msra.mxu0 0
      %1977 = vmatprep.subr.bf16.mxu0 0
      %1978 = vmatpush2.bf16.msra.mxu0 0
      %1979 = vmatprep.subr.bf16.mxu0 0
      %1980 = vmatpush2.bf16.msra.mxu0 0
      %1981 = vmatprep.subr.bf16.mxu0 0
      %1982 = vmatpush2.bf16.msra.mxu0 0
      %1983 = vmatprep.subr.bf16.mxu0 0
      %1984 = vmatpush2.bf16.msra.mxu0 0
      %1985 = vmatprep.subr.bf16.mxu0 0
      %1986 = vmatpush2.bf16.msra.mxu0 0
      %1987 = vmatprep.subr.bf16.mxu0 0
      %1988 = vmatpush2.bf16.msra.mxu0 0
      %1989 = vmatprep.subr.bf16.mxu0 0
      %1990 = vmatpush2.bf16.msra.mxu0 0
      %1991 = vmatprep.mubr.bf16.mxu0 0
      %1992 = vmatmul.mubr.bf16.gmra.mxu0 %v1954
      %v1993 = vpop.f32.mrf.mxu0
      %v1994 = vadd.f32 0.0, %v1993
      %v1995 = vpop.f32.mrf.mxu0
      %v1996 = vpop.f32.mrf.mxu0
      %v1997 = vpop.f32.mrf.mxu0
      %1998 = vdwg.mxu0
      %v1999 = vld [vmem:[%s11 + $0x2] sm:$0x1]
      %v2000 = vld [vmem:[%s11 + $0x6] sm:$0x1]
      %v2001 = vlaneseq
      %v2002 = vshrl.u32 %v2001, 7
      %v2003 = vsub.s32 0, %v2002
      %v2004 = vrot.slane %v1999, %v2003
      %2006 = vrot.lane.b32.xlu0 %v2004, 64
      %v2007 = vpop.permute.xlu0 %2006
      %v2009 = vadd.f32 %v1401, %v2007
      %v2010 = vpack.c.bf16 %v2009, %v2009
      %v2011 = vlaneseq
      %v2012 = vshrl.u32 %v2011, 7
      %v2013 = vsub.s32 0, %v2012
      %v2014 = vrot.slane %v2000, %v2013
      %2016 = vrot.lane.b32.xlu0 %v2014, 64
      %v2017 = vpop.permute.xlu0 %2016
      %v2019 = vadd.f32 %v1401, %v2017
      %v2020 = vpack.c.bf16 %v2019, %v2019
      %2022 = vrot.lane.b32.xlu0 %v2020, 64
      %v2023 = vpop.permute.xlu0 %2022
      %2024 = vrot.lane.b32.xlu0 %v1583, 64
      %v2025 = vpop.permute.xlu0 %2024
      %v2027 = vsel %vm1584, %v2023, 0
      %v2030 = vsel %vm1584, %v2025, 0
      %2032 = vmatprep.subr.bf16.mxu0 0
      %2033 = vmatpush1.bf16.xpose.msra.mxu0 0
      %2034 = vmatprep.subr.bf16.mxu0 0
      %2035 = vmatpush1.bf16.xpose.msra.mxu0 0
      %2036 = vmatprep.subr.bf16.mxu0 0
      %2037 = vmatpush1.bf16.xpose.msra.mxu0 0
      %2038 = vmatprep.subr.bf16.mxu0 0
      %2039 = vmatpush1.bf16.xpose.msra.mxu0 0
      %2040 = vmatprep.subr.bf16.mxu0 0
      %2041 = vmatpush1.bf16.xpose.msra.mxu0 0
      %2042 = vmatprep.subr.bf16.mxu0 0
      %2043 = vmatpush1.bf16.xpose.msra.mxu0 0
      %2044 = vmatprep.subr.bf16.mxu0 0
      %2045 = vmatpush1.bf16.xpose.msra.mxu0 0
      %2046 = vmatprep.subr.bf16.mxu0 0
      %2047 = vmatpush1.bf16.xpose.msra.mxu0 %v2030
      %2048 = vmatprep.subr.bf16.mxu0 0
      %2049 = vmatpush2.bf16.xpose.msra.mxu0 0
      %2050 = vmatprep.subr.bf16.mxu0 0
      %2051 = vmatpush2.bf16.xpose.msra.mxu0 0
      %2052 = vmatprep.subr.bf16.mxu0 0
      %2053 = vmatpush2.bf16.xpose.msra.mxu0 0
      %2054 = vmatprep.subr.bf16.mxu0 0
      %2055 = vmatpush2.bf16.xpose.msra.mxu0 0
      %2056 = vmatprep.subr.bf16.mxu0 0
      %2057 = vmatpush2.bf16.xpose.msra.mxu0 0
      %2058 = vmatprep.subr.bf16.mxu0 0
      %2059 = vmatpush2.bf16.xpose.msra.mxu0 0
      %2060 = vmatprep.subr.bf16.mxu0 0
      %2061 = vmatpush2.bf16.xpose.msra.mxu0 0
      %2062 = vmatprep.subr.bf16.mxu0 0
      %2063 = vmatpush2.bf16.xpose.msra.mxu0 0
      %2064 = vmatprep.mubr.bf16.mxu0 0
      %2065 = vmatmul.mubr.bf16.gmra.mxu0 %v2027
      %v2066 = vpop.f32.mrf.mxu0
      %v2067 = vadd.f32 0.0, %v2066
      %v2068 = vpop.f32.mrf.mxu0
      %v2069 = vpop.f32.mrf.mxu0
      %v2070 = vpop.f32.mrf.mxu0
      %2071 = vdwg.mxu0
      %2073 = vrot.lane.b32.xlu0 %v2067, 121
      %v2074 = vpop.permute.xlu0 %2073
      %2076 = vrot.lane.b32.xlu0 %v2067, 1
      %v2077 = vpop.permute.xlu0 %2076
      %v2079 = vsel %vm1638, %v2074, %v2077
      %v2080 = vsel %vm1561, %v2079, %v2067
      %2082 = vrot.lane.b32.xlu0 %v2080, 122
      %v2083 = vpop.permute.xlu0 %2082
      %2085 = vrot.lane.b32.xlu0 %v2080, 2
      %v2086 = vpop.permute.xlu0 %2085
      %v2088 = vsel %vm1648, %v2083, %v2086
      %v2089 = vsel %vm1564, %v2088, %v2080
      %2091 = vrot.lane.b32.xlu0 %v2089, 124
      %v2092 = vpop.permute.xlu0 %2091
      %2094 = vrot.lane.b32.xlu0 %v2089, 4
      %v2095 = vpop.permute.xlu0 %2094
      %v2097 = vsel %vm1658, %v2092, %v2095
      %v2098 = vsel %vm1567, %v2097, %v2089
      %v2100 = vrot.slane %v2098, 1
      %v2102 = vsel %vm1664, %v2100, %v2100
      %v2103 = vsel %vm1667, 0.0, %v2102
      %v2104 = vsel %vm1666, %v2098, %v2103
      %2106 = vrot.lane.b32.xlu0 %v2010, 64
      %v2107 = vpop.permute.xlu0 %2106
      %2108 = vrot.lane.b32.xlu0 %v1576, 64
      %v2109 = vpop.permute.xlu0 %2108
      %v2111 = vsel %vm1584, %v2107, 0
      %v2114 = vsel %vm1584, %v2109, 0
      %2116 = vmatprep.subr.bf16.mxu0 0
      %2117 = vmatpush1.bf16.xpose.msra.mxu0 0
      %2118 = vmatprep.subr.bf16.mxu0 0
      %2119 = vmatpush1.bf16.xpose.msra.mxu0 0
      %2120 = vmatprep.subr.bf16.mxu0 0
      %2121 = vmatpush1.bf16.xpose.msra.mxu0 0
      %2122 = vmatprep.subr.bf16.mxu0 0
      %2123 = vmatpush1.bf16.xpose.msra.mxu0 0
      %2124 = vmatprep.subr.bf16.mxu0 0
      %2125 = vmatpush1.bf16.xpose.msra.mxu0 0
      %2126 = vmatprep.subr.bf16.mxu0 0
      %2127 = vmatpush1.bf16.xpose.msra.mxu0 0
      %2128 = vmatprep.subr.bf16.mxu0 0
      %2129 = vmatpush1.bf16.xpose.msra.mxu0 0
      %2130 = vmatprep.subr.bf16.mxu0 0
      %2131 = vmatpush1.bf16.xpose.msra.mxu0 %v2114
      %2132 = vmatprep.subr.bf16.mxu0 0
      %2133 = vmatpush2.bf16.xpose.msra.mxu0 0
      %2134 = vmatprep.subr.bf16.mxu0 0
      %2135 = vmatpush2.bf16.xpose.msra.mxu0 0
      %2136 = vmatprep.subr.bf16.mxu0 0
      %2137 = vmatpush2.bf16.xpose.msra.mxu0 0
      %2138 = vmatprep.subr.bf16.mxu0 0
      %2139 = vmatpush2.bf16.xpose.msra.mxu0 0
      %2140 = vmatprep.subr.bf16.mxu0 0
      %2141 = vmatpush2.bf16.xpose.msra.mxu0 0
      %2142 = vmatprep.subr.bf16.mxu0 0
      %2143 = vmatpush2.bf16.xpose.msra.mxu0 0
      %2144 = vmatprep.subr.bf16.mxu0 0
      %2145 = vmatpush2.bf16.xpose.msra.mxu0 0
      %2146 = vmatprep.subr.bf16.mxu0 0
      %2147 = vmatpush2.bf16.xpose.msra.mxu0 0
      %2148 = vmatprep.mubr.bf16.mxu0 0
      %2149 = vmatmul.mubr.bf16.gmra.mxu0 %v2111
      %v2150 = vpop.f32.mrf.mxu0
      %v2151 = vadd.f32 %v2104, %v2150
      %v2152 = vpop.f32.mrf.mxu0
      %v2153 = vpop.f32.mrf.mxu0
      %v2154 = vpop.f32.mrf.mxu0
      %2155 = vdwg.mxu0
      %v2156 = vmul.f32 %v2151, 0.088388346
      %v2157 = vsel %vm1717, %v2156, -inf
      %2158 = vmax.xlane.f32.xlu0 %v2157
      %v2159 = vpop.xlane.xlu0 %2158
      %v2160 = vsub.f32 %v2156, %v2159
      %v2161 = vmul.f32 %v2160, 1.442695
      %v2162 = vpow.pop %v2161
      %v2163 = vsel %vm1717, %v2162, 0.0
      %2164 = vadd.xlane.f32.xlu0 %v2163
      %v2165 = vpop.xlane.xlu0 %2164
      %v2166 = vrcp.pop %v2165
      %v2167 = vmul.f32 %v2162, %v2166
      %v2168 = vpack.c.bf16 %v2167, %v2167
      %2169 = vrot.lane.b32.xlu0 %v1730, 64
      %v2170 = vpop.permute.xlu0 %2169
      %v2172 = vsel %vm1717, %v2168, 0
      %v2175 = vsel %vm1734, %v2170, 0
      %2177 = vmatprep.subr.bf16.mxu0 0
      %2178 = vmatpush1.bf16.msra.mxu0 0
      %2179 = vmatprep.subr.bf16.mxu0 0
      %2180 = vmatpush1.bf16.msra.mxu0 0
      %2181 = vmatprep.subr.bf16.mxu0 0
      %2182 = vmatpush1.bf16.msra.mxu0 0
      %2183 = vmatprep.subr.bf16.mxu0 0
      %2184 = vmatpush1.bf16.msra.mxu0 0
      %2185 = vmatprep.subr.bf16.mxu0 0
      %2186 = vmatpush1.bf16.msra.mxu0 0
      %2187 = vmatprep.subr.bf16.mxu0 0
      %2188 = vmatpush1.bf16.msra.mxu0 0
      %2189 = vmatprep.subr.bf16.mxu0 0
      %2190 = vmatpush1.bf16.msra.mxu0 0
      %2191 = vmatprep.subr.bf16.mxu0 0
      %2192 = vmatpush1.bf16.msra.mxu0 %v2175
      %2193 = vmatprep.subr.bf16.mxu0 0
      %2194 = vmatpush2.bf16.msra.mxu0 0
      %2195 = vmatprep.subr.bf16.mxu0 0
      %2196 = vmatpush2.bf16.msra.mxu0 0
      %2197 = vmatprep.subr.bf16.mxu0 0
      %2198 = vmatpush2.bf16.msra.mxu0 0
      %2199 = vmatprep.subr.bf16.mxu0 0
      %2200 = vmatpush2.bf16.msra.mxu0 0
      %2201 = vmatprep.subr.bf16.mxu0 0
      %2202 = vmatpush2.bf16.msra.mxu0 0
      %2203 = vmatprep.subr.bf16.mxu0 0
      %2204 = vmatpush2.bf16.msra.mxu0 0
      %2205 = vmatprep.subr.bf16.mxu0 0
      %2206 = vmatpush2.bf16.msra.mxu0 0
      %2207 = vmatprep.subr.bf16.mxu0 0
      %2208 = vmatpush2.bf16.msra.mxu0 0
      %2209 = vmatprep.mubr.bf16.mxu0 0
      %2210 = vmatmul.mubr.bf16.gmra.mxu0 %v2172
      %v2211 = vpop.f32.mrf.mxu0
      %v2212 = vadd.f32 0.0, %v2211
      %v2213 = vpop.f32.mrf.mxu0
      %v2214 = vpop.f32.mrf.mxu0
      %v2215 = vpop.f32.mrf.mxu0
      %2216 = vdwg.mxu0
      %v2217 = vld [vmem:[%s11 + $0x3] sm:$0x1]
      %v2218 = vld [vmem:[%s11 + $0x7] sm:$0x1]
      %v2219 = vlaneseq
      %v2220 = vshrl.u32 %v2219, 7
      %v2221 = vsub.s32 0, %v2220
      %v2222 = vrot.slane %v2217, %v2221
      %2224 = vrot.lane.b32.xlu0 %v2222, 96
      %v2225 = vpop.permute.xlu0 %2224
      %v2227 = vadd.f32 %v1401, %v2225
      %v2228 = vpack.c.bf16 %v2227, %v2227
      %v2229 = vlaneseq
      %v2230 = vshrl.u32 %v2229, 7
      %v2231 = vsub.s32 0, %v2230
      %v2232 = vrot.slane %v2218, %v2231
      %2234 = vrot.lane.b32.xlu0 %v2232, 96
      %v2235 = vpop.permute.xlu0 %2234
      %v2237 = vadd.f32 %v1401, %v2235
      %v2238 = vpack.c.bf16 %v2237, %v2237
      %2240 = vrot.lane.b32.xlu0 %v2238, 32
      %v2241 = vpop.permute.xlu0 %2240
      %2242 = vrot.lane.b32.xlu0 %v1583, 32
      %v2243 = vpop.permute.xlu0 %2242
      %v2245 = vsel %vm1584, %v2241, 0
      %v2248 = vsel %vm1584, %v2243, 0
      %2250 = vmatprep.subr.bf16.mxu0 0
      %2251 = vmatpush1.bf16.xpose.msra.mxu0 0
      %2252 = vmatprep.subr.bf16.mxu0 0
      %2253 = vmatpush1.bf16.xpose.msra.mxu0 0
      %2254 = vmatprep.subr.bf16.mxu0 0
      %2255 = vmatpush1.bf16.xpose.msra.mxu0 0
      %2256 = vmatprep.subr.bf16.mxu0 0
      %2257 = vmatpush1.bf16.xpose.msra.mxu0 0
      %2258 = vmatprep.subr.bf16.mxu0 0
      %2259 = vmatpush1.bf16.xpose.msra.mxu0 0
      %2260 = vmatprep.subr.bf16.mxu0 0
      %2261 = vmatpush1.bf16.xpose.msra.mxu0 0
      %2262 = vmatprep.subr.bf16.mxu0 0
      %2263 = vmatpush1.bf16.xpose.msra.mxu0 0
      %2264 = vmatprep.subr.bf16.mxu0 0
      %2265 = vmatpush1.bf16.xpose.msra.mxu0 %v2248
      %2266 = vmatprep.subr.bf16.mxu0 0
      %2267 = vmatpush2.bf16.xpose.msra.mxu0 0
      %2268 = vmatprep.subr.bf16.mxu0 0
      %2269 = vmatpush2.bf16.xpose.msra.mxu0 0
      %2270 = vmatprep.subr.bf16.mxu0 0
      %2271 = vmatpush2.bf16.xpose.msra.mxu0 0
      %2272 = vmatprep.subr.bf16.mxu0 0
      %2273 = vmatpush2.bf16.xpose.msra.mxu0 0
      %2274 = vmatprep.subr.bf16.mxu0 0
      %2275 = vmatpush2.bf16.xpose.msra.mxu0 0
      %2276 = vmatprep.subr.bf16.mxu0 0
      %2277 = vmatpush2.bf16.xpose.msra.mxu0 0
      %2278 = vmatprep.subr.bf16.mxu0 0
      %2279 = vmatpush2.bf16.xpose.msra.mxu0 0
      %2280 = vmatprep.subr.bf16.mxu0 0
      %2281 = vmatpush2.bf16.xpose.msra.mxu0 0
      %2282 = vmatprep.mubr.bf16.mxu0 0
      %2283 = vmatmul.mubr.bf16.gmra.mxu0 %v2245
      %v2284 = vpop.f32.mrf.mxu0
      %v2285 = vadd.f32 0.0, %v2284
      %v2286 = vpop.f32.mrf.mxu0
      %v2287 = vpop.f32.mrf.mxu0
      %v2288 = vpop.f32.mrf.mxu0
      %2289 = vdwg.mxu0
      %2291 = vrot.lane.b32.xlu0 %v2285, 121
      %v2292 = vpop.permute.xlu0 %2291
      %2294 = vrot.lane.b32.xlu0 %v2285, 1
      %v2295 = vpop.permute.xlu0 %2294
      %v2297 = vsel %vm1638, %v2292, %v2295
      %v2298 = vsel %vm1561, %v2297, %v2285
      %2300 = vrot.lane.b32.xlu0 %v2298, 122
      %v2301 = vpop.permute.xlu0 %2300
      %2303 = vrot.lane.b32.xlu0 %v2298, 2
      %v2304 = vpop.permute.xlu0 %2303
      %v2306 = vsel %vm1648, %v2301, %v2304
      %v2307 = vsel %vm1564, %v2306, %v2298
      %2309 = vrot.lane.b32.xlu0 %v2307, 124
      %v2310 = vpop.permute.xlu0 %2309
      %2312 = vrot.lane.b32.xlu0 %v2307, 4
      %v2313 = vpop.permute.xlu0 %2312
      %v2315 = vsel %vm1658, %v2310, %v2313
      %v2316 = vsel %vm1567, %v2315, %v2307
      %v2318 = vrot.slane %v2316, 1
      %v2320 = vsel %vm1664, %v2318, %v2318
      %v2321 = vsel %vm1667, 0.0, %v2320
      %v2322 = vsel %vm1666, %v2316, %v2321
      %2324 = vrot.lane.b32.xlu0 %v2228, 32
      %v2325 = vpop.permute.xlu0 %2324
      %2326 = vrot.lane.b32.xlu0 %v1576, 32
      %v2327 = vpop.permute.xlu0 %2326
      %v2329 = vsel %vm1584, %v2325, 0
      %v2332 = vsel %vm1584, %v2327, 0
      %2334 = vmatprep.subr.bf16.mxu0 0
      %2335 = vmatpush1.bf16.xpose.msra.mxu0 0
      %2336 = vmatprep.subr.bf16.mxu0 0
      %2337 = vmatpush1.bf16.xpose.msra.mxu0 0
      %2338 = vmatprep.subr.bf16.mxu0 0
      %2339 = vmatpush1.bf16.xpose.msra.mxu0 0
      %2340 = vmatprep.subr.bf16.mxu0 0
      %2341 = vmatpush1.bf16.xpose.msra.mxu0 0
      %2342 = vmatprep.subr.bf16.mxu0 0
      %2343 = vmatpush1.bf16.xpose.msra.mxu0 0
      %2344 = vmatprep.subr.bf16.mxu0 0
      %2345 = vmatpush1.bf16.xpose.msra.mxu0 0
      %2346 = vmatprep.subr.bf16.mxu0 0
      %2347 = vmatpush1.bf16.xpose.msra.mxu0 0
      %2348 = vmatprep.subr.bf16.mxu0 0
      %2349 = vmatpush1.bf16.xpose.msra.mxu0 %v2332
      %2350 = vmatprep.subr.bf16.mxu0 0
      %2351 = vmatpush2.bf16.xpose.msra.mxu0 0
      %2352 = vmatprep.subr.bf16.mxu0 0
      %2353 = vmatpush2.bf16.xpose.msra.mxu0 0
      %2354 = vmatprep.subr.bf16.mxu0 0
      %2355 = vmatpush2.bf16.xpose.msra.mxu0 0
      %2356 = vmatprep.subr.bf16.mxu0 0
      %2357 = vmatpush2.bf16.xpose.msra.mxu0 0
      %2358 = vmatprep.subr.bf16.mxu0 0
      %2359 = vmatpush2.bf16.xpose.msra.mxu0 0
      %2360 = vmatprep.subr.bf16.mxu0 0
      %2361 = vmatpush2.bf16.xpose.msra.mxu0 0
      %2362 = vmatprep.subr.bf16.mxu0 0
      %2363 = vmatpush2.bf16.xpose.msra.mxu0 0
      %2364 = vmatprep.subr.bf16.mxu0 0
      %2365 = vmatpush2.bf16.xpose.msra.mxu0 0
      %2366 = vmatprep.mubr.bf16.mxu0 0
      %2367 = vmatmul.mubr.bf16.gmra.mxu0 %v2329
      %v2368 = vpop.f32.mrf.mxu0
      %v2369 = vadd.f32 %v2322, %v2368
      %v2370 = vpop.f32.mrf.mxu0
      %v2371 = vpop.f32.mrf.mxu0
      %v2372 = vpop.f32.mrf.mxu0
      %2373 = vdwg.mxu0
      %v2374 = vmul.f32 %v2369, 0.088388346
      %v2375 = vsel %vm1717, %v2374, -inf
      %2376 = vmax.xlane.f32.xlu0 %v2375
      %v2377 = vpop.xlane.xlu0 %2376
      %v2378 = vsub.f32 %v2374, %v2377
      %v2379 = vmul.f32 %v2378, 1.442695
      %v2380 = vpow.pop %v2379
      %v2381 = vsel %vm1717, %v2380, 0.0
      %2382 = vadd.xlane.f32.xlu0 %v2381
      %v2383 = vpop.xlane.xlu0 %2382
      %v2384 = vrcp.pop %v2383
      %v2385 = vmul.f32 %v2380, %v2384
      %v2386 = vpack.c.bf16 %v2385, %v2385
      %2387 = vrot.lane.b32.xlu0 %v1730, 32
      %v2388 = vpop.permute.xlu0 %2387
      %v2390 = vsel %vm1717, %v2386, 0
      %v2393 = vsel %vm1734, %v2388, 0
      %2395 = vmatprep.subr.bf16.mxu0 0
      %2396 = vmatpush1.bf16.msra.mxu0 0
      %2397 = vmatprep.subr.bf16.mxu0 0
      %2398 = vmatpush1.bf16.msra.mxu0 0
      %2399 = vmatprep.subr.bf16.mxu0 0
      %2400 = vmatpush1.bf16.msra.mxu0 0
      %2401 = vmatprep.subr.bf16.mxu0 0
      %2402 = vmatpush1.bf16.msra.mxu0 0
      %2403 = vmatprep.subr.bf16.mxu0 0
      %2404 = vmatpush1.bf16.msra.mxu0 0
      %2405 = vmatprep.subr.bf16.mxu0 0
      %2406 = vmatpush1.bf16.msra.mxu0 0
      %2407 = vmatprep.subr.bf16.mxu0 0
      %2408 = vmatpush1.bf16.msra.mxu0 0
      %2409 = vmatprep.subr.bf16.mxu0 0
      %2410 = vmatpush1.bf16.msra.mxu0 %v2393
      %2411 = vmatprep.subr.bf16.mxu0 0
      %2412 = vmatpush2.bf16.msra.mxu0 0
      %2413 = vmatprep.subr.bf16.mxu0 0
      %2414 = vmatpush2.bf16.msra.mxu0 0
      %2415 = vmatprep.subr.bf16.mxu0 0
      %2416 = vmatpush2.bf16.msra.mxu0 0
      %2417 = vmatprep.subr.bf16.mxu0 0
      %2418 = vmatpush2.bf16.msra.mxu0 0
      %2419 = vmatprep.subr.bf16.mxu0 0
      %2420 = vmatpush2.bf16.msra.mxu0 0
      %2421 = vmatprep.subr.bf16.mxu0 0
      %2422 = vmatpush2.bf16.msra.mxu0 0
      %2423 = vmatprep.subr.bf16.mxu0 0
      %2424 = vmatpush2.bf16.msra.mxu0 0
      %2425 = vmatprep.subr.bf16.mxu0 0
      %2426 = vmatpush2.bf16.msra.mxu0 0
      %2427 = vmatprep.mubr.bf16.mxu0 0
      %2428 = vmatmul.mubr.bf16.gmra.mxu0 %v2390
      %v2429 = vpop.f32.mrf.mxu0
      %v2430 = vadd.f32 0.0, %v2429
      %v2431 = vpop.f32.mrf.mxu0
      %v2432 = vpop.f32.mrf.mxu0
      %v2433 = vpop.f32.mrf.mxu0
      %2434 = vdwg.mxu0
      %2436 = vrot.lane.b32.xlu0 %v1994, 32
      %v2437 = vpop.permute.xlu0 %2436
      %2440 = vrot.lane.b32.xlu0 %v2212, 64
      %v2441 = vpop.permute.xlu0 %2440
      %2444 = vrot.lane.b32.xlu0 %v2430, 96
      %v2445 = vpop.permute.xlu0 %2444
      %v2447 = vsel %vm1584, %v1773, %v2437
      %vm2448 = vcmask 523264
      %v2449 = vsel %vm2448, %v2447, %v2441
      %vm2450 = vcmask 785408
      %v2451 = vsel %vm2450, %v2449, %v2445
      %v2452 = vpack.c.bf16 %v2451, %v2451
      %v2453 = vld [vmem:[%s12] sm:$0xf]
      %v2454 = vld [vmem:[%s12 + $0x4] sm:$0xf]
      %v2455 = vld [vmem:[%s12 + $0x8] sm:$0xf]
      %v2456 = vld [vmem:[%s12 + $0xc] sm:$0xf]
      %v2457 = vld [vmem:[%s12 + $0x10] sm:$0xf]
      %v2458 = vld [vmem:[%s12 + $0x14] sm:$0xf]
      %v2459 = vld [vmem:[%s12 + $0x18] sm:$0xf]
      %v2460 = vld [vmem:[%s12 + $0x1c] sm:$0xf]
      %v2461 = vld [vmem:[%s12 + $0x20] sm:$0xf]
      %v2462 = vld [vmem:[%s12 + $0x24] sm:$0xf]
      %v2463 = vld [vmem:[%s12 + $0x28] sm:$0xf]
      %v2464 = vld [vmem:[%s12 + $0x2c] sm:$0xf]
      %v2465 = vld [vmem:[%s12 + $0x30] sm:$0xf]
      %v2466 = vld [vmem:[%s12 + $0x34] sm:$0xf]
      %v2467 = vld [vmem:[%s12 + $0x38] sm:$0xf]
      %v2468 = vld [vmem:[%s12 + $0x3c] sm:$0xf]
      %v2469 = vld [vmem:[%s13] sm:$0x1]
      %v2471 = vlaneseq
      %v2472 = vshrl.u32 %v2471, 7
      %v2473 = vsub.s32 0, %v2472
      %v2474 = vrot.slane %v2469, %v2473
      %v2492 = vunpack.c.l.b16 %v2453
      %v2493 = vunpack.c.l.b16 %v2454
      %v2494 = vunpack.c.l.b16 %v2455
      %v2495 = vunpack.c.l.b16 %v2456
      %v2496 = vunpack.c.l.b16 %v2457
      %v2497 = vunpack.c.l.b16 %v2458
      %v2498 = vunpack.c.l.b16 %v2459
      %v2499 = vunpack.c.l.b16 %v2460
      %v2500 = vunpack.c.l.b16 %v2461
      %v2501 = vunpack.c.l.b16 %v2462
      %v2502 = vunpack.c.l.b16 %v2463
      %v2503 = vunpack.c.l.b16 %v2464
      %v2504 = vunpack.c.l.b16 %v2465
      %v2505 = vunpack.c.l.b16 %v2466
      %v2506 = vunpack.c.l.b16 %v2467
      %v2507 = vunpack.c.l.b16 %v2468
      %v2508 = vpack.c.b16 %v2493, %v2492
      %v2509 = vpack.c.b16 %v2495, %v2494
      %v2510 = vpack.c.b16 %v2497, %v2496
      %v2511 = vpack.c.b16 %v2499, %v2498
      %v2512 = vpack.c.b16 %v2501, %v2500
      %v2513 = vpack.c.b16 %v2503, %v2502
      %v2514 = vpack.c.b16 %v2505, %v2504
      %v2515 = vpack.c.b16 %v2507, %v2506
      %2524 = vmatprep.subr.bf16.mxu0 0
      %2525 = vmatpush1.bf16.msra.mxu0 %v2515
      %2526 = vmatprep.subr.bf16.mxu0 0
      %2527 = vmatpush1.bf16.msra.mxu0 %v2514
      %2528 = vmatprep.subr.bf16.mxu0 0
      %2529 = vmatpush1.bf16.msra.mxu0 %v2513
      %2530 = vmatprep.subr.bf16.mxu0 0
      %2531 = vmatpush1.bf16.msra.mxu0 %v2512
      %2532 = vmatprep.subr.bf16.mxu0 0
      %2533 = vmatpush1.bf16.msra.mxu0 %v2511
      %2534 = vmatprep.subr.bf16.mxu0 0
      %2535 = vmatpush1.bf16.msra.mxu0 %v2510
      %2536 = vmatprep.subr.bf16.mxu0 0
      %2537 = vmatpush1.bf16.msra.mxu0 %v2509
      %2538 = vmatprep.subr.bf16.mxu0 0
      %2539 = vmatpush1.bf16.msra.mxu0 %v2508
      %2540 = vmatprep.subr.bf16.mxu0 0
      %2541 = vmatpush2.bf16.msra.mxu0 0
      %2542 = vmatprep.subr.bf16.mxu0 0
      %2543 = vmatpush2.bf16.msra.mxu0 0
      %2544 = vmatprep.subr.bf16.mxu0 0
      %2545 = vmatpush2.bf16.msra.mxu0 0
      %2546 = vmatprep.subr.bf16.mxu0 0
      %2547 = vmatpush2.bf16.msra.mxu0 0
      %2548 = vmatprep.subr.bf16.mxu0 0
      %2549 = vmatpush2.bf16.msra.mxu0 0
      %2550 = vmatprep.subr.bf16.mxu0 0
      %2551 = vmatpush2.bf16.msra.mxu0 0
      %2552 = vmatprep.subr.bf16.mxu0 0
      %2553 = vmatpush2.bf16.msra.mxu0 0
      %2554 = vmatprep.subr.bf16.mxu0 0
      %2555 = vmatpush2.bf16.msra.mxu0 0
      %2556 = vmatprep.mubr.bf16.mxu0 0
      %2557 = vmatmul.mubr.bf16.gmra.mxu0 %v2452
      %v2558 = vpop.f32.mrf.mxu0
      %v2559 = vadd.f32 %v2474, %v2558
      %v2560 = vpop.f32.mrf.mxu0
      %v2561 = vpop.f32.mrf.mxu0
      %v2562 = vpop.f32.mrf.mxu0
      %2563 = vdwg.mxu0
      %v2564 = vadd.f32 %v1164, %v2559
      %v2565 = vld [vmem:[%s2 + $0x2] sm:$0x1]
      %v2566 = vld [vmem:[%s3 + $0x2] sm:$0x1]
      %2567 = vadd.xlane.f32.xlu0 %v2564
      %v2568 = vpop.xlane.xlu0 %2567
      %v2569 = vmul.f32 %v2568, %v802
      %v2570 = vsub.f32 %v2564, %v2569
      %v2571 = vmul.f32 %v2570, %v2570
      %2572 = vadd.xlane.f32.xlu0 %v2571
      %v2573 = vpop.xlane.xlu0 %2572
      %v2574 = vmul.f32 %v2573, %v802
      %v2575 = vadd.f32 %v2574, 1e-05
      %v2576 = vrsqrt.pop %v2575
      %v2577 = vmul.f32 %v2570, %v2576
      %v2578 = vlaneseq
      %v2579 = vshrl.u32 %v2578, 7
      %v2580 = vsub.s32 0, %v2579
      %v2581 = vrot.slane %v2565, %v2580
      %v2582 = vmul.f32 %v2577, %v2581
      %v2583 = vlaneseq
      %v2584 = vshrl.u32 %v2583, 7
      %v2585 = vsub.s32 0, %v2584
      %v2586 = vrot.slane %v2566, %v2585
      %v2587 = vadd.f32 %v2582, %v2586
      %v2588 = vpack.c.bf16 %v2587, %v2587
      %v2589 = vld [vmem:[%s14] sm:$0xff]
      %v2590 = vld [vmem:[%s14 + $0x8] sm:$0xff]
      %v2591 = vld [vmem:[%s14 + $0x10] sm:$0xff]
      %v2592 = vld [vmem:[%s14 + $0x18] sm:$0xff]
      %v2593 = vld [vmem:[%s14 + $0x20] sm:$0xff]
      %v2594 = vld [vmem:[%s14 + $0x28] sm:$0xff]
      %v2595 = vld [vmem:[%s14 + $0x30] sm:$0xff]
      %v2596 = vld [vmem:[%s14 + $0x38] sm:$0xff]
      %v2597 = vld [vmem:[%s14 + $0x40] sm:$0xff]
      %v2598 = vld [vmem:[%s14 + $0x48] sm:$0xff]
      %v2599 = vld [vmem:[%s14 + $0x50] sm:$0xff]
      %v2600 = vld [vmem:[%s14 + $0x58] sm:$0xff]
      %v2601 = vld [vmem:[%s14 + $0x60] sm:$0xff]
      %v2602 = vld [vmem:[%s14 + $0x68] sm:$0xff]
      %v2603 = vld [vmem:[%s14 + $0x70] sm:$0xff]
      %v2604 = vld [vmem:[%s14 + $0x78] sm:$0xff]
      %v2605 = vld [vmem:[%s15] sm:$0x3]
      %v2607 = vlaneseq
      %v2608 = vshrl.u32 %v2607, 7
      %v2609 = vsub.s32 0, %v2608
      %v2610 = vrot.slane %v2605, %v2609
      %v2611 = vlaneseq
      %v2612 = vshrl.u32 %v2611, 7
      %v2613 = vsub.s32 1, %v2612
      %v2614 = vrot.slane %v2605, %v2613
      %v2633 = vunpack.c.l.b16 %v2589
      %v2634 = vunpack.c.h.b16 %v2589
      %v2635 = vunpack.c.l.b16 %v2590
      %v2636 = vunpack.c.h.b16 %v2590
      %v2637 = vunpack.c.l.b16 %v2591
      %v2638 = vunpack.c.h.b16 %v2591
      %v2639 = vunpack.c.l.b16 %v2592
      %v2640 = vunpack.c.h.b16 %v2592
      %v2641 = vunpack.c.l.b16 %v2593
      %v2642 = vunpack.c.h.b16 %v2593
      %v2643 = vunpack.c.l.b16 %v2594
      %v2644 = vunpack.c.h.b16 %v2594
      %v2645 = vunpack.c.l.b16 %v2595
      %v2646 = vunpack.c.h.b16 %v2595
      %v2647 = vunpack.c.l.b16 %v2596
      %v2648 = vunpack.c.h.b16 %v2596
      %v2649 = vunpack.c.l.b16 %v2597
      %v2650 = vunpack.c.h.b16 %v2597
      %v2651 = vunpack.c.l.b16 %v2598
      %v2652 = vunpack.c.h.b16 %v2598
      %v2653 = vunpack.c.l.b16 %v2599
      %v2654 = vunpack.c.h.b16 %v2599
      %v2655 = vunpack.c.l.b16 %v2600
      %v2656 = vunpack.c.h.b16 %v2600
      %v2657 = vunpack.c.l.b16 %v2601
      %v2658 = vunpack.c.h.b16 %v2601
      %v2659 = vunpack.c.l.b16 %v2602
      %v2660 = vunpack.c.h.b16 %v2602
      %v2661 = vunpack.c.l.b16 %v2603
      %v2662 = vunpack.c.h.b16 %v2603
      %v2663 = vunpack.c.l.b16 %v2604
      %v2664 = vunpack.c.h.b16 %v2604
      %v2665 = vpack.c.b16 %v2635, %v2633
      %v2666 = vpack.c.b16 %v2636, %v2634
      %v2667 = vpack.c.b16 %v2639, %v2637
      %v2668 = vpack.c.b16 %v2640, %v2638
      %v2669 = vpack.c.b16 %v2643, %v2641
      %v2670 = vpack.c.b16 %v2644, %v2642
      %v2671 = vpack.c.b16 %v2647, %v2645
      %v2672 = vpack.c.b16 %v2648, %v2646
      %v2673 = vpack.c.b16 %v2651, %v2649
      %v2674 = vpack.c.b16 %v2652, %v2650
      %v2675 = vpack.c.b16 %v2655, %v2653
      %v2676 = vpack.c.b16 %v2656, %v2654
      %v2677 = vpack.c.b16 %v2659, %v2657
      %v2678 = vpack.c.b16 %v2660, %v2658
      %v2679 = vpack.c.b16 %v2663, %v2661
      %v2680 = vpack.c.b16 %v2664, %v2662
      %2697 = vmatprep.subr.bf16.mxu0 %v2680
      %2698 = vmatpush1.bf16.msra.mxu0 %v2679
      %2699 = vmatprep.subr.bf16.mxu0 %v2678
      %2700 = vmatpush1.bf16.msra.mxu0 %v2677
      %2701 = vmatprep.subr.bf16.mxu0 %v2676
      %2702 = vmatpush1.bf16.msra.mxu0 %v2675
      %2703 = vmatprep.subr.bf16.mxu0 %v2674
      %2704 = vmatpush1.bf16.msra.mxu0 %v2673
      %2705 = vmatprep.subr.bf16.mxu0 %v2672
      %2706 = vmatpush1.bf16.msra.mxu0 %v2671
      %2707 = vmatprep.subr.bf16.mxu0 %v2670
      %2708 = vmatpush1.bf16.msra.mxu0 %v2669
      %2709 = vmatprep.subr.bf16.mxu0 %v2668
      %2710 = vmatpush1.bf16.msra.mxu0 %v2667
      %2711 = vmatprep.subr.bf16.mxu0 %v2666
      %2712 = vmatpush1.bf16.msra.mxu0 %v2665
      %2713 = vmatprep.subr.bf16.mxu0 0
      %2714 = vmatpush2.bf16.msra.mxu0 0
      %2715 = vmatprep.subr.bf16.mxu0 0
      %2716 = vmatpush2.bf16.msra.mxu0 0
      %2717 = vmatprep.subr.bf16.mxu0 0
      %2718 = vmatpush2.bf16.msra.mxu0 0
      %2719 = vmatprep.subr.bf16.mxu0 0
      %2720 = vmatpush2.bf16.msra.mxu0 0
      %2721 = vmatprep.subr.bf16.mxu0 0
      %2722 = vmatpush2.bf16.msra.mxu0 0
      %2723 = vmatprep.subr.bf16.mxu0 0
      %2724 = vmatpush2.bf16.msra.mxu0 0
      %2725 = vmatprep.subr.bf16.mxu0 0
      %2726 = vmatpush2.bf16.msra.mxu0 0
      %2727 = vmatprep.subr.bf16.mxu0 0
      %2728 = vmatpush2.bf16.msra.mxu0 0
      %2729 = vmatprep.mubr.bf16.mxu0 0
      %2730 = vmatmul.mubr.bf16.gmra.mxu0 %v2588
      %v2731 = vpop.f32.mrf.mxu0
      %v2732 = vadd.f32 %v2610, %v2731
      %v2733 = vpop.f32.mrf.mxu0
      %v2734 = vadd.f32 %v2614, %v2733
      %v2735 = vpop.f32.mrf.mxu0
      %v2736 = vpop.f32.mrf.mxu0
      %2737 = vdwg.mxu0
      %v2738 = vxor.u32 %v2734, 2147483648
      %v2739 = vmul.f32 %v2738, 1.442695
      %v2740 = vpow.pop %v2739
      %v2741 = vadd.f32 %v2740, 1.0
      %v2742 = vrcp.pop %v2741
      %v2743 = vmul.f32 1.0, %v2742
      %v2744 = vmul.f32 %v2732, %v2743
      %v2746 = vrot.slane %v2744, 1
      %v2748 = vsel %vm1664, 0.0, %v2746
      %v2749 = vld [vmem:[%s16] sm:$0x1]
      %v2750 = vlaneseq
      %v2751 = vshrl.u32 %v2750, 7
      %v2752 = vsub.s32 0, %v2751
      %v2753 = vrot.slane %v2749, %v2752
      %v2754 = vmul.f32 %v2748, %v2753
      %v2755 = vadd.f32 %v2754, 0.0
      %v2756 = vrot.slane %v2744, 2
      %vm2758 = vcmask 1045504
      %v2759 = vsel %vm2758, 0.0, %v2756
      %v2760 = vld [vmem:[%s16 + $0x1] sm:$0x1]
      %v2761 = vlaneseq
      %v2762 = vshrl.u32 %v2761, 7
      %v2763 = vsub.s32 0, %v2762
      %v2764 = vrot.slane %v2760, %v2763
      %v2765 = vmul.f32 %v2759, %v2764
      %v2766 = vadd.f32 %v2755, %v2765
      %v2767 = vrot.slane %v2744, 3
      %vm2769 = vcmask 1044480
      %v2770 = vsel %vm2769, 0.0, %v2767
      %v2771 = vld [vmem:[%s16 + $0x2] sm:$0x1]
      %v2772 = vlaneseq
      %v2773 = vshrl.u32 %v2772, 7
      %v2774 = vsub.s32 0, %v2773
      %v2775 = vrot.slane %v2771, %v2774
      %v2776 = vmul.f32 %v2770, %v2775
      %v2777 = vadd.f32 %v2766, %v2776
      %v2778 = vrot.slane %v2744, 4
      %v2780 = vsel %vm1734, 0.0, %v2778
      %v2781 = vld [vmem:[%s16 + $0x3] sm:$0x1]
      %v2782 = vlaneseq
      %v2783 = vshrl.u32 %v2782, 7
      %v2784 = vsub.s32 0, %v2783
      %v2785 = vrot.slane %v2781, %v2784
      %v2786 = vmul.f32 %v2780, %v2785
      %v2787 = vadd.f32 %v2777, %v2786
      %v2788 = vrot.slane %v2744, 5
      %vm2790 = vcmask 1042432
      %v2791 = vsel %vm2790, 0.0, %v2788
      %v2792 = vld [vmem:[%s16 + $0x4] sm:$0x1]
      %v2793 = vlaneseq
      %v2794 = vshrl.u32 %v2793, 7
      %v2795 = vsub.s32 0, %v2794
      %v2796 = vrot.slane %v2792, %v2795
      %v2797 = vmul.f32 %v2791, %v2796
      %v2798 = vadd.f32 %v2787, %v2797
      %v2799 = vrot.slane %v2744, 6
      %vm2801 = vcmask 1041408
      %v2802 = vsel %vm2801, 0.0, %v2799
      %v2803 = vld [vmem:[%s16 + $0x5] sm:$0x1]
      %v2804 = vlaneseq
      %v2805 = vshrl.u32 %v2804, 7
      %v2806 = vsub.s32 0, %v2805
      %v2807 = vrot.slane %v2803, %v2806
      %v2808 = vmul.f32 %v2802, %v2807
      %v2809 = vadd.f32 %v2798, %v2808
      %v2810 = vrot.slane %v2744, 7
      %vm2812 = vcmask 1040384
      %v2813 = vsel %vm2812, 0.0, %v2810
      %v2814 = vld [vmem:[%s16 + $0x6] sm:$0x1]
      %v2815 = vlaneseq
      %v2816 = vshrl.u32 %v2815, 7
      %v2817 = vsub.s32 0, %v2816
      %v2818 = vrot.slane %v2814, %v2817
      %v2819 = vmul.f32 %v2813, %v2818
      %v2820 = vadd.f32 %v2809, %v2819
      %v2821 = vld [vmem:[%s16 + $0x7] sm:$0x1]
      %v2822 = vlaneseq
      %v2823 = vshrl.u32 %v2822, 7
      %v2824 = vsub.s32 0, %v2823
      %v2825 = vrot.slane %v2821, %v2824
      %v2826 = vmul.f32 %v2744, %v2825
      %v2827 = vadd.f32 %v2820, %v2826
      %v2828 = vsel %vm1664, %v2746, 0.0
      %v2829 = vld [vmem:[%s16 + $0x8] sm:$0x1]
      %v2830 = vlaneseq
      %v2831 = vshrl.u32 %v2830, 7
      %v2832 = vsub.s32 0, %v2831
      %v2833 = vrot.slane %v2829, %v2832
      %v2834 = vmul.f32 %v2828, %v2833
      %v2835 = vadd.f32 %v2827, %v2834
      %v2836 = vsel %vm2758, %v2756, 0.0
      %v2837 = vld [vmem:[%s16 + $0x9] sm:$0x1]
      %v2838 = vlaneseq
      %v2839 = vshrl.u32 %v2838, 7
      %v2840 = vsub.s32 0, %v2839
      %v2841 = vrot.slane %v2837, %v2840
      %v2842 = vmul.f32 %v2836, %v2841
      %v2843 = vadd.f32 %v2835, %v2842
      %v2844 = vsel %vm2769, %v2767, 0.0
      %v2845 = vld [vmem:[%s16 + $0xa] sm:$0x1]
      %v2846 = vlaneseq
      %v2847 = vshrl.u32 %v2846, 7
      %v2848 = vsub.s32 0, %v2847
      %v2849 = vrot.slane %v2845, %v2848
      %v2850 = vmul.f32 %v2844, %v2849
      %v2851 = vadd.f32 %v2843, %v2850
      %v2852 = vsel %vm1734, %v2778, 0.0
      %v2853 = vld [vmem:[%s16 + $0xb] sm:$0x1]
      %v2854 = vlaneseq
      %v2855 = vshrl.u32 %v2854, 7
      %v2856 = vsub.s32 0, %v2855
      %v2857 = vrot.slane %v2853, %v2856
      %v2858 = vmul.f32 %v2852, %v2857
      %v2859 = vadd.f32 %v2851, %v2858
      %v2860 = vsel %vm2790, %v2788, 0.0
      %v2861 = vld [vmem:[%s16 + $0xc] sm:$0x1]
      %v2862 = vlaneseq
      %v2863 = vshrl.u32 %v2862, 7
      %v2864 = vsub.s32 0, %v2863
      %v2865 = vrot.slane %v2861, %v2864
      %v2866 = vmul.f32 %v2860, %v2865
      %v2867 = vadd.f32 %v2859, %v2866
      %v2868 = vsel %vm2801, %v2799, 0.0
      %v2869 = vld [vmem:[%s16 + $0xd] sm:$0x1]
      %v2870 = vlaneseq
      %v2871 = vshrl.u32 %v2870, 7
      %v2872 = vsub.s32 0, %v2871
      %v2873 = vrot.slane %v2869, %v2872
      %v2874 = vmul.f32 %v2868, %v2873
      %v2875 = vadd.f32 %v2867, %v2874
      %v2876 = vsel %vm2812, %v2810, 0.0
      %v2877 = vld [vmem:[%s16 + $0xe] sm:$0x1]
      %v2878 = vlaneseq
      %v2879 = vshrl.u32 %v2878, 7
      %v2880 = vsub.s32 0, %v2879
      %v2881 = vrot.slane %v2877, %v2880
      %v2882 = vmul.f32 %v2876, %v2881
      %v2883 = vadd.f32 %v2875, %v2882
      %v2884 = vld [vmem:[%s17] sm:$0x1]
      %v2886 = vlaneseq
      %v2887 = vshrl.u32 %v2886, 7
      %v2888 = vsub.s32 0, %v2887
      %v2889 = vrot.slane %v2884, %v2888
      %v2891 = vmul.f32 %v2883, %v2889
      %v2892 = vld [vmem:[%s18] sm:$0x1]
      %v2894 = vlaneseq
      %v2895 = vshrl.u32 %v2894, 7
      %v2896 = vsub.s32 0, %v2895
      %v2897 = vrot.slane %v2892, %v2896
      %v2899 = vadd.f32 %v2891, %v2897
      %v2900 = vxor.u32 %v2899, 2147483648
      %v2901 = vmul.f32 %v2900, 1.442695
      %v2902 = vpow.pop %v2901
      %v2903 = vadd.f32 %v2902, 1.0
      %v2904 = vrcp.pop %v2903
      %v2905 = vmul.f32 1.0, %v2904
      %v2906 = vmul.f32 %v2899, %v2905
      %v2907 = vpack.c.bf16 %v2906, %v2906
      %v2908 = vld [vmem:[%s19] sm:$0xf]
      %v2909 = vld [vmem:[%s19 + $0x4] sm:$0xf]
      %v2910 = vld [vmem:[%s19 + $0x8] sm:$0xf]
      %v2911 = vld [vmem:[%s19 + $0xc] sm:$0xf]
      %v2912 = vld [vmem:[%s19 + $0x10] sm:$0xf]
      %v2913 = vld [vmem:[%s19 + $0x14] sm:$0xf]
      %v2914 = vld [vmem:[%s19 + $0x18] sm:$0xf]
      %v2915 = vld [vmem:[%s19 + $0x1c] sm:$0xf]
      %v2916 = vld [vmem:[%s19 + $0x20] sm:$0xf]
      %v2917 = vld [vmem:[%s19 + $0x24] sm:$0xf]
      %v2918 = vld [vmem:[%s19 + $0x28] sm:$0xf]
      %v2919 = vld [vmem:[%s19 + $0x2c] sm:$0xf]
      %v2920 = vld [vmem:[%s19 + $0x30] sm:$0xf]
      %v2921 = vld [vmem:[%s19 + $0x34] sm:$0xf]
      %v2922 = vld [vmem:[%s19 + $0x38] sm:$0xf]
      %v2923 = vld [vmem:[%s19 + $0x3c] sm:$0xf]
      %v2924 = vld [vmem:[%s20] sm:$0x1]
      %v2926 = vlaneseq
      %v2927 = vshrl.u32 %v2926, 7
      %v2928 = vsub.s32 0, %v2927
      %v2929 = vrot.slane %v2924, %v2928
      %v2947 = vunpack.c.l.b16 %v2908
      %v2948 = vunpack.c.l.b16 %v2909
      %v2949 = vunpack.c.l.b16 %v2910
      %v2950 = vunpack.c.l.b16 %v2911
      %v2951 = vunpack.c.l.b16 %v2912
      %v2952 = vunpack.c.l.b16 %v2913
      %v2953 = vunpack.c.l.b16 %v2914
      %v2954 = vunpack.c.l.b16 %v2915
      %v2955 = vunpack.c.l.b16 %v2916
      %v2956 = vunpack.c.l.b16 %v2917
      %v2957 = vunpack.c.l.b16 %v2918
      %v2958 = vunpack.c.l.b16 %v2919
      %v2959 = vunpack.c.l.b16 %v2920
      %v2960 = vunpack.c.l.b16 %v2921
      %v2961 = vunpack.c.l.b16 %v2922
      %v2962 = vunpack.c.l.b16 %v2923
      %v2963 = vpack.c.b16 %v2948, %v2947
      %v2964 = vpack.c.b16 %v2950, %v2949
      %v2965 = vpack.c.b16 %v2952, %v2951
      %v2966 = vpack.c.b16 %v2954, %v2953
      %v2967 = vpack.c.b16 %v2956, %v2955
      %v2968 = vpack.c.b16 %v2958, %v2957
      %v2969 = vpack.c.b16 %v2960, %v2959
      %v2970 = vpack.c.b16 %v2962, %v2961
      %2979 = vmatprep.subr.bf16.mxu0 0
      %2980 = vmatpush1.bf16.msra.mxu0 %v2970
      %2981 = vmatprep.subr.bf16.mxu0 0
      %2982 = vmatpush1.bf16.msra.mxu0 %v2969
      %2983 = vmatprep.subr.bf16.mxu0 0
      %2984 = vmatpush1.bf16.msra.mxu0 %v2968
      %2985 = vmatprep.subr.bf16.mxu0 0
      %2986 = vmatpush1.bf16.msra.mxu0 %v2967
      %2987 = vmatprep.subr.bf16.mxu0 0
      %2988 = vmatpush1.bf16.msra.mxu0 %v2966
      %2989 = vmatprep.subr.bf16.mxu0 0
      %2990 = vmatpush1.bf16.msra.mxu0 %v2965
      %2991 = vmatprep.subr.bf16.mxu0 0
      %2992 = vmatpush1.bf16.msra.mxu0 %v2964
      %2993 = vmatprep.subr.bf16.mxu0 0
      %2994 = vmatpush1.bf16.msra.mxu0 %v2963
      %2995 = vmatprep.subr.bf16.mxu0 0
      %2996 = vmatpush2.bf16.msra.mxu0 0
      %2997 = vmatprep.subr.bf16.mxu0 0
      %2998 = vmatpush2.bf16.msra.mxu0 0
      %2999 = vmatprep.subr.bf16.mxu0 0
      %3000 = vmatpush2.bf16.msra.mxu0 0
      %3001 = vmatprep.subr.bf16.mxu0 0
      %3002 = vmatpush2.bf16.msra.mxu0 0
      %3003 = vmatprep.subr.bf16.mxu0 0
      %3004 = vmatpush2.bf16.msra.mxu0 0
      %3005 = vmatprep.subr.bf16.mxu0 0
      %3006 = vmatpush2.bf16.msra.mxu0 0
      %3007 = vmatprep.subr.bf16.mxu0 0
      %3008 = vmatpush2.bf16.msra.mxu0 0
      %3009 = vmatprep.subr.bf16.mxu0 0
      %3010 = vmatpush2.bf16.msra.mxu0 0
      %3011 = vmatprep.mubr.bf16.mxu0 0
      %3012 = vmatmul.mubr.bf16.gmra.mxu0 %v2907
      %v3013 = vpop.f32.mrf.mxu0
      %v3014 = vadd.f32 %v2929, %v3013
      %v3015 = vpop.f32.mrf.mxu0
      %v3016 = vpop.f32.mrf.mxu0
      %v3017 = vpop.f32.mrf.mxu0
      %3018 = vdwg.mxu0
      %v3019 = vadd.f32 %v2564, %v3014
      %v3020 = vld [vmem:[%s2 + $0x3] sm:$0x1]
      %v3021 = vld [vmem:[%s3 + $0x3] sm:$0x1]
      %3022 = vadd.xlane.f32.xlu0 %v3019
      %v3023 = vpop.xlane.xlu0 %3022
      %v3024 = vmul.f32 %v3023, %v802
      %v3025 = vsub.f32 %v3019, %v3024
      %v3026 = vmul.f32 %v3025, %v3025
      %3027 = vadd.xlane.f32.xlu0 %v3026
      %v3028 = vpop.xlane.xlu0 %3027
      %v3029 = vmul.f32 %v3028, %v802
      %v3030 = vadd.f32 %v3029, 1e-05
      %v3031 = vrsqrt.pop %v3030
      %v3032 = vmul.f32 %v3025, %v3031
      %v3033 = vlaneseq
      %v3034 = vshrl.u32 %v3033, 7
      %v3035 = vsub.s32 0, %v3034
      %v3036 = vrot.slane %v3020, %v3035
      %v3037 = vmul.f32 %v3032, %v3036
      %v3038 = vlaneseq
      %v3039 = vshrl.u32 %v3038, 7
      %v3040 = vsub.s32 0, %v3039
      %v3041 = vrot.slane %v3021, %v3040
      %v3042 = vadd.f32 %v3037, %v3041
      %v3043 = vpack.c.bf16 %v3042, %v3042
      %v3044 = vld [vmem:[%s21] sm:$0xff]
      %v3045 = vld [vmem:[%s21 + $0x8] sm:$0xff]
      %v3046 = vld [vmem:[%s21 + $0x10] sm:$0xff]
      %v3047 = vld [vmem:[%s21 + $0x18] sm:$0xff]
      %v3048 = vld [vmem:[%s21 + $0x20] sm:$0xff]
      %v3049 = vld [vmem:[%s21 + $0x28] sm:$0xff]
      %v3050 = vld [vmem:[%s21 + $0x30] sm:$0xff]
      %v3051 = vld [vmem:[%s21 + $0x38] sm:$0xff]
      %v3052 = vld [vmem:[%s21 + $0x40] sm:$0xff]
      %v3053 = vld [vmem:[%s21 + $0x48] sm:$0xff]
      %v3054 = vld [vmem:[%s21 + $0x50] sm:$0xff]
      %v3055 = vld [vmem:[%s21 + $0x58] sm:$0xff]
      %v3056 = vld [vmem:[%s21 + $0x60] sm:$0xff]
      %v3057 = vld [vmem:[%s21 + $0x68] sm:$0xff]
      %v3058 = vld [vmem:[%s21 + $0x70] sm:$0xff]
      %v3059 = vld [vmem:[%s21 + $0x78] sm:$0xff]
      %v3060 = vld [vmem:[%s22] sm:$0x3]
      %v3062 = vlaneseq
      %v3063 = vshrl.u32 %v3062, 7
      %v3064 = vsub.s32 0, %v3063
      %v3065 = vrot.slane %v3060, %v3064
      %v3066 = vlaneseq
      %v3067 = vshrl.u32 %v3066, 7
      %v3068 = vsub.s32 1, %v3067
      %v3069 = vrot.slane %v3060, %v3068
      %v3088 = vunpack.c.l.b16 %v3044
      %v3089 = vunpack.c.h.b16 %v3044
      %v3090 = vunpack.c.l.b16 %v3045
      %v3091 = vunpack.c.h.b16 %v3045
      %v3092 = vunpack.c.l.b16 %v3046
      %v3093 = vunpack.c.h.b16 %v3046
      %v3094 = vunpack.c.l.b16 %v3047
      %v3095 = vunpack.c.h.b16 %v3047
      %v3096 = vunpack.c.l.b16 %v3048
      %v3097 = vunpack.c.h.b16 %v3048
      %v3098 = vunpack.c.l.b16 %v3049
      %v3099 = vunpack.c.h.b16 %v3049
      %v3100 = vunpack.c.l.b16 %v3050
      %v3101 = vunpack.c.h.b16 %v3050
      %v3102 = vunpack.c.l.b16 %v3051
      %v3103 = vunpack.c.h.b16 %v3051
      %v3104 = vunpack.c.l.b16 %v3052
      %v3105 = vunpack.c.h.b16 %v3052
      %v3106 = vunpack.c.l.b16 %v3053
      %v3107 = vunpack.c.h.b16 %v3053
      %v3108 = vunpack.c.l.b16 %v3054
      %v3109 = vunpack.c.h.b16 %v3054
      %v3110 = vunpack.c.l.b16 %v3055
      %v3111 = vunpack.c.h.b16 %v3055
      %v3112 = vunpack.c.l.b16 %v3056
      %v3113 = vunpack.c.h.b16 %v3056
      %v3114 = vunpack.c.l.b16 %v3057
      %v3115 = vunpack.c.h.b16 %v3057
      %v3116 = vunpack.c.l.b16 %v3058
      %v3117 = vunpack.c.h.b16 %v3058
      %v3118 = vunpack.c.l.b16 %v3059
      %v3119 = vunpack.c.h.b16 %v3059
      %v3120 = vpack.c.b16 %v3090, %v3088
      %v3121 = vpack.c.b16 %v3091, %v3089
      %v3122 = vpack.c.b16 %v3094, %v3092
      %v3123 = vpack.c.b16 %v3095, %v3093
      %v3124 = vpack.c.b16 %v3098, %v3096
      %v3125 = vpack.c.b16 %v3099, %v3097
      %v3126 = vpack.c.b16 %v3102, %v3100
      %v3127 = vpack.c.b16 %v3103, %v3101
      %v3128 = vpack.c.b16 %v3106, %v3104
      %v3129 = vpack.c.b16 %v3107, %v3105
      %v3130 = vpack.c.b16 %v3110, %v3108
      %v3131 = vpack.c.b16 %v3111, %v3109
      %v3132 = vpack.c.b16 %v3114, %v3112
      %v3133 = vpack.c.b16 %v3115, %v3113
      %v3134 = vpack.c.b16 %v3118, %v3116
      %v3135 = vpack.c.b16 %v3119, %v3117
      %3152 = vmatprep.subr.bf16.mxu0 %v3135
      %3153 = vmatpush1.bf16.msra.mxu0 %v3134
      %3154 = vmatprep.subr.bf16.mxu0 %v3133
      %3155 = vmatpush1.bf16.msra.mxu0 %v3132
      %3156 = vmatprep.subr.bf16.mxu0 %v3131
      %3157 = vmatpush1.bf16.msra.mxu0 %v3130
      %3158 = vmatprep.subr.bf16.mxu0 %v3129
      %3159 = vmatpush1.bf16.msra.mxu0 %v3128
      %3160 = vmatprep.subr.bf16.mxu0 %v3127
      %3161 = vmatpush1.bf16.msra.mxu0 %v3126
      %3162 = vmatprep.subr.bf16.mxu0 %v3125
      %3163 = vmatpush1.bf16.msra.mxu0 %v3124
      %3164 = vmatprep.subr.bf16.mxu0 %v3123
      %3165 = vmatpush1.bf16.msra.mxu0 %v3122
      %3166 = vmatprep.subr.bf16.mxu0 %v3121
      %3167 = vmatpush1.bf16.msra.mxu0 %v3120
      %3168 = vmatprep.subr.bf16.mxu0 0
      %3169 = vmatpush2.bf16.msra.mxu0 0
      %3170 = vmatprep.subr.bf16.mxu0 0
      %3171 = vmatpush2.bf16.msra.mxu0 0
      %3172 = vmatprep.subr.bf16.mxu0 0
      %3173 = vmatpush2.bf16.msra.mxu0 0
      %3174 = vmatprep.subr.bf16.mxu0 0
      %3175 = vmatpush2.bf16.msra.mxu0 0
      %3176 = vmatprep.subr.bf16.mxu0 0
      %3177 = vmatpush2.bf16.msra.mxu0 0
      %3178 = vmatprep.subr.bf16.mxu0 0
      %3179 = vmatpush2.bf16.msra.mxu0 0
      %3180 = vmatprep.subr.bf16.mxu0 0
      %3181 = vmatpush2.bf16.msra.mxu0 0
      %3182 = vmatprep.subr.bf16.mxu0 0
      %3183 = vmatpush2.bf16.msra.mxu0 0
      %3184 = vmatprep.mubr.bf16.mxu0 0
      %3185 = vmatmul.mubr.bf16.gmra.mxu0 %v3043
      %v3186 = vpop.f32.mrf.mxu0
      %v3187 = vadd.f32 %v3065, %v3186
      %v3188 = vpop.f32.mrf.mxu0
      %v3189 = vadd.f32 %v3069, %v3188
      %v3190 = vpop.f32.mrf.mxu0
      %v3191 = vpop.f32.mrf.mxu0
      %3192 = vdwg.mxu0
      %v3193 = vxor.u32 %v3187, 2147483648
      %v3194 = vxor.u32 %v3189, 2147483648
      %v3195 = vmul.f32 %v3193, 1.442695
      %v3196 = vpow.pop %v3195
      %v3197 = vmul.f32 %v3194, 1.442695
      %v3198 = vpow.pop %v3197
      %v3199 = vadd.f32 %v3196, 1.0
      %v3200 = vadd.f32 %v3198, 1.0
      %v3201 = vrcp.pop %v3199
      %v3202 = vmul.f32 1.0, %v3201
      %v3203 = vrcp.pop %v3200
      %v3204 = vmul.f32 1.0, %v3203
      %v3205 = vmul.f32 %v3187, %v3202
      %v3206 = vmul.f32 %v3189, %v3204
      %v3207 = vpack.c.bf16 %v3205, %v3205
      %v3208 = vpack.c.bf16 %v3206, %v3206
      %v3209 = vld [vmem:[%s23] sm:$0xf]
      %v3210 = vld [vmem:[%s23 + $0x4] sm:$0xf]
      %v3211 = vld [vmem:[%s23 + $0x8] sm:$0xf]
      %v3212 = vld [vmem:[%s23 + $0xc] sm:$0xf]
      %v3213 = vld [vmem:[%s23 + $0x10] sm:$0xf]
      %v3214 = vld [vmem:[%s23 + $0x14] sm:$0xf]
      %v3215 = vld [vmem:[%s23 + $0x18] sm:$0xf]
      %v3216 = vld [vmem:[%s23 + $0x1c] sm:$0xf]
      %v3217 = vld [vmem:[%s23 + $0x20] sm:$0xf]
      %v3218 = vld [vmem:[%s23 + $0x24] sm:$0xf]
      %v3219 = vld [vmem:[%s23 + $0x28] sm:$0xf]
      %v3220 = vld [vmem:[%s23 + $0x2c] sm:$0xf]
      %v3221 = vld [vmem:[%s23 + $0x30] sm:$0xf]
      %v3222 = vld [vmem:[%s23 + $0x34] sm:$0xf]
      %v3223 = vld [vmem:[%s23 + $0x38] sm:$0xf]
      %v3224 = vld [vmem:[%s23 + $0x3c] sm:$0xf]
      %v3225 = vld [vmem:[%s23 + $0x40] sm:$0xf]
      %v3226 = vld [vmem:[%s23 + $0x44] sm:$0xf]
      %v3227 = vld [vmem:[%s23 + $0x48] sm:$0xf]
      %v3228 = vld [vmem:[%s23 + $0x4c] sm:$0xf]
      %v3229 = vld [vmem:[%s23 + $0x50] sm:$0xf]
      %v3230 = vld [vmem:[%s23 + $0x54] sm:$0xf]
      %v3231 = vld [vmem:[%s23 + $0x58] sm:$0xf]
      %v3232 = vld [vmem:[%s23 + $0x5c] sm:$0xf]
      %v3233 = vld [vmem:[%s23 + $0x60] sm:$0xf]
      %v3234 = vld [vmem:[%s23 + $0x64] sm:$0xf]
      %v3235 = vld [vmem:[%s23 + $0x68] sm:$0xf]
      %v3236 = vld [vmem:[%s23 + $0x6c] sm:$0xf]
      %v3237 = vld [vmem:[%s23 + $0x70] sm:$0xf]
      %v3238 = vld [vmem:[%s23 + $0x74] sm:$0xf]
      %v3239 = vld [vmem:[%s23 + $0x78] sm:$0xf]
      %v3240 = vld [vmem:[%s23 + $0x7c] sm:$0xf]
      %v3241 = vld [vmem:[%s24] sm:$0x1]
      %v3243 = vlaneseq
      %v3244 = vshrl.u32 %v3243, 7
      %v3245 = vsub.s32 0, %v3244
      %v3246 = vrot.slane %v3241, %v3245
      %v3280 = vunpack.c.l.b16 %v3209
      %v3281 = vunpack.c.l.b16 %v3210
      %v3282 = vunpack.c.l.b16 %v3211
      %v3283 = vunpack.c.l.b16 %v3212
      %v3284 = vunpack.c.l.b16 %v3213
      %v3285 = vunpack.c.l.b16 %v3214
      %v3286 = vunpack.c.l.b16 %v3215
      %v3287 = vunpack.c.l.b16 %v3216
      %v3288 = vunpack.c.l.b16 %v3217
      %v3289 = vunpack.c.l.b16 %v3218
      %v3290 = vunpack.c.l.b16 %v3219
      %v3291 = vunpack.c.l.b16 %v3220
      %v3292 = vunpack.c.l.b16 %v3221
      %v3293 = vunpack.c.l.b16 %v3222
      %v3294 = vunpack.c.l.b16 %v3223
      %v3295 = vunpack.c.l.b16 %v3224
      %v3296 = vunpack.c.l.b16 %v3225
      %v3297 = vunpack.c.l.b16 %v3226
      %v3298 = vunpack.c.l.b16 %v3227
      %v3299 = vunpack.c.l.b16 %v3228
      %v3300 = vunpack.c.l.b16 %v3229
      %v3301 = vunpack.c.l.b16 %v3230
      %v3302 = vunpack.c.l.b16 %v3231
      %v3303 = vunpack.c.l.b16 %v3232
      %v3304 = vunpack.c.l.b16 %v3233
      %v3305 = vunpack.c.l.b16 %v3234
      %v3306 = vunpack.c.l.b16 %v3235
      %v3307 = vunpack.c.l.b16 %v3236
      %v3308 = vunpack.c.l.b16 %v3237
      %v3309 = vunpack.c.l.b16 %v3238
      %v3310 = vunpack.c.l.b16 %v3239
      %v3311 = vunpack.c.l.b16 %v3240
      %v3312 = vpack.c.b16 %v3281, %v3280
      %v3313 = vpack.c.b16 %v3283, %v3282
      %v3314 = vpack.c.b16 %v3285, %v3284
      %v3315 = vpack.c.b16 %v3287, %v3286
      %v3316 = vpack.c.b16 %v3289, %v3288
      %v3317 = vpack.c.b16 %v3291, %v3290
      %v3318 = vpack.c.b16 %v3293, %v3292
      %v3319 = vpack.c.b16 %v3295, %v3294
      %v3320 = vpack.c.b16 %v3297, %v3296
      %v3321 = vpack.c.b16 %v3299, %v3298
      %v3322 = vpack.c.b16 %v3301, %v3300
      %v3323 = vpack.c.b16 %v3303, %v3302
      %v3324 = vpack.c.b16 %v3305, %v3304
      %v3325 = vpack.c.b16 %v3307, %v3306
      %v3326 = vpack.c.b16 %v3309, %v3308
      %v3327 = vpack.c.b16 %v3311, %v3310
      %3344 = vmatprep.subr.bf16.mxu0 0
      %3345 = vmatpush1.bf16.msra.mxu0 %v3319
      %3346 = vmatprep.subr.bf16.mxu0 0
      %3347 = vmatpush1.bf16.msra.mxu0 %v3318
      %3348 = vmatprep.subr.bf16.mxu0 0
      %3349 = vmatpush1.bf16.msra.mxu0 %v3317
      %3350 = vmatprep.subr.bf16.mxu0 0
      %3351 = vmatpush1.bf16.msra.mxu0 %v3316
      %3352 = vmatprep.subr.bf16.mxu0 0
      %3353 = vmatpush1.bf16.msra.mxu0 %v3315
      %3354 = vmatprep.subr.bf16.mxu0 0
      %3355 = vmatpush1.bf16.msra.mxu0 %v3314
      %3356 = vmatprep.subr.bf16.mxu0 0
      %3357 = vmatpush1.bf16.msra.mxu0 %v3313
      %3358 = vmatprep.subr.bf16.mxu0 0
      %3359 = vmatpush1.bf16.msra.mxu0 %v3312
      %3360 = vmatprep.subr.bf16.mxu0 0
      %3361 = vmatpush2.bf16.msra.mxu0 %v3327
      %3362 = vmatprep.subr.bf16.mxu0 0
      %3363 = vmatpush2.bf16.msra.mxu0 %v3326
      %3364 = vmatprep.subr.bf16.mxu0 0
      %3365 = vmatpush2.bf16.msra.mxu0 %v3325
      %3366 = vmatprep.subr.bf16.mxu0 0
      %3367 = vmatpush2.bf16.msra.mxu0 %v3324
      %3368 = vmatprep.subr.bf16.mxu0 0
      %3369 = vmatpush2.bf16.msra.mxu0 %v3323
      %3370 = vmatprep.subr.bf16.mxu0 0
      %3371 = vmatpush2.bf16.msra.mxu0 %v3322
      %3372 = vmatprep.subr.bf16.mxu0 0
      %3373 = vmatpush2.bf16.msra.mxu0 %v3321
      %3374 = vmatprep.subr.bf16.mxu0 0
      %3375 = vmatpush2.bf16.msra.mxu0 %v3320
      %3376 = vmatprep.mubr.bf16.mxu0 %v3208
      %3377 = vmatmul.mubr.bf16.gmra.mxu0 %v3207
      %v3378 = vpop.f32.mrf.mxu0
      %v3379 = vadd.f32 %v3246, %v3378
      %v3380 = vpop.f32.mrf.mxu0
      %v3381 = vpop.f32.mrf.mxu0
      %v3382 = vpop.f32.mrf.mxu0
      %3383 = vdwg.mxu0
      %v3384 = vmul.f32 %v3379, 0.5
      %v3385 = vadd.f32 %v3019, %v3384
      %v3386 = vld [vmem:[%s2 + $0x4] sm:$0x1]
      %v3387 = vld [vmem:[%s3 + $0x4] sm:$0x1]
      %3388 = vadd.xlane.f32.xlu0 %v3385
      %v3389 = vpop.xlane.xlu0 %3388
      %v3390 = vmul.f32 %v3389, %v802
      %v3391 = vsub.f32 %v3385, %v3390
      %v3392 = vmul.f32 %v3391, %v3391
      %3393 = vadd.xlane.f32.xlu0 %v3392
      %v3394 = vpop.xlane.xlu0 %3393
      %v3395 = vmul.f32 %v3394, %v802
      %v3396 = vadd.f32 %v3395, 1e-05
      %v3397 = vrsqrt.pop %v3396
      %v3398 = vmul.f32 %v3391, %v3397
      %v3399 = vlaneseq
      %v3400 = vshrl.u32 %v3399, 7
      %v3401 = vsub.s32 0, %v3400
      %v3402 = vrot.slane %v3386, %v3401
      %v3403 = vmul.f32 %v3398, %v3402
      %v3404 = vlaneseq
      %v3405 = vshrl.u32 %v3404, 7
      %v3406 = vsub.s32 0, %v3405
      %v3407 = vrot.slane %v3387, %v3406
      %v3408 = vadd.f32 %v3403, %v3407
      %3409 = vst [vmem:[%s792] sm:$0xff] %v3408
      %v3410 = vrot.slane %v3408, 4
      %v3411 = vadd.f32 %v3408, %v3410
      %v3412 = vrot.slane %v3411, 2
      %v3413 = vadd.f32 %v3411, %v3412
      %v3414 = vrot.slane %v3413, 1
      %v3415 = vadd.f32 %v3413, %v3414
      %v3416 = vrcp.pop 8.0
      %v3417 = vmul.f32 %v3415, %v3416
      %3418 = vst [vmem:[%s795] sm:$0x1] %v3417
      %p3419 = scmp.lt.s32.totalorder %s38, 1
      %s3420 = scalar_select %p3419, %s38, 1
      %s3421 = smul.addr %s3420, 8
      %s3422 = scalar_lea.vmem %s25, %s3421
      %p3423 = scmp.lt.s32.totalorder %s38, 1
      %s3424 = scalar_select %p3423, %s38, 1
      %s3425 = scalar_lea.vmem %s26, %s3424
      // Predicated region
      $region121: #{cnn_conformer_forward.11} parent=119 // pred_check
        %p3426 = pneg %p586
      $region122: #{cnn_conformer_forward.11} parent=119 // pred_check_branch
        %3428 = sbr.rel (%p3426) target = $region124
      $region123: #{cnn_conformer_forward.11} parent=119 // pred_region
        _
      $region124: #{cnn_conformer_forward.11} parent=119 // pred_fallthru
        _
      // Predicated region
      $region125: #{cnn_conformer_forward.11} parent=119 // pred_check
        %p3429 = pneg %p612
      $region126: #{cnn_conformer_forward.11} parent=119 // pred_check_branch
        %3431 = sbr.rel (%p3429) target = $region128
      $region127: #{cnn_conformer_forward.11} parent=119 // pred_region
        _
      $region128: #{cnn_conformer_forward.11} parent=119 // pred_fallthru
        _
    $region120: #{cnn_conformer_forward.11} parent=5 // pred_fallthru
      _
    %p3432 = scmp.le.s32.totalorder 2, %s33
    // Predicated region
    $region129: #{cnn_conformer_forward.11} parent=5 // pred_check
      %p3433 = pneg %p3432
    $region130: #{cnn_conformer_forward.11} parent=5 // pred_check_branch
      %3435 = sbr.rel (%p3433) target = $region132
    $region131: #{cnn_conformer_forward.11} parent=5 // pred_region
      %s3436 = ssub.s32 %s33, 2
      // Predicated region
      $region133: #{cnn_conformer_forward.11} parent=131 // pred_check
        %p3437 = pneg %p592
      $region134: #{cnn_conformer_forward.11} parent=131 // pred_check_branch
        %3439 = sbr.rel (%p3437) target = $region136
      $region135: #{cnn_conformer_forward.11} parent=131 // pred_region
        %p3440 = scmp.lt.s32.totalorder %s39, 1
        %s3441 = scalar_select %p3440, %s39, 1
        %s3442 = smul.addr %s3441, 8
        %s3443 = scalar_lea.vmem %s25, %s3442
      $region136: #{cnn_conformer_forward.11} parent=131 // pred_fallthru
        _
      // Predicated region
      $region137: #{cnn_conformer_forward.11} parent=131 // pred_check
        %p3444 = pneg %p618
      $region138: #{cnn_conformer_forward.11} parent=131 // pred_check_branch
        %3446 = sbr.rel (%p3444) target = $region140
      $region139: #{cnn_conformer_forward.11} parent=131 // pred_region
        %p3447 = scmp.lt.s32.totalorder %s39, 1
        %s3448 = scalar_select %p3447, %s39, 1
        %s3449 = scalar_lea.vmem %s26, %s3448
      $region140: #{cnn_conformer_forward.11} parent=131 // pred_fallthru
        _
    $region132: #{cnn_conformer_forward.11} parent=5 // pred_fallthru
      _
  $region6: #{cnn_conformer_forward.11} parent=0 // loop_footer
    %s37 = sadd.s32 1, %s33
  $region7: #{cnn_conformer_forward.11} parent=0 // loop_footer_branch
    %32 = sbr.rel target = $region3
  $region8: #{cnn_conformer_forward.11} parent=0 // loop_exit
    _

// kernel: cnn_conformer_forward.18
$region0: #{cnn_conformer_forward.18}
  #allocation0 [shape = 'u32[]', space=smem, size = 0x4, offset = 0x4, fixed_abs, tag = 'smem constant byte address 0x4 - core index']
  #allocation1 [shape = 'u32[144,128]{1,0:T(1,128)}', space=vmem, size = 0x12000, scoped, tag = 'internal scratch']
  %s0 = inlined_call_operand.vmem [shape: f32[2,8,128], index: 0, kind: input, shape index: {}]
  %s1 = inlined_call_operand.vmem [shape: f32[8,128], index: 1, kind: input, shape index: {}]
  %s2 = inlined_call_operand.vmem [shape: f32[5,128], index: 2, kind: input, shape index: {}]
  %s3 = inlined_call_operand.vmem [shape: f32[5,128], index: 3, kind: input, shape index: {}]
  %s4 = inlined_call_operand.vmem [shape: bf16[128,256], index: 4, kind: input, shape index: {}]
  %s5 = inlined_call_operand.vmem [shape: f32[1,256], index: 5, kind: input, shape index: {}]
  %s6 = inlined_call_operand.vmem [shape: bf16[256,128], index: 6, kind: input, shape index: {}]
  %s7 = inlined_call_operand.vmem [shape: f32[1,128], index: 7, kind: input, shape index: {}]
  %s8 = inlined_call_operand.vmem [shape: bf16[128,384], index: 8, kind: input, shape index: {}]
  %s9 = inlined_call_operand.vmem [shape: f32[1,384], index: 9, kind: input, shape index: {}]
  %s10 = inlined_call_operand.vmem [shape: bf16[128,128], index: 10, kind: input, shape index: {}]
  %s11 = inlined_call_operand.vmem [shape: f32[8,32], index: 11, kind: input, shape index: {}]
  %s12 = inlined_call_operand.vmem [shape: bf16[128,128], index: 12, kind: input, shape index: {}]
  %s13 = inlined_call_operand.vmem [shape: f32[1,128], index: 13, kind: input, shape index: {}]
  %s14 = inlined_call_operand.vmem [shape: bf16[128,256], index: 14, kind: input, shape index: {}]
  %s15 = inlined_call_operand.vmem [shape: f32[1,256], index: 15, kind: input, shape index: {}]
  %s16 = inlined_call_operand.vmem [shape: f32[15,128], index: 16, kind: input, shape index: {}]
  %s17 = inlined_call_operand.vmem [shape: f32[1,128], index: 17, kind: input, shape index: {}]
  %s18 = inlined_call_operand.vmem [shape: f32[1,128], index: 18, kind: input, shape index: {}]
  %s19 = inlined_call_operand.vmem [shape: bf16[128,128], index: 19, kind: input, shape index: {}]
  %s20 = inlined_call_operand.vmem [shape: f32[1,128], index: 20, kind: input, shape index: {}]
  %s21 = inlined_call_operand.vmem [shape: bf16[128,256], index: 21, kind: input, shape index: {}]
  %s22 = inlined_call_operand.vmem [shape: f32[1,256], index: 22, kind: input, shape index: {}]
  %s23 = inlined_call_operand.vmem [shape: bf16[256,128], index: 23, kind: input, shape index: {}]
  %s24 = inlined_call_operand.vmem [shape: f32[1,128], index: 24, kind: input, shape index: {}]
  %s25 = inlined_call_operand.hbm [shape: f32[2,8,128], index: 25, kind: output, shape index: {0}]
  %s26 = inlined_call_operand.vmem [shape: f32[2,1,128], index: 26, kind: output, shape index: {1}]
  %27 = xla_tuple %s25, %s26
  %s28 = sld [smem:[#allocation0]]
  $region141: #{cnn_conformer_forward.18} parent=0
    _
  %s30 = ssub.s32 1, %s28
  %s31 = scalar_select 0, %s30, %s28
  $region1: #{cnn_conformer_forward.18} parent=0
    #allocation2 [shape = 'u8[8192]{0}', space=vmem, size = 0x2000, scoped, tag = 'output window, operand 0']
    #allocation3 [shape = 's32[2]{0}', space=sflag, size = 0x8, scoped, tag = 'scoped memory for cnn_conformer_forward.18']
    %32 = vsyncpa [#allocation3], 0
    %s33 = scalar_lea.sflag [#allocation3], 1
    %34 = vsyncpa %s33, 0
    loop: start=0, step=1, limit=4
    $region2: #{cnn_conformer_forward.18} parent=1 // loop_pre_header
      _
    $region3: #{cnn_conformer_forward.18} parent=1 // loop_header
      %s36 = sphi 0, %s40
      %p37 = scmp.ge.s32.totalorder %s36, 4
      %s46 = sphi 0, %s48
      %s49 = sphi 0, %s46
      %s50 = sphi 0, %s49
      %s66 = sphi 0, %s50
      %s70 = sphi 0, %s70
      %s72 = sphi 0, %s70
      %s73 = sphi 0, %s72
      %s87 = sphi 0, %s73
      %s91 = sphi 0, %s91
      %s93 = sphi 0, %s91
      %s94 = sphi 0, %s93
      %s108 = sphi 0, %s94
      %s112 = sphi 0, %s112
      %s114 = sphi 0, %s112
      %s115 = sphi 0, %s114
      %s129 = sphi 0, %s115
      %s133 = sphi 0, %s133
      %s135 = sphi 0, %s133
      %s136 = sphi 0, %s135
      %s150 = sphi 0, %s136
      %s154 = sphi 0, %s154
      %s156 = sphi 0, %s154
      %s157 = sphi 0, %s156
      %s171 = sphi 0, %s157
      %s175 = sphi 0, %s175
      %s177 = sphi 0, %s175
      %s178 = sphi 0, %s177
      %s192 = sphi 0, %s178
      %s196 = sphi 0, %s196
      %s198 = sphi 0, %s196
      %s199 = sphi 0, %s198
      %s213 = sphi 0, %s199
      %s217 = sphi 0, %s217
      %s219 = sphi 0, %s217
      %s220 = sphi 0, %s219
      %s234 = sphi 0, %s220
      %s238 = sphi 0, %s238
      %s240 = sphi 0, %s238
      %s241 = sphi 0, %s240
      %s255 = sphi 0, %s241
      %s259 = sphi 0, %s259
      %s261 = sphi 0, %s259
      %s262 = sphi 0, %s261
      %s276 = sphi 0, %s262
      %s280 = sphi 0, %s280
      %s282 = sphi 0, %s280
      %s283 = sphi 0, %s282
      %s297 = sphi 0, %s283
      %s301 = sphi 0, %s301
      %s303 = sphi 0, %s301
      %s304 = sphi 0, %s303
      %s318 = sphi 0, %s304
      %s322 = sphi 0, %s322
      %s324 = sphi 0, %s322
      %s325 = sphi 0, %s324
      %s339 = sphi 0, %s325
      %s343 = sphi 0, %s343
      %s345 = sphi 0, %s343
      %s346 = sphi 0, %s345
      %s360 = sphi 0, %s346
      %s364 = sphi 0, %s364
      %s366 = sphi 0, %s364
      %s367 = sphi 0, %s366
      %s381 = sphi 0, %s367
      %s385 = sphi 0, %s385
      %s387 = sphi 0, %s385
      %s388 = sphi 0, %s387
      %s402 = sphi 0, %s388
      %s406 = sphi 0, %s406
      %s408 = sphi 0, %s406
      %s409 = sphi 0, %s408
      %s423 = sphi 0, %s409
      %s427 = sphi 0, %s427
      %s429 = sphi 0, %s427
      %s430 = sphi 0, %s429
      %s444 = sphi 0, %s430
      %s448 = sphi 0, %s448
      %s450 = sphi 0, %s448
      %s451 = sphi 0, %s450
      %s465 = sphi 0, %s451
      %s469 = sphi 0, %s469
      %s471 = sphi 0, %s469
      %s472 = sphi 0, %s471
      %s486 = sphi 0, %s472
      %s490 = sphi 0, %s490
      %s492 = sphi 0, %s490
      %s493 = sphi 0, %s492
      %s507 = sphi 0, %s493
      %s511 = sphi 0, %s511
      %s513 = sphi 0, %s511
      %s514 = sphi 0, %s513
      %s528 = sphi 0, %s514
      %s532 = sphi 0, %s532
      %s534 = sphi 0, %s532
      %s535 = sphi 0, %s534
      %s549 = sphi 0, %s535
      %s553 = sphi 0, %s553
      %s555 = sphi 0, %s553
      %s556 = sphi 0, %s555
      %s570 = sphi 0, %s556
      %s576 = sphi 0, %s578
      %s579 = sphi 0, %s576
      %s580 = sphi 0, %s579
      %s596 = sphi 0, %s580
      %s602 = sphi 0, %s604
      %s605 = sphi 0, %s602
      %s606 = sphi 0, %s605
      %s622 = sphi 0, %s606
    $region4: #{cnn_conformer_forward.18} parent=1 // loop_header_branch
      %39 = sbr.rel (%p37) target = $region8
    $region5: #{cnn_conformer_forward.18} parent=1 // loop_body
      %s41 = ssub.s32 %s36, 1
      %s42 = ssub.s32 %s36, 2
      %s43 = sadd.s32 %s36, 1
      %s44 = ssub.s32 %s36, %s43
      %p45 = scmp.eq.s32.totalorder %s44, 0
      %s47 = sadd.s32 %s46, 1
      %s48 = scalar_select %p45, %s46, %s47
      %p51 = pneg %p45
      %p52 = scmp.eq.s32.totalorder %s36, 1
      %p53 = por %p51, %p52
      %p54 = scmp.ne.s32.totalorder %s46, %s49
      %p55 = scmp.eq.s32.totalorder %s36, 0
      %p56 = por %p54, %p55
      %p57 = scmp.ne.s32.totalorder %s46, %s49
      %p58 = scmp.eq.s32.totalorder %s41, 1
      %p59 = por %p57, %p58
      %p60 = scmp.ne.s32.totalorder %s49, %s50
      %p61 = scmp.eq.s32.totalorder %s41, 0
      %p62 = por %p60, %p61
      %p63 = scmp.ne.s32.totalorder %s49, %s50
      %p64 = scmp.eq.s32.totalorder %s42, 1
      %p65 = por %p63, %p64
      %p67 = scmp.ne.s32.totalorder %s50, %s66
      %p68 = scmp.eq.s32.totalorder %s42, 0
      %p69 = por %p67, %p68
      %s71 = sadd.s32 %s70, 1
      %p74 = scmp.eq.s32.totalorder %s36, 1
      %p75 = scmp.ne.s32.totalorder %s70, %s72
      %p76 = scmp.eq.s32.totalorder %s36, 0
      %p77 = por %p75, %p76
      %p78 = scmp.ne.s32.totalorder %s70, %s72
      %p79 = scmp.eq.s32.totalorder %s41, 1
      %p80 = por %p78, %p79
      %p81 = scmp.ne.s32.totalorder %s72, %s73
      %p82 = scmp.eq.s32.totalorder %s41, 0
      %p83 = por %p81, %p82
      %p84 = scmp.ne.s32.totalorder %s72, %s73
      %p85 = scmp.eq.s32.totalorder %s42, 1
      %p86 = por %p84, %p85
      %p88 = scmp.ne.s32.totalorder %s73, %s87
      %p89 = scmp.eq.s32.totalorder %s42, 0
      %p90 = por %p88, %p89
      %s92 = sadd.s32 %s91, 1
      %p95 = scmp.eq.s32.totalorder %s36, 1
      %p96 = scmp.ne.s32.totalorder %s91, %s93
      %p97 = scmp.eq.s32.totalorder %s36, 0
      %p98 = por %p96, %p97
      %p99 = scmp.ne.s32.totalorder %s91, %s93
      %p100 = scmp.eq.s32.totalorder %s41, 1
      %p101 = por %p99, %p100
      %p102 = scmp.ne.s32.totalorder %s93, %s94
      %p103 = scmp.eq.s32.totalorder %s41, 0
      %p104 = por %p102, %p103
      %p105 = scmp.ne.s32.totalorder %s93, %s94
      %p106 = scmp.eq.s32.totalorder %s42, 1
      %p107 = por %p105, %p106
      %p109 = scmp.ne.s32.totalorder %s94, %s108
      %p110 = scmp.eq.s32.totalorder %s42, 0
      %p111 = por %p109, %p110
      %s113 = sadd.s32 %s112, 1
      %p116 = scmp.eq.s32.totalorder %s36, 1
      %p117 = scmp.ne.s32.totalorder %s112, %s114
      %p118 = scmp.eq.s32.totalorder %s36, 0
      %p119 = por %p117, %p118
      %p120 = scmp.ne.s32.totalorder %s112, %s114
      %p121 = scmp.eq.s32.totalorder %s41, 1
      %p122 = por %p120, %p121
      %p123 = scmp.ne.s32.totalorder %s114, %s115
      %p124 = scmp.eq.s32.totalorder %s41, 0
      %p125 = por %p123, %p124
      %p126 = scmp.ne.s32.totalorder %s114, %s115
      %p127 = scmp.eq.s32.totalorder %s42, 1
      %p128 = por %p126, %p127
      %p130 = scmp.ne.s32.totalorder %s115, %s129
      %p131 = scmp.eq.s32.totalorder %s42, 0
      %p132 = por %p130, %p131
      %s134 = sadd.s32 %s133, 1
      %p137 = scmp.eq.s32.totalorder %s36, 1
      %p138 = scmp.ne.s32.totalorder %s133, %s135
      %p139 = scmp.eq.s32.totalorder %s36, 0
      %p140 = por %p138, %p139
      %p141 = scmp.ne.s32.totalorder %s133, %s135
      %p142 = scmp.eq.s32.totalorder %s41, 1
      %p143 = por %p141, %p142
      %p144 = scmp.ne.s32.totalorder %s135, %s136
      %p145 = scmp.eq.s32.totalorder %s41, 0
      %p146 = por %p144, %p145
      %p147 = scmp.ne.s32.totalorder %s135, %s136
      %p148 = scmp.eq.s32.totalorder %s42, 1
      %p149 = por %p147, %p148
      %p151 = scmp.ne.s32.totalorder %s136, %s150
      %p152 = scmp.eq.s32.totalorder %s42, 0
      %p153 = por %p151, %p152
      %s155 = sadd.s32 %s154, 1
      %p158 = scmp.eq.s32.totalorder %s36, 1
      %p159 = scmp.ne.s32.totalorder %s154, %s156
      %p160 = scmp.eq.s32.totalorder %s36, 0
      %p161 = por %p159, %p160
      %p162 = scmp.ne.s32.totalorder %s154, %s156
      %p163 = scmp.eq.s32.totalorder %s41, 1
      %p164 = por %p162, %p163
      %p165 = scmp.ne.s32.totalorder %s156, %s157
      %p166 = scmp.eq.s32.totalorder %s41, 0
      %p167 = por %p165, %p166
      %p168 = scmp.ne.s32.totalorder %s156, %s157
      %p169 = scmp.eq.s32.totalorder %s42, 1
      %p170 = por %p168, %p169
      %p172 = scmp.ne.s32.totalorder %s157, %s171
      %p173 = scmp.eq.s32.totalorder %s42, 0
      %p174 = por %p172, %p173
      %s176 = sadd.s32 %s175, 1
      %p179 = scmp.eq.s32.totalorder %s36, 1
      %p180 = scmp.ne.s32.totalorder %s175, %s177
      %p181 = scmp.eq.s32.totalorder %s36, 0
      %p182 = por %p180, %p181
      %p183 = scmp.ne.s32.totalorder %s175, %s177
      %p184 = scmp.eq.s32.totalorder %s41, 1
      %p185 = por %p183, %p184
      %p186 = scmp.ne.s32.totalorder %s177, %s178
      %p187 = scmp.eq.s32.totalorder %s41, 0
      %p188 = por %p186, %p187
      %p189 = scmp.ne.s32.totalorder %s177, %s178
      %p190 = scmp.eq.s32.totalorder %s42, 1
      %p191 = por %p189, %p190
      %p193 = scmp.ne.s32.totalorder %s178, %s192
      %p194 = scmp.eq.s32.totalorder %s42, 0
      %p195 = por %p193, %p194
      %s197 = sadd.s32 %s196, 1
      %p200 = scmp.eq.s32.totalorder %s36, 1
      %p201 = scmp.ne.s32.totalorder %s196, %s198
      %p202 = scmp.eq.s32.totalorder %s36, 0
      %p203 = por %p201, %p202
      %p204 = scmp.ne.s32.totalorder %s196, %s198
      %p205 = scmp.eq.s32.totalorder %s41, 1
      %p206 = por %p204, %p205
      %p207 = scmp.ne.s32.totalorder %s198, %s199
      %p208 = scmp.eq.s32.totalorder %s41, 0
      %p209 = por %p207, %p208
      %p210 = scmp.ne.s32.totalorder %s198, %s199
      %p211 = scmp.eq.s32.totalorder %s42, 1
      %p212 = por %p210, %p211
      %p214 = scmp.ne.s32.totalorder %s199, %s213
      %p215 = scmp.eq.s32.totalorder %s42, 0
      %p216 = por %p214, %p215
      %s218 = sadd.s32 %s217, 1
      %p221 = scmp.eq.s32.totalorder %s36, 1
      %p222 = scmp.ne.s32.totalorder %s217, %s219
      %p223 = scmp.eq.s32.totalorder %s36, 0
      %p224 = por %p222, %p223
      %p225 = scmp.ne.s32.totalorder %s217, %s219
      %p226 = scmp.eq.s32.totalorder %s41, 1
      %p227 = por %p225, %p226
      %p228 = scmp.ne.s32.totalorder %s219, %s220
      %p229 = scmp.eq.s32.totalorder %s41, 0
      %p230 = por %p228, %p229
      %p231 = scmp.ne.s32.totalorder %s219, %s220
      %p232 = scmp.eq.s32.totalorder %s42, 1
      %p233 = por %p231, %p232
      %p235 = scmp.ne.s32.totalorder %s220, %s234
      %p236 = scmp.eq.s32.totalorder %s42, 0
      %p237 = por %p235, %p236
      %s239 = sadd.s32 %s238, 1
      %p242 = scmp.eq.s32.totalorder %s36, 1
      %p243 = scmp.ne.s32.totalorder %s238, %s240
      %p244 = scmp.eq.s32.totalorder %s36, 0
      %p245 = por %p243, %p244
      %p246 = scmp.ne.s32.totalorder %s238, %s240
      %p247 = scmp.eq.s32.totalorder %s41, 1
      %p248 = por %p246, %p247
      %p249 = scmp.ne.s32.totalorder %s240, %s241
      %p250 = scmp.eq.s32.totalorder %s41, 0
      %p251 = por %p249, %p250
      %p252 = scmp.ne.s32.totalorder %s240, %s241
      %p253 = scmp.eq.s32.totalorder %s42, 1
      %p254 = por %p252, %p253
      %p256 = scmp.ne.s32.totalorder %s241, %s255
      %p257 = scmp.eq.s32.totalorder %s42, 0
      %p258 = por %p256, %p257
      %s260 = sadd.s32 %s259, 1
      %p263 = scmp.eq.s32.totalorder %s36, 1
      %p264 = scmp.ne.s32.totalorder %s259, %s261
      %p265 = scmp.eq.s32.totalorder %s36, 0
      %p266 = por %p264, %p265
      %p267 = scmp.ne.s32.totalorder %s259, %s261
      %p268 = scmp.eq.s32.totalorder %s41, 1
      %p269 = por %p267, %p268
      %p270 = scmp.ne.s32.totalorder %s261, %s262
      %p271 = scmp.eq.s32.totalorder %s41, 0
      %p272 = por %p270, %p271
      %p273 = scmp.ne.s32.totalorder %s261, %s262
      %p274 = scmp.eq.s32.totalorder %s42, 1
      %p275 = por %p273, %p274
      %p277 = scmp.ne.s32.totalorder %s262, %s276
      %p278 = scmp.eq.s32.totalorder %s42, 0
      %p279 = por %p277, %p278
      %s281 = sadd.s32 %s280, 1
      %p284 = scmp.eq.s32.totalorder %s36, 1
      %p285 = scmp.ne.s32.totalorder %s280, %s282
      %p286 = scmp.eq.s32.totalorder %s36, 0
      %p287 = por %p285, %p286
      %p288 = scmp.ne.s32.totalorder %s280, %s282
      %p289 = scmp.eq.s32.totalorder %s41, 1
      %p290 = por %p288, %p289
      %p291 = scmp.ne.s32.totalorder %s282, %s283
      %p292 = scmp.eq.s32.totalorder %s41, 0
      %p293 = por %p291, %p292
      %p294 = scmp.ne.s32.totalorder %s282, %s283
      %p295 = scmp.eq.s32.totalorder %s42, 1
      %p296 = por %p294, %p295
      %p298 = scmp.ne.s32.totalorder %s283, %s297
      %p299 = scmp.eq.s32.totalorder %s42, 0
      %p300 = por %p298, %p299
      %s302 = sadd.s32 %s301, 1
      %p305 = scmp.eq.s32.totalorder %s36, 1
      %p306 = scmp.ne.s32.totalorder %s301, %s303
      %p307 = scmp.eq.s32.totalorder %s36, 0
      %p308 = por %p306, %p307
      %p309 = scmp.ne.s32.totalorder %s301, %s303
      %p310 = scmp.eq.s32.totalorder %s41, 1
      %p311 = por %p309, %p310
      %p312 = scmp.ne.s32.totalorder %s303, %s304
      %p313 = scmp.eq.s32.totalorder %s41, 0
      %p314 = por %p312, %p313
      %p315 = scmp.ne.s32.totalorder %s303, %s304
      %p316 = scmp.eq.s32.totalorder %s42, 1
      %p317 = por %p315, %p316
      %p319 = scmp.ne.s32.totalorder %s304, %s318
      %p320 = scmp.eq.s32.totalorder %s42, 0
      %p321 = por %p319, %p320
      %s323 = sadd.s32 %s322, 1
      %p326 = scmp.eq.s32.totalorder %s36, 1
      %p327 = scmp.ne.s32.totalorder %s322, %s324
      %p328 = scmp.eq.s32.totalorder %s36, 0
      %p329 = por %p327, %p328
      %p330 = scmp.ne.s32.totalorder %s322, %s324
      %p331 = scmp.eq.s32.totalorder %s41, 1
      %p332 = por %p330, %p331
      %p333 = scmp.ne.s32.totalorder %s324, %s325
      %p334 = scmp.eq.s32.totalorder %s41, 0
      %p335 = por %p333, %p334
      %p336 = scmp.ne.s32.totalorder %s324, %s325
      %p337 = scmp.eq.s32.totalorder %s42, 1
      %p338 = por %p336, %p337
      %p340 = scmp.ne.s32.totalorder %s325, %s339
      %p341 = scmp.eq.s32.totalorder %s42, 0
      %p342 = por %p340, %p341
      %s344 = sadd.s32 %s343, 1
      %p347 = scmp.eq.s32.totalorder %s36, 1
      %p348 = scmp.ne.s32.totalorder %s343, %s345
      %p349 = scmp.eq.s32.totalorder %s36, 0
      %p350 = por %p348, %p349
      %p351 = scmp.ne.s32.totalorder %s343, %s345
      %p352 = scmp.eq.s32.totalorder %s41, 1
      %p353 = por %p351, %p352
      %p354 = scmp.ne.s32.totalorder %s345, %s346
      %p355 = scmp.eq.s32.totalorder %s41, 0
      %p356 = por %p354, %p355
      %p357 = scmp.ne.s32.totalorder %s345, %s346
      %p358 = scmp.eq.s32.totalorder %s42, 1
      %p359 = por %p357, %p358
      %p361 = scmp.ne.s32.totalorder %s346, %s360
      %p362 = scmp.eq.s32.totalorder %s42, 0
      %p363 = por %p361, %p362
      %s365 = sadd.s32 %s364, 1
      %p368 = scmp.eq.s32.totalorder %s36, 1
      %p369 = scmp.ne.s32.totalorder %s364, %s366
      %p370 = scmp.eq.s32.totalorder %s36, 0
      %p371 = por %p369, %p370
      %p372 = scmp.ne.s32.totalorder %s364, %s366
      %p373 = scmp.eq.s32.totalorder %s41, 1
      %p374 = por %p372, %p373
      %p375 = scmp.ne.s32.totalorder %s366, %s367
      %p376 = scmp.eq.s32.totalorder %s41, 0
      %p377 = por %p375, %p376
      %p378 = scmp.ne.s32.totalorder %s366, %s367
      %p379 = scmp.eq.s32.totalorder %s42, 1
      %p380 = por %p378, %p379
      %p382 = scmp.ne.s32.totalorder %s367, %s381
      %p383 = scmp.eq.s32.totalorder %s42, 0
      %p384 = por %p382, %p383
      %s386 = sadd.s32 %s385, 1
      %p389 = scmp.eq.s32.totalorder %s36, 1
      %p390 = scmp.ne.s32.totalorder %s385, %s387
      %p391 = scmp.eq.s32.totalorder %s36, 0
      %p392 = por %p390, %p391
      %p393 = scmp.ne.s32.totalorder %s385, %s387
      %p394 = scmp.eq.s32.totalorder %s41, 1
      %p395 = por %p393, %p394
      %p396 = scmp.ne.s32.totalorder %s387, %s388
      %p397 = scmp.eq.s32.totalorder %s41, 0
      %p398 = por %p396, %p397
      %p399 = scmp.ne.s32.totalorder %s387, %s388
      %p400 = scmp.eq.s32.totalorder %s42, 1
      %p401 = por %p399, %p400
      %p403 = scmp.ne.s32.totalorder %s388, %s402
      %p404 = scmp.eq.s32.totalorder %s42, 0
      %p405 = por %p403, %p404
      %s407 = sadd.s32 %s406, 1
      %p410 = scmp.eq.s32.totalorder %s36, 1
      %p411 = scmp.ne.s32.totalorder %s406, %s408
      %p412 = scmp.eq.s32.totalorder %s36, 0
      %p413 = por %p411, %p412
      %p414 = scmp.ne.s32.totalorder %s406, %s408
      %p415 = scmp.eq.s32.totalorder %s41, 1
      %p416 = por %p414, %p415
      %p417 = scmp.ne.s32.totalorder %s408, %s409
      %p418 = scmp.eq.s32.totalorder %s41, 0
      %p419 = por %p417, %p418
      %p420 = scmp.ne.s32.totalorder %s408, %s409
      %p421 = scmp.eq.s32.totalorder %s42, 1
      %p422 = por %p420, %p421
      %p424 = scmp.ne.s32.totalorder %s409, %s423
      %p425 = scmp.eq.s32.totalorder %s42, 0
      %p426 = por %p424, %p425
      %s428 = sadd.s32 %s427, 1
      %p431 = scmp.eq.s32.totalorder %s36, 1
      %p432 = scmp.ne.s32.totalorder %s427, %s429
      %p433 = scmp.eq.s32.totalorder %s36, 0
      %p434 = por %p432, %p433
      %p435 = scmp.ne.s32.totalorder %s427, %s429
      %p436 = scmp.eq.s32.totalorder %s41, 1
      %p437 = por %p435, %p436
      %p438 = scmp.ne.s32.totalorder %s429, %s430
      %p439 = scmp.eq.s32.totalorder %s41, 0
      %p440 = por %p438, %p439
      %p441 = scmp.ne.s32.totalorder %s429, %s430
      %p442 = scmp.eq.s32.totalorder %s42, 1
      %p443 = por %p441, %p442
      %p445 = scmp.ne.s32.totalorder %s430, %s444
      %p446 = scmp.eq.s32.totalorder %s42, 0
      %p447 = por %p445, %p446
      %s449 = sadd.s32 %s448, 1
      %p452 = scmp.eq.s32.totalorder %s36, 1
      %p453 = scmp.ne.s32.totalorder %s448, %s450
      %p454 = scmp.eq.s32.totalorder %s36, 0
      %p455 = por %p453, %p454
      %p456 = scmp.ne.s32.totalorder %s448, %s450
      %p457 = scmp.eq.s32.totalorder %s41, 1
      %p458 = por %p456, %p457
      %p459 = scmp.ne.s32.totalorder %s450, %s451
      %p460 = scmp.eq.s32.totalorder %s41, 0
      %p461 = por %p459, %p460
      %p462 = scmp.ne.s32.totalorder %s450, %s451
      %p463 = scmp.eq.s32.totalorder %s42, 1
      %p464 = por %p462, %p463
      %p466 = scmp.ne.s32.totalorder %s451, %s465
      %p467 = scmp.eq.s32.totalorder %s42, 0
      %p468 = por %p466, %p467
      %s470 = sadd.s32 %s469, 1
      %p473 = scmp.eq.s32.totalorder %s36, 1
      %p474 = scmp.ne.s32.totalorder %s469, %s471
      %p475 = scmp.eq.s32.totalorder %s36, 0
      %p476 = por %p474, %p475
      %p477 = scmp.ne.s32.totalorder %s469, %s471
      %p478 = scmp.eq.s32.totalorder %s41, 1
      %p479 = por %p477, %p478
      %p480 = scmp.ne.s32.totalorder %s471, %s472
      %p481 = scmp.eq.s32.totalorder %s41, 0
      %p482 = por %p480, %p481
      %p483 = scmp.ne.s32.totalorder %s471, %s472
      %p484 = scmp.eq.s32.totalorder %s42, 1
      %p485 = por %p483, %p484
      %p487 = scmp.ne.s32.totalorder %s472, %s486
      %p488 = scmp.eq.s32.totalorder %s42, 0
      %p489 = por %p487, %p488
      %s491 = sadd.s32 %s490, 1
      %p494 = scmp.eq.s32.totalorder %s36, 1
      %p495 = scmp.ne.s32.totalorder %s490, %s492
      %p496 = scmp.eq.s32.totalorder %s36, 0
      %p497 = por %p495, %p496
      %p498 = scmp.ne.s32.totalorder %s490, %s492
      %p499 = scmp.eq.s32.totalorder %s41, 1
      %p500 = por %p498, %p499
      %p501 = scmp.ne.s32.totalorder %s492, %s493
      %p502 = scmp.eq.s32.totalorder %s41, 0
      %p503 = por %p501, %p502
      %p504 = scmp.ne.s32.totalorder %s492, %s493
      %p505 = scmp.eq.s32.totalorder %s42, 1
      %p506 = por %p504, %p505
      %p508 = scmp.ne.s32.totalorder %s493, %s507
      %p509 = scmp.eq.s32.totalorder %s42, 0
      %p510 = por %p508, %p509
      %s512 = sadd.s32 %s511, 1
      %p515 = scmp.eq.s32.totalorder %s36, 1
      %p516 = scmp.ne.s32.totalorder %s511, %s513
      %p517 = scmp.eq.s32.totalorder %s36, 0
      %p518 = por %p516, %p517
      %p519 = scmp.ne.s32.totalorder %s511, %s513
      %p520 = scmp.eq.s32.totalorder %s41, 1
      %p521 = por %p519, %p520
      %p522 = scmp.ne.s32.totalorder %s513, %s514
      %p523 = scmp.eq.s32.totalorder %s41, 0
      %p524 = por %p522, %p523
      %p525 = scmp.ne.s32.totalorder %s513, %s514
      %p526 = scmp.eq.s32.totalorder %s42, 1
      %p527 = por %p525, %p526
      %p529 = scmp.ne.s32.totalorder %s514, %s528
      %p530 = scmp.eq.s32.totalorder %s42, 0
      %p531 = por %p529, %p530
      %s533 = sadd.s32 %s532, 1
      %p536 = scmp.eq.s32.totalorder %s36, 1
      %p537 = scmp.ne.s32.totalorder %s532, %s534
      %p538 = scmp.eq.s32.totalorder %s36, 0
      %p539 = por %p537, %p538
      %p540 = scmp.ne.s32.totalorder %s532, %s534
      %p541 = scmp.eq.s32.totalorder %s41, 1
      %p542 = por %p540, %p541
      %p543 = scmp.ne.s32.totalorder %s534, %s535
      %p544 = scmp.eq.s32.totalorder %s41, 0
      %p545 = por %p543, %p544
      %p546 = scmp.ne.s32.totalorder %s534, %s535
      %p547 = scmp.eq.s32.totalorder %s42, 1
      %p548 = por %p546, %p547
      %p550 = scmp.ne.s32.totalorder %s535, %s549
      %p551 = scmp.eq.s32.totalorder %s42, 0
      %p552 = por %p550, %p551
      %s554 = sadd.s32 %s553, 1
      %p557 = scmp.eq.s32.totalorder %s36, 1
      %p558 = scmp.ne.s32.totalorder %s553, %s555
      %p559 = scmp.eq.s32.totalorder %s36, 0
      %p560 = por %p558, %p559
      %p561 = scmp.ne.s32.totalorder %s553, %s555
      %p562 = scmp.eq.s32.totalorder %s41, 1
      %p563 = por %p561, %p562
      %p564 = scmp.ne.s32.totalorder %s555, %s556
      %p565 = scmp.eq.s32.totalorder %s41, 0
      %p566 = por %p564, %p565
      %p567 = scmp.ne.s32.totalorder %s555, %s556
      %p568 = scmp.eq.s32.totalorder %s42, 1
      %p569 = por %p567, %p568
      %p571 = scmp.ne.s32.totalorder %s556, %s570
      %p572 = scmp.eq.s32.totalorder %s42, 0
      %p573 = por %p571, %p572
      %s574 = ssub.s32 %s36, %s43
      %p575 = scmp.eq.s32.totalorder %s574, 0
      %s577 = sadd.s32 %s576, 1
      %s578 = scalar_select %p575, %s576, %s577
      %p581 = pneg %p575
      %p582 = scmp.eq.s32.totalorder %s36, 1
      %p583 = por %p581, %p582
      %p584 = scmp.ne.s32.totalorder %s576, %s579
      %p585 = scmp.eq.s32.totalorder %s36, 0
      %p586 = por %p584, %p585
      %p587 = scmp.ne.s32.totalorder %s576, %s579
      %p588 = scmp.eq.s32.totalorder %s41, 1
      %p589 = por %p587, %p588
      %p590 = scmp.ne.s32.totalorder %s579, %s580
      %p591 = scmp.eq.s32.totalorder %s41, 0
      %p592 = por %p590, %p591
      %p593 = scmp.ne.s32.totalorder %s579, %s580
      %p594 = scmp.eq.s32.totalorder %s42, 1
      %p595 = por %p593, %p594
      %p597 = scmp.ne.s32.totalorder %s580, %s596
      %p598 = scmp.eq.s32.totalorder %s42, 0
      %p599 = por %p597, %p598
      %s600 = ssub.s32 %s36, %s43
      %p601 = scmp.eq.s32.totalorder %s600, 0
      %s603 = sadd.s32 %s602, 1
      %s604 = scalar_select %p601, %s602, %s603
      %p607 = pneg %p601
      %p608 = scmp.eq.s32.totalorder %s36, 1
      %p609 = por %p607, %p608
      %p610 = scmp.ne.s32.totalorder %s602, %s605
      %p611 = scmp.eq.s32.totalorder %s36, 0
      %p612 = por %p610, %p611
      %p613 = scmp.ne.s32.totalorder %s602, %s605
      %p614 = scmp.eq.s32.totalorder %s41, 1
      %p615 = por %p613, %p614
      %p616 = scmp.ne.s32.totalorder %s605, %s606
      %p617 = scmp.eq.s32.totalorder %s41, 0
      %p618 = por %p616, %p617
      %p619 = scmp.ne.s32.totalorder %s605, %s606
      %p620 = scmp.eq.s32.totalorder %s42, 1
      %p621 = por %p619, %p620
      %p623 = scmp.ne.s32.totalorder %s606, %s622
      %p624 = scmp.eq.s32.totalorder %s42, 0
      %p625 = por %p623, %p624
      %p626 = scmp.le.s32.totalorder 1, %s36
      %p627 = scmp.lt.s32.totalorder %s36, 3
      %p628 = pnand %p626, %p627
      %p629 = pneg %p628
      // Predicated region
      $region9: #{cnn_conformer_forward.18} parent=5 // pred_check
        _
      $region10: #{cnn_conformer_forward.18} parent=5 // pred_check_branch
        %631 = sbr.rel (%p628) target = $region12
      $region11: #{cnn_conformer_forward.18} parent=5 // pred_region
        %s632 = ssub.s32 %s36, 1
        // Predicated region
        $region13: #{cnn_conformer_forward.18} parent=11 // pred_check
          %p633 = pneg %p83
        $region14: #{cnn_conformer_forward.18} parent=11 // pred_check_branch
          %635 = sbr.rel (%p633) target = $region16
        $region15: #{cnn_conformer_forward.18} parent=11 // pred_region
          _
        $region16: #{cnn_conformer_forward.18} parent=11 // pred_fallthru
          _
        // Predicated region
        $region17: #{cnn_conformer_forward.18} parent=11 // pred_check
          %p636 = pneg %p104
        $region18: #{cnn_conformer_forward.18} parent=11 // pred_check_branch
          %638 = sbr.rel (%p636) target = $region20
        $region19: #{cnn_conformer_forward.18} parent=11 // pred_region
          _
        $region20: #{cnn_conformer_forward.18} parent=11 // pred_fallthru
          _
        // Predicated region
        $region21: #{cnn_conformer_forward.18} parent=11 // pred_check
          %p639 = pneg %p125
        $region22: #{cnn_conformer_forward.18} parent=11 // pred_check_branch
          %641 = sbr.rel (%p639) target = $region24
        $region23: #{cnn_conformer_forward.18} parent=11 // pred_region
          _
        $region24: #{cnn_conformer_forward.18} parent=11 // pred_fallthru
          _
        // Predicated region
        $region25: #{cnn_conformer_forward.18} parent=11 // pred_check
          %p642 = pneg %p146
        $region26: #{cnn_conformer_forward.18} parent=11 // pred_check_branch
          %644 = sbr.rel (%p642) target = $region28
        $region27: #{cnn_conformer_forward.18} parent=11 // pred_region
          _
        $region28: #{cnn_conformer_forward.18} parent=11 // pred_fallthru
          _
        // Predicated region
        $region29: #{cnn_conformer_forward.18} parent=11 // pred_check
          %p645 = pneg %p167
        $region30: #{cnn_conformer_forward.18} parent=11 // pred_check_branch
          %647 = sbr.rel (%p645) target = $region32
        $region31: #{cnn_conformer_forward.18} parent=11 // pred_region
          _
        $region32: #{cnn_conformer_forward.18} parent=11 // pred_fallthru
          _
        // Predicated region
        $region33: #{cnn_conformer_forward.18} parent=11 // pred_check
          %p648 = pneg %p188
        $region34: #{cnn_conformer_forward.18} parent=11 // pred_check_branch
          %650 = sbr.rel (%p648) target = $region36
        $region35: #{cnn_conformer_forward.18} parent=11 // pred_region
          _
        $region36: #{cnn_conformer_forward.18} parent=11 // pred_fallthru
          _
        // Predicated region
        $region37: #{cnn_conformer_forward.18} parent=11 // pred_check
          %p651 = pneg %p209
        $region38: #{cnn_conformer_forward.18} parent=11 // pred_check_branch
          %653 = sbr.rel (%p651) target = $region40
        $region39: #{cnn_conformer_forward.18} parent=11 // pred_region
          _
        $region40: #{cnn_conformer_forward.18} parent=11 // pred_fallthru
          _
        // Predicated region
        $region41: #{cnn_conformer_forward.18} parent=11 // pred_check
          %p654 = pneg %p230
        $region42: #{cnn_conformer_forward.18} parent=11 // pred_check_branch
          %656 = sbr.rel (%p654) target = $region44
        $region43: #{cnn_conformer_forward.18} parent=11 // pred_region
          _
        $region44: #{cnn_conformer_forward.18} parent=11 // pred_fallthru
          _
        // Predicated region
        $region45: #{cnn_conformer_forward.18} parent=11 // pred_check
          %p657 = pneg %p251
        $region46: #{cnn_conformer_forward.18} parent=11 // pred_check_branch
          %659 = sbr.rel (%p657) target = $region48
        $region47: #{cnn_conformer_forward.18} parent=11 // pred_region
          _
        $region48: #{cnn_conformer_forward.18} parent=11 // pred_fallthru
          _
        // Predicated region
        $region49: #{cnn_conformer_forward.18} parent=11 // pred_check
          %p660 = pneg %p272
        $region50: #{cnn_conformer_forward.18} parent=11 // pred_check_branch
          %662 = sbr.rel (%p660) target = $region52
        $region51: #{cnn_conformer_forward.18} parent=11 // pred_region
          _
        $region52: #{cnn_conformer_forward.18} parent=11 // pred_fallthru
          _
        // Predicated region
        $region53: #{cnn_conformer_forward.18} parent=11 // pred_check
          %p663 = pneg %p293
        $region54: #{cnn_conformer_forward.18} parent=11 // pred_check_branch
          %665 = sbr.rel (%p663) target = $region56
        $region55: #{cnn_conformer_forward.18} parent=11 // pred_region
          _
        $region56: #{cnn_conformer_forward.18} parent=11 // pred_fallthru
          _
        // Predicated region
        $region57: #{cnn_conformer_forward.18} parent=11 // pred_check
          %p666 = pneg %p314
        $region58: #{cnn_conformer_forward.18} parent=11 // pred_check_branch
          %668 = sbr.rel (%p666) target = $region60
        $region59: #{cnn_conformer_forward.18} parent=11 // pred_region
          _
        $region60: #{cnn_conformer_forward.18} parent=11 // pred_fallthru
          _
        // Predicated region
        $region61: #{cnn_conformer_forward.18} parent=11 // pred_check
          %p669 = pneg %p335
        $region62: #{cnn_conformer_forward.18} parent=11 // pred_check_branch
          %671 = sbr.rel (%p669) target = $region64
        $region63: #{cnn_conformer_forward.18} parent=11 // pred_region
          _
        $region64: #{cnn_conformer_forward.18} parent=11 // pred_fallthru
          _
        // Predicated region
        $region65: #{cnn_conformer_forward.18} parent=11 // pred_check
          %p672 = pneg %p356
        $region66: #{cnn_conformer_forward.18} parent=11 // pred_check_branch
          %674 = sbr.rel (%p672) target = $region68
        $region67: #{cnn_conformer_forward.18} parent=11 // pred_region
          _
        $region68: #{cnn_conformer_forward.18} parent=11 // pred_fallthru
          _
        // Predicated region
        $region69: #{cnn_conformer_forward.18} parent=11 // pred_check
          %p675 = pneg %p377
        $region70: #{cnn_conformer_forward.18} parent=11 // pred_check_branch
          %677 = sbr.rel (%p675) target = $region72
        $region71: #{cnn_conformer_forward.18} parent=11 // pred_region
          _
        $region72: #{cnn_conformer_forward.18} parent=11 // pred_fallthru
          _
        // Predicated region
        $region73: #{cnn_conformer_forward.18} parent=11 // pred_check
          %p678 = pneg %p398
        $region74: #{cnn_conformer_forward.18} parent=11 // pred_check_branch
          %680 = sbr.rel (%p678) target = $region76
        $region75: #{cnn_conformer_forward.18} parent=11 // pred_region
          _
        $region76: #{cnn_conformer_forward.18} parent=11 // pred_fallthru
          _
        // Predicated region
        $region77: #{cnn_conformer_forward.18} parent=11 // pred_check
          %p681 = pneg %p419
        $region78: #{cnn_conformer_forward.18} parent=11 // pred_check_branch
          %683 = sbr.rel (%p681) target = $region80
        $region79: #{cnn_conformer_forward.18} parent=11 // pred_region
          _
        $region80: #{cnn_conformer_forward.18} parent=11 // pred_fallthru
          _
        // Predicated region
        $region81: #{cnn_conformer_forward.18} parent=11 // pred_check
          %p684 = pneg %p440
        $region82: #{cnn_conformer_forward.18} parent=11 // pred_check_branch
          %686 = sbr.rel (%p684) target = $region84
        $region83: #{cnn_conformer_forward.18} parent=11 // pred_region
          _
        $region84: #{cnn_conformer_forward.18} parent=11 // pred_fallthru
          _
        // Predicated region
        $region85: #{cnn_conformer_forward.18} parent=11 // pred_check
          %p687 = pneg %p461
        $region86: #{cnn_conformer_forward.18} parent=11 // pred_check_branch
          %689 = sbr.rel (%p687) target = $region88
        $region87: #{cnn_conformer_forward.18} parent=11 // pred_region
          _
        $region88: #{cnn_conformer_forward.18} parent=11 // pred_fallthru
          _
        // Predicated region
        $region89: #{cnn_conformer_forward.18} parent=11 // pred_check
          %p690 = pneg %p482
        $region90: #{cnn_conformer_forward.18} parent=11 // pred_check_branch
          %692 = sbr.rel (%p690) target = $region92
        $region91: #{cnn_conformer_forward.18} parent=11 // pred_region
          _
        $region92: #{cnn_conformer_forward.18} parent=11 // pred_fallthru
          _
        // Predicated region
        $region93: #{cnn_conformer_forward.18} parent=11 // pred_check
          %p693 = pneg %p503
        $region94: #{cnn_conformer_forward.18} parent=11 // pred_check_branch
          %695 = sbr.rel (%p693) target = $region96
        $region95: #{cnn_conformer_forward.18} parent=11 // pred_region
          _
        $region96: #{cnn_conformer_forward.18} parent=11 // pred_fallthru
          _
        // Predicated region
        $region97: #{cnn_conformer_forward.18} parent=11 // pred_check
          %p696 = pneg %p524
        $region98: #{cnn_conformer_forward.18} parent=11 // pred_check_branch
          %698 = sbr.rel (%p696) target = $region100
        $region99: #{cnn_conformer_forward.18} parent=11 // pred_region
          _
        $region100: #{cnn_conformer_forward.18} parent=11 // pred_fallthru
          _
        // Predicated region
        $region101: #{cnn_conformer_forward.18} parent=11 // pred_check
          %p699 = pneg %p545
        $region102: #{cnn_conformer_forward.18} parent=11 // pred_check_branch
          %701 = sbr.rel (%p699) target = $region104
        $region103: #{cnn_conformer_forward.18} parent=11 // pred_region
          _
        $region104: #{cnn_conformer_forward.18} parent=11 // pred_fallthru
          _
        // Predicated region
        $region105: #{cnn_conformer_forward.18} parent=11 // pred_check
          %p702 = pneg %p566
        $region106: #{cnn_conformer_forward.18} parent=11 // pred_check_branch
          %704 = sbr.rel (%p702) target = $region108
        $region107: #{cnn_conformer_forward.18} parent=11 // pred_region
          _
        $region108: #{cnn_conformer_forward.18} parent=11 // pred_fallthru
          _
      $region12: #{cnn_conformer_forward.18} parent=5 // pred_fallthru
        _
      %p705 = scmp.lt.s32.totalorder %s36, 2
      // Predicated region
      $region109: #{cnn_conformer_forward.18} parent=5 // pred_check
        %p706 = pneg %p705
      $region110: #{cnn_conformer_forward.18} parent=5 // pred_check_branch
        %708 = sbr.rel (%p706) target = $region112
      $region111: #{cnn_conformer_forward.18} parent=5 // pred_region
        // Predicated region
        $region113: #{cnn_conformer_forward.18} parent=111 // pred_check
          %p709 = pneg %p56
        $region114: #{cnn_conformer_forward.18} parent=111 // pred_check_branch
          %711 = sbr.rel (%p709) target = $region116
        $region115: #{cnn_conformer_forward.18} parent=111 // pred_region
          %p712 = scmp.lt.s32.totalorder %s36, 1
          %s713 = scalar_select %p712, %s36, 1
          %s714 = smul.addr %s713, 8
          %s715 = scalar_lea.vmem %s0, %s714
        $region116: #{cnn_conformer_forward.18} parent=111 // pred_fallthru
          _
      $region112: #{cnn_conformer_forward.18} parent=5 // pred_fallthru
        _
      %p716 = scmp.le.s32.totalorder 1, %s36
      %p717 = scmp.lt.s32.totalorder %s36, 3
      %p718 = pnand %p716, %p717
      %p719 = pneg %p718
      // Predicated region
      $region117: #{cnn_conformer_forward.18} parent=5 // pred_check
        _
      $region118: #{cnn_conformer_forward.18} parent=5 // pred_check_branch
        %721 = sbr.rel (%p718) target = $region120
      $region119: #{cnn_conformer_forward.18} parent=5 // pred_region
        %s722 = ssub.s32 %s36, 1
        %p723 = scmp.lt.s32.totalorder %s41, 1
        %s724 = scalar_select %p723, %s41, 1
        %s725 = smul.addr %s724, 8
        %s726 = scalar_lea.vmem %s0, %s725
        %p727 = pneg %p62
        %p728 = pneg %p59
        %p729 = pneg %p83
        %p730 = pneg %p80
        %p731 = pneg %p104
        %p732 = pneg %p101
        %p733 = pneg %p125
        %p734 = pneg %p122
        %p735 = pneg %p146
        %p736 = pneg %p143
        %p737 = pneg %p167
        %p738 = pneg %p164
        %p739 = pneg %p188
        %p740 = pneg %p185
        %p741 = pneg %p209
        %p742 = pneg %p206
        %p743 = pneg %p230
        %p744 = pneg %p227
        %p745 = pneg %p251
        %p746 = pneg %p248
        %p747 = pneg %p272
        %p748 = pneg %p269
        %p749 = pneg %p293
        %p750 = pneg %p290
        %p751 = pneg %p314
        %p752 = pneg %p311
        %p753 = pneg %p335
        %p754 = pneg %p332
        %p755 = pneg %p356
        %p756 = pneg %p353
        %p757 = pneg %p377
        %p758 = pneg %p374
        %p759 = pneg %p398
        %p760 = pneg %p395
        %p761 = pneg %p419
        %p762 = pneg %p416
        %p763 = pneg %p440
        %p764 = pneg %p437
        %p765 = pneg %p461
        %p766 = pneg %p458
        %p767 = pneg %p482
        %p768 = pneg %p479
        %p769 = pneg %p503
        %p770 = pneg %p500
        %p771 = pneg %p524
        %p772 = pneg %p521
        %p773 = pneg %p545
        %p774 = pneg %p542
        %p775 = pneg %p566
        %p776 = pneg %p563
        %p777 = pneg %p592
        %p778 = pneg %p589
        %s779 = sand.u32 %s579, 1
        %s780 = scalar_lea.sflag [#allocation3], %s779
        %s781 = sand.u32 %s579, 1
        %s782 = smul.addr %s781, 8
        %s783 = scalar_lea.vmem [#allocation2], %s782
        %p784 = pneg %p618
        %p785 = pneg %p615
        %p786 = scmp.lt.s32.totalorder %s41, 1
        %s787 = scalar_select %p786, %s41, 1
        %s788 = scalar_lea.vmem %s26, %s787
        %p789 = scmp.lt.s32.totalorder %s41, 1
        %s790 = scalar_select %p789, %s41, 1
        %s791 = smul.addr %s790, 8
        %s792 = scalar_lea.vmem %s0, %s791
        %p793 = scmp.lt.s32.totalorder %s41, 1
        %s794 = scalar_select %p793, %s41, 1
        %s795 = scalar_lea.vmem %s26, %s794
        %v797 = vld [vmem:[%s792] sm:$0xff]
        %v798 = vld [vmem:[%s2] sm:$0x1]
        %v799 = vld [vmem:[%s3] sm:$0x1]
        %800 = vadd.xlane.f32.xlu0 %v797
        %v801 = vpop.xlane.xlu0 %800
        %v802 = vrcp.pop 128.0
        %v803 = vmul.f32 %v801, %v802
        %v804 = vsub.f32 %v797, %v803
        %v805 = vmul.f32 %v804, %v804
        %806 = vadd.xlane.f32.xlu0 %v805
        %v807 = vpop.xlane.xlu0 %806
        %v808 = vmul.f32 %v807, %v802
        %v809 = vadd.f32 %v808, 1e-05
        %v810 = vrsqrt.pop %v809
        %v811 = vmul.f32 %v804, %v810
        %v812 = vlaneseq
        %v813 = vshrl.u32 %v812, 7
        %v814 = vsub.s32 0, %v813
        %v815 = vrot.slane %v798, %v814
        %v816 = vmul.f32 %v811, %v815
        %v817 = vlaneseq
        %v818 = vshrl.u32 %v817, 7
        %v819 = vsub.s32 0, %v818
        %v820 = vrot.slane %v799, %v819
        %v821 = vadd.f32 %v816, %v820
        %v822 = vpack.c.bf16 %v821, %v821
        %v823 = vld [vmem:[%s4] sm:$0xff]
        %v824 = vld [vmem:[%s4 + $0x8] sm:$0xff]
        %v825 = vld [vmem:[%s4 + $0x10] sm:$0xff]
        %v826 = vld [vmem:[%s4 + $0x18] sm:$0xff]
        %v827 = vld [vmem:[%s4 + $0x20] sm:$0xff]
        %v828 = vld [vmem:[%s4 + $0x28] sm:$0xff]
        %v829 = vld [vmem:[%s4 + $0x30] sm:$0xff]
        %v830 = vld [vmem:[%s4 + $0x38] sm:$0xff]
        %v831 = vld [vmem:[%s4 + $0x40] sm:$0xff]
        %v832 = vld [vmem:[%s4 + $0x48] sm:$0xff]
        %v833 = vld [vmem:[%s4 + $0x50] sm:$0xff]
        %v834 = vld [vmem:[%s4 + $0x58] sm:$0xff]
        %v835 = vld [vmem:[%s4 + $0x60] sm:$0xff]
        %v836 = vld [vmem:[%s4 + $0x68] sm:$0xff]
        %v837 = vld [vmem:[%s4 + $0x70] sm:$0xff]
        %v838 = vld [vmem:[%s4 + $0x78] sm:$0xff]
        %v839 = vld [vmem:[%s5] sm:$0x3]
        %v841 = vlaneseq
        %v842 = vshrl.u32 %v841, 7
        %v843 = vsub.s32 0, %v842
        %v844 = vrot.slane %v839, %v843
        %v845 = vlaneseq
        %v846 = vshrl.u32 %v845, 7
        %v847 = vsub.s32 1, %v846
        %v848 = vrot.slane %v839, %v847
        %v867 = vunpack.c.l.b16 %v823
        %v868 = vunpack.c.h.b16 %v823
        %v869 = vunpack.c.l.b16 %v824
        %v870 = vunpack.c.h.b16 %v824
        %v871 = vunpack.c.l.b16 %v825
        %v872 = vunpack.c.h.b16 %v825
        %v873 = vunpack.c.l.b16 %v826
        %v874 = vunpack.c.h.b16 %v826
        %v875 = vunpack.c.l.b16 %v827
        %v876 = vunpack.c.h.b16 %v827
        %v877 = vunpack.c.l.b16 %v828
        %v878 = vunpack.c.h.b16 %v828
        %v879 = vunpack.c.l.b16 %v829
        %v880 = vunpack.c.h.b16 %v829
        %v881 = vunpack.c.l.b16 %v830
        %v882 = vunpack.c.h.b16 %v830
        %v883 = vunpack.c.l.b16 %v831
        %v884 = vunpack.c.h.b16 %v831
        %v885 = vunpack.c.l.b16 %v832
        %v886 = vunpack.c.h.b16 %v832
        %v887 = vunpack.c.l.b16 %v833
        %v888 = vunpack.c.h.b16 %v833
        %v889 = vunpack.c.l.b16 %v834
        %v890 = vunpack.c.h.b16 %v834
        %v891 = vunpack.c.l.b16 %v835
        %v892 = vunpack.c.h.b16 %v835
        %v893 = vunpack.c.l.b16 %v836
        %v894 = vunpack.c.h.b16 %v836
        %v895 = vunpack.c.l.b16 %v837
        %v896 = vunpack.c.h.b16 %v837
        %v897 = vunpack.c.l.b16 %v838
        %v898 = vunpack.c.h.b16 %v838
        %v899 = vpack.c.b16 %v869, %v867
        %v900 = vpack.c.b16 %v870, %v868
        %v901 = vpack.c.b16 %v873, %v871
        %v902 = vpack.c.b16 %v874, %v872
        %v903 = vpack.c.b16 %v877, %v875
        %v904 = vpack.c.b16 %v878, %v876
        %v905 = vpack.c.b16 %v881, %v879
        %v906 = vpack.c.b16 %v882, %v880
        %v907 = vpack.c.b16 %v885, %v883
        %v908 = vpack.c.b16 %v886, %v884
        %v909 = vpack.c.b16 %v889, %v887
        %v910 = vpack.c.b16 %v890, %v888
        %v911 = vpack.c.b16 %v893, %v891
        %v912 = vpack.c.b16 %v894, %v892
        %v913 = vpack.c.b16 %v897, %v895
        %v914 = vpack.c.b16 %v898, %v896
        %931 = vmatprep.subr.bf16.mxu0 %v914
        %932 = vmatpush1.bf16.msra.mxu0 %v913
        %933 = vmatprep.subr.bf16.mxu0 %v912
        %934 = vmatpush1.bf16.msra.mxu0 %v911
        %935 = vmatprep.subr.bf16.mxu0 %v910
        %936 = vmatpush1.bf16.msra.mxu0 %v909
        %937 = vmatprep.subr.bf16.mxu0 %v908
        %938 = vmatpush1.bf16.msra.mxu0 %v907
        %939 = vmatprep.subr.bf16.mxu0 %v906
        %940 = vmatpush1.bf16.msra.mxu0 %v905
        %941 = vmatprep.subr.bf16.mxu0 %v904
        %942 = vmatpush1.bf16.msra.mxu0 %v903
        %943 = vmatprep.subr.bf16.mxu0 %v902
        %944 = vmatpush1.bf16.msra.mxu0 %v901
        %945 = vmatprep.subr.bf16.mxu0 %v900
        %946 = vmatpush1.bf16.msra.mxu0 %v899
        %947 = vmatprep.subr.bf16.mxu0 0
        %948 = vmatpush2.bf16.msra.mxu0 0
        %949 = vmatprep.subr.bf16.mxu0 0
        %950 = vmatpush2.bf16.msra.mxu0 0
        %951 = vmatprep.subr.bf16.mxu0 0
        %952 = vmatpush2.bf16.msra.mxu0 0
        %953 = vmatprep.subr.bf16.mxu0 0
        %954 = vmatpush2.bf16.msra.mxu0 0
        %955 = vmatprep.subr.bf16.mxu0 0
        %956 = vmatpush2.bf16.msra.mxu0 0
        %957 = vmatprep.subr.bf16.mxu0 0
        %958 = vmatpush2.bf16.msra.mxu0 0
        %959 = vmatprep.subr.bf16.mxu0 0
        %960 = vmatpush2.bf16.msra.mxu0 0
        %961 = vmatprep.subr.bf16.mxu0 0
        %962 = vmatpush2.bf16.msra.mxu0 0
        %963 = vmatprep.mubr.bf16.mxu0 0
        %964 = vmatmul.mubr.bf16.gmra.mxu0 %v822
        %v965 = vpop.f32.mrf.mxu0
        %v966 = vadd.f32 %v844, %v965
        %v967 = vpop.f32.mrf.mxu0
        %v968 = vadd.f32 %v848, %v967
        %v969 = vpop.f32.mrf.mxu0
        %v970 = vpop.f32.mrf.mxu0
        %971 = vdwg.mxu0
        %v972 = vxor.u32 %v966, 2147483648
        %v973 = vxor.u32 %v968, 2147483648
        %v974 = vmul.f32 %v972, 1.442695
        %v975 = vpow.pop %v974
        %v976 = vmul.f32 %v973, 1.442695
        %v977 = vpow.pop %v976
        %v978 = vadd.f32 %v975, 1.0
        %v979 = vadd.f32 %v977, 1.0
        %v980 = vrcp.pop %v978
        %v981 = vmul.f32 1.0, %v980
        %v982 = vrcp.pop %v979
        %v983 = vmul.f32 1.0, %v982
        %v984 = vmul.f32 %v966, %v981
        %v985 = vmul.f32 %v968, %v983
        %v986 = vpack.c.bf16 %v984, %v984
        %v987 = vpack.c.bf16 %v985, %v985
        %v988 = vld [vmem:[%s6] sm:$0xf]
        %v989 = vld [vmem:[%s6 + $0x4] sm:$0xf]
        %v990 = vld [vmem:[%s6 + $0x8] sm:$0xf]
        %v991 = vld [vmem:[%s6 + $0xc] sm:$0xf]
        %v992 = vld [vmem:[%s6 + $0x10] sm:$0xf]
        %v993 = vld [vmem:[%s6 + $0x14] sm:$0xf]
        %v994 = vld [vmem:[%s6 + $0x18] sm:$0xf]
        %v995 = vld [vmem:[%s6 + $0x1c] sm:$0xf]
        %v996 = vld [vmem:[%s6 + $0x20] sm:$0xf]
        %v997 = vld [vmem:[%s6 + $0x24] sm:$0xf]
        %v998 = vld [vmem:[%s6 + $0x28] sm:$0xf]
        %v999 = vld [vmem:[%s6 + $0x2c] sm:$0xf]
        %v1000 = vld [vmem:[%s6 + $0x30] sm:$0xf]
        %v1001 = vld [vmem:[%s6 + $0x34] sm:$0xf]
        %v1002 = vld [vmem:[%s6 + $0x38] sm:$0xf]
        %v1003 = vld [vmem:[%s6 + $0x3c] sm:$0xf]
        %v1004 = vld [vmem:[%s6 + $0x40] sm:$0xf]
        %v1005 = vld [vmem:[%s6 + $0x44] sm:$0xf]
        %v1006 = vld [vmem:[%s6 + $0x48] sm:$0xf]
        %v1007 = vld [vmem:[%s6 + $0x4c] sm:$0xf]
        %v1008 = vld [vmem:[%s6 + $0x50] sm:$0xf]
        %v1009 = vld [vmem:[%s6 + $0x54] sm:$0xf]
        %v1010 = vld [vmem:[%s6 + $0x58] sm:$0xf]
        %v1011 = vld [vmem:[%s6 + $0x5c] sm:$0xf]
        %v1012 = vld [vmem:[%s6 + $0x60] sm:$0xf]
        %v1013 = vld [vmem:[%s6 + $0x64] sm:$0xf]
        %v1014 = vld [vmem:[%s6 + $0x68] sm:$0xf]
        %v1015 = vld [vmem:[%s6 + $0x6c] sm:$0xf]
        %v1016 = vld [vmem:[%s6 + $0x70] sm:$0xf]
        %v1017 = vld [vmem:[%s6 + $0x74] sm:$0xf]
        %v1018 = vld [vmem:[%s6 + $0x78] sm:$0xf]
        %v1019 = vld [vmem:[%s6 + $0x7c] sm:$0xf]
        %v1020 = vld [vmem:[%s7] sm:$0x1]
        %v1022 = vlaneseq
        %v1023 = vshrl.u32 %v1022, 7
        %v1024 = vsub.s32 0, %v1023
        %v1025 = vrot.slane %v1020, %v1024
        %v1059 = vunpack.c.l.b16 %v988
        %v1060 = vunpack.c.l.b16 %v989
        %v1061 = vunpack.c.l.b16 %v990
        %v1062 = vunpack.c.l.b16 %v991
        %v1063 = vunpack.c.l.b16 %v992
        %v1064 = vunpack.c.l.b16 %v993
        %v1065 = vunpack.c.l.b16 %v994
        %v1066 = vunpack.c.l.b16 %v995
        %v1067 = vunpack.c.l.b16 %v996
        %v1068 = vunpack.c.l.b16 %v997
        %v1069 = vunpack.c.l.b16 %v998
        %v1070 = vunpack.c.l.b16 %v999
        %v1071 = vunpack.c.l.b16 %v1000
        %v1072 = vunpack.c.l.b16 %v1001
        %v1073 = vunpack.c.l.b16 %v1002
        %v1074 = vunpack.c.l.b16 %v1003
        %v1075 = vunpack.c.l.b16 %v1004
        %v1076 = vunpack.c.l.b16 %v1005
        %v1077 = vunpack.c.l.b16 %v1006
        %v1078 = vunpack.c.l.b16 %v1007
        %v1079 = vunpack.c.l.b16 %v1008
        %v1080 = vunpack.c.l.b16 %v1009
        %v1081 = vunpack.c.l.b16 %v1010
        %v1082 = vunpack.c.l.b16 %v1011
        %v1083 = vunpack.c.l.b16 %v1012
        %v1084 = vunpack.c.l.b16 %v1013
        %v1085 = vunpack.c.l.b16 %v1014
        %v1086 = vunpack.c.l.b16 %v1015
        %v1087 = vunpack.c.l.b16 %v1016
        %v1088 = vunpack.c.l.b16 %v1017
        %v1089 = vunpack.c.l.b16 %v1018
        %v1090 = vunpack.c.l.b16 %v1019
        %v1091 = vpack.c.b16 %v1060, %v1059
        %v1092 = vpack.c.b16 %v1062, %v1061
        %v1093 = vpack.c.b16 %v1064, %v1063
        %v1094 = vpack.c.b16 %v1066, %v1065
        %v1095 = vpack.c.b16 %v1068, %v1067
        %v1096 = vpack.c.b16 %v1070, %v1069
        %v1097 = vpack.c.b16 %v1072, %v1071
        %v1098 = vpack.c.b16 %v1074, %v1073
        %v1099 = vpack.c.b16 %v1076, %v1075
        %v1100 = vpack.c.b16 %v1078, %v1077
        %v1101 = vpack.c.b16 %v1080, %v1079
        %v1102 = vpack.c.b16 %v1082, %v1081
        %v1103 = vpack.c.b16 %v1084, %v1083
        %v1104 = vpack.c.b16 %v1086, %v1085
        %v1105 = vpack.c.b16 %v1088, %v1087
        %v1106 = vpack.c.b16 %v1090, %v1089
        %1123 = vmatprep.subr.bf16.mxu0 0
        %1124 = vmatpush1.bf16.msra.mxu0 %v1098
        %1125 = vmatprep.subr.bf16.mxu0 0
        %1126 = vmatpush1.bf16.msra.mxu0 %v1097
        %1127 = vmatprep.subr.bf16.mxu0 0
        %1128 = vmatpush1.bf16.msra.mxu0 %v1096
        %1129 = vmatprep.subr.bf16.mxu0 0
        %1130 = vmatpush1.bf16.msra.mxu0 %v1095
        %1131 = vmatprep.subr.bf16.mxu0 0
        %1132 = vmatpush1.bf16.msra.mxu0 %v1094
        %1133 = vmatprep.subr.bf16.mxu0 0
        %1134 = vmatpush1.bf16.msra.mxu0 %v1093
        %1135 = vmatprep.subr.bf16.mxu0 0
        %1136 = vmatpush1.bf16.msra.mxu0 %v1092
        %1137 = vmatprep.subr.bf16.mxu0 0
        %1138 = vmatpush1.bf16.msra.mxu0 %v1091
        %1139 = vmatprep.subr.bf16.mxu0 0
        %1140 = vmatpush2.bf16.msra.mxu0 %v1106
        %1141 = vmatprep.subr.bf16.mxu0 0
        %1142 = vmatpush2.bf16.msra.mxu0 %v1105
        %1143 = vmatprep.subr.bf16.mxu0 0
        %1144 = vmatpush2.bf16.msra.mxu0 %v1104
        %1145 = vmatprep.subr.bf16.mxu0 0
        %1146 = vmatpush2.bf16.msra.mxu0 %v1103
        %1147 = vmatprep.subr.bf16.mxu0 0
        %1148 = vmatpush2.bf16.msra.mxu0 %v1102
        %1149 = vmatprep.subr.bf16.mxu0 0
        %1150 = vmatpush2.bf16.msra.mxu0 %v1101
        %1151 = vmatprep.subr.bf16.mxu0 0
        %1152 = vmatpush2.bf16.msra.mxu0 %v1100
        %1153 = vmatprep.subr.bf16.mxu0 0
        %1154 = vmatpush2.bf16.msra.mxu0 %v1099
        %1155 = vmatprep.mubr.bf16.mxu0 %v987
        %1156 = vmatmul.mubr.bf16.gmra.mxu0 %v986
        %v1157 = vpop.f32.mrf.mxu0
        %v1158 = vadd.f32 %v1025, %v1157
        %v1159 = vpop.f32.mrf.mxu0
        %v1160 = vpop.f32.mrf.mxu0
        %v1161 = vpop.f32.mrf.mxu0
        %1162 = vdwg.mxu0
        %v1163 = vmul.f32 %v1158, 0.5
        %v1164 = vadd.f32 %v797, %v1163
        %v1165 = vld [vmem:[%s2 + $0x1] sm:$0x1]
        %v1166 = vld [vmem:[%s3 + $0x1] sm:$0x1]
        %1167 = vadd.xlane.f32.xlu0 %v1164
        %v1168 = vpop.xlane.xlu0 %1167
        %v1169 = vmul.f32 %v1168, %v802
        %v1170 = vsub.f32 %v1164, %v1169
        %v1171 = vmul.f32 %v1170, %v1170
        %1172 = vadd.xlane.f32.xlu0 %v1171
        %v1173 = vpop.xlane.xlu0 %1172
        %v1174 = vmul.f32 %v1173, %v802
        %v1175 = vadd.f32 %v1174, 1e-05
        %v1176 = vrsqrt.pop %v1175
        %v1177 = vmul.f32 %v1170, %v1176
        %v1178 = vlaneseq
        %v1179 = vshrl.u32 %v1178, 7
        %v1180 = vsub.s32 0, %v1179
        %v1181 = vrot.slane %v1165, %v1180
        %v1182 = vmul.f32 %v1177, %v1181
        %v1183 = vlaneseq
        %v1184 = vshrl.u32 %v1183, 7
        %v1185 = vsub.s32 0, %v1184
        %v1186 = vrot.slane %v1166, %v1185
        %v1187 = vadd.f32 %v1182, %v1186
        %v1188 = vpack.c.bf16 %v1187, %v1187
        %v1189 = vld [vmem:[%s8] sm:$0xff]
        %v1190 = vld [vmem:[%s8 + $0x8] sm:$0xf]
        %v1191 = vld [vmem:[%s8 + $0xc] sm:$0xff]
        %v1192 = vld [vmem:[%s8 + $0x14] sm:$0xf]
        %v1193 = vld [vmem:[%s8 + $0x18] sm:$0xff]
        %v1194 = vld [vmem:[%s8 + $0x20] sm:$0xf]
        %v1195 = vld [vmem:[%s8 + $0x24] sm:$0xff]
        %v1196 = vld [vmem:[%s8 + $0x2c] sm:$0xf]
        %v1197 = vld [vmem:[%s8 + $0x30] sm:$0xff]
        %v1198 = vld [vmem:[%s8 + $0x38] sm:$0xf]
        %v1199 = vld [vmem:[%s8 + $0x3c] sm:$0xff]
        %v1200 = vld [vmem:[%s8 + $0x44] sm:$0xf]
        %v1201 = vld [vmem:[%s8 + $0x48] sm:$0xff]
        %v1202 = vld [vmem:[%s8 + $0x50] sm:$0xf]
        %v1203 = vld [vmem:[%s8 + $0x54] sm:$0xff]
        %v1204 = vld [vmem:[%s8 + $0x5c] sm:$0xf]
        %v1205 = vld [vmem:[%s8 + $0x60] sm:$0xff]
        %v1206 = vld [vmem:[%s8 + $0x68] sm:$0xf]
        %v1207 = vld [vmem:[%s8 + $0x6c] sm:$0xff]
        %v1208 = vld [vmem:[%s8 + $0x74] sm:$0xf]
        %v1209 = vld [vmem:[%s8 + $0x78] sm:$0xff]
        %v1210 = vld [vmem:[%s8 + $0x80] sm:$0xf]
        %v1211 = vld [vmem:[%s8 + $0x84] sm:$0xff]
        %v1212 = vld [vmem:[%s8 + $0x8c] sm:$0xf]
        %v1213 = vld [vmem:[%s8 + $0x90] sm:$0xff]
        %v1214 = vld [vmem:[%s8 + $0x98] sm:$0xf]
        %v1215 = vld [vmem:[%s8 + $0x9c] sm:$0xff]
        %v1216 = vld [vmem:[%s8 + $0xa4] sm:$0xf]
        %v1217 = vld [vmem:[%s8 + $0xa8] sm:$0xff]
        %v1218 = vld [vmem:[%s8 + $0xb0] sm:$0xf]
        %v1219 = vld [vmem:[%s8 + $0xb4] sm:$0xff]
        %v1220 = vld [vmem:[%s8 + $0xbc] sm:$0xf]
        %v1221 = vld [vmem:[%s9] sm:$0x7]
        %v1223 = vlaneseq
        %v1224 = vshrl.u32 %v1223, 7
        %v1225 = vsub.s32 0, %v1224
        %v1226 = vrot.slane %v1221, %v1225
        %v1227 = vlaneseq
        %v1228 = vshrl.u32 %v1227, 7
        %v1229 = vsub.s32 1, %v1228
        %v1230 = vrot.slane %v1221, %v1229
        %v1231 = vlaneseq
        %v1232 = vshrl.u32 %v1231, 7
        %v1233 = vsub.s32 2, %v1232
        %v1234 = vrot.slane %v1221, %v1233
        %v1270 = vunpack.c.l.b16 %v1189
        %v1271 = vunpack.c.h.b16 %v1189
        %v1272 = vunpack.c.l.b16 %v1190
        %v1273 = vunpack.c.l.b16 %v1191
        %v1274 = vunpack.c.h.b16 %v1191
        %v1275 = vunpack.c.l.b16 %v1192
        %v1276 = vunpack.c.l.b16 %v1193
        %v1277 = vunpack.c.h.b16 %v1193
        %v1278 = vunpack.c.l.b16 %v1194
        %v1279 = vunpack.c.l.b16 %v1195
        %v1280 = vunpack.c.h.b16 %v1195
        %v1281 = vunpack.c.l.b16 %v1196
        %v1282 = vunpack.c.l.b16 %v1197
        %v1283 = vunpack.c.h.b16 %v1197
        %v1284 = vunpack.c.l.b16 %v1198
        %v1285 = vunpack.c.l.b16 %v1199
        %v1286 = vunpack.c.h.b16 %v1199
        %v1287 = vunpack.c.l.b16 %v1200
        %v1288 = vunpack.c.l.b16 %v1201
        %v1289 = vunpack.c.h.b16 %v1201
        %v1290 = vunpack.c.l.b16 %v1202
        %v1291 = vunpack.c.l.b16 %v1203
        %v1292 = vunpack.c.h.b16 %v1203
        %v1293 = vunpack.c.l.b16 %v1204
        %v1294 = vunpack.c.l.b16 %v1205
        %v1295 = vunpack.c.h.b16 %v1205
        %v1296 = vunpack.c.l.b16 %v1206
        %v1297 = vunpack.c.l.b16 %v1207
        %v1298 = vunpack.c.h.b16 %v1207
        %v1299 = vunpack.c.l.b16 %v1208
        %v1300 = vunpack.c.l.b16 %v1209
        %v1301 = vunpack.c.h.b16 %v1209
        %v1302 = vunpack.c.l.b16 %v1210
        %v1303 = vunpack.c.l.b16 %v1211
        %v1304 = vunpack.c.h.b16 %v1211
        %v1305 = vunpack.c.l.b16 %v1212
        %v1306 = vunpack.c.l.b16 %v1213
        %v1307 = vunpack.c.h.b16 %v1213
        %v1308 = vunpack.c.l.b16 %v1214
        %v1309 = vunpack.c.l.b16 %v1215
        %v1310 = vunpack.c.h.b16 %v1215
        %v1311 = vunpack.c.l.b16 %v1216
        %v1312 = vunpack.c.l.b16 %v1217
        %v1313 = vunpack.c.h.b16 %v1217
        %v1314 = vunpack.c.l.b16 %v1218
        %v1315 = vunpack.c.l.b16 %v1219
        %v1316 = vunpack.c.h.b16 %v1219
        %v1317 = vunpack.c.l.b16 %v1220
        %v1318 = vpack.c.b16 %v1273, %v1270
        %v1319 = vpack.c.b16 %v1274, %v1271
        %v1320 = vpack.c.b16 %v1275, %v1272
        %v1321 = vpack.c.b16 %v1279, %v1276
        %v1322 = vpack.c.b16 %v1280, %v1277
        %v1323 = vpack.c.b16 %v1281, %v1278
        %v1324 = vpack.c.b16 %v1285, %v1282
        %v1325 = vpack.c.b16 %v1286, %v1283
        %v1326 = vpack.c.b16 %v1287, %v1284
        %v1327 = vpack.c.b16 %v1291, %v1288
        %v1328 = vpack.c.b16 %v1292, %v1289
        %v1329 = vpack.c.b16 %v1293, %v1290
        %v1330 = vpack.c.b16 %v1297, %v1294
        %v1331 = vpack.c.b16 %v1298, %v1295
        %v1332 = vpack.c.b16 %v1299, %v1296
        %v1333 = vpack.c.b16 %v1303, %v1300
        %v1334 = vpack.c.b16 %v1304, %v1301
        %v1335 = vpack.c.b16 %v1305, %v1302
        %v1336 = vpack.c.b16 %v1309, %v1306
        %v1337 = vpack.c.b16 %v1310, %v1307
        %v1338 = vpack.c.b16 %v1311, %v1308
        %v1339 = vpack.c.b16 %v1315, %v1312
        %v1340 = vpack.c.b16 %v1316, %v1313
        %v1341 = vpack.c.b16 %v1317, %v1314
        %1366 = vmatprep.subr.bf16.mxu0 %v1340
        %1367 = vmatpush1.bf16.msra.mxu0 %v1339
        %1368 = vmatprep.subr.bf16.mxu0 %v1337
        %1369 = vmatpush1.bf16.msra.mxu0 %v1336
        %1370 = vmatprep.subr.bf16.mxu0 %v1334
        %1371 = vmatpush1.bf16.msra.mxu0 %v1333
        %1372 = vmatprep.subr.bf16.mxu0 %v1331
        %1373 = vmatpush1.bf16.msra.mxu0 %v1330
        %1374 = vmatprep.subr.bf16.mxu0 %v1328
        %1375 = vmatpush1.bf16.msra.mxu0 %v1327
        %1376 = vmatprep.subr.bf16.mxu0 %v1325
        %1377 = vmatpush1.bf16.msra.mxu0 %v1324
        %1378 = vmatprep.subr.bf16.mxu0 %v1322
        %1379 = vmatpush1.bf16.msra.mxu0 %v1321
        %1380 = vmatprep.subr.bf16.mxu0 %v1319
        %1381 = vmatpush1.bf16.msra.mxu0 %v1318
        %1382 = vmatprep.subr.bf16.mxu0 0
        %1383 = vmatpush2.bf16.msra.mxu0 0
        %1384 = vmatprep.subr.bf16.mxu0 0
        %1385 = vmatpush2.bf16.msra.mxu0 0
        %1386 = vmatprep.subr.bf16.mxu0 0
        %1387 = vmatpush2.bf16.msra.mxu0 0
        %1388 = vmatprep.subr.bf16.mxu0 0
        %1389 = vmatpush2.bf16.msra.mxu0 0
        %1390 = vmatprep.subr.bf16.mxu0 0
        %1391 = vmatpush2.bf16.msra.mxu0 0
        %1392 = vmatprep.subr.bf16.mxu0 0
        %1393 = vmatpush2.bf16.msra.mxu0 0
        %1394 = vmatprep.subr.bf16.mxu0 0
        %1395 = vmatpush2.bf16.msra.mxu0 0
        %1396 = vmatprep.subr.bf16.mxu0 0
        %1397 = vmatpush2.bf16.msra.mxu0 0
        %1398 = vmatprep.mubr.bf16.mxu0 0
        %1399 = vmatmul.mubr.bf16.gmra.mxu0 %v1188
        %v1400 = vpop.f32.mrf.mxu0
        %v1401 = vadd.f32 %v1226, %v1400
        %v1402 = vpop.f32.mrf.mxu0
        %v1403 = vadd.f32 %v1230, %v1402
        %v1404 = vpop.f32.mrf.mxu0
        %v1405 = vpop.f32.mrf.mxu0
        %1406 = vdwg.mxu0
        %1407 = vmatprep.subr.bf16.mxu0 0
        %1408 = vmatpush1.bf16.msra.mxu0 %v1341
        %1409 = vmatprep.subr.bf16.mxu0 0
        %1410 = vmatpush1.bf16.msra.mxu0 %v1338
        %1411 = vmatprep.subr.bf16.mxu0 0
        %1412 = vmatpush1.bf16.msra.mxu0 %v1335
        %1413 = vmatprep.subr.bf16.mxu0 0
        %1414 = vmatpush1.bf16.msra.mxu0 %v1332
        %1415 = vmatprep.subr.bf16.mxu0 0
        %1416 = vmatpush1.bf16.msra.mxu0 %v1329
        %1417 = vmatprep.subr.bf16.mxu0 0
        %1418 = vmatpush1.bf16.msra.mxu0 %v1326
        %1419 = vmatprep.subr.bf16.mxu0 0
        %1420 = vmatpush1.bf16.msra.mxu0 %v1323
        %1421 = vmatprep.subr.bf16.mxu0 0
        %1422 = vmatpush1.bf16.msra.mxu0 %v1320
        %1423 = vmatprep.subr.bf16.mxu0 0
        %1424 = vmatpush2.bf16.msra.mxu0 0
        %1425 = vmatprep.subr.bf16.mxu0 0
        %1426 = vmatpush2.bf16.msra.mxu0 0
        %1427 = vmatprep.subr.bf16.mxu0 0
        %1428 = vmatpush2.bf16.msra.mxu0 0
        %1429 = vmatprep.subr.bf16.mxu0 0
        %1430 = vmatpush2.bf16.msra.mxu0 0
        %1431 = vmatprep.subr.bf16.mxu0 0
        %1432 = vmatpush2.bf16.msra.mxu0 0
        %1433 = vmatprep.subr.bf16.mxu0 0
        %1434 = vmatpush2.bf16.msra.mxu0 0
        %1435 = vmatprep.subr.bf16.mxu0 0
        %1436 = vmatpush2.bf16.msra.mxu0 0
        %1437 = vmatprep.subr.bf16.mxu0 0
        %1438 = vmatpush2.bf16.msra.mxu0 0
        %1439 = vmatprep.mubr.bf16.mxu0 0
        %1440 = vmatmul.mubr.bf16.gmra.mxu0 %v1188
        %v1441 = vpop.f32.mrf.mxu0
        %v1442 = vadd.f32 %v1234, %v1441
        %v1443 = vpop.f32.mrf.mxu0
        %v1444 = vpop.f32.mrf.mxu0
        %v1445 = vpop.f32.mrf.mxu0
        %1446 = vdwg.mxu0
        %v1447 = vld [vmem:[%s1] sm:$0xff]
        %v1448 = vpack.c.bf16 %v1447, %v1447
        %v1449 = vld [vmem:[%s10] sm:$0xf]
        %v1450 = vld [vmem:[%s10 + $0x4] sm:$0xf]
        %v1451 = vld [vmem:[%s10 + $0x8] sm:$0xf]
        %v1452 = vld [vmem:[%s10 + $0xc] sm:$0xf]
        %v1453 = vld [vmem:[%s10 + $0x10] sm:$0xf]
        %v1454 = vld [vmem:[%s10 + $0x14] sm:$0xf]
        %v1455 = vld [vmem:[%s10 + $0x18] sm:$0xf]
        %v1456 = vld [vmem:[%s10 + $0x1c] sm:$0xf]
        %v1457 = vld [vmem:[%s10 + $0x20] sm:$0xf]
        %v1458 = vld [vmem:[%s10 + $0x24] sm:$0xf]
        %v1459 = vld [vmem:[%s10 + $0x28] sm:$0xf]
        %v1460 = vld [vmem:[%s10 + $0x2c] sm:$0xf]
        %v1461 = vld [vmem:[%s10 + $0x30] sm:$0xf]
        %v1462 = vld [vmem:[%s10 + $0x34] sm:$0xf]
        %v1463 = vld [vmem:[%s10 + $0x38] sm:$0xf]
        %v1464 = vld [vmem:[%s10 + $0x3c] sm:$0xf]
        %v1481 = vunpack.c.l.b16 %v1449
        %v1482 = vunpack.c.l.b16 %v1450
        %v1483 = vunpack.c.l.b16 %v1451
        %v1484 = vunpack.c.l.b16 %v1452
        %v1485 = vunpack.c.l.b16 %v1453
        %v1486 = vunpack.c.l.b16 %v1454
        %v1487 = vunpack.c.l.b16 %v1455
        %v1488 = vunpack.c.l.b16 %v1456
        %v1489 = vunpack.c.l.b16 %v1457
        %v1490 = vunpack.c.l.b16 %v1458
        %v1491 = vunpack.c.l.b16 %v1459
        %v1492 = vunpack.c.l.b16 %v1460
        %v1493 = vunpack.c.l.b16 %v1461
        %v1494 = vunpack.c.l.b16 %v1462
        %v1495 = vunpack.c.l.b16 %v1463
        %v1496 = vunpack.c.l.b16 %v1464
        %v1497 = vpack.c.b16 %v1482, %v1481
        %v1498 = vpack.c.b16 %v1484, %v1483
        %v1499 = vpack.c.b16 %v1486, %v1485
        %v1500 = vpack.c.b16 %v1488, %v1487
        %v1501 = vpack.c.b16 %v1490, %v1489
        %v1502 = vpack.c.b16 %v1492, %v1491
        %v1503 = vpack.c.b16 %v1494, %v1493
        %v1504 = vpack.c.b16 %v1496, %v1495
        %1513 = vmatprep.subr.bf16.mxu0 0
        %1514 = vmatpush1.bf16.msra.mxu0 %v1504
        %1515 = vmatprep.subr.bf16.mxu0 0
        %1516 = vmatpush1.bf16.msra.mxu0 %v1503
        %1517 = vmatprep.subr.bf16.mxu0 0
        %1518 = vmatpush1.bf16.msra.mxu0 %v1502
        %1519 = vmatprep.subr.bf16.mxu0 0
        %1520 = vmatpush1.bf16.msra.mxu0 %v1501
        %1521 = vmatprep.subr.bf16.mxu0 0
        %1522 = vmatpush1.bf16.msra.mxu0 %v1500
        %1523 = vmatprep.subr.bf16.mxu0 0
        %1524 = vmatpush1.bf16.msra.mxu0 %v1499
        %1525 = vmatprep.subr.bf16.mxu0 0
        %1526 = vmatpush1.bf16.msra.mxu0 %v1498
        %1527 = vmatprep.subr.bf16.mxu0 0
        %1528 = vmatpush1.bf16.msra.mxu0 %v1497
        %1529 = vmatprep.subr.bf16.mxu0 0
        %1530 = vmatpush2.bf16.msra.mxu0 0
        %1531 = vmatprep.subr.bf16.mxu0 0
        %1532 = vmatpush2.bf16.msra.mxu0 0
        %1533 = vmatprep.subr.bf16.mxu0 0
        %1534 = vmatpush2.bf16.msra.mxu0 0
        %1535 = vmatprep.subr.bf16.mxu0 0
        %1536 = vmatpush2.bf16.msra.mxu0 0
        %1537 = vmatprep.subr.bf16.mxu0 0
        %1538 = vmatpush2.bf16.msra.mxu0 0
        %1539 = vmatprep.subr.bf16.mxu0 0
        %1540 = vmatpush2.bf16.msra.mxu0 0
        %1541 = vmatprep.subr.bf16.mxu0 0
        %1542 = vmatpush2.bf16.msra.mxu0 0
        %1543 = vmatprep.subr.bf16.mxu0 0
        %1544 = vmatpush2.bf16.msra.mxu0 0
        %1545 = vmatprep.mubr.bf16.mxu0 0
        %1546 = vmatmul.mubr.bf16.gmra.mxu0 %v1448
        %v1547 = vpop.f32.mrf.mxu0
        %v1548 = vadd.f32 0.0, %v1547
        %v1549 = vpop.f32.mrf.mxu0
        %v1550 = vpop.f32.mrf.mxu0
        %v1551 = vpop.f32.mrf.mxu0
        %1552 = vdwg.mxu0
        %v1553 = vlaneseq
        %v1554 = vshrl.u32 %v1553, 7
        %v1555 = vlaneseq
        %v1556 = vand.u32 %v1555, 127
        %vm1557 = vcmp.eq.s32.totalorder %v1554, 7
        %v1558 = vadd.s32 %v1554, 1
        %v1559 = vsel %vm1557, 0, %v1558
        %v1560 = vand.u32 %v1559, 1
        %vm1561 = vcmp.eq.s32.totalorder %v1560, 1
        %v1562 = vshra.s32 %v1559, 1
        %v1563 = vand.u32 %v1562, 1
        %vm1564 = vcmp.eq.s32.totalorder %v1563, 1
        %v1565 = vshra.s32 %v1559, 2
        %v1566 = vand.u32 %v1565, 1
        %vm1567 = vcmp.eq.s32.totalorder %v1566, 1
        %v1568 = vld [vmem:[%s11] sm:$0x1]
        %v1569 = vld [vmem:[%s11 + $0x4] sm:$0x1]
        %v1570 = vlaneseq
        %v1571 = vshrl.u32 %v1570, 7
        %v1572 = vsub.s32 0, %v1571
        %v1573 = vrot.slane %v1568, %v1572
        %v1574 = vadd.f32 %v1401, %v1573
        %v1575 = vpack.c.bf16 %v1574, %v1574
        %v1576 = vpack.c.bf16 %v1403, %v1403
        %v1577 = vlaneseq
        %v1578 = vshrl.u32 %v1577, 7
        %v1579 = vsub.s32 0, %v1578
        %v1580 = vrot.slane %v1569, %v1579
        %v1581 = vadd.f32 %v1401, %v1580
        %v1582 = vpack.c.bf16 %v1581, %v1581
        %v1583 = vpack.c.bf16 %v1548, %v1548
        %vm1584 = vcmask 261120
        %v1586 = vsel %vm1584, %v1582, 0
        %v1589 = vsel %vm1584, %v1583, 0
        %1591 = vmatprep.subr.bf16.mxu0 0
        %1592 = vmatpush1.bf16.xpose.msra.mxu0 0
        %1593 = vmatprep.subr.bf16.mxu0 0
        %1594 = vmatpush1.bf16.xpose.msra.mxu0 0
        %1595 = vmatprep.subr.bf16.mxu0 0
        %1596 = vmatpush1.bf16.xpose.msra.mxu0 0
        %1597 = vmatprep.subr.bf16.mxu0 0
        %1598 = vmatpush1.bf16.xpose.msra.mxu0 0
        %1599 = vmatprep.subr.bf16.mxu0 0
        %1600 = vmatpush1.bf16.xpose.msra.mxu0 0
        %1601 = vmatprep.subr.bf16.mxu0 0
        %1602 = vmatpush1.bf16.xpose.msra.mxu0 0
        %1603 = vmatprep.subr.bf16.mxu0 0
        %1604 = vmatpush1.bf16.xpose.msra.mxu0 0
        %1605 = vmatprep.subr.bf16.mxu0 0
        %1606 = vmatpush1.bf16.xpose.msra.mxu0 %v1589
        %1607 = vmatprep.subr.bf16.mxu0 0
        %1608 = vmatpush2.bf16.xpose.msra.mxu0 0
        %1609 = vmatprep.subr.bf16.mxu0 0
        %1610 = vmatpush2.bf16.xpose.msra.mxu0 0
        %1611 = vmatprep.subr.bf16.mxu0 0
        %1612 = vmatpush2.bf16.xpose.msra.mxu0 0
        %1613 = vmatprep.subr.bf16.mxu0 0
        %1614 = vmatpush2.bf16.xpose.msra.mxu0 0
        %1615 = vmatprep.subr.bf16.mxu0 0
        %1616 = vmatpush2.bf16.xpose.msra.mxu0 0
        %1617 = vmatprep.subr.bf16.mxu0 0
        %1618 = vmatpush2.bf16.xpose.msra.mxu0 0
        %1619 = vmatprep.subr.bf16.mxu0 0
        %1620 = vmatpush2.bf16.xpose.msra.mxu0 0
        %1621 = vmatprep.subr.bf16.mxu0 0
        %1622 = vmatpush2.bf16.xpose.msra.mxu0 0
        %1623 = vmatprep.mubr.bf16.mxu0 0
        %1624 = vmatmul.mubr.bf16.gmra.mxu0 %v1586
        %v1625 = vpop.f32.mrf.mxu0
        %v1626 = vadd.f32 0.0, %v1625
        %v1627 = vpop.f32.mrf.mxu0
        %v1628 = vpop.f32.mrf.mxu0
        %v1629 = vpop.f32.mrf.mxu0
        %1630 = vdwg.mxu0
        %1632 = vrot.lane.b32.xlu0 %v1626, 121
        %v1633 = vpop.permute.xlu0 %1632
        %1635 = vrot.lane.b32.xlu0 %v1626, 1
        %v1636 = vpop.permute.xlu0 %1635
        %vm1638 = vcmask 7168
        %v1639 = vsel %vm1638, %v1633, %v1636
        %v1640 = vsel %vm1561, %v1639, %v1626
        %1642 = vrot.lane.b32.xlu0 %v1640, 122
        %v1643 = vpop.permute.xlu0 %1642
        %1645 = vrot.lane.b32.xlu0 %v1640, 2
        %v1646 = vpop.permute.xlu0 %1645
        %vm1648 = vcmask 15360
        %v1649 = vsel %vm1648, %v1643, %v1646
        %v1650 = vsel %vm1564, %v1649, %v1640
        %1652 = vrot.lane.b32.xlu0 %v1650, 124
        %v1653 = vpop.permute.xlu0 %1652
        %1655 = vrot.lane.b32.xlu0 %v1650, 4
        %v1656 = vpop.permute.xlu0 %1655
        %vm1658 = vcmask 31744
        %v1659 = vsel %vm1658, %v1653, %v1656
        %v1660 = vsel %vm1567, %v1659, %v1650
        %v1662 = vrot.slane %v1660, 1
        %vm1664 = vcmask 1046528
        %v1665 = vsel %vm1664, %v1662, %v1662
        %vm1666 = vcmp.le.s32.totalorder %v1556, %v1554
        %vm1667 = vcmp.eq.s32.totalorder %v1556, %v1558
        %v1668 = vsel %vm1667, 0.0, %v1665
        %v1669 = vsel %vm1666, %v1660, %v1668
        %v1671 = vsel %vm1584, %v1575, 0
        %v1674 = vsel %vm1584, %v1576, 0
        %1676 = vmatprep.subr.bf16.mxu0 0
        %1677 = vmatpush1.bf16.xpose.msra.mxu0 0
        %1678 = vmatprep.subr.bf16.mxu0 0
        %1679 = vmatpush1.bf16.xpose.msra.mxu0 0
        %1680 = vmatprep.subr.bf16.mxu0 0
        %1681 = vmatpush1.bf16.xpose.msra.mxu0 0
        %1682 = vmatprep.subr.bf16.mxu0 0
        %1683 = vmatpush1.bf16.xpose.msra.mxu0 0
        %1684 = vmatprep.subr.bf16.mxu0 0
        %1685 = vmatpush1.bf16.xpose.msra.mxu0 0
        %1686 = vmatprep.subr.bf16.mxu0 0
        %1687 = vmatpush1.bf16.xpose.msra.mxu0 0
        %1688 = vmatprep.subr.bf16.mxu0 0
        %1689 = vmatpush1.bf16.xpose.msra.mxu0 0
        %1690 = vmatprep.subr.bf16.mxu0 0
        %1691 = vmatpush1.bf16.xpose.msra.mxu0 %v1674
        %1692 = vmatprep.subr.bf16.mxu0 0
        %1693 = vmatpush2.bf16.xpose.msra.mxu0 0
        %1694 = vmatprep.subr.bf16.mxu0 0
        %1695 = vmatpush2.bf16.xpose.msra.mxu0 0
        %1696 = vmatprep.subr.bf16.mxu0 0
        %1697 = vmatpush2.bf16.xpose.msra.mxu0 0
        %1698 = vmatprep.subr.bf16.mxu0 0
        %1699 = vmatpush2.bf16.xpose.msra.mxu0 0
        %1700 = vmatprep.subr.bf16.mxu0 0
        %1701 = vmatpush2.bf16.xpose.msra.mxu0 0
        %1702 = vmatprep.subr.bf16.mxu0 0
        %1703 = vmatpush2.bf16.xpose.msra.mxu0 0
        %1704 = vmatprep.subr.bf16.mxu0 0
        %1705 = vmatpush2.bf16.xpose.msra.mxu0 0
        %1706 = vmatprep.subr.bf16.mxu0 0
        %1707 = vmatpush2.bf16.xpose.msra.mxu0 0
        %1708 = vmatprep.mubr.bf16.mxu0 0
        %1709 = vmatmul.mubr.bf16.gmra.mxu0 %v1671
        %v1710 = vpop.f32.mrf.mxu0
        %v1711 = vadd.f32 %v1669, %v1710
        %v1712 = vpop.f32.mrf.mxu0
        %v1713 = vpop.f32.mrf.mxu0
        %v1714 = vpop.f32.mrf.mxu0
        %1715 = vdwg.mxu0
        %v1716 = vmul.f32 %v1711, 0.088388346
        %vm1717 = vcmask 64512
        %v1718 = vsel %vm1717, %v1716, -inf
        %1719 = vmax.xlane.f32.xlu0 %v1718
        %v1720 = vpop.xlane.xlu0 %1719
        %v1721 = vsub.f32 %v1716, %v1720
        %v1722 = vmul.f32 %v1721, 1.442695
        %v1723 = vpow.pop %v1722
        %v1724 = vsel %vm1717, %v1723, 0.0
        %1725 = vadd.xlane.f32.xlu0 %v1724
        %v1726 = vpop.xlane.xlu0 %1725
        %v1727 = vrcp.pop %v1726
        %v1728 = vmul.f32 %v1723, %v1727
        %v1729 = vpack.c.bf16 %v1728, %v1728
        %v1730 = vpack.c.bf16 %v1442, %v1442
        %v1732 = vsel %vm1717, %v1729, 0
        %vm1734 = vcmask 1043456
        %v1736 = vsel %vm1734, %v1730, 0
        %1738 = vmatprep.subr.bf16.mxu0 0
        %1739 = vmatpush1.bf16.msra.mxu0 0
        %1740 = vmatprep.subr.bf16.mxu0 0
        %1741 = vmatpush1.bf16.msra.mxu0 0
        %1742 = vmatprep.subr.bf16.mxu0 0
        %1743 = vmatpush1.bf16.msra.mxu0 0
        %1744 = vmatprep.subr.bf16.mxu0 0
        %1745 = vmatpush1.bf16.msra.mxu0 0
        %1746 = vmatprep.subr.bf16.mxu0 0
        %1747 = vmatpush1.bf16.msra.mxu0 0
        %1748 = vmatprep.subr.bf16.mxu0 0
        %1749 = vmatpush1.bf16.msra.mxu0 0
        %1750 = vmatprep.subr.bf16.mxu0 0
        %1751 = vmatpush1.bf16.msra.mxu0 0
        %1752 = vmatprep.subr.bf16.mxu0 0
        %1753 = vmatpush1.bf16.msra.mxu0 %v1736
        %1754 = vmatprep.subr.bf16.mxu0 0
        %1755 = vmatpush2.bf16.msra.mxu0 0
        %1756 = vmatprep.subr.bf16.mxu0 0
        %1757 = vmatpush2.bf16.msra.mxu0 0
        %1758 = vmatprep.subr.bf16.mxu0 0
        %1759 = vmatpush2.bf16.msra.mxu0 0
        %1760 = vmatprep.subr.bf16.mxu0 0
        %1761 = vmatpush2.bf16.msra.mxu0 0
        %1762 = vmatprep.subr.bf16.mxu0 0
        %1763 = vmatpush2.bf16.msra.mxu0 0
        %1764 = vmatprep.subr.bf16.mxu0 0
        %1765 = vmatpush2.bf16.msra.mxu0 0
        %1766 = vmatprep.subr.bf16.mxu0 0
        %1767 = vmatpush2.bf16.msra.mxu0 0
        %1768 = vmatprep.subr.bf16.mxu0 0
        %1769 = vmatpush2.bf16.msra.mxu0 0
        %1770 = vmatprep.mubr.bf16.mxu0 0
        %1771 = vmatmul.mubr.bf16.gmra.mxu0 %v1732
        %v1772 = vpop.f32.mrf.mxu0
        %v1773 = vadd.f32 0.0, %v1772
        %v1774 = vpop.f32.mrf.mxu0
        %v1775 = vpop.f32.mrf.mxu0
        %v1776 = vpop.f32.mrf.mxu0
        %1777 = vdwg.mxu0
        %v1778 = vld [vmem:[%s11 + $0x1] sm:$0x1]
        %v1779 = vld [vmem:[%s11 + $0x5] sm:$0x1]
        %v1780 = vlaneseq
        %v1781 = vshrl.u32 %v1780, 7
        %v1782 = vsub.s32 0, %v1781
        %v1783 = vrot.slane %v1778, %v1782
        %1785 = vrot.lane.b32.xlu0 %v1783, 32
        %v1786 = vpop.permute.xlu0 %1785
        %v1788 = vadd.f32 %v1401, %v1786
        %v1789 = vpack.c.bf16 %v1788, %v1788
        %v1790 = vlaneseq
        %v1791 = vshrl.u32 %v1790, 7
        %v1792 = vsub.s32 0, %v1791
        %v1793 = vrot.slane %v1779, %v1792
        %1795 = vrot.lane.b32.xlu0 %v1793, 32
        %v1796 = vpop.permute.xlu0 %1795
        %v1798 = vadd.f32 %v1401, %v1796
        %v1799 = vpack.c.bf16 %v1798, %v1798
        %1801 = vrot.lane.b32.xlu0 %v1799, 96
        %v1802 = vpop.permute.xlu0 %1801
        %1804 = vrot.lane.b32.xlu0 %v1583, 96
        %v1805 = vpop.permute.xlu0 %1804
        %v1807 = vsel %vm1584, %v1802, 0
        %v1810 = vsel %vm1584, %v1805, 0
        %1812 = vmatprep.subr.bf16.mxu0 0
        %1813 = vmatpush1.bf16.xpose.msra.mxu0 0
        %1814 = vmatprep.subr.bf16.mxu0 0
        %1815 = vmatpush1.bf16.xpose.msra.mxu0 0
        %1816 = vmatprep.subr.bf16.mxu0 0
        %1817 = vmatpush1.bf16.xpose.msra.mxu0 0
        %1818 = vmatprep.subr.bf16.mxu0 0
        %1819 = vmatpush1.bf16.xpose.msra.mxu0 0
        %1820 = vmatprep.subr.bf16.mxu0 0
        %1821 = vmatpush1.bf16.xpose.msra.mxu0 0
        %1822 = vmatprep.subr.bf16.mxu0 0
        %1823 = vmatpush1.bf16.xpose.msra.mxu0 0
        %1824 = vmatprep.subr.bf16.mxu0 0
        %1825 = vmatpush1.bf16.xpose.msra.mxu0 0
        %1826 = vmatprep.subr.bf16.mxu0 0
        %1827 = vmatpush1.bf16.xpose.msra.mxu0 %v1810
        %1828 = vmatprep.subr.bf16.mxu0 0
        %1829 = vmatpush2.bf16.xpose.msra.mxu0 0
        %1830 = vmatprep.subr.bf16.mxu0 0
        %1831 = vmatpush2.bf16.xpose.msra.mxu0 0
        %1832 = vmatprep.subr.bf16.mxu0 0
        %1833 = vmatpush2.bf16.xpose.msra.mxu0 0
        %1834 = vmatprep.subr.bf16.mxu0 0
        %1835 = vmatpush2.bf16.xpose.msra.mxu0 0
        %1836 = vmatprep.subr.bf16.mxu0 0
        %1837 = vmatpush2.bf16.xpose.msra.mxu0 0
        %1838 = vmatprep.subr.bf16.mxu0 0
        %1839 = vmatpush2.bf16.xpose.msra.mxu0 0
        %1840 = vmatprep.subr.bf16.mxu0 0
        %1841 = vmatpush2.bf16.xpose.msra.mxu0 0
        %1842 = vmatprep.subr.bf16.mxu0 0
        %1843 = vmatpush2.bf16.xpose.msra.mxu0 0
        %1844 = vmatprep.mubr.bf16.mxu0 0
        %1845 = vmatmul.mubr.bf16.gmra.mxu0 %v1807
        %v1846 = vpop.f32.mrf.mxu0
        %v1847 = vadd.f32 0.0, %v1846
        %v1848 = vpop.f32.mrf.mxu0
        %v1849 = vpop.f32.mrf.mxu0
        %v1850 = vpop.f32.mrf.mxu0
        %1851 = vdwg.mxu0
        %1853 = vrot.lane.b32.xlu0 %v1847, 121
        %v1854 = vpop.permute.xlu0 %1853
        %1856 = vrot.lane.b32.xlu0 %v1847, 1
        %v1857 = vpop.permute.xlu0 %1856
        %v1859 = vsel %vm1638, %v1854, %v1857
        %v1860 = vsel %vm1561, %v1859, %v1847
        %1862 = vrot.lane.b32.xlu0 %v1860, 122
        %v1863 = vpop.permute.xlu0 %1862
        %1865 = vrot.lane.b32.xlu0 %v1860, 2
        %v1866 = vpop.permute.xlu0 %1865
        %v1868 = vsel %vm1648, %v1863, %v1866
        %v1869 = vsel %vm1564, %v1868, %v1860
        %1871 = vrot.lane.b32.xlu0 %v1869, 124
        %v1872 = vpop.permute.xlu0 %1871
        %1874 = vrot.lane.b32.xlu0 %v1869, 4
        %v1875 = vpop.permute.xlu0 %1874
        %v1877 = vsel %vm1658, %v1872, %v1875
        %v1878 = vsel %vm1567, %v1877, %v1869
        %v1880 = vrot.slane %v1878, 1
        %v1882 = vsel %vm1664, %v1880, %v1880
        %v1883 = vsel %vm1667, 0.0, %v1882
        %v1884 = vsel %vm1666, %v1878, %v1883
        %1886 = vrot.lane.b32.xlu0 %v1789, 96
        %v1887 = vpop.permute.xlu0 %1886
        %1889 = vrot.lane.b32.xlu0 %v1576, 96
        %v1890 = vpop.permute.xlu0 %1889
        %v1892 = vsel %vm1584, %v1887, 0
        %v1895 = vsel %vm1584, %v1890, 0
        %1897 = vmatprep.subr.bf16.mxu0 0
        %1898 = vmatpush1.bf16.xpose.msra.mxu0 0
        %1899 = vmatprep.subr.bf16.mxu0 0
        %1900 = vmatpush1.bf16.xpose.msra.mxu0 0
        %1901 = vmatprep.subr.bf16.mxu0 0
        %1902 = vmatpush1.bf16.xpose.msra.mxu0 0
        %1903 = vmatprep.subr.bf16.mxu0 0
        %1904 = vmatpush1.bf16.xpose.msra.mxu0 0
        %1905 = vmatprep.subr.bf16.mxu0 0
        %1906 = vmatpush1.bf16.xpose.msra.mxu0 0
        %1907 = vmatprep.subr.bf16.mxu0 0
        %1908 = vmatpush1.bf16.xpose.msra.mxu0 0
        %1909 = vmatprep.subr.bf16.mxu0 0
        %1910 = vmatpush1.bf16.xpose.msra.mxu0 0
        %1911 = vmatprep.subr.bf16.mxu0 0
        %1912 = vmatpush1.bf16.xpose.msra.mxu0 %v1895
        %1913 = vmatprep.subr.bf16.mxu0 0
        %1914 = vmatpush2.bf16.xpose.msra.mxu0 0
        %1915 = vmatprep.subr.bf16.mxu0 0
        %1916 = vmatpush2.bf16.xpose.msra.mxu0 0
        %1917 = vmatprep.subr.bf16.mxu0 0
        %1918 = vmatpush2.bf16.xpose.msra.mxu0 0
        %1919 = vmatprep.subr.bf16.mxu0 0
        %1920 = vmatpush2.bf16.xpose.msra.mxu0 0
        %1921 = vmatprep.subr.bf16.mxu0 0
        %1922 = vmatpush2.bf16.xpose.msra.mxu0 0
        %1923 = vmatprep.subr.bf16.mxu0 0
        %1924 = vmatpush2.bf16.xpose.msra.mxu0 0
        %1925 = vmatprep.subr.bf16.mxu0 0
        %1926 = vmatpush2.bf16.xpose.msra.mxu0 0
        %1927 = vmatprep.subr.bf16.mxu0 0
        %1928 = vmatpush2.bf16.xpose.msra.mxu0 0
        %1929 = vmatprep.mubr.bf16.mxu0 0
        %1930 = vmatmul.mubr.bf16.gmra.mxu0 %v1892
        %v1931 = vpop.f32.mrf.mxu0
        %v1932 = vadd.f32 %v1884, %v1931
        %v1933 = vpop.f32.mrf.mxu0
        %v1934 = vpop.f32.mrf.mxu0
        %v1935 = vpop.f32.mrf.mxu0
        %1936 = vdwg.mxu0
        %v1937 = vmul.f32 %v1932, 0.088388346
        %v1938 = vsel %vm1717, %v1937, -inf
        %1939 = vmax.xlane.f32.xlu0 %v1938
        %v1940 = vpop.xlane.xlu0 %1939
        %v1941 = vsub.f32 %v1937, %v1940
        %v1942 = vmul.f32 %v1941, 1.442695
        %v1943 = vpow.pop %v1942
        %v1944 = vsel %vm1717, %v1943, 0.0
        %1945 = vadd.xlane.f32.xlu0 %v1944
        %v1946 = vpop.xlane.xlu0 %1945
        %v1947 = vrcp.pop %v1946
        %v1948 = vmul.f32 %v1943, %v1947
        %v1949 = vpack.c.bf16 %v1948, %v1948
        %1951 = vrot.lane.b32.xlu0 %v1730, 96
        %v1952 = vpop.permute.xlu0 %1951
        %v1954 = vsel %vm1717, %v1949, 0
        %v1957 = vsel %vm1734, %v1952, 0
        %1959 = vmatprep.subr.bf16.mxu0 0
        %1960 = vmatpush1.bf16.msra.mxu0 0
        %1961 = vmatprep.subr.bf16.mxu0 0
        %1962 = vmatpush1.bf16.msra.mxu0 0
        %1963 = vmatprep.subr.bf16.mxu0 0
        %1964 = vmatpush1.bf16.msra.mxu0 0
        %1965 = vmatprep.subr.bf16.mxu0 0
        %1966 = vmatpush1.bf16.msra.mxu0 0
        %1967 = vmatprep.subr.bf16.mxu0 0
        %1968 = vmatpush1.bf16.msra.mxu0 0
        %1969 = vmatprep.subr.bf16.mxu0 0
        %1970 = vmatpush1.bf16.msra.mxu0 0
        %1971 = vmatprep.subr.bf16.mxu0 0
        %1972 = vmatpush1.bf16.msra.mxu0 0
        %1973 = vmatprep.subr.bf16.mxu0 0
        %1974 = vmatpush1.bf16.msra.mxu0 %v1957
        %1975 = vmatprep.subr.bf16.mxu0 0
        %1976 = vmatpush2.bf16.msra.mxu0 0
        %1977 = vmatprep.subr.bf16.mxu0 0
        %1978 = vmatpush2.bf16.msra.mxu0 0
        %1979 = vmatprep.subr.bf16.mxu0 0
        %1980 = vmatpush2.bf16.msra.mxu0 0
        %1981 = vmatprep.subr.bf16.mxu0 0
        %1982 = vmatpush2.bf16.msra.mxu0 0
        %1983 = vmatprep.subr.bf16.mxu0 0
        %1984 = vmatpush2.bf16.msra.mxu0 0
        %1985 = vmatprep.subr.bf16.mxu0 0
        %1986 = vmatpush2.bf16.msra.mxu0 0
        %1987 = vmatprep.subr.bf16.mxu0 0
        %1988 = vmatpush2.bf16.msra.mxu0 0
        %1989 = vmatprep.subr.bf16.mxu0 0
        %1990 = vmatpush2.bf16.msra.mxu0 0
        %1991 = vmatprep.mubr.bf16.mxu0 0
        %1992 = vmatmul.mubr.bf16.gmra.mxu0 %v1954
        %v1993 = vpop.f32.mrf.mxu0
        %v1994 = vadd.f32 0.0, %v1993
        %v1995 = vpop.f32.mrf.mxu0
        %v1996 = vpop.f32.mrf.mxu0
        %v1997 = vpop.f32.mrf.mxu0
        %1998 = vdwg.mxu0
        %v1999 = vld [vmem:[%s11 + $0x2] sm:$0x1]
        %v2000 = vld [vmem:[%s11 + $0x6] sm:$0x1]
        %v2001 = vlaneseq
        %v2002 = vshrl.u32 %v2001, 7
        %v2003 = vsub.s32 0, %v2002
        %v2004 = vrot.slane %v1999, %v2003
        %2006 = vrot.lane.b32.xlu0 %v2004, 64
        %v2007 = vpop.permute.xlu0 %2006
        %v2009 = vadd.f32 %v1401, %v2007
        %v2010 = vpack.c.bf16 %v2009, %v2009
        %v2011 = vlaneseq
        %v2012 = vshrl.u32 %v2011, 7
        %v2013 = vsub.s32 0, %v2012
        %v2014 = vrot.slane %v2000, %v2013
        %2016 = vrot.lane.b32.xlu0 %v2014, 64
        %v2017 = vpop.permute.xlu0 %2016
        %v2019 = vadd.f32 %v1401, %v2017
        %v2020 = vpack.c.bf16 %v2019, %v2019
        %2022 = vrot.lane.b32.xlu0 %v2020, 64
        %v2023 = vpop.permute.xlu0 %2022
        %2024 = vrot.lane.b32.xlu0 %v1583, 64
        %v2025 = vpop.permute.xlu0 %2024
        %v2027 = vsel %vm1584, %v2023, 0
        %v2030 = vsel %vm1584, %v2025, 0
        %2032 = vmatprep.subr.bf16.mxu0 0
        %2033 = vmatpush1.bf16.xpose.msra.mxu0 0
        %2034 = vmatprep.subr.bf16.mxu0 0
        %2035 = vmatpush1.bf16.xpose.msra.mxu0 0
        %2036 = vmatprep.subr.bf16.mxu0 0
        %2037 = vmatpush1.bf16.xpose.msra.mxu0 0
        %2038 = vmatprep.subr.bf16.mxu0 0
        %2039 = vmatpush1.bf16.xpose.msra.mxu0 0
        %2040 = vmatprep.subr.bf16.mxu0 0
        %2041 = vmatpush1.bf16.xpose.msra.mxu0 0
        %2042 = vmatprep.subr.bf16.mxu0 0
        %2043 = vmatpush1.bf16.xpose.msra.mxu0 0
        %2044 = vmatprep.subr.bf16.mxu0 0
        %2045 = vmatpush1.bf16.xpose.msra.mxu0 0
        %2046 = vmatprep.subr.bf16.mxu0 0
        %2047 = vmatpush1.bf16.xpose.msra.mxu0 %v2030
        %2048 = vmatprep.subr.bf16.mxu0 0
        %2049 = vmatpush2.bf16.xpose.msra.mxu0 0
        %2050 = vmatprep.subr.bf16.mxu0 0
        %2051 = vmatpush2.bf16.xpose.msra.mxu0 0
        %2052 = vmatprep.subr.bf16.mxu0 0
        %2053 = vmatpush2.bf16.xpose.msra.mxu0 0
        %2054 = vmatprep.subr.bf16.mxu0 0
        %2055 = vmatpush2.bf16.xpose.msra.mxu0 0
        %2056 = vmatprep.subr.bf16.mxu0 0
        %2057 = vmatpush2.bf16.xpose.msra.mxu0 0
        %2058 = vmatprep.subr.bf16.mxu0 0
        %2059 = vmatpush2.bf16.xpose.msra.mxu0 0
        %2060 = vmatprep.subr.bf16.mxu0 0
        %2061 = vmatpush2.bf16.xpose.msra.mxu0 0
        %2062 = vmatprep.subr.bf16.mxu0 0
        %2063 = vmatpush2.bf16.xpose.msra.mxu0 0
        %2064 = vmatprep.mubr.bf16.mxu0 0
        %2065 = vmatmul.mubr.bf16.gmra.mxu0 %v2027
        %v2066 = vpop.f32.mrf.mxu0
        %v2067 = vadd.f32 0.0, %v2066
        %v2068 = vpop.f32.mrf.mxu0
        %v2069 = vpop.f32.mrf.mxu0
        %v2070 = vpop.f32.mrf.mxu0
        %2071 = vdwg.mxu0
        %2073 = vrot.lane.b32.xlu0 %v2067, 121
        %v2074 = vpop.permute.xlu0 %2073
        %2076 = vrot.lane.b32.xlu0 %v2067, 1
        %v2077 = vpop.permute.xlu0 %2076
        %v2079 = vsel %vm1638, %v2074, %v2077
        %v2080 = vsel %vm1561, %v2079, %v2067
        %2082 = vrot.lane.b32.xlu0 %v2080, 122
        %v2083 = vpop.permute.xlu0 %2082
        %2085 = vrot.lane.b32.xlu0 %v2080, 2
        %v2086 = vpop.permute.xlu0 %2085
        %v2088 = vsel %vm1648, %v2083, %v2086
        %v2089 = vsel %vm1564, %v2088, %v2080
        %2091 = vrot.lane.b32.xlu0 %v2089, 124
        %v2092 = vpop.permute.xlu0 %2091
        %2094 = vrot.lane.b32.xlu0 %v2089, 4
        %v2095 = vpop.permute.xlu0 %2094
        %v2097 = vsel %vm1658, %v2092, %v2095
        %v2098 = vsel %vm1567, %v2097, %v2089
        %v2100 = vrot.slane %v2098, 1
        %v2102 = vsel %vm1664, %v2100, %v2100
        %v2103 = vsel %vm1667, 0.0, %v2102
        %v2104 = vsel %vm1666, %v2098, %v2103
        %2106 = vrot.lane.b32.xlu0 %v2010, 64
        %v2107 = vpop.permute.xlu0 %2106
        %2108 = vrot.lane.b32.xlu0 %v1576, 64
        %v2109 = vpop.permute.xlu0 %2108
        %v2111 = vsel %vm1584, %v2107, 0
        %v2114 = vsel %vm1584, %v2109, 0
        %2116 = vmatprep.subr.bf16.mxu0 0
        %2117 = vmatpush1.bf16.xpose.msra.mxu0 0
        %2118 = vmatprep.subr.bf16.mxu0 0
        %2119 = vmatpush1.bf16.xpose.msra.mxu0 0
        %2120 = vmatprep.subr.bf16.mxu0 0
        %2121 = vmatpush1.bf16.xpose.msra.mxu0 0
        %2122 = vmatprep.subr.bf16.mxu0 0
        %2123 = vmatpush1.bf16.xpose.msra.mxu0 0
        %2124 = vmatprep.subr.bf16.mxu0 0
        %2125 = vmatpush1.bf16.xpose.msra.mxu0 0
        %2126 = vmatprep.subr.bf16.mxu0 0
        %2127 = vmatpush1.bf16.xpose.msra.mxu0 0
        %2128 = vmatprep.subr.bf16.mxu0 0
        %2129 = vmatpush1.bf16.xpose.msra.mxu0 0
        %2130 = vmatprep.subr.bf16.mxu0 0
        %2131 = vmatpush1.bf16.xpose.msra.mxu0 %v2114
        %2132 = vmatprep.subr.bf16.mxu0 0
        %2133 = vmatpush2.bf16.xpose.msra.mxu0 0
        %2134 = vmatprep.subr.bf16.mxu0 0
        %2135 = vmatpush2.bf16.xpose.msra.mxu0 0
        %2136 = vmatprep.subr.bf16.mxu0 0
        %2137 = vmatpush2.bf16.xpose.msra.mxu0 0
        %2138 = vmatprep.subr.bf16.mxu0 0
        %2139 = vmatpush2.bf16.xpose.msra.mxu0 0
        %2140 = vmatprep.subr.bf16.mxu0 0
        %2141 = vmatpush2.bf16.xpose.msra.mxu0 0
        %2142 = vmatprep.subr.bf16.mxu0 0
        %2143 = vmatpush2.bf16.xpose.msra.mxu0 0
        %2144 = vmatprep.subr.bf16.mxu0 0
        %2145 = vmatpush2.bf16.xpose.msra.mxu0 0
        %2146 = vmatprep.subr.bf16.mxu0 0
        %2147 = vmatpush2.bf16.xpose.msra.mxu0 0
        %2148 = vmatprep.mubr.bf16.mxu0 0
        %2149 = vmatmul.mubr.bf16.gmra.mxu0 %v2111
        %v2150 = vpop.f32.mrf.mxu0
        %v2151 = vadd.f32 %v2104, %v2150
        %v2152 = vpop.f32.mrf.mxu0
        %v2153 = vpop.f32.mrf.mxu0
        %v2154 = vpop.f32.mrf.mxu0
        %2155 = vdwg.mxu0
        %v2156 = vmul.f32 %v2151, 0.088388346
        %v2157 = vsel %vm1717, %v2156, -inf
        %2158 = vmax.xlane.f32.xlu0 %v2157
        %v2159 = vpop.xlane.xlu0 %2158
        %v2160 = vsub.f32 %v2156, %v2159
        %v2161 = vmul.f32 %v2160, 1.442695
        %v2162 = vpow.pop %v2161
        %v2163 = vsel %vm1717, %v2162, 0.0
        %2164 = vadd.xlane.f32.xlu0 %v2163
        %v2165 = vpop.xlane.xlu0 %2164
        %v2166 = vrcp.pop %v2165
        %v2167 = vmul.f32 %v2162, %v2166
        %v2168 = vpack.c.bf16 %v2167, %v2167
        %2169 = vrot.lane.b32.xlu0 %v1730, 64
        %v2170 = vpop.permute.xlu0 %2169
        %v2172 = vsel %vm1717, %v2168, 0
        %v2175 = vsel %vm1734, %v2170, 0
        %2177 = vmatprep.subr.bf16.mxu0 0
        %2178 = vmatpush1.bf16.msra.mxu0 0
        %2179 = vmatprep.subr.bf16.mxu0 0
        %2180 = vmatpush1.bf16.msra.mxu0 0
        %2181 = vmatprep.subr.bf16.mxu0 0
        %2182 = vmatpush1.bf16.msra.mxu0 0
        %2183 = vmatprep.subr.bf16.mxu0 0
        %2184 = vmatpush1.bf16.msra.mxu0 0
        %2185 = vmatprep.subr.bf16.mxu0 0
        %2186 = vmatpush1.bf16.msra.mxu0 0
        %2187 = vmatprep.subr.bf16.mxu0 0
        %2188 = vmatpush1.bf16.msra.mxu0 0
        %2189 = vmatprep.subr.bf16.mxu0 0
        %2190 = vmatpush1.bf16.msra.mxu0 0
        %2191 = vmatprep.subr.bf16.mxu0 0
        %2192 = vmatpush1.bf16.msra.mxu0 %v2175
        %2193 = vmatprep.subr.bf16.mxu0 0
        %2194 = vmatpush2.bf16.msra.mxu0 0
        %2195 = vmatprep.subr.bf16.mxu0 0
        %2196 = vmatpush2.bf16.msra.mxu0 0
        %2197 = vmatprep.subr.bf16.mxu0 0
        %2198 = vmatpush2.bf16.msra.mxu0 0
        %2199 = vmatprep.subr.bf16.mxu0 0
        %2200 = vmatpush2.bf16.msra.mxu0 0
        %2201 = vmatprep.subr.bf16.mxu0 0
        %2202 = vmatpush2.bf16.msra.mxu0 0
        %2203 = vmatprep.subr.bf16.mxu0 0
        %2204 = vmatpush2.bf16.msra.mxu0 0
        %2205 = vmatprep.subr.bf16.mxu0 0
        %2206 = vmatpush2.bf16.msra.mxu0 0
        %2207 = vmatprep.subr.bf16.mxu0 0
        %2208 = vmatpush2.bf16.msra.mxu0 0
        %2209 = vmatprep.mubr.bf16.mxu0 0
        %2210 = vmatmul.mubr.bf16.gmra.mxu0 %v2172
        %v2211 = vpop.f32.mrf.mxu0
        %v2212 = vadd.f32 0.0, %v2211
        %v2213 = vpop.f32.mrf.mxu0
        %v2214 = vpop.f32.mrf.mxu0
        %v2215 = vpop.f32.mrf.mxu0
        %2216 = vdwg.mxu0
        %v2217 = vld [vmem:[%s11 + $0x3] sm:$0x1]
        %v2218 = vld [vmem:[%s11 + $0x7] sm:$0x1]
        %v2219 = vlaneseq
        %v2220 = vshrl.u32 %v2219, 7
        %v2221 = vsub.s32 0, %v2220
        %v2222 = vrot.slane %v2217, %v2221
        %2224 = vrot.lane.b32.xlu0 %v2222, 96
        %v2225 = vpop.permute.xlu0 %2224
        %v2227 = vadd.f32 %v1401, %v2225
        %v2228 = vpack.c.bf16 %v2227, %v2227
        %v2229 = vlaneseq
        %v2230 = vshrl.u32 %v2229, 7
        %v2231 = vsub.s32 0, %v2230
        %v2232 = vrot.slane %v2218, %v2231
        %2234 = vrot.lane.b32.xlu0 %v2232, 96
        %v2235 = vpop.permute.xlu0 %2234
        %v2237 = vadd.f32 %v1401, %v2235
        %v2238 = vpack.c.bf16 %v2237, %v2237
        %2240 = vrot.lane.b32.xlu0 %v2238, 32
        %v2241 = vpop.permute.xlu0 %2240
        %2242 = vrot.lane.b32.xlu0 %v1583, 32
        %v2243 = vpop.permute.xlu0 %2242
        %v2245 = vsel %vm1584, %v2241, 0
        %v2248 = vsel %vm1584, %v2243, 0
        %2250 = vmatprep.subr.bf16.mxu0 0
        %2251 = vmatpush1.bf16.xpose.msra.mxu0 0
        %2252 = vmatprep.subr.bf16.mxu0 0
        %2253 = vmatpush1.bf16.xpose.msra.mxu0 0
        %2254 = vmatprep.subr.bf16.mxu0 0
        %2255 = vmatpush1.bf16.xpose.msra.mxu0 0
        %2256 = vmatprep.subr.bf16.mxu0 0
        %2257 = vmatpush1.bf16.xpose.msra.mxu0 0
        %2258 = vmatprep.subr.bf16.mxu0 0
        %2259 = vmatpush1.bf16.xpose.msra.mxu0 0
        %2260 = vmatprep.subr.bf16.mxu0 0
        %2261 = vmatpush1.bf16.xpose.msra.mxu0 0
        %2262 = vmatprep.subr.bf16.mxu0 0
        %2263 = vmatpush1.bf16.xpose.msra.mxu0 0
        %2264 = vmatprep.subr.bf16.mxu0 0
        %2265 = vmatpush1.bf16.xpose.msra.mxu0 %v2248
        %2266 = vmatprep.subr.bf16.mxu0 0
        %2267 = vmatpush2.bf16.xpose.msra.mxu0 0
        %2268 = vmatprep.subr.bf16.mxu0 0
        %2269 = vmatpush2.bf16.xpose.msra.mxu0 0
        %2270 = vmatprep.subr.bf16.mxu0 0
        %2271 = vmatpush2.bf16.xpose.msra.mxu0 0
        %2272 = vmatprep.subr.bf16.mxu0 0
        %2273 = vmatpush2.bf16.xpose.msra.mxu0 0
        %2274 = vmatprep.subr.bf16.mxu0 0
        %2275 = vmatpush2.bf16.xpose.msra.mxu0 0
        %2276 = vmatprep.subr.bf16.mxu0 0
        %2277 = vmatpush2.bf16.xpose.msra.mxu0 0
        %2278 = vmatprep.subr.bf16.mxu0 0
        %2279 = vmatpush2.bf16.xpose.msra.mxu0 0
        %2280 = vmatprep.subr.bf16.mxu0 0
        %2281 = vmatpush2.bf16.xpose.msra.mxu0 0
        %2282 = vmatprep.mubr.bf16.mxu0 0
        %2283 = vmatmul.mubr.bf16.gmra.mxu0 %v2245
        %v2284 = vpop.f32.mrf.mxu0
        %v2285 = vadd.f32 0.0, %v2284
        %v2286 = vpop.f32.mrf.mxu0
        %v2287 = vpop.f32.mrf.mxu0
        %v2288 = vpop.f32.mrf.mxu0
        %2289 = vdwg.mxu0
        %2291 = vrot.lane.b32.xlu0 %v2285, 121
        %v2292 = vpop.permute.xlu0 %2291
        %2294 = vrot.lane.b32.xlu0 %v2285, 1
        %v2295 = vpop.permute.xlu0 %2294
        %v2297 = vsel %vm1638, %v2292, %v2295
        %v2298 = vsel %vm1561, %v2297, %v2285
        %2300 = vrot.lane.b32.xlu0 %v2298, 122
        %v2301 = vpop.permute.xlu0 %2300
        %2303 = vrot.lane.b32.xlu0 %v2298, 2
        %v2304 = vpop.permute.xlu0 %2303
        %v2306 = vsel %vm1648, %v2301, %v2304
        %v2307 = vsel %vm1564, %v2306, %v2298
        %2309 = vrot.lane.b32.xlu0 %v2307, 124
        %v2310 = vpop.permute.xlu0 %2309
        %2312 = vrot.lane.b32.xlu0 %v2307, 4
        %v2313 = vpop.permute.xlu0 %2312
        %v2315 = vsel %vm1658, %v2310, %v2313
        %v2316 = vsel %vm1567, %v2315, %v2307
        %v2318 = vrot.slane %v2316, 1
        %v2320 = vsel %vm1664, %v2318, %v2318
        %v2321 = vsel %vm1667, 0.0, %v2320
        %v2322 = vsel %vm1666, %v2316, %v2321
        %2324 = vrot.lane.b32.xlu0 %v2228, 32
        %v2325 = vpop.permute.xlu0 %2324
        %2326 = vrot.lane.b32.xlu0 %v1576, 32
        %v2327 = vpop.permute.xlu0 %2326
        %v2329 = vsel %vm1584, %v2325, 0
        %v2332 = vsel %vm1584, %v2327, 0
        %2334 = vmatprep.subr.bf16.mxu0 0
        %2335 = vmatpush1.bf16.xpose.msra.mxu0 0
        %2336 = vmatprep.subr.bf16.mxu0 0
        %2337 = vmatpush1.bf16.xpose.msra.mxu0 0
        %2338 = vmatprep.subr.bf16.mxu0 0
        %2339 = vmatpush1.bf16.xpose.msra.mxu0 0
        %2340 = vmatprep.subr.bf16.mxu0 0
        %2341 = vmatpush1.bf16.xpose.msra.mxu0 0
        %2342 = vmatprep.subr.bf16.mxu0 0
        %2343 = vmatpush1.bf16.xpose.msra.mxu0 0
        %2344 = vmatprep.subr.bf16.mxu0 0
        %2345 = vmatpush1.bf16.xpose.msra.mxu0 0
        %2346 = vmatprep.subr.bf16.mxu0 0
        %2347 = vmatpush1.bf16.xpose.msra.mxu0 0
        %2348 = vmatprep.subr.bf16.mxu0 0
        %2349 = vmatpush1.bf16.xpose.msra.mxu0 %v2332
        %2350 = vmatprep.subr.bf16.mxu0 0
        %2351 = vmatpush2.bf16.xpose.msra.mxu0 0
        %2352 = vmatprep.subr.bf16.mxu0 0
        %2353 = vmatpush2.bf16.xpose.msra.mxu0 0
        %2354 = vmatprep.subr.bf16.mxu0 0
        %2355 = vmatpush2.bf16.xpose.msra.mxu0 0
        %2356 = vmatprep.subr.bf16.mxu0 0
        %2357 = vmatpush2.bf16.xpose.msra.mxu0 0
        %2358 = vmatprep.subr.bf16.mxu0 0
        %2359 = vmatpush2.bf16.xpose.msra.mxu0 0
        %2360 = vmatprep.subr.bf16.mxu0 0
        %2361 = vmatpush2.bf16.xpose.msra.mxu0 0
        %2362 = vmatprep.subr.bf16.mxu0 0
        %2363 = vmatpush2.bf16.xpose.msra.mxu0 0
        %2364 = vmatprep.subr.bf16.mxu0 0
        %2365 = vmatpush2.bf16.xpose.msra.mxu0 0
        %2366 = vmatprep.mubr.bf16.mxu0 0
        %2367 = vmatmul.mubr.bf16.gmra.mxu0 %v2329
        %v2368 = vpop.f32.mrf.mxu0
        %v2369 = vadd.f32 %v2322, %v2368
        %v2370 = vpop.f32.mrf.mxu0
        %v2371 = vpop.f32.mrf.mxu0
        %v2372 = vpop.f32.mrf.mxu0
        %2373 = vdwg.mxu0
        %v2374 = vmul.f32 %v2369, 0.088388346
        %v2375 = vsel %vm1717, %v2374, -inf
        %2376 = vmax.xlane.f32.xlu0 %v2375
        %v2377 = vpop.xlane.xlu0 %2376
        %v2378 = vsub.f32 %v2374, %v2377
        %v2379 = vmul.f32 %v2378, 1.442695
        %v2380 = vpow.pop %v2379
        %v2381 = vsel %vm1717, %v2380, 0.0
        %2382 = vadd.xlane.f32.xlu0 %v2381
        %v2383 = vpop.xlane.xlu0 %2382
        %v2384 = vrcp.pop %v2383
        %v2385 = vmul.f32 %v2380, %v2384
        %v2386 = vpack.c.bf16 %v2385, %v2385
        %2387 = vrot.lane.b32.xlu0 %v1730, 32
        %v2388 = vpop.permute.xlu0 %2387
        %v2390 = vsel %vm1717, %v2386, 0
        %v2393 = vsel %vm1734, %v2388, 0
        %2395 = vmatprep.subr.bf16.mxu0 0
        %2396 = vmatpush1.bf16.msra.mxu0 0
        %2397 = vmatprep.subr.bf16.mxu0 0
        %2398 = vmatpush1.bf16.msra.mxu0 0
        %2399 = vmatprep.subr.bf16.mxu0 0
        %2400 = vmatpush1.bf16.msra.mxu0 0
        %2401 = vmatprep.subr.bf16.mxu0 0
        %2402 = vmatpush1.bf16.msra.mxu0 0
        %2403 = vmatprep.subr.bf16.mxu0 0
        %2404 = vmatpush1.bf16.msra.mxu0 0
        %2405 = vmatprep.subr.bf16.mxu0 0
        %2406 = vmatpush1.bf16.msra.mxu0 0
        %2407 = vmatprep.subr.bf16.mxu0 0
        %2408 = vmatpush1.bf16.msra.mxu0 0
        %2409 = vmatprep.subr.bf16.mxu0 0
        %2410 = vmatpush1.bf16.msra.mxu0 %v2393
        %2411 = vmatprep.subr.bf16.mxu0 0
        %2412 = vmatpush2.bf16.msra.mxu0 0
        %2413 = vmatprep.subr.bf16.mxu0 0
        %2414 = vmatpush2.bf16.msra.mxu0 0
        %2415 = vmatprep.subr.bf16.mxu0 0
        %2416 = vmatpush2.bf16.msra.mxu0 0
        %2417 = vmatprep.subr.bf16.mxu0 0
        %2418 = vmatpush2.bf16.msra.mxu0 0
        %2419 = vmatprep.subr.bf16.mxu0 0
        %2420 = vmatpush2.bf16.msra.mxu0 0
        %2421 = vmatprep.subr.bf16.mxu0 0
        %2422 = vmatpush2.bf16.msra.mxu0 0
        %2423 = vmatprep.subr.bf16.mxu0 0
        %2424 = vmatpush2.bf16.msra.mxu0 0
        %2425 = vmatprep.subr.bf16.mxu0 0
        %2426 = vmatpush2.bf16.msra.mxu0 0
        %2427 = vmatprep.mubr.bf16.mxu0 0
        %2428 = vmatmul.mubr.bf16.gmra.mxu0 %v2390
        %v2429 = vpop.f32.mrf.mxu0
        %v2430 = vadd.f32 0.0, %v2429
        %v2431 = vpop.f32.mrf.mxu0
        %v2432 = vpop.f32.mrf.mxu0
        %v2433 = vpop.f32.mrf.mxu0
        %2434 = vdwg.mxu0
        %2436 = vrot.lane.b32.xlu0 %v1994, 32
        %v2437 = vpop.permute.xlu0 %2436
        %2440 = vrot.lane.b32.xlu0 %v2212, 64
        %v2441 = vpop.permute.xlu0 %2440
        %2444 = vrot.lane.b32.xlu0 %v2430, 96
        %v2445 = vpop.permute.xlu0 %2444
        %v2447 = vsel %vm1584, %v1773, %v2437
        %vm2448 = vcmask 523264
        %v2449 = vsel %vm2448, %v2447, %v2441
        %vm2450 = vcmask 785408
        %v2451 = vsel %vm2450, %v2449, %v2445
        %v2452 = vpack.c.bf16 %v2451, %v2451
        %v2453 = vld [vmem:[%s12] sm:$0xf]
        %v2454 = vld [vmem:[%s12 + $0x4] sm:$0xf]
        %v2455 = vld [vmem:[%s12 + $0x8] sm:$0xf]
        %v2456 = vld [vmem:[%s12 + $0xc] sm:$0xf]
        %v2457 = vld [vmem:[%s12 + $0x10] sm:$0xf]
        %v2458 = vld [vmem:[%s12 + $0x14] sm:$0xf]
        %v2459 = vld [vmem:[%s12 + $0x18] sm:$0xf]
        %v2460 = vld [vmem:[%s12 + $0x1c] sm:$0xf]
        %v2461 = vld [vmem:[%s12 + $0x20] sm:$0xf]
        %v2462 = vld [vmem:[%s12 + $0x24] sm:$0xf]
        %v2463 = vld [vmem:[%s12 + $0x28] sm:$0xf]
        %v2464 = vld [vmem:[%s12 + $0x2c] sm:$0xf]
        %v2465 = vld [vmem:[%s12 + $0x30] sm:$0xf]
        %v2466 = vld [vmem:[%s12 + $0x34] sm:$0xf]
        %v2467 = vld [vmem:[%s12 + $0x38] sm:$0xf]
        %v2468 = vld [vmem:[%s12 + $0x3c] sm:$0xf]
        %v2469 = vld [vmem:[%s13] sm:$0x1]
        %v2471 = vlaneseq
        %v2472 = vshrl.u32 %v2471, 7
        %v2473 = vsub.s32 0, %v2472
        %v2474 = vrot.slane %v2469, %v2473
        %v2492 = vunpack.c.l.b16 %v2453
        %v2493 = vunpack.c.l.b16 %v2454
        %v2494 = vunpack.c.l.b16 %v2455
        %v2495 = vunpack.c.l.b16 %v2456
        %v2496 = vunpack.c.l.b16 %v2457
        %v2497 = vunpack.c.l.b16 %v2458
        %v2498 = vunpack.c.l.b16 %v2459
        %v2499 = vunpack.c.l.b16 %v2460
        %v2500 = vunpack.c.l.b16 %v2461
        %v2501 = vunpack.c.l.b16 %v2462
        %v2502 = vunpack.c.l.b16 %v2463
        %v2503 = vunpack.c.l.b16 %v2464
        %v2504 = vunpack.c.l.b16 %v2465
        %v2505 = vunpack.c.l.b16 %v2466
        %v2506 = vunpack.c.l.b16 %v2467
        %v2507 = vunpack.c.l.b16 %v2468
        %v2508 = vpack.c.b16 %v2493, %v2492
        %v2509 = vpack.c.b16 %v2495, %v2494
        %v2510 = vpack.c.b16 %v2497, %v2496
        %v2511 = vpack.c.b16 %v2499, %v2498
        %v2512 = vpack.c.b16 %v2501, %v2500
        %v2513 = vpack.c.b16 %v2503, %v2502
        %v2514 = vpack.c.b16 %v2505, %v2504
        %v2515 = vpack.c.b16 %v2507, %v2506
        %2524 = vmatprep.subr.bf16.mxu0 0
        %2525 = vmatpush1.bf16.msra.mxu0 %v2515
        %2526 = vmatprep.subr.bf16.mxu0 0
        %2527 = vmatpush1.bf16.msra.mxu0 %v2514
        %2528 = vmatprep.subr.bf16.mxu0 0
        %2529 = vmatpush1.bf16.msra.mxu0 %v2513
        %2530 = vmatprep.subr.bf16.mxu0 0
        %2531 = vmatpush1.bf16.msra.mxu0 %v2512
        %2532 = vmatprep.subr.bf16.mxu0 0
        %2533 = vmatpush1.bf16.msra.mxu0 %v2511
        %2534 = vmatprep.subr.bf16.mxu0 0
        %2535 = vmatpush1.bf16.msra.mxu0 %v2510
        %2536 = vmatprep.subr.bf16.mxu0 0
        %2537 = vmatpush1.bf16.msra.mxu0 %v2509
        %2538 = vmatprep.subr.bf16.mxu0 0
        %2539 = vmatpush1.bf16.msra.mxu0 %v2508
        %2540 = vmatprep.subr.bf16.mxu0 0
        %2541 = vmatpush2.bf16.msra.mxu0 0
        %2542 = vmatprep.subr.bf16.mxu0 0
        %2543 = vmatpush2.bf16.msra.mxu0 0
        %2544 = vmatprep.subr.bf16.mxu0 0
        %2545 = vmatpush2.bf16.msra.mxu0 0
        %2546 = vmatprep.subr.bf16.mxu0 0
        %2547 = vmatpush2.bf16.msra.mxu0 0
        %2548 = vmatprep.subr.bf16.mxu0 0
        %2549 = vmatpush2.bf16.msra.mxu0 0
        %2550 = vmatprep.subr.bf16.mxu0 0
        %2551 = vmatpush2.bf16.msra.mxu0 0
        %2552 = vmatprep.subr.bf16.mxu0 0
        %2553 = vmatpush2.bf16.msra.mxu0 0
        %2554 = vmatprep.subr.bf16.mxu0 0
        %2555 = vmatpush2.bf16.msra.mxu0 0
        %2556 = vmatprep.mubr.bf16.mxu0 0
        %2557 = vmatmul.mubr.bf16.gmra.mxu0 %v2452
        %v2558 = vpop.f32.mrf.mxu0
        %v2559 = vadd.f32 %v2474, %v2558
        %v2560 = vpop.f32.mrf.mxu0
        %v2561 = vpop.f32.mrf.mxu0
        %v2562 = vpop.f32.mrf.mxu0
        %2563 = vdwg.mxu0
        %v2564 = vadd.f32 %v1164, %v2559
        %v2565 = vld [vmem:[%s2 + $0x2] sm:$0x1]
        %v2566 = vld [vmem:[%s3 + $0x2] sm:$0x1]
        %2567 = vadd.xlane.f32.xlu0 %v2564
        %v2568 = vpop.xlane.xlu0 %2567
        %v2569 = vmul.f32 %v2568, %v802
        %v2570 = vsub.f32 %v2564, %v2569
        %v2571 = vmul.f32 %v2570, %v2570
        %2572 = vadd.xlane.f32.xlu0 %v2571
        %v2573 = vpop.xlane.xlu0 %2572
        %v2574 = vmul.f32 %v2573, %v802
        %v2575 = vadd.f32 %v2574, 1e-05
        %v2576 = vrsqrt.pop %v2575
        %v2577 = vmul.f32 %v2570, %v2576
        %v2578 = vlaneseq
        %v2579 = vshrl.u32 %v2578, 7
        %v2580 = vsub.s32 0, %v2579
        %v2581 = vrot.slane %v2565, %v2580
        %v2582 = vmul.f32 %v2577, %v2581
        %v2583 = vlaneseq
        %v2584 = vshrl.u32 %v2583, 7
        %v2585 = vsub.s32 0, %v2584
        %v2586 = vrot.slane %v2566, %v2585
        %v2587 = vadd.f32 %v2582, %v2586
        %v2588 = vpack.c.bf16 %v2587, %v2587
        %v2589 = vld [vmem:[%s14] sm:$0xff]
        %v2590 = vld [vmem:[%s14 + $0x8] sm:$0xff]
        %v2591 = vld [vmem:[%s14 + $0x10] sm:$0xff]
        %v2592 = vld [vmem:[%s14 + $0x18] sm:$0xff]
        %v2593 = vld [vmem:[%s14 + $0x20] sm:$0xff]
        %v2594 = vld [vmem:[%s14 + $0x28] sm:$0xff]
        %v2595 = vld [vmem:[%s14 + $0x30] sm:$0xff]
        %v2596 = vld [vmem:[%s14 + $0x38] sm:$0xff]
        %v2597 = vld [vmem:[%s14 + $0x40] sm:$0xff]
        %v2598 = vld [vmem:[%s14 + $0x48] sm:$0xff]
        %v2599 = vld [vmem:[%s14 + $0x50] sm:$0xff]
        %v2600 = vld [vmem:[%s14 + $0x58] sm:$0xff]
        %v2601 = vld [vmem:[%s14 + $0x60] sm:$0xff]
        %v2602 = vld [vmem:[%s14 + $0x68] sm:$0xff]
        %v2603 = vld [vmem:[%s14 + $0x70] sm:$0xff]
        %v2604 = vld [vmem:[%s14 + $0x78] sm:$0xff]
        %v2605 = vld [vmem:[%s15] sm:$0x3]
        %v2607 = vlaneseq
        %v2608 = vshrl.u32 %v2607, 7
        %v2609 = vsub.s32 0, %v2608
        %v2610 = vrot.slane %v2605, %v2609
        %v2611 = vlaneseq
        %v2612 = vshrl.u32 %v2611, 7
        %v2613 = vsub.s32 1, %v2612
        %v2614 = vrot.slane %v2605, %v2613
        %v2633 = vunpack.c.l.b16 %v2589
        %v2634 = vunpack.c.h.b16 %v2589
        %v2635 = vunpack.c.l.b16 %v2590
        %v2636 = vunpack.c.h.b16 %v2590
        %v2637 = vunpack.c.l.b16 %v2591
        %v2638 = vunpack.c.h.b16 %v2591
        %v2639 = vunpack.c.l.b16 %v2592
        %v2640 = vunpack.c.h.b16 %v2592
        %v2641 = vunpack.c.l.b16 %v2593
        %v2642 = vunpack.c.h.b16 %v2593
        %v2643 = vunpack.c.l.b16 %v2594
        %v2644 = vunpack.c.h.b16 %v2594
        %v2645 = vunpack.c.l.b16 %v2595
        %v2646 = vunpack.c.h.b16 %v2595
        %v2647 = vunpack.c.l.b16 %v2596
        %v2648 = vunpack.c.h.b16 %v2596
        %v2649 = vunpack.c.l.b16 %v2597
        %v2650 = vunpack.c.h.b16 %v2597
        %v2651 = vunpack.c.l.b16 %v2598
        %v2652 = vunpack.c.h.b16 %v2598
        %v2653 = vunpack.c.l.b16 %v2599
        %v2654 = vunpack.c.h.b16 %v2599
        %v2655 = vunpack.c.l.b16 %v2600
        %v2656 = vunpack.c.h.b16 %v2600
        %v2657 = vunpack.c.l.b16 %v2601
        %v2658 = vunpack.c.h.b16 %v2601
        %v2659 = vunpack.c.l.b16 %v2602
        %v2660 = vunpack.c.h.b16 %v2602
        %v2661 = vunpack.c.l.b16 %v2603
        %v2662 = vunpack.c.h.b16 %v2603
        %v2663 = vunpack.c.l.b16 %v2604
        %v2664 = vunpack.c.h.b16 %v2604
        %v2665 = vpack.c.b16 %v2635, %v2633
        %v2666 = vpack.c.b16 %v2636, %v2634
        %v2667 = vpack.c.b16 %v2639, %v2637
        %v2668 = vpack.c.b16 %v2640, %v2638
        %v2669 = vpack.c.b16 %v2643, %v2641
        %v2670 = vpack.c.b16 %v2644, %v2642
        %v2671 = vpack.c.b16 %v2647, %v2645
        %v2672 = vpack.c.b16 %v2648, %v2646
        %v2673 = vpack.c.b16 %v2651, %v2649
        %v2674 = vpack.c.b16 %v2652, %v2650
        %v2675 = vpack.c.b16 %v2655, %v2653
        %v2676 = vpack.c.b16 %v2656, %v2654
        %v2677 = vpack.c.b16 %v2659, %v2657
        %v2678 = vpack.c.b16 %v2660, %v2658
        %v2679 = vpack.c.b16 %v2663, %v2661
        %v2680 = vpack.c.b16 %v2664, %v2662
        %2697 = vmatprep.subr.bf16.mxu0 %v2680
        %2698 = vmatpush1.bf16.msra.mxu0 %v2679
        %2699 = vmatprep.subr.bf16.mxu0 %v2678
        %2700 = vmatpush1.bf16.msra.mxu0 %v2677
        %2701 = vmatprep.subr.bf16.mxu0 %v2676
        %2702 = vmatpush1.bf16.msra.mxu0 %v2675
        %2703 = vmatprep.subr.bf16.mxu0 %v2674
        %2704 = vmatpush1.bf16.msra.mxu0 %v2673
        %2705 = vmatprep.subr.bf16.mxu0 %v2672
        %2706 = vmatpush1.bf16.msra.mxu0 %v2671
        %2707 = vmatprep.subr.bf16.mxu0 %v2670
        %2708 = vmatpush1.bf16.msra.mxu0 %v2669
        %2709 = vmatprep.subr.bf16.mxu0 %v2668
        %2710 = vmatpush1.bf16.msra.mxu0 %v2667
        %2711 = vmatprep.subr.bf16.mxu0 %v2666
        %2712 = vmatpush1.bf16.msra.mxu0 %v2665
        %2713 = vmatprep.subr.bf16.mxu0 0
        %2714 = vmatpush2.bf16.msra.mxu0 0
        %2715 = vmatprep.subr.bf16.mxu0 0
        %2716 = vmatpush2.bf16.msra.mxu0 0
        %2717 = vmatprep.subr.bf16.mxu0 0
        %2718 = vmatpush2.bf16.msra.mxu0 0
        %2719 = vmatprep.subr.bf16.mxu0 0
        %2720 = vmatpush2.bf16.msra.mxu0 0
        %2721 = vmatprep.subr.bf16.mxu0 0
        %2722 = vmatpush2.bf16.msra.mxu0 0
        %2723 = vmatprep.subr.bf16.mxu0 0
        %2724 = vmatpush2.bf16.msra.mxu0 0
        %2725 = vmatprep.subr.bf16.mxu0 0
        %2726 = vmatpush2.bf16.msra.mxu0 0
        %2727 = vmatprep.subr.bf16.mxu0 0
        %2728 = vmatpush2.bf16.msra.mxu0 0
        %2729 = vmatprep.mubr.bf16.mxu0 0
        %2730 = vmatmul.mubr.bf16.gmra.mxu0 %v2588
        %v2731 = vpop.f32.mrf.mxu0
        %v2732 = vadd.f32 %v2610, %v2731
        %v2733 = vpop.f32.mrf.mxu0
        %v2734 = vadd.f32 %v2614, %v2733
        %v2735 = vpop.f32.mrf.mxu0
        %v2736 = vpop.f32.mrf.mxu0
        %2737 = vdwg.mxu0
        %v2738 = vxor.u32 %v2734, 2147483648
        %v2739 = vmul.f32 %v2738, 1.442695
        %v2740 = vpow.pop %v2739
        %v2741 = vadd.f32 %v2740, 1.0
        %v2742 = vrcp.pop %v2741
        %v2743 = vmul.f32 1.0, %v2742
        %v2744 = vmul.f32 %v2732, %v2743
        %v2746 = vrot.slane %v2744, 1
        %v2748 = vsel %vm1664, 0.0, %v2746
        %v2749 = vld [vmem:[%s16] sm:$0x1]
        %v2750 = vlaneseq
        %v2751 = vshrl.u32 %v2750, 7
        %v2752 = vsub.s32 0, %v2751
        %v2753 = vrot.slane %v2749, %v2752
        %v2754 = vmul.f32 %v2748, %v2753
        %v2755 = vadd.f32 %v2754, 0.0
        %v2756 = vrot.slane %v2744, 2
        %vm2758 = vcmask 1045504
        %v2759 = vsel %vm2758, 0.0, %v2756
        %v2760 = vld [vmem:[%s16 + $0x1] sm:$0x1]
        %v2761 = vlaneseq
        %v2762 = vshrl.u32 %v2761, 7
        %v2763 = vsub.s32 0, %v2762
        %v2764 = vrot.slane %v2760, %v2763
        %v2765 = vmul.f32 %v2759, %v2764
        %v2766 = vadd.f32 %v2755, %v2765
        %v2767 = vrot.slane %v2744, 3
        %vm2769 = vcmask 1044480
        %v2770 = vsel %vm2769, 0.0, %v2767
        %v2771 = vld [vmem:[%s16 + $0x2] sm:$0x1]
        %v2772 = vlaneseq
        %v2773 = vshrl.u32 %v2772, 7
        %v2774 = vsub.s32 0, %v2773
        %v2775 = vrot.slane %v2771, %v2774
        %v2776 = vmul.f32 %v2770, %v2775
        %v2777 = vadd.f32 %v2766, %v2776
        %v2778 = vrot.slane %v2744, 4
        %v2780 = vsel %vm1734, 0.0, %v2778
        %v2781 = vld [vmem:[%s16 + $0x3] sm:$0x1]
        %v2782 = vlaneseq
        %v2783 = vshrl.u32 %v2782, 7
        %v2784 = vsub.s32 0, %v2783
        %v2785 = vrot.slane %v2781, %v2784
        %v2786 = vmul.f32 %v2780, %v2785
        %v2787 = vadd.f32 %v2777, %v2786
        %v2788 = vrot.slane %v2744, 5
        %vm2790 = vcmask 1042432
        %v2791 = vsel %vm2790, 0.0, %v2788
        %v2792 = vld [vmem:[%s16 + $0x4] sm:$0x1]
        %v2793 = vlaneseq
        %v2794 = vshrl.u32 %v2793, 7
        %v2795 = vsub.s32 0, %v2794
        %v2796 = vrot.slane %v2792, %v2795
        %v2797 = vmul.f32 %v2791, %v2796
        %v2798 = vadd.f32 %v2787, %v2797
        %v2799 = vrot.slane %v2744, 6
        %vm2801 = vcmask 1041408
        %v2802 = vsel %vm2801, 0.0, %v2799
        %v2803 = vld [vmem:[%s16 + $0x5] sm:$0x1]
        %v2804 = vlaneseq
        %v2805 = vshrl.u32 %v2804, 7
        %v2806 = vsub.s32 0, %v2805
        %v2807 = vrot.slane %v2803, %v2806
        %v2808 = vmul.f32 %v2802, %v2807
        %v2809 = vadd.f32 %v2798, %v2808
        %v2810 = vrot.slane %v2744, 7
        %vm2812 = vcmask 1040384
        %v2813 = vsel %vm2812, 0.0, %v2810
        %v2814 = vld [vmem:[%s16 + $0x6] sm:$0x1]
        %v2815 = vlaneseq
        %v2816 = vshrl.u32 %v2815, 7
        %v2817 = vsub.s32 0, %v2816
        %v2818 = vrot.slane %v2814, %v2817
        %v2819 = vmul.f32 %v2813, %v2818
        %v2820 = vadd.f32 %v2809, %v2819
        %v2821 = vld [vmem:[%s16 + $0x7] sm:$0x1]
        %v2822 = vlaneseq
        %v2823 = vshrl.u32 %v2822, 7
        %v2824 = vsub.s32 0, %v2823
        %v2825 = vrot.slane %v2821, %v2824
        %v2826 = vmul.f32 %v2744, %v2825
        %v2827 = vadd.f32 %v2820, %v2826
        %v2828 = vsel %vm1664, %v2746, 0.0
        %v2829 = vld [vmem:[%s16 + $0x8] sm:$0x1]
        %v2830 = vlaneseq
        %v2831 = vshrl.u32 %v2830, 7
        %v2832 = vsub.s32 0, %v2831
        %v2833 = vrot.slane %v2829, %v2832
        %v2834 = vmul.f32 %v2828, %v2833
        %v2835 = vadd.f32 %v2827, %v2834
        %v2836 = vsel %vm2758, %v2756, 0.0
        %v2837 = vld [vmem:[%s16 + $0x9] sm:$0x1]
        %v2838 = vlaneseq
        %v2839 = vshrl.u32 %v2838, 7
        %v2840 = vsub.s32 0, %v2839
        %v2841 = vrot.slane %v2837, %v2840
        %v2842 = vmul.f32 %v2836, %v2841
        %v2843 = vadd.f32 %v2835, %v2842
        %v2844 = vsel %vm2769, %v2767, 0.0
        %v2845 = vld [vmem:[%s16 + $0xa] sm:$0x1]
        %v2846 = vlaneseq
        %v2847 = vshrl.u32 %v2846, 7
        %v2848 = vsub.s32 0, %v2847
        %v2849 = vrot.slane %v2845, %v2848
        %v2850 = vmul.f32 %v2844, %v2849
        %v2851 = vadd.f32 %v2843, %v2850
        %v2852 = vsel %vm1734, %v2778, 0.0
        %v2853 = vld [vmem:[%s16 + $0xb] sm:$0x1]
        %v2854 = vlaneseq
        %v2855 = vshrl.u32 %v2854, 7
        %v2856 = vsub.s32 0, %v2855
        %v2857 = vrot.slane %v2853, %v2856
        %v2858 = vmul.f32 %v2852, %v2857
        %v2859 = vadd.f32 %v2851, %v2858
        %v2860 = vsel %vm2790, %v2788, 0.0
        %v2861 = vld [vmem:[%s16 + $0xc] sm:$0x1]
        %v2862 = vlaneseq
        %v2863 = vshrl.u32 %v2862, 7
        %v2864 = vsub.s32 0, %v2863
        %v2865 = vrot.slane %v2861, %v2864
        %v2866 = vmul.f32 %v2860, %v2865
        %v2867 = vadd.f32 %v2859, %v2866
        %v2868 = vsel %vm2801, %v2799, 0.0
        %v2869 = vld [vmem:[%s16 + $0xd] sm:$0x1]
        %v2870 = vlaneseq
        %v2871 = vshrl.u32 %v2870, 7
        %v2872 = vsub.s32 0, %v2871
        %v2873 = vrot.slane %v2869, %v2872
        %v2874 = vmul.f32 %v2868, %v2873
        %v2875 = vadd.f32 %v2867, %v2874
        %v2876 = vsel %vm2812, %v2810, 0.0
        %v2877 = vld [vmem:[%s16 + $0xe] sm:$0x1]
        %v2878 = vlaneseq
        %v2879 = vshrl.u32 %v2878, 7
        %v2880 = vsub.s32 0, %v2879
        %v2881 = vrot.slane %v2877, %v2880
        %v2882 = vmul.f32 %v2876, %v2881
        %v2883 = vadd.f32 %v2875, %v2882
        %v2884 = vld [vmem:[%s17] sm:$0x1]
        %v2886 = vlaneseq
        %v2887 = vshrl.u32 %v2886, 7
        %v2888 = vsub.s32 0, %v2887
        %v2889 = vrot.slane %v2884, %v2888
        %v2891 = vmul.f32 %v2883, %v2889
        %v2892 = vld [vmem:[%s18] sm:$0x1]
        %v2894 = vlaneseq
        %v2895 = vshrl.u32 %v2894, 7
        %v2896 = vsub.s32 0, %v2895
        %v2897 = vrot.slane %v2892, %v2896
        %v2899 = vadd.f32 %v2891, %v2897
        %v2900 = vxor.u32 %v2899, 2147483648
        %v2901 = vmul.f32 %v2900, 1.442695
        %v2902 = vpow.pop %v2901
        %v2903 = vadd.f32 %v2902, 1.0
        %v2904 = vrcp.pop %v2903
        %v2905 = vmul.f32 1.0, %v2904
        %v2906 = vmul.f32 %v2899, %v2905
        %v2907 = vpack.c.bf16 %v2906, %v2906
        %v2908 = vld [vmem:[%s19] sm:$0xf]
        %v2909 = vld [vmem:[%s19 + $0x4] sm:$0xf]
        %v2910 = vld [vmem:[%s19 + $0x8] sm:$0xf]
        %v2911 = vld [vmem:[%s19 + $0xc] sm:$0xf]
        %v2912 = vld [vmem:[%s19 + $0x10] sm:$0xf]
        %v2913 = vld [vmem:[%s19 + $0x14] sm:$0xf]
        %v2914 = vld [vmem:[%s19 + $0x18] sm:$0xf]
        %v2915 = vld [vmem:[%s19 + $0x1c] sm:$0xf]
        %v2916 = vld [vmem:[%s19 + $0x20] sm:$0xf]
        %v2917 = vld [vmem:[%s19 + $0x24] sm:$0xf]
        %v2918 = vld [vmem:[%s19 + $0x28] sm:$0xf]
        %v2919 = vld [vmem:[%s19 + $0x2c] sm:$0xf]
        %v2920 = vld [vmem:[%s19 + $0x30] sm:$0xf]
        %v2921 = vld [vmem:[%s19 + $0x34] sm:$0xf]
        %v2922 = vld [vmem:[%s19 + $0x38] sm:$0xf]
        %v2923 = vld [vmem:[%s19 + $0x3c] sm:$0xf]
        %v2924 = vld [vmem:[%s20] sm:$0x1]
        %v2926 = vlaneseq
        %v2927 = vshrl.u32 %v2926, 7
        %v2928 = vsub.s32 0, %v2927
        %v2929 = vrot.slane %v2924, %v2928
        %v2947 = vunpack.c.l.b16 %v2908
        %v2948 = vunpack.c.l.b16 %v2909
        %v2949 = vunpack.c.l.b16 %v2910
        %v2950 = vunpack.c.l.b16 %v2911
        %v2951 = vunpack.c.l.b16 %v2912
        %v2952 = vunpack.c.l.b16 %v2913
        %v2953 = vunpack.c.l.b16 %v2914
        %v2954 = vunpack.c.l.b16 %v2915
        %v2955 = vunpack.c.l.b16 %v2916
        %v2956 = vunpack.c.l.b16 %v2917
        %v2957 = vunpack.c.l.b16 %v2918
        %v2958 = vunpack.c.l.b16 %v2919
        %v2959 = vunpack.c.l.b16 %v2920
        %v2960 = vunpack.c.l.b16 %v2921
        %v2961 = vunpack.c.l.b16 %v2922
        %v2962 = vunpack.c.l.b16 %v2923
        %v2963 = vpack.c.b16 %v2948, %v2947
        %v2964 = vpack.c.b16 %v2950, %v2949
        %v2965 = vpack.c.b16 %v2952, %v2951
        %v2966 = vpack.c.b16 %v2954, %v2953
        %v2967 = vpack.c.b16 %v2956, %v2955
        %v2968 = vpack.c.b16 %v2958, %v2957
        %v2969 = vpack.c.b16 %v2960, %v2959
        %v2970 = vpack.c.b16 %v2962, %v2961
        %2979 = vmatprep.subr.bf16.mxu0 0
        %2980 = vmatpush1.bf16.msra.mxu0 %v2970
        %2981 = vmatprep.subr.bf16.mxu0 0
        %2982 = vmatpush1.bf16.msra.mxu0 %v2969
        %2983 = vmatprep.subr.bf16.mxu0 0
        %2984 = vmatpush1.bf16.msra.mxu0 %v2968
        %2985 = vmatprep.subr.bf16.mxu0 0
        %2986 = vmatpush1.bf16.msra.mxu0 %v2967
        %2987 = vmatprep.subr.bf16.mxu0 0
        %2988 = vmatpush1.bf16.msra.mxu0 %v2966
        %2989 = vmatprep.subr.bf16.mxu0 0
        %2990 = vmatpush1.bf16.msra.mxu0 %v2965
        %2991 = vmatprep.subr.bf16.mxu0 0
        %2992 = vmatpush1.bf16.msra.mxu0 %v2964
        %2993 = vmatprep.subr.bf16.mxu0 0
        %2994 = vmatpush1.bf16.msra.mxu0 %v2963
        %2995 = vmatprep.subr.bf16.mxu0 0
        %2996 = vmatpush2.bf16.msra.mxu0 0
        %2997 = vmatprep.subr.bf16.mxu0 0
        %2998 = vmatpush2.bf16.msra.mxu0 0
        %2999 = vmatprep.subr.bf16.mxu0 0
        %3000 = vmatpush2.bf16.msra.mxu0 0
        %3001 = vmatprep.subr.bf16.mxu0 0
        %3002 = vmatpush2.bf16.msra.mxu0 0
        %3003 = vmatprep.subr.bf16.mxu0 0
        %3004 = vmatpush2.bf16.msra.mxu0 0
        %3005 = vmatprep.subr.bf16.mxu0 0
        %3006 = vmatpush2.bf16.msra.mxu0 0
        %3007 = vmatprep.subr.bf16.mxu0 0
        %3008 = vmatpush2.bf16.msra.mxu0 0
        %3009 = vmatprep.subr.bf16.mxu0 0
        %3010 = vmatpush2.bf16.msra.mxu0 0
        %3011 = vmatprep.mubr.bf16.mxu0 0
        %3012 = vmatmul.mubr.bf16.gmra.mxu0 %v2907
        %v3013 = vpop.f32.mrf.mxu0
        %v3014 = vadd.f32 %v2929, %v3013
        %v3015 = vpop.f32.mrf.mxu0
        %v3016 = vpop.f32.mrf.mxu0
        %v3017 = vpop.f32.mrf.mxu0
        %3018 = vdwg.mxu0
        %v3019 = vadd.f32 %v2564, %v3014
        %v3020 = vld [vmem:[%s2 + $0x3] sm:$0x1]
        %v3021 = vld [vmem:[%s3 + $0x3] sm:$0x1]
        %3022 = vadd.xlane.f32.xlu0 %v3019
        %v3023 = vpop.xlane.xlu0 %3022
        %v3024 = vmul.f32 %v3023, %v802
        %v3025 = vsub.f32 %v3019, %v3024
        %v3026 = vmul.f32 %v3025, %v3025
        %3027 = vadd.xlane.f32.xlu0 %v3026
        %v3028 = vpop.xlane.xlu0 %3027
        %v3029 = vmul.f32 %v3028, %v802
        %v3030 = vadd.f32 %v3029, 1e-05
        %v3031 = vrsqrt.pop %v3030
        %v3032 = vmul.f32 %v3025, %v3031
        %v3033 = vlaneseq
        %v3034 = vshrl.u32 %v3033, 7
        %v3035 = vsub.s32 0, %v3034
        %v3036 = vrot.slane %v3020, %v3035
        %v3037 = vmul.f32 %v3032, %v3036
        %v3038 = vlaneseq
        %v3039 = vshrl.u32 %v3038, 7
        %v3040 = vsub.s32 0, %v3039
        %v3041 = vrot.slane %v3021, %v3040
        %v3042 = vadd.f32 %v3037, %v3041
        %v3043 = vpack.c.bf16 %v3042, %v3042
        %v3044 = vld [vmem:[%s21] sm:$0xff]
        %v3045 = vld [vmem:[%s21 + $0x8] sm:$0xff]
        %v3046 = vld [vmem:[%s21 + $0x10] sm:$0xff]
        %v3047 = vld [vmem:[%s21 + $0x18] sm:$0xff]
        %v3048 = vld [vmem:[%s21 + $0x20] sm:$0xff]
        %v3049 = vld [vmem:[%s21 + $0x28] sm:$0xff]
        %v3050 = vld [vmem:[%s21 + $0x30] sm:$0xff]
        %v3051 = vld [vmem:[%s21 + $0x38] sm:$0xff]
        %v3052 = vld [vmem:[%s21 + $0x40] sm:$0xff]
        %v3053 = vld [vmem:[%s21 + $0x48] sm:$0xff]
        %v3054 = vld [vmem:[%s21 + $0x50] sm:$0xff]
        %v3055 = vld [vmem:[%s21 + $0x58] sm:$0xff]
        %v3056 = vld [vmem:[%s21 + $0x60] sm:$0xff]
        %v3057 = vld [vmem:[%s21 + $0x68] sm:$0xff]
        %v3058 = vld [vmem:[%s21 + $0x70] sm:$0xff]
        %v3059 = vld [vmem:[%s21 + $0x78] sm:$0xff]
        %v3060 = vld [vmem:[%s22] sm:$0x3]
        %v3062 = vlaneseq
        %v3063 = vshrl.u32 %v3062, 7
        %v3064 = vsub.s32 0, %v3063
        %v3065 = vrot.slane %v3060, %v3064
        %v3066 = vlaneseq
        %v3067 = vshrl.u32 %v3066, 7
        %v3068 = vsub.s32 1, %v3067
        %v3069 = vrot.slane %v3060, %v3068
        %v3088 = vunpack.c.l.b16 %v3044
        %v3089 = vunpack.c.h.b16 %v3044
        %v3090 = vunpack.c.l.b16 %v3045
        %v3091 = vunpack.c.h.b16 %v3045
        %v3092 = vunpack.c.l.b16 %v3046
        %v3093 = vunpack.c.h.b16 %v3046
        %v3094 = vunpack.c.l.b16 %v3047
        %v3095 = vunpack.c.h.b16 %v3047
        %v3096 = vunpack.c.l.b16 %v3048
        %v3097 = vunpack.c.h.b16 %v3048
        %v3098 = vunpack.c.l.b16 %v3049
        %v3099 = vunpack.c.h.b16 %v3049
        %v3100 = vunpack.c.l.b16 %v3050
        %v3101 = vunpack.c.h.b16 %v3050
        %v3102 = vunpack.c.l.b16 %v3051
        %v3103 = vunpack.c.h.b16 %v3051
        %v3104 = vunpack.c.l.b16 %v3052
        %v3105 = vunpack.c.h.b16 %v3052
        %v3106 = vunpack.c.l.b16 %v3053
        %v3107 = vunpack.c.h.b16 %v3053
        %v3108 = vunpack.c.l.b16 %v3054
        %v3109 = vunpack.c.h.b16 %v3054
        %v3110 = vunpack.c.l.b16 %v3055
        %v3111 = vunpack.c.h.b16 %v3055
        %v3112 = vunpack.c.l.b16 %v3056
        %v3113 = vunpack.c.h.b16 %v3056
        %v3114 = vunpack.c.l.b16 %v3057
        %v3115 = vunpack.c.h.b16 %v3057
        %v3116 = vunpack.c.l.b16 %v3058
        %v3117 = vunpack.c.h.b16 %v3058
        %v3118 = vunpack.c.l.b16 %v3059
        %v3119 = vunpack.c.h.b16 %v3059
        %v3120 = vpack.c.b16 %v3090, %v3088
        %v3121 = vpack.c.b16 %v3091, %v3089
        %v3122 = vpack.c.b16 %v3094, %v3092
        %v3123 = vpack.c.b16 %v3095, %v3093
        %v3124 = vpack.c.b16 %v3098, %v3096
        %v3125 = vpack.c.b16 %v3099, %v3097
        %v3126 = vpack.c.b16 %v3102, %v3100
        %v3127 = vpack.c.b16 %v3103, %v3101
        %v3128 = vpack.c.b16 %v3106, %v3104
        %v3129 = vpack.c.b16 %v3107, %v3105
        %v3130 = vpack.c.b16 %v3110, %v3108
        %v3131 = vpack.c.b16 %v3111, %v3109
        %v3132 = vpack.c.b16 %v3114, %v3112
        %v3133 = vpack.c.b16 %v3115, %v3113
        %v3134 = vpack.c.b16 %v3118, %v3116
        %v3135 = vpack.c.b16 %v3119, %v3117
        %3152 = vmatprep.subr.bf16.mxu0 %v3135
        %3153 = vmatpush1.bf16.msra.mxu0 %v3134
        %3154 = vmatprep.subr.bf16.mxu0 %v3133
        %3155 = vmatpush1.bf16.msra.mxu0 %v3132
        %3156 = vmatprep.subr.bf16.mxu0 %v3131
        %3157 = vmatpush1.bf16.msra.mxu0 %v3130
        %3158 = vmatprep.subr.bf16.mxu0 %v3129
        %3159 = vmatpush1.bf16.msra.mxu0 %v3128
        %3160 = vmatprep.subr.bf16.mxu0 %v3127
        %3161 = vmatpush1.bf16.msra.mxu0 %v3126
        %3162 = vmatprep.subr.bf16.mxu0 %v3125
        %3163 = vmatpush1.bf16.msra.mxu0 %v3124
        %3164 = vmatprep.subr.bf16.mxu0 %v3123
        %3165 = vmatpush1.bf16.msra.mxu0 %v3122
        %3166 = vmatprep.subr.bf16.mxu0 %v3121
        %3167 = vmatpush1.bf16.msra.mxu0 %v3120
        %3168 = vmatprep.subr.bf16.mxu0 0
        %3169 = vmatpush2.bf16.msra.mxu0 0
        %3170 = vmatprep.subr.bf16.mxu0 0
        %3171 = vmatpush2.bf16.msra.mxu0 0
        %3172 = vmatprep.subr.bf16.mxu0 0
        %3173 = vmatpush2.bf16.msra.mxu0 0
        %3174 = vmatprep.subr.bf16.mxu0 0
        %3175 = vmatpush2.bf16.msra.mxu0 0
        %3176 = vmatprep.subr.bf16.mxu0 0
        %3177 = vmatpush2.bf16.msra.mxu0 0
        %3178 = vmatprep.subr.bf16.mxu0 0
        %3179 = vmatpush2.bf16.msra.mxu0 0
        %3180 = vmatprep.subr.bf16.mxu0 0
        %3181 = vmatpush2.bf16.msra.mxu0 0
        %3182 = vmatprep.subr.bf16.mxu0 0
        %3183 = vmatpush2.bf16.msra.mxu0 0
        %3184 = vmatprep.mubr.bf16.mxu0 0
        %3185 = vmatmul.mubr.bf16.gmra.mxu0 %v3043
        %v3186 = vpop.f32.mrf.mxu0
        %v3187 = vadd.f32 %v3065, %v3186
        %v3188 = vpop.f32.mrf.mxu0
        %v3189 = vadd.f32 %v3069, %v3188
        %v3190 = vpop.f32.mrf.mxu0
        %v3191 = vpop.f32.mrf.mxu0
        %3192 = vdwg.mxu0
        %v3193 = vxor.u32 %v3187, 2147483648
        %v3194 = vxor.u32 %v3189, 2147483648
        %v3195 = vmul.f32 %v3193, 1.442695
        %v3196 = vpow.pop %v3195
        %v3197 = vmul.f32 %v3194, 1.442695
        %v3198 = vpow.pop %v3197
        %v3199 = vadd.f32 %v3196, 1.0
        %v3200 = vadd.f32 %v3198, 1.0
        %v3201 = vrcp.pop %v3199
        %v3202 = vmul.f32 1.0, %v3201
        %v3203 = vrcp.pop %v3200
        %v3204 = vmul.f32 1.0, %v3203
        %v3205 = vmul.f32 %v3187, %v3202
        %v3206 = vmul.f32 %v3189, %v3204
        %v3207 = vpack.c.bf16 %v3205, %v3205
        %v3208 = vpack.c.bf16 %v3206, %v3206
        %v3209 = vld [vmem:[%s23] sm:$0xf]
        %v3210 = vld [vmem:[%s23 + $0x4] sm:$0xf]
        %v3211 = vld [vmem:[%s23 + $0x8] sm:$0xf]
        %v3212 = vld [vmem:[%s23 + $0xc] sm:$0xf]
        %v3213 = vld [vmem:[%s23 + $0x10] sm:$0xf]
        %v3214 = vld [vmem:[%s23 + $0x14] sm:$0xf]
        %v3215 = vld [vmem:[%s23 + $0x18] sm:$0xf]
        %v3216 = vld [vmem:[%s23 + $0x1c] sm:$0xf]
        %v3217 = vld [vmem:[%s23 + $0x20] sm:$0xf]
        %v3218 = vld [vmem:[%s23 + $0x24] sm:$0xf]
        %v3219 = vld [vmem:[%s23 + $0x28] sm:$0xf]
        %v3220 = vld [vmem:[%s23 + $0x2c] sm:$0xf]
        %v3221 = vld [vmem:[%s23 + $0x30] sm:$0xf]
        %v3222 = vld [vmem:[%s23 + $0x34] sm:$0xf]
        %v3223 = vld [vmem:[%s23 + $0x38] sm:$0xf]
        %v3224 = vld [vmem:[%s23 + $0x3c] sm:$0xf]
        %v3225 = vld [vmem:[%s23 + $0x40] sm:$0xf]
        %v3226 = vld [vmem:[%s23 + $0x44] sm:$0xf]
        %v3227 = vld [vmem:[%s23 + $0x48] sm:$0xf]
        %v3228 = vld [vmem:[%s23 + $0x4c] sm:$0xf]
        %v3229 = vld [vmem:[%s23 + $0x50] sm:$0xf]
        %v3230 = vld [vmem:[%s23 + $0x54] sm:$0xf]
        %v3231 = vld [vmem:[%s23 + $0x58] sm:$0xf]
        %v3232 = vld [vmem:[%s23 + $0x5c] sm:$0xf]
        %v3233 = vld [vmem:[%s23 + $0x60] sm:$0xf]
        %v3234 = vld [vmem:[%s23 + $0x64] sm:$0xf]
        %v3235 = vld [vmem:[%s23 + $0x68] sm:$0xf]
        %v3236 = vld [vmem:[%s23 + $0x6c] sm:$0xf]
        %v3237 = vld [vmem:[%s23 + $0x70] sm:$0xf]
        %v3238 = vld [vmem:[%s23 + $0x74] sm:$0xf]
        %v3239 = vld [vmem:[%s23 + $0x78] sm:$0xf]
        %v3240 = vld [vmem:[%s23 + $0x7c] sm:$0xf]
        %v3241 = vld [vmem:[%s24] sm:$0x1]
        %v3243 = vlaneseq
        %v3244 = vshrl.u32 %v3243, 7
        %v3245 = vsub.s32 0, %v3244
        %v3246 = vrot.slane %v3241, %v3245
        %v3280 = vunpack.c.l.b16 %v3209
        %v3281 = vunpack.c.l.b16 %v3210
        %v3282 = vunpack.c.l.b16 %v3211
        %v3283 = vunpack.c.l.b16 %v3212
        %v3284 = vunpack.c.l.b16 %v3213
        %v3285 = vunpack.c.l.b16 %v3214
        %v3286 = vunpack.c.l.b16 %v3215
        %v3287 = vunpack.c.l.b16 %v3216
        %v3288 = vunpack.c.l.b16 %v3217
        %v3289 = vunpack.c.l.b16 %v3218
        %v3290 = vunpack.c.l.b16 %v3219
        %v3291 = vunpack.c.l.b16 %v3220
        %v3292 = vunpack.c.l.b16 %v3221
        %v3293 = vunpack.c.l.b16 %v3222
        %v3294 = vunpack.c.l.b16 %v3223
        %v3295 = vunpack.c.l.b16 %v3224
        %v3296 = vunpack.c.l.b16 %v3225
        %v3297 = vunpack.c.l.b16 %v3226
        %v3298 = vunpack.c.l.b16 %v3227
        %v3299 = vunpack.c.l.b16 %v3228
        %v3300 = vunpack.c.l.b16 %v3229
        %v3301 = vunpack.c.l.b16 %v3230
        %v3302 = vunpack.c.l.b16 %v3231
        %v3303 = vunpack.c.l.b16 %v3232
        %v3304 = vunpack.c.l.b16 %v3233
        %v3305 = vunpack.c.l.b16 %v3234
        %v3306 = vunpack.c.l.b16 %v3235
        %v3307 = vunpack.c.l.b16 %v3236
        %v3308 = vunpack.c.l.b16 %v3237
        %v3309 = vunpack.c.l.b16 %v3238
        %v3310 = vunpack.c.l.b16 %v3239
        %v3311 = vunpack.c.l.b16 %v3240
        %v3312 = vpack.c.b16 %v3281, %v3280
        %v3313 = vpack.c.b16 %v3283, %v3282
        %v3314 = vpack.c.b16 %v3285, %v3284
        %v3315 = vpack.c.b16 %v3287, %v3286
        %v3316 = vpack.c.b16 %v3289, %v3288
        %v3317 = vpack.c.b16 %v3291, %v3290
        %v3318 = vpack.c.b16 %v3293, %v3292
        %v3319 = vpack.c.b16 %v3295, %v3294
        %v3320 = vpack.c.b16 %v3297, %v3296
        %v3321 = vpack.c.b16 %v3299, %v3298
        %v3322 = vpack.c.b16 %v3301, %v3300
        %v3323 = vpack.c.b16 %v3303, %v3302
        %v3324 = vpack.c.b16 %v3305, %v3304
        %v3325 = vpack.c.b16 %v3307, %v3306
        %v3326 = vpack.c.b16 %v3309, %v3308
        %v3327 = vpack.c.b16 %v3311, %v3310
        %3344 = vmatprep.subr.bf16.mxu0 0
        %3345 = vmatpush1.bf16.msra.mxu0 %v3319
        %3346 = vmatprep.subr.bf16.mxu0 0
        %3347 = vmatpush1.bf16.msra.mxu0 %v3318
        %3348 = vmatprep.subr.bf16.mxu0 0
        %3349 = vmatpush1.bf16.msra.mxu0 %v3317
        %3350 = vmatprep.subr.bf16.mxu0 0
        %3351 = vmatpush1.bf16.msra.mxu0 %v3316
        %3352 = vmatprep.subr.bf16.mxu0 0
        %3353 = vmatpush1.bf16.msra.mxu0 %v3315
        %3354 = vmatprep.subr.bf16.mxu0 0
        %3355 = vmatpush1.bf16.msra.mxu0 %v3314
        %3356 = vmatprep.subr.bf16.mxu0 0
        %3357 = vmatpush1.bf16.msra.mxu0 %v3313
        %3358 = vmatprep.subr.bf16.mxu0 0
        %3359 = vmatpush1.bf16.msra.mxu0 %v3312
        %3360 = vmatprep.subr.bf16.mxu0 0
        %3361 = vmatpush2.bf16.msra.mxu0 %v3327
        %3362 = vmatprep.subr.bf16.mxu0 0
        %3363 = vmatpush2.bf16.msra.mxu0 %v3326
        %3364 = vmatprep.subr.bf16.mxu0 0
        %3365 = vmatpush2.bf16.msra.mxu0 %v3325
        %3366 = vmatprep.subr.bf16.mxu0 0
        %3367 = vmatpush2.bf16.msra.mxu0 %v3324
        %3368 = vmatprep.subr.bf16.mxu0 0
        %3369 = vmatpush2.bf16.msra.mxu0 %v3323
        %3370 = vmatprep.subr.bf16.mxu0 0
        %3371 = vmatpush2.bf16.msra.mxu0 %v3322
        %3372 = vmatprep.subr.bf16.mxu0 0
        %3373 = vmatpush2.bf16.msra.mxu0 %v3321
        %3374 = vmatprep.subr.bf16.mxu0 0
        %3375 = vmatpush2.bf16.msra.mxu0 %v3320
        %3376 = vmatprep.mubr.bf16.mxu0 %v3208
        %3377 = vmatmul.mubr.bf16.gmra.mxu0 %v3207
        %v3378 = vpop.f32.mrf.mxu0
        %v3379 = vadd.f32 %v3246, %v3378
        %v3380 = vpop.f32.mrf.mxu0
        %v3381 = vpop.f32.mrf.mxu0
        %v3382 = vpop.f32.mrf.mxu0
        %3383 = vdwg.mxu0
        %v3384 = vmul.f32 %v3379, 0.5
        %v3385 = vadd.f32 %v3019, %v3384
        %v3386 = vld [vmem:[%s2 + $0x4] sm:$0x1]
        %v3387 = vld [vmem:[%s3 + $0x4] sm:$0x1]
        %3388 = vadd.xlane.f32.xlu0 %v3385
        %v3389 = vpop.xlane.xlu0 %3388
        %v3390 = vmul.f32 %v3389, %v802
        %v3391 = vsub.f32 %v3385, %v3390
        %v3392 = vmul.f32 %v3391, %v3391
        %3393 = vadd.xlane.f32.xlu0 %v3392
        %v3394 = vpop.xlane.xlu0 %3393
        %v3395 = vmul.f32 %v3394, %v802
        %v3396 = vadd.f32 %v3395, 1e-05
        %v3397 = vrsqrt.pop %v3396
        %v3398 = vmul.f32 %v3391, %v3397
        %v3399 = vlaneseq
        %v3400 = vshrl.u32 %v3399, 7
        %v3401 = vsub.s32 0, %v3400
        %v3402 = vrot.slane %v3386, %v3401
        %v3403 = vmul.f32 %v3398, %v3402
        %v3404 = vlaneseq
        %v3405 = vshrl.u32 %v3404, 7
        %v3406 = vsub.s32 0, %v3405
        %v3407 = vrot.slane %v3387, %v3406
        %v3408 = vadd.f32 %v3403, %v3407
        %3409 = vst [vmem:[%s783] sm:$0xff] %v3408
        %v3410 = vrot.slane %v3408, 4
        %v3411 = vadd.f32 %v3408, %v3410
        %v3412 = vrot.slane %v3411, 2
        %v3413 = vadd.f32 %v3411, %v3412
        %v3414 = vrot.slane %v3413, 1
        %v3415 = vadd.f32 %v3413, %v3414
        %v3416 = vrcp.pop 8.0
        %v3417 = vmul.f32 %v3415, %v3416
        %3418 = vst [vmem:[%s795] sm:$0x1] %v3417
        %s3419 = sand.u32 %s579, 1
        %s3420 = scalar_lea.sflag [#allocation3], %s3419
        %s3421 = sand.u32 %s579, 1
        %s3422 = smul.addr %s3421, 8
        %s3423 = scalar_lea.vmem [#allocation2], %s3422
        %p3424 = scmp.lt.s32.totalorder %s41, 1
        %s3425 = scalar_select %p3424, %s41, 1
        %s3426 = scalar_lea.vmem %s26, %s3425
        // Predicated region
        $region121: #{cnn_conformer_forward.18} parent=119 // pred_check
          %p3427 = pneg %p589
        $region122: #{cnn_conformer_forward.18} parent=119 // pred_check_branch
          %3429 = sbr.rel (%p3427) target = $region124
        $region123: #{cnn_conformer_forward.18} parent=119 // pred_region
          %s3431 = ssub.s32 128, 128
          %3432 = vsyncadd %s3420, %s3431
          %s3433 = smul.addr %s41, 128
          %s3434 = scalar_lea.hbm %s25, %s3433
          %s3436 = sshll.u32 %s3423, 4
          %s3437 = int_to_ptr.vmem [resolvable:$true] %s3436
          %3439 = dma.vmem_to_hbm [thread:$0]  %s3437, 128, %s3434, %s3420
        $region124: #{cnn_conformer_forward.18} parent=119 // pred_fallthru
          _
        // Predicated region
        $region125: #{cnn_conformer_forward.18} parent=119 // pred_check
          %p3440 = pneg %p615
        $region126: #{cnn_conformer_forward.18} parent=119 // pred_check_branch
          %3442 = sbr.rel (%p3440) target = $region128
        $region127: #{cnn_conformer_forward.18} parent=119 // pred_region
          _
        $region128: #{cnn_conformer_forward.18} parent=119 // pred_fallthru
          _
      $region120: #{cnn_conformer_forward.18} parent=5 // pred_fallthru
        _
      %p3443 = scmp.le.s32.totalorder 2, %s36
      // Predicated region
      $region129: #{cnn_conformer_forward.18} parent=5 // pred_check
        %p3444 = pneg %p3443
      $region130: #{cnn_conformer_forward.18} parent=5 // pred_check_branch
        %3446 = sbr.rel (%p3444) target = $region132
      $region131: #{cnn_conformer_forward.18} parent=5 // pred_region
        %s3447 = ssub.s32 %s36, 2
        // Predicated region
        $region133: #{cnn_conformer_forward.18} parent=131 // pred_check
          %p3448 = pneg %p595
        $region134: #{cnn_conformer_forward.18} parent=131 // pred_check_branch
          %3450 = sbr.rel (%p3448) target = $region136
        $region135: #{cnn_conformer_forward.18} parent=131 // pred_region
          %s3451 = sand.u32 %s580, 1
          %s3452 = scalar_lea.sflag [#allocation3], %s3451
          %s3453 = sand.u32 %s580, 1
          %s3454 = smul.addr %s3453, 8
          %s3455 = scalar_lea.vmem [#allocation2], %s3454
          %3456 = dma.done %s3452, 128
        $region136: #{cnn_conformer_forward.18} parent=131 // pred_fallthru
          _
        // Predicated region
        $region137: #{cnn_conformer_forward.18} parent=131 // pred_check
          %p3457 = pneg %p621
        $region138: #{cnn_conformer_forward.18} parent=131 // pred_check_branch
          %3459 = sbr.rel (%p3457) target = $region140
        $region139: #{cnn_conformer_forward.18} parent=131 // pred_region
          %p3460 = scmp.lt.s32.totalorder %s42, 1
          %s3461 = scalar_select %p3460, %s42, 1
          %s3462 = scalar_lea.vmem %s26, %s3461
        $region140: #{cnn_conformer_forward.18} parent=131 // pred_fallthru
          _
      $region132: #{cnn_conformer_forward.18} parent=5 // pred_fallthru
        _
    $region6: #{cnn_conformer_forward.18} parent=1 // loop_footer
      %s40 = sadd.s32 1, %s36
    $region7: #{cnn_conformer_forward.18} parent=1 // loop_footer_branch
      %35 = sbr.rel target = $region3
    $region8: #{cnn_conformer_forward.18} parent=1 // loop_exit
      _
    %3463 = vsyncpa [#allocation3], 1
    %s3464 = scalar_lea.sflag [#allocation3], 1
    %3465 = vsyncpa %s3464, 1

</llo_original>
